<compile_context>
chip_gen: v6e
topology: v6e:2x2x1
jax: 0.10.0
libtpu: 0.0.40
codegen_flags: <defaults>
</compile_context>

<pallas_src>
import numpy as np

import jax
import jax.numpy as jnp
from jax import lax
from jax.experimental import pallas as pl
from jax.experimental.pallas import tpu as pltpu

LANES = 128  # TPU lane width


# --------------------------- fused decoder kernel ---------------------------
def _build_decoder_kernel(H, W, L, C_SLOT, c_real, eps):
    P = LANES // C_SLOT          # spatial positions packed per 128-lane group
    Wg = W // P                  # packed width (lane groups per image row)
    M = Wg * H                   # rows of the packed activation matrix
    HW = H * W
    REST = LANES - C_SLOT        # lanes holding sub-positions 0 .. P-2

    def kernel(x_ref, w_ref, cb_ref, g_ref, bt_ref, wl_ref, bl_ref, o_ref,
               buf0, buf1, patches):
        # x_ref:  (1, Wg, H, 128)  one packed sample: lane = subpos*C_SLOT + channel
        # w_ref:  (L, 9*128, 128)  bf16 block-diagonal im2col conv weights
        # cb_ref: (L, 1, 128)      f32 conv biases, replicated over sub-positions
        # g_ref:  (L, M, 128)      bf16 LayerNorm gamma (packed layout, 0 on pad lanes)
        # bt_ref: (L, M, 128)      bf16 LayerNorm beta  (0 on pad lanes)
        # wl_ref: (C_SLOT, 128)    bf16 padded linear weight (already transposed)
        # bl_ref: (1, 128)         f32 padded linear bias
        # o_ref:  (1, 1, 128)      sigmoid(logits), lane-padded
        # buf0/buf1: VMEM (Wg+2, H+2, 128) f32  ping-pong zero-padded activations
        # patches:   VMEM (M, 9*128)       bf16 packed im2col patch matrix

        # Zero ONLY the 1-position border ring; interiors are fully rewritten each layer,
        # so a full memset would be wasted store-slot traffic.
        for buf in (buf0, buf1):
            buf[0:1, :, :] = jnp.zeros((1, H + 2, LANES), jnp.float32)
            buf[Wg + 1:Wg + 2, :, :] = jnp.zeros((1, H + 2, LANES), jnp.float32)
            buf[:, 0:1, :] = jnp.zeros((Wg + 2, 1, LANES), jnp.float32)
            buf[:, H + 1:H + 2, :] = jnp.zeros((Wg + 2, 1, LANES), jnp.float32)

        buf0[1:1 + Wg, 1:1 + H, :] = x_ref[0]
        bufs = (buf0, buf1)

        for l in range(L):                          # statically unrolled over layers
            src = bufs[l % 2]
            dst = bufs[(l + 1) % 2]

            # ---- packed im2col (bf16): every tap store is a full, aligned 128-lane
            #      store; W +/- 1 taps are two lane-range concats (no roll/gather). ----
            for dy in range(3):
                slab = src[:, dy:dy + H, :].astype(jnp.bfloat16)   # (Wg+2, H, 128)
                ctr = slab[1:1 + Wg]                               # dx == 0 groups
                t0, t1, t2 = dy * 3, dy * 3 + 1, dy * 3 + 2
                tap_prev = jnp.concatenate(                        # w - 1 tap
                    [slab[0:Wg, :, REST:], ctr[:, :, :REST]], axis=-1)
                tap_next = jnp.concatenate(                        # w + 1 tap
                    [ctr[:, :, C_SLOT:], slab[2:2 + Wg, :, :C_SLOT]], axis=-1)
                patches[:, t0 * LANES:(t0 + 1) * LANES] = tap_prev.reshape(M, LANES)
                patches[:, t1 * LANES:(t1 + 1) * LANES] = ctr.reshape(M, LANES)
                patches[:, t2 * LANES:(t2 + 1) * LANES] = tap_next.reshape(M, LANES)

            # ---- 3x3 conv == ONE bf16 MXU matmul (K = 9*128), f32 accumulation ----
            y = jnp.dot(patches[...], w_ref[l],
                        preferred_element_type=jnp.float32) + cb_ref[l]

            # ---- LayerNorm over (C, H, W), fused single-traversal stats (f32).
            #      Padded lanes of y are exactly 0, so full-array sums divided by the
            #      REAL element count give exact mean / E[x^2]. ----
            inv_n = 1.0 / float(c_real[l] * HW)
            s1 = jnp.sum(y, axis=0, keepdims=True)       # (1, 128) row partials
            s2 = jnp.sum(y * y, axis=0, keepdims=True)   # (1, 128)
            mean = jnp.sum(s1) * inv_n
            var = jnp.maximum(jnp.sum(s2) * inv_n - mean * mean, 0.0)
            y = (y - mean) * lax.rsqrt(var + eps)
            # bf16 affine params (0 on padded lanes restores exact zeros) + ReLU
            y = jnp.maximum(y * g_ref[l] + bt_ref[l], 0.0)

            if l + 1 < L:
                dst[1:1 + Wg, 1:1 + H, :] = y.reshape(Wg, H, LANES)
            else:
                # Fused epilogue: AdaptiveAvgPool2d((1,1)) -> Linear -> Sigmoid.
                s = jnp.sum(y, axis=0, keepdims=True)    # per (sub-pos, chan) sums
                pooled = s[:, 0:C_SLOT]
                for i in range(1, P):                    # fold the P sub-positions
                    pooled = pooled + s[:, i * C_SLOT:(i + 1) * C_SLOT]
                pooled = pooled * (1.0 / HW)             # (1, C_SLOT)
                logits = jnp.dot(pooled.astype(jnp.bfloat16), wl_ref[...],
                                 preferred_element_type=jnp.float32) + bl_ref[...]
                o_ref[...] = (1.0 / (1.0 + jnp.exp(-logits))).reshape(1, 1, LANES)

    return kernel


def decoder_forward(image_nchw, prepared, eps=1e-5):
    """Fused Pallas forward. image_nchw: (B, 3, H, W) float32 -> (B, message_length)."""
    (w_stack, cb_stack, g_stack, bt_stack, wl_pad, bl_pad,
     c_real, msg_len, C_SLOT) = prepared
    B, cin, H, W = image_nchw.shape
    L = w_stack.shape[0]
    P = LANES // C_SLOT
    assert W % P == 0 and H % 8 == 0
    Wg = W // P
    M = Wg * H

    # Boundary-only layout plumbing: NCHW -> packed (B, Wg, H, P*C_SLOT).
    x = jnp.transpose(image_nchw, (0, 2, 3, 1)).astype(jnp.float32)   # NHWC
    x = jnp.pad(x, ((0, 0), (0, 0), (0, 0), (0, C_SLOT - cin)))
    x = x.reshape(B, H, Wg, P, C_SLOT).transpose(0, 2, 1, 3, 4).reshape(B, Wg, H, LANES)

    kernel = _build_decoder_kernel(H, W, L, C_SLOT, c_real, eps)

    flops = 2 * B * (L * M * (9 * LANES) * LANES + C_SLOT * LANES)
    bytes_accessed = int(x.size * 4 + w_stack.size * 2 + cb_stack.size * 4
                         + g_stack.size * 2 + bt_stack.size * 2
                         + wl_pad.size * 2 + bl_pad.size * 4 + B * LANES * 4)

    out = pl.pallas_call(
        kernel,
        out_shape=jax.ShapeDtypeStruct((B, 1, LANES), jnp.float32),
        grid=(B,),
        in_specs=[
            pl.BlockSpec((1, Wg, H, LANES), lambda b: (b, 0, 0, 0)),
            # Constant operands: whole-array VMEM residency, single-buffered.
            pl.BlockSpec(memory_space=pltpu.MemorySpace.VMEM),   # conv weights (bf16)
            pl.BlockSpec(memory_space=pltpu.MemorySpace.VMEM),   # conv biases  (f32)
            pl.BlockSpec(memory_space=pltpu.MemorySpace.VMEM),   # LN gamma     (bf16)
            pl.BlockSpec(memory_space=pltpu.MemorySpace.VMEM),   # LN beta      (bf16)
            pl.BlockSpec(memory_space=pltpu.MemorySpace.VMEM),   # linear W     (bf16)
            pl.BlockSpec(memory_space=pltpu.MemorySpace.VMEM),   # linear bias  (f32)
        ],
        out_specs=pl.BlockSpec((1, 1, LANES), lambda b: (b, 0, 0)),
        scratch_shapes=[
            pltpu.VMEM((Wg + 2, H + 2, LANES), jnp.float32),     # ping
            pltpu.VMEM((Wg + 2, H + 2, LANES), jnp.float32),     # pong
            pltpu.VMEM((M, 9 * LANES), jnp.bfloat16),            # packed im2col
        ],
        compiler_params=pltpu.CompilerParams(
            dimension_semantics=("parallel",),                   # v7x: sample per core
            vmem_limit_bytes=32 * 1024 * 1024),
        cost_estimate=pl.CostEstimate(flops=int(flops),
                                      transcendentals=int(B * (L + LANES)),
                                      bytes_accessed=bytes_accessed),
    )(x, w_stack, cb_stack, g_stack, bt_stack, wl_pad, bl_pad)

    return out[:, 0, :msg_len]


# ------------------------------ parameters ------------------------------
def init_decoder_params(key, H, W, decoder_channels=32, decoder_blocks=3,
                        message_length=8):
    """Random params matching Decoder_LN structure (LN affine stored as (H, W, C))."""
    io = [(3, decoder_channels)]
    io += [(decoder_channels, decoder_channels)] * (decoder_blocks - 1)
    io += [(decoder_channels, message_length)]
    conv_layers = []
    for i, (cin, cout) in enumerate(io):
        k = jax.random.fold_in(key, i)
        kw, kb, kg, kbe = jax.random.split(k, 4)
        w = jax.random.normal(kw, (3, 3, cin, cout), jnp.float32) * 0.1        # HWIO
        b = jax.random.normal(kb, (cout,), jnp.float32) * 0.05
        gamma = 1.0 + 0.1 * jax.random.normal(kg, (H, W, cout), jnp.float32)   # LN weight
        beta = 0.05 * jax.random.normal(kbe, (H, W, cout), jnp.float32)        # LN bias
        conv_layers.append((w, b, gamma, beta))
    kl = jax.random.fold_in(key, 1000)
    kw, kb = jax.random.split(kl)
    m = message_length
    w_lin = jax.random.normal(kw, (m, m), jnp.float32) / np.sqrt(m)            # (out, in)
    b_lin = jax.random.normal(kb, (m,), jnp.float32) * 0.05
    return conv_layers, (w_lin, b_lin)


def prepare_params(conv_layers, linear, H, W):
    """One-time host-side prep: spatial packing, block-diagonal im2col weights, bf16."""
    L = len(conv_layers)
    c_max = max(max(w.shape[2], w.shape[3]) for (w, _, _, _) in conv_layers)
    assert c_max <= 64, "spatial packing implemented for channel counts <= 64"
    C_SLOT = 32 if c_max <= 32 else 64
    P = LANES // C_SLOT
    assert W % P == 0
    Wg = W // P
    M = Wg * H

    w_stack = np.zeros((L, 9 * LANES, LANES), np.float32)
    cb_stack = np.zeros((L, 1, LANES), np.float32)
    g_stack = np.zeros((L, M, LANES), np.float32)
    bt_stack = np.zeros((L, M, LANES), np.float32)
    c_real = []

    def pack_spatial(a, cout):            # (H, W, cout) -> packed (M, 128)
        ap = np.zeros((H, W, C_SLOT), np.float32)
        ap[:, :, :cout] = a
        return ap.reshape(H, Wg, P, C_SLOT).transpose(1, 0, 2, 3).reshape(M, LANES)

    for l, (w, b, gamma, beta) in enumerate(conv_layers):
        w = np.asarray(w, np.float32)
        _, _, cin, cout = w.shape
        wp = np.zeros((9, C_SLOT, C_SLOT), np.float32)
        wp[:, :cin, :cout] = w.reshape(9, cin, cout)
        big = np.zeros((9, P, C_SLOT, P, C_SLOT), np.float32)
        for i in range(P):                                   # block-diagonal over subpos
            big[:, i, :, i, :] = wp
        w_stack[l] = big.reshape(9 * LANES, LANES)
        cb_stack[l, 0, :] = np.tile(np.pad(np.asarray(b, np.float32),
                                           (0, C_SLOT - cout)), P)
        g_stack[l] = pack_spatial(np.asarray(gamma, np.float32), cout)
        bt_stack[l] = pack_spatial(np.asarray(beta, np.float32), cout)
        c_real.append(cout)

    # Guard the zero-padding invariant the in-kernel LN reduction relies on.
    for l, cr in enumerate(c_real):
        pad_mask = np.ones(LANES, bool)
        for i in range(P):
            pad_mask[i * C_SLOT:i * C_SLOT + cr] = False
        assert not w_stack[l][:, pad_mask].any()
        assert not cb_stack[l][:, pad_mask].any()
        assert not g_stack[l][:, pad_mask].any()
        assert not bt_stack[l][:, pad_mask].any()

    w_lin, b_lin = linear
    w_lin = np.asarray(w_lin, np.float32)
    msg = int(w_lin.shape[0])
    assert msg <= C_SLOT
    wl = np.zeros((C_SLOT, LANES), np.float32)
    wl[:msg, :msg] = w_lin.T                         # PyTorch Linear: x @ W.T + b
    bl = np.zeros((1, LANES), np.float32)
    bl[0, :msg] = np.asarray(b_lin, np.float32)

    return (jnp.asarray(w_stack, jnp.bfloat16), jnp.asarray(cb_stack, jnp.float32),
            jnp.asarray(g_stack, jnp.bfloat16), jnp.asarray(bt_stack, jnp.bfloat16),
            jnp.asarray(wl, jnp.bfloat16), jnp.asarray(bl, jnp.float32),
            tuple(c_real), msg, C_SLOT)


# --------------------------- pure-JAX reference ---------------------------
def decoder_reference(image_nchw, conv_layers, linear, eps=1e-5):
    x = jnp.transpose(image_nchw, (0, 2, 3, 1)).astype(jnp.float32)
    for (w, b, gamma, beta) in conv_layers:
        y = lax.conv_general_dilated(x, w, (1, 1), 'SAME',
                                     dimension_numbers=('NHWC', 'HWIO', 'NHWC')) + b
        mean = jnp.mean(y, axis=(1, 2, 3), keepdims=True)            # LN over (C,H,W)
        var = jnp.mean(jnp.square(y - mean), axis=(1, 2, 3), keepdims=True)
        y = (y - mean) / jnp.sqrt(var + eps)
        y = y * gamma[None] + beta[None]
        x = jnp.maximum(y, 0.0)
    pooled = jnp.mean(x, axis=(1, 2))                                # AdaptiveAvgPool2d
    w_lin, b_lin = linear
    return jax.nn.sigmoid(pooled @ w_lin.T + b_lin)


if __name__ == "__main__":
    key = jax.random.PRNGKey(0)
    # Small shapes consistent with the module (the spec hard-codes LN to 64x64; here the
    # LayerNorm normalized_shape is (C, H, W) with H=W=16 to keep the test small).
    B, H, W = 2, 16, 16
    decoder_channels, decoder_blocks, message_length = 32, 3, 8

    k_img, k_par = jax.random.split(key)
    image_with_wm = jax.random.normal(k_img, (B, 3, H, W), jnp.float32)   # NCHW
    conv_layers, linear = init_decoder_params(
        k_par, H, W, decoder_channels, decoder_blocks, message_length)
    prepared = prepare_params(conv_layers, linear, H, W)

    out = decoder_forward(image_with_wm, prepared)
    out = jax.block_until_ready(out)
    assert out.shape == (B, message_length)

    ref = decoder_reference(image_with_wm, conv_layers, linear)
    # bf16 matmul operands / affine params set the error floor; stats & accum stay f32.
    np.testing.assert_allclose(np.asarray(out), np.asarray(ref), rtol=5e-3, atol=2e-3)

    print("KERNEL_OK")
</pallas_src>

<mosaic_0001>
module attributes {stable_mosaic.version = 11 : i64} {
  func.func @kernel(%arg0: i32, %arg1: memref<1x4x16x128xf32, #tpu.memory_space<vmem>>, %arg2: memref<4x1152x128xbf16, #tpu.memory_space<vmem>>, %arg3: memref<4x1x128xf32, #tpu.memory_space<vmem>>, %arg4: memref<4x64x128xbf16, #tpu.memory_space<vmem>>, %arg5: memref<4x64x128xbf16, #tpu.memory_space<vmem>>, %arg6: memref<32x128xbf16, #tpu.memory_space<vmem>>, %arg7: memref<1x128xf32, #tpu.memory_space<vmem>>, %arg8: memref<1x1x128xf32, #tpu.memory_space<vmem>>, %arg9: memref<6x18x128xf32, #tpu.memory_space<vmem>>, %arg10: memref<6x18x128xf32, #tpu.memory_space<vmem>>, %arg11: memref<64x1152xbf16, #tpu.memory_space<vmem>>) attributes {dimension_semantics = [#tpu.dimension_semantics<parallel>], iteration_bounds = array<i64: 2>, scalar_prefetch = 0 : i64, scratch_operands = 3 : i64, tpu.core_type = #tpu.core_type<tc>, window_params = [{transform_indices = @transform_0, window_bounds = array<i64: 1, 4, 16, 128>}, {pipeline_mode = #tpu.pipeline_mode<synchronous>, transform_indices = @transform_1, window_bounds = array<i64: 4, 1152, 128>}, {pipeline_mode = #tpu.pipeline_mode<synchronous>, transform_indices = @transform_2, window_bounds = array<i64: 4, 1, 128>}, {pipeline_mode = #tpu.pipeline_mode<synchronous>, transform_indices = @transform_3, window_bounds = array<i64: 4, 64, 128>}, {pipeline_mode = #tpu.pipeline_mode<synchronous>, transform_indices = @transform_4, window_bounds = array<i64: 4, 64, 128>}, {pipeline_mode = #tpu.pipeline_mode<synchronous>, transform_indices = @transform_5, window_bounds = array<i64: 32, 128>}, {pipeline_mode = #tpu.pipeline_mode<synchronous>, transform_indices = @transform_6, window_bounds = array<i64: 1, 128>}, {transform_indices = @transform_7, window_bounds = array<i64: 1, 1, 128>}]} {
    %cst = arith.constant 0.000000e+00 : f32
    %0 = vector.broadcast %cst : f32 to vector<1x18x128xf32>
    %c0 = arith.constant 0 : index
    %c0_0 = arith.constant 0 : index
    %c0_1 = arith.constant 0 : index
    %1 = vector.load %arg9[%c0, %c0_0, %c0_1] : memref<6x18x128xf32, #tpu.memory_space<vmem>>, vector<1x18x128xf32>
    tpu.vector_store %arg9[%c0, %c0_0, %c0_1], %0 {strides = array<i32>} : memref<6x18x128xf32, #tpu.memory_space<vmem>>, vector<1x18x128xf32>,
    %cst_2 = arith.constant 0.000000e+00 : f32
    %2 = vector.broadcast %cst_2 : f32 to vector<1x18x128xf32>
    %c5 = arith.constant 5 : index
    %c0_3 = arith.constant 0 : index
    %c0_4 = arith.constant 0 : index
    %3 = vector.load %arg9[%c5, %c0_3, %c0_4] : memref<6x18x128xf32, #tpu.memory_space<vmem>>, vector<1x18x128xf32>
    tpu.vector_store %arg9[%c5, %c0_3, %c0_4], %2 {strides = array<i32>} : memref<6x18x128xf32, #tpu.memory_space<vmem>>, vector<1x18x128xf32>,
    %cst_5 = arith.constant 0.000000e+00 : f32
    %4 = vector.broadcast %cst_5 : f32 to vector<6x1x128xf32>
    %c0_6 = arith.constant 0 : index
    %c0_7 = arith.constant 0 : index
    %c0_8 = arith.constant 0 : index
    %5 = vector.load %arg9[%c0_6, %c0_7, %c0_8] : memref<6x18x128xf32, #tpu.memory_space<vmem>>, vector<6x1x128xf32>
    tpu.vector_store %arg9[%c0_6, %c0_7, %c0_8], %4 {strides = array<i32>} : memref<6x18x128xf32, #tpu.memory_space<vmem>>, vector<6x1x128xf32>,
    %cst_9 = arith.constant 0.000000e+00 : f32
    %6 = vector.broadcast %cst_9 : f32 to vector<6x1x128xf32>
    %c0_10 = arith.constant 0 : index
    %c17 = arith.constant 17 : index
    %c0_11 = arith.constant 0 : index
    %7 = vector.load %arg9[%c0_10, %c17, %c0_11] : memref<6x18x128xf32, #tpu.memory_space<vmem>>, vector<6x1x128xf32>
    tpu.vector_store %arg9[%c0_10, %c17, %c0_11], %6 {strides = array<i32>} : memref<6x18x128xf32, #tpu.memory_space<vmem>>, vector<6x1x128xf32>,
    %cst_12 = arith.constant 0.000000e+00 : f32
    %8 = vector.broadcast %cst_12 : f32 to vector<1x18x128xf32>
    %c0_13 = arith.constant 0 : index
    %c0_14 = arith.constant 0 : index
    %c0_15 = arith.constant 0 : index
    %9 = vector.load %arg10[%c0_13, %c0_14, %c0_15] : memref<6x18x128xf32, #tpu.memory_space<vmem>>, vector<1x18x128xf32>
    tpu.vector_store %arg10[%c0_13, %c0_14, %c0_15], %8 {strides = array<i32>} : memref<6x18x128xf32, #tpu.memory_space<vmem>>, vector<1x18x128xf32>,
    %cst_16 = arith.constant 0.000000e+00 : f32
    %10 = vector.broadcast %cst_16 : f32 to vector<1x18x128xf32>
    %c5_17 = arith.constant 5 : index
    %c0_18 = arith.constant 0 : index
    %c0_19 = arith.constant 0 : index
    %11 = vector.load %arg10[%c5_17, %c0_18, %c0_19] : memref<6x18x128xf32, #tpu.memory_space<vmem>>, vector<1x18x128xf32>
    tpu.vector_store %arg10[%c5_17, %c0_18, %c0_19], %10 {strides = array<i32>} : memref<6x18x128xf32, #tpu.memory_space<vmem>>, vector<1x18x128xf32>,
    %cst_20 = arith.constant 0.000000e+00 : f32
    %12 = vector.broadcast %cst_20 : f32 to vector<6x1x128xf32>
    %c0_21 = arith.constant 0 : index
    %c0_22 = arith.constant 0 : index
    %c0_23 = arith.constant 0 : index
    %13 = vector.load %arg10[%c0_21, %c0_22, %c0_23] : memref<6x18x128xf32, #tpu.memory_space<vmem>>, vector<6x1x128xf32>
    tpu.vector_store %arg10[%c0_21, %c0_22, %c0_23], %12 {strides = array<i32>} : memref<6x18x128xf32, #tpu.memory_space<vmem>>, vector<6x1x128xf32>,
    %cst_24 = arith.constant 0.000000e+00 : f32
    %14 = vector.broadcast %cst_24 : f32 to vector<6x1x128xf32>
    %c0_25 = arith.constant 0 : index
    %c17_26 = arith.constant 17 : index
    %c0_27 = arith.constant 0 : index
    %15 = vector.load %arg10[%c0_25, %c17_26, %c0_27] : memref<6x18x128xf32, #tpu.memory_space<vmem>>, vector<6x1x128xf32>
    tpu.vector_store %arg10[%c0_25, %c17_26, %c0_27], %14 {strides = array<i32>} : memref<6x18x128xf32, #tpu.memory_space<vmem>>, vector<6x1x128xf32>,
    %c0_28 = arith.constant 0 : index
    %c0_29 = arith.constant 0 : index
    %c0_30 = arith.constant 0 : index
    %c0_31 = arith.constant 0 : index
    %16 = vector.load %arg1[%c0_28, %c0_29, %c0_30, %c0_31] : memref<1x4x16x128xf32, #tpu.memory_space<vmem>>, vector<1x4x16x128xf32>
    %17 = vector.shape_cast %16 : vector<1x4x16x128xf32> to vector<4x16x128xf32>
    %c1 = arith.constant 1 : index
    %c1_32 = arith.constant 1 : index
    %c0_33 = arith.constant 0 : index
    %18 = vector.load %arg9[%c1, %c1_32, %c0_33] : memref<6x18x128xf32, #tpu.memory_space<vmem>>, vector<4x16x128xf32>
    tpu.vector_store %arg9[%c1, %c1_32, %c0_33], %17 {strides = array<i32>} : memref<6x18x128xf32, #tpu.memory_space<vmem>>, vector<4x16x128xf32>,
    %c0_34 = arith.constant 0 : index
    %c0_35 = arith.constant 0 : index
    %c0_36 = arith.constant 0 : index
    %19 = vector.load %arg9[%c0_34, %c0_35, %c0_36] : memref<6x18x128xf32, #tpu.memory_space<vmem>>, vector<6x16x128xf32>
    %20 = arith.truncf %19 : vector<6x16x128xf32> to vector<6x16x128xbf16>
    %21 = vector.extract_strided_slice %20 {offsets = [1, 0, 0], sizes = [4, 16, 128], strides = [1, 1, 1]} : vector<6x16x128xbf16> to vector<4x16x128xbf16>
    %22 = vector.extract_strided_slice %20 {offsets = [0, 0, 96], sizes = [4, 16, 32], strides = [1, 1, 1]} : vector<6x16x128xbf16> to vector<4x16x32xbf16>
    %23 = vector.extract_strided_slice %21 {offsets = [0, 0, 0], sizes = [4, 16, 96], strides = [1, 1, 1]} : vector<4x16x128xbf16> to vector<4x16x96xbf16>
    %24 = tpu.concatenate %22, %23 in 2 : vector<4x16x32xbf16>, vector<4x16x96xbf16> -> vector<4x16x128xbf16>
    %25 = vector.extract_strided_slice %21 {offsets = [0, 0, 32], sizes = [4, 16, 96], strides = [1, 1, 1]} : vector<4x16x128xbf16> to vector<4x16x96xbf16>
    %26 = vector.extract_strided_slice %20 {offsets = [2, 0, 0], sizes = [4, 16, 32], strides = [1, 1, 1]} : vector<6x16x128xbf16> to vector<4x16x32xbf16>
    %27 = tpu.concatenate %25, %26 in 2 : vector<4x16x96xbf16>, vector<4x16x32xbf16> -> vector<4x16x128xbf16>
    %28 = vector.shape_cast %24 : vector<4x16x128xbf16> to vector<64x128xbf16>
    %c0_37 = arith.constant 0 : index
    %c0_38 = arith.constant 0 : index
    %29 = vector.load %arg11[%c0_37, %c0_38] : memref<64x1152xbf16, #tpu.memory_space<vmem>>, vector<64x128xbf16>
    tpu.vector_store %arg11[%c0_37, %c0_38], %28 {strides = array<i32>} : memref<64x1152xbf16, #tpu.memory_space<vmem>>, vector<64x128xbf16>,
    %30 = vector.shape_cast %21 : vector<4x16x128xbf16> to vector<64x128xbf16>
    %c0_39 = arith.constant 0 : index
    %c128 = arith.constant 128 : index
    %31 = vector.load %arg11[%c0_39, %c128] : memref<64x1152xbf16, #tpu.memory_space<vmem>>, vector<64x128xbf16>
    tpu.vector_store %arg11[%c0_39, %c128], %30 {strides = array<i32>} : memref<64x1152xbf16, #tpu.memory_space<vmem>>, vector<64x128xbf16>,
    %32 = vector.shape_cast %27 : vector<4x16x128xbf16> to vector<64x128xbf16>
    %c0_40 = arith.constant 0 : index
    %c256 = arith.constant 256 : index
    %33 = vector.load %arg11[%c0_40, %c256] : memref<64x1152xbf16, #tpu.memory_space<vmem>>, vector<64x128xbf16>
    tpu.vector_store %arg11[%c0_40, %c256], %32 {strides = array<i32>} : memref<64x1152xbf16, #tpu.memory_space<vmem>>, vector<64x128xbf16>,
    %c0_41 = arith.constant 0 : index
    %c1_42 = arith.constant 1 : index
    %c0_43 = arith.constant 0 : index
    %34 = vector.load %arg9[%c0_41, %c1_42, %c0_43] : memref<6x18x128xf32, #tpu.memory_space<vmem>>, vector<6x16x128xf32>
    %35 = arith.truncf %34 : vector<6x16x128xf32> to vector<6x16x128xbf16>
    %36 = vector.extract_strided_slice %35 {offsets = [1, 0, 0], sizes = [4, 16, 128], strides = [1, 1, 1]} : vector<6x16x128xbf16> to vector<4x16x128xbf16>
    %37 = vector.extract_strided_slice %35 {offsets = [0, 0, 96], sizes = [4, 16, 32], strides = [1, 1, 1]} : vector<6x16x128xbf16> to vector<4x16x32xbf16>
    %38 = vector.extract_strided_slice %36 {offsets = [0, 0, 0], sizes = [4, 16, 96], strides = [1, 1, 1]} : vector<4x16x128xbf16> to vector<4x16x96xbf16>
    %39 = tpu.concatenate %37, %38 in 2 : vector<4x16x32xbf16>, vector<4x16x96xbf16> -> vector<4x16x128xbf16>
    %40 = vector.extract_strided_slice %36 {offsets = [0, 0, 32], sizes = [4, 16, 96], strides = [1, 1, 1]} : vector<4x16x128xbf16> to vector<4x16x96xbf16>
    %41 = vector.extract_strided_slice %35 {offsets = [2, 0, 0], sizes = [4, 16, 32], strides = [1, 1, 1]} : vector<6x16x128xbf16> to vector<4x16x32xbf16>
    %42 = tpu.concatenate %40, %41 in 2 : vector<4x16x96xbf16>, vector<4x16x32xbf16> -> vector<4x16x128xbf16>
    %43 = vector.shape_cast %39 : vector<4x16x128xbf16> to vector<64x128xbf16>
    %c0_44 = arith.constant 0 : index
    %c384 = arith.constant 384 : index
    %44 = vector.load %arg11[%c0_44, %c384] : memref<64x1152xbf16, #tpu.memory_space<vmem>>, vector<64x128xbf16>
    tpu.vector_store %arg11[%c0_44, %c384], %43 {strides = array<i32>} : memref<64x1152xbf16, #tpu.memory_space<vmem>>, vector<64x128xbf16>,
    %45 = vector.shape_cast %36 : vector<4x16x128xbf16> to vector<64x128xbf16>
    %c0_45 = arith.constant 0 : index
    %c512 = arith.constant 512 : index
    %46 = vector.load %arg11[%c0_45, %c512] : memref<64x1152xbf16, #tpu.memory_space<vmem>>, vector<64x128xbf16>
    tpu.vector_store %arg11[%c0_45, %c512], %45 {strides = array<i32>} : memref<64x1152xbf16, #tpu.memory_space<vmem>>, vector<64x128xbf16>,
    %47 = vector.shape_cast %42 : vector<4x16x128xbf16> to vector<64x128xbf16>
    %c0_46 = arith.constant 0 : index
    %c640 = arith.constant 640 : index
    %48 = vector.load %arg11[%c0_46, %c640] : memref<64x1152xbf16, #tpu.memory_space<vmem>>, vector<64x128xbf16>
    tpu.vector_store %arg11[%c0_46, %c640], %47 {strides = array<i32>} : memref<64x1152xbf16, #tpu.memory_space<vmem>>, vector<64x128xbf16>,
    %c0_47 = arith.constant 0 : index
    %c2 = arith.constant 2 : index
    %c0_48 = arith.constant 0 : index
    %49 = vector.load %arg9[%c0_47, %c2, %c0_48] : memref<6x18x128xf32, #tpu.memory_space<vmem>>, vector<6x16x128xf32>
    %50 = arith.truncf %49 : vector<6x16x128xf32> to vector<6x16x128xbf16>
    %51 = vector.extract_strided_slice %50 {offsets = [1, 0, 0], sizes = [4, 16, 128], strides = [1, 1, 1]} : vector<6x16x128xbf16> to vector<4x16x128xbf16>
    %52 = vector.extract_strided_slice %50 {offsets = [0, 0, 96], sizes = [4, 16, 32], strides = [1, 1, 1]} : vector<6x16x128xbf16> to vector<4x16x32xbf16>
    %53 = vector.extract_strided_slice %51 {offsets = [0, 0, 0], sizes = [4, 16, 96], strides = [1, 1, 1]} : vector<4x16x128xbf16> to vector<4x16x96xbf16>
    %54 = tpu.concatenate %52, %53 in 2 : vector<4x16x32xbf16>, vector<4x16x96xbf16> -> vector<4x16x128xbf16>
    %55 = vector.extract_strided_slice %51 {offsets = [0, 0, 32], sizes = [4, 16, 96], strides = [1, 1, 1]} : vector<4x16x128xbf16> to vector<4x16x96xbf16>
    %56 = vector.extract_strided_slice %50 {offsets = [2, 0, 0], sizes = [4, 16, 32], strides = [1, 1, 1]} : vector<6x16x128xbf16> to vector<4x16x32xbf16>
    %57 = tpu.concatenate %55, %56 in 2 : vector<4x16x96xbf16>, vector<4x16x32xbf16> -> vector<4x16x128xbf16>
    %58 = vector.shape_cast %54 : vector<4x16x128xbf16> to vector<64x128xbf16>
    %c0_49 = arith.constant 0 : index
    %c768 = arith.constant 768 : index
    %59 = vector.load %arg11[%c0_49, %c768] : memref<64x1152xbf16, #tpu.memory_space<vmem>>, vector<64x128xbf16>
    tpu.vector_store %arg11[%c0_49, %c768], %58 {strides = array<i32>} : memref<64x1152xbf16, #tpu.memory_space<vmem>>, vector<64x128xbf16>,
    %60 = vector.shape_cast %51 : vector<4x16x128xbf16> to vector<64x128xbf16>
    %c0_50 = arith.constant 0 : index
    %c896 = arith.constant 896 : index
    %61 = vector.load %arg11[%c0_50, %c896] : memref<64x1152xbf16, #tpu.memory_space<vmem>>, vector<64x128xbf16>
    tpu.vector_store %arg11[%c0_50, %c896], %60 {strides = array<i32>} : memref<64x1152xbf16, #tpu.memory_space<vmem>>, vector<64x128xbf16>,
    %62 = vector.shape_cast %57 : vector<4x16x128xbf16> to vector<64x128xbf16>
    %c0_51 = arith.constant 0 : index
    %c1024 = arith.constant 1024 : index
    %63 = vector.load %arg11[%c0_51, %c1024] : memref<64x1152xbf16, #tpu.memory_space<vmem>>, vector<64x128xbf16>
    tpu.vector_store %arg11[%c0_51, %c1024], %62 {strides = array<i32>} : memref<64x1152xbf16, #tpu.memory_space<vmem>>, vector<64x128xbf16>,
    %c0_52 = arith.constant 0 : index
    %c0_53 = arith.constant 0 : index
    %64 = vector.load %arg11[%c0_52, %c0_53] : memref<64x1152xbf16, #tpu.memory_space<vmem>>, vector<64x1152xbf16>
    %c0_54 = arith.constant 0 : index
    %c0_55 = arith.constant 0 : index
    %c0_56 = arith.constant 0 : index
    %65 = vector.load %arg2[%c0_54, %c0_55, %c0_56] : memref<4x1152x128xbf16, #tpu.memory_space<vmem>>, vector<1x1152x128xbf16>
    %66 = vector.shape_cast %65 : vector<1x1152x128xbf16> to vector<1152x128xbf16>
    %cst_57 = arith.constant dense<0.000000e+00> : vector<64x128xf32>
    %67 = tpu.matmul %64, %66, %cst_57 {dimension_numbers = #tpu.dot_dimension_numbers<[1], [0], [0], [1], [0, 0, 1, 1], [], []>} : vector<64x1152xbf16>, vector<1152x128xbf16>, vector<64x128xf32> -> vector<64x128xf32>
    %c0_58 = arith.constant 0 : index
    %c0_59 = arith.constant 0 : index
    %c0_60 = arith.constant 0 : index
    %68 = vector.load %arg3[%c0_58, %c0_59, %c0_60] : memref<4x1x128xf32, #tpu.memory_space<vmem>>, vector<1x1x128xf32>
    %69 = vector.shape_cast %68 : vector<1x1x128xf32> to vector<1x128xf32>
    %70 = vector.broadcast %69 : vector<1x128xf32> to vector<64x128xf32>
    %71 = arith.addf %67, %70 : vector<64x128xf32>
    %cst_61 = arith.constant dense<0.000000e+00> : vector<128xf32>
    %72 = vector.multi_reduction <add>, %71, %cst_61 [0] : vector<64x128xf32> to vector<128xf32>
    %73 = vector.shape_cast %72 : vector<128xf32> to vector<1x128xf32>
    %74 = arith.mulf %71, %71 : vector<64x128xf32>
    %cst_62 = arith.constant dense<0.000000e+00> : vector<128xf32>
    %75 = vector.multi_reduction <add>, %74, %cst_62 [0] : vector<64x128xf32> to vector<128xf32>
    %76 = vector.shape_cast %75 : vector<128xf32> to vector<1x128xf32>
    %77 = vector.shape_cast %73 : vector<1x128xf32> to vector<1x1x128xf32>
    %cst_63 = arith.constant dense<0.000000e+00> : vector<1xf32>
    %78 = vector.multi_reduction <add>, %77, %cst_63 [1, 2] : vector<1x1x128xf32> to vector<1xf32>
    %79 = vector.shape_cast %78 : vector<1xf32> to vector<1x1x1xf32>
    %80 = vector.extract %79[0, 0, 0] : f32 from vector<1x1x1xf32>
    %cst_64 = arith.constant 1.22070313E-4 : f32
    %81 = arith.mulf %80, %cst_64 : f32
    %82 = vector.shape_cast %76 : vector<1x128xf32> to vector<1x1x128xf32>
    %cst_65 = arith.constant dense<0.000000e+00> : vector<1xf32>
    %83 = vector.multi_reduction <add>, %82, %cst_65 [1, 2] : vector<1x1x128xf32> to vector<1xf32>
    %84 = vector.shape_cast %83 : vector<1xf32> to vector<1x1x1xf32>
    %85 = vector.extract %84[0, 0, 0] : f32 from vector<1x1x1xf32>
    %cst_66 = arith.constant 1.22070313E-4 : f32
    %86 = arith.mulf %85, %cst_66 : f32
    %87 = arith.mulf %81, %81 : f32
    %88 = arith.subf %86, %87 : f32
    %cst_67 = arith.constant 0.000000e+00 : f32
    %89 = arith.maximumf %88, %cst_67 : f32
    %90 = vector.broadcast %81 : f32 to vector<64x128xf32>
    %91 = arith.subf %71, %90 : vector<64x128xf32>
    %cst_68 = arith.constant 9.99999974E-6 : f32
    %92 = arith.addf %89, %cst_68 : f32
    %93 = math.rsqrt %92 : f32
    %94 = vector.broadcast %93 : f32 to vector<64x128xf32>
    %95 = arith.mulf %91, %94 : vector<64x128xf32>
    %c0_69 = arith.constant 0 : index
    %c0_70 = arith.constant 0 : index
    %c0_71 = arith.constant 0 : index
    %96 = vector.load %arg4[%c0_69, %c0_70, %c0_71] : memref<4x64x128xbf16, #tpu.memory_space<vmem>>, vector<1x64x128xbf16>
    %97 = vector.shape_cast %96 : vector<1x64x128xbf16> to vector<64x128xbf16>
    %98 = arith.extf %97 : vector<64x128xbf16> to vector<64x128xf32>
    %99 = arith.mulf %95, %98 : vector<64x128xf32>
    %c0_72 = arith.constant 0 : index
    %c0_73 = arith.constant 0 : index
    %c0_74 = arith.constant 0 : index
    %100 = vector.load %arg5[%c0_72, %c0_73, %c0_74] : memref<4x64x128xbf16, #tpu.memory_space<vmem>>, vector<1x64x128xbf16>
    %101 = vector.shape_cast %100 : vector<1x64x128xbf16> to vector<64x128xbf16>
    %102 = arith.extf %101 : vector<64x128xbf16> to vector<64x128xf32>
    %103 = arith.addf %99, %102 : vector<64x128xf32>
    %cst_75 = arith.constant 0.000000e+00 : f32
    %104 = vector.broadcast %cst_75 : f32 to vector<64x128xf32>
    %105 = arith.maximumf %103, %104 : vector<64x128xf32>
    %106 = vector.shape_cast %105 : vector<64x128xf32> to vector<4x16x128xf32>
    %c1_76 = arith.constant 1 : index
    %c1_77 = arith.constant 1 : index
    %c0_78 = arith.constant 0 : index
    %107 = vector.load %arg10[%c1_76, %c1_77, %c0_78] : memref<6x18x128xf32, #tpu.memory_space<vmem>>, vector<4x16x128xf32>
    tpu.vector_store %arg10[%c1_76, %c1_77, %c0_78], %106 {strides = array<i32>} : memref<6x18x128xf32, #tpu.memory_space<vmem>>, vector<4x16x128xf32>,
    %c0_79 = arith.constant 0 : index
    %c0_80 = arith.constant 0 : index
    %c0_81 = arith.constant 0 : index
    %108 = vector.load %arg10[%c0_79, %c0_80, %c0_81] : memref<6x18x128xf32, #tpu.memory_space<vmem>>, vector<6x16x128xf32>
    %109 = arith.truncf %108 : vector<6x16x128xf32> to vector<6x16x128xbf16>
    %110 = vector.extract_strided_slice %109 {offsets = [1, 0, 0], sizes = [4, 16, 128], strides = [1, 1, 1]} : vector<6x16x128xbf16> to vector<4x16x128xbf16>
    %111 = vector.extract_strided_slice %109 {offsets = [0, 0, 96], sizes = [4, 16, 32], strides = [1, 1, 1]} : vector<6x16x128xbf16> to vector<4x16x32xbf16>
    %112 = vector.extract_strided_slice %110 {offsets = [0, 0, 0], sizes = [4, 16, 96], strides = [1, 1, 1]} : vector<4x16x128xbf16> to vector<4x16x96xbf16>
    %113 = tpu.concatenate %111, %112 in 2 : vector<4x16x32xbf16>, vector<4x16x96xbf16> -> vector<4x16x128xbf16>
    %114 = vector.extract_strided_slice %110 {offsets = [0, 0, 32], sizes = [4, 16, 96], strides = [1, 1, 1]} : vector<4x16x128xbf16> to vector<4x16x96xbf16>
    %115 = vector.extract_strided_slice %109 {offsets = [2, 0, 0], sizes = [4, 16, 32], strides = [1, 1, 1]} : vector<6x16x128xbf16> to vector<4x16x32xbf16>
    %116 = tpu.concatenate %114, %115 in 2 : vector<4x16x96xbf16>, vector<4x16x32xbf16> -> vector<4x16x128xbf16>
    %117 = vector.shape_cast %113 : vector<4x16x128xbf16> to vector<64x128xbf16>
    %c0_82 = arith.constant 0 : index
    %c0_83 = arith.constant 0 : index
    %118 = vector.load %arg11[%c0_82, %c0_83] : memref<64x1152xbf16, #tpu.memory_space<vmem>>, vector<64x128xbf16>
    tpu.vector_store %arg11[%c0_82, %c0_83], %117 {strides = array<i32>} : memref<64x1152xbf16, #tpu.memory_space<vmem>>, vector<64x128xbf16>,
    %119 = vector.shape_cast %110 : vector<4x16x128xbf16> to vector<64x128xbf16>
    %c0_84 = arith.constant 0 : index
    %c128_85 = arith.constant 128 : index
    %120 = vector.load %arg11[%c0_84, %c128_85] : memref<64x1152xbf16, #tpu.memory_space<vmem>>, vector<64x128xbf16>
    tpu.vector_store %arg11[%c0_84, %c128_85], %119 {strides = array<i32>} : memref<64x1152xbf16, #tpu.memory_space<vmem>>, vector<64x128xbf16>,
    %121 = vector.shape_cast %116 : vector<4x16x128xbf16> to vector<64x128xbf16>
    %c0_86 = arith.constant 0 : index
    %c256_87 = arith.constant 256 : index
    %122 = vector.load %arg11[%c0_86, %c256_87] : memref<64x1152xbf16, #tpu.memory_space<vmem>>, vector<64x128xbf16>
    tpu.vector_store %arg11[%c0_86, %c256_87], %121 {strides = array<i32>} : memref<64x1152xbf16, #tpu.memory_space<vmem>>, vector<64x128xbf16>,
    %c0_88 = arith.constant 0 : index
    %c1_89 = arith.constant 1 : index
    %c0_90 = arith.constant 0 : index
    %123 = vector.load %arg10[%c0_88, %c1_89, %c0_90] : memref<6x18x128xf32, #tpu.memory_space<vmem>>, vector<6x16x128xf32>
    %124 = arith.truncf %123 : vector<6x16x128xf32> to vector<6x16x128xbf16>
    %125 = vector.extract_strided_slice %124 {offsets = [1, 0, 0], sizes = [4, 16, 128], strides = [1, 1, 1]} : vector<6x16x128xbf16> to vector<4x16x128xbf16>
    %126 = vector.extract_strided_slice %124 {offsets = [0, 0, 96], sizes = [4, 16, 32], strides = [1, 1, 1]} : vector<6x16x128xbf16> to vector<4x16x32xbf16>
    %127 = vector.extract_strided_slice %125 {offsets = [0, 0, 0], sizes = [4, 16, 96], strides = [1, 1, 1]} : vector<4x16x128xbf16> to vector<4x16x96xbf16>
    %128 = tpu.concatenate %126, %127 in 2 : vector<4x16x32xbf16>, vector<4x16x96xbf16> -> vector<4x16x128xbf16>
    %129 = vector.extract_strided_slice %125 {offsets = [0, 0, 32], sizes = [4, 16, 96], strides = [1, 1, 1]} : vector<4x16x128xbf16> to vector<4x16x96xbf16>
    %130 = vector.extract_strided_slice %124 {offsets = [2, 0, 0], sizes = [4, 16, 32], strides = [1, 1, 1]} : vector<6x16x128xbf16> to vector<4x16x32xbf16>
    %131 = tpu.concatenate %129, %130 in 2 : vector<4x16x96xbf16>, vector<4x16x32xbf16> -> vector<4x16x128xbf16>
    %132 = vector.shape_cast %128 : vector<4x16x128xbf16> to vector<64x128xbf16>
    %c0_91 = arith.constant 0 : index
    %c384_92 = arith.constant 384 : index
    %133 = vector.load %arg11[%c0_91, %c384_92] : memref<64x1152xbf16, #tpu.memory_space<vmem>>, vector<64x128xbf16>
    tpu.vector_store %arg11[%c0_91, %c384_92], %132 {strides = array<i32>} : memref<64x1152xbf16, #tpu.memory_space<vmem>>, vector<64x128xbf16>,
    %134 = vector.shape_cast %125 : vector<4x16x128xbf16> to vector<64x128xbf16>
    %c0_93 = arith.constant 0 : index
    %c512_94 = arith.constant 512 : index
    %135 = vector.load %arg11[%c0_93, %c512_94] : memref<64x1152xbf16, #tpu.memory_space<vmem>>, vector<64x128xbf16>
    tpu.vector_store %arg11[%c0_93, %c512_94], %134 {strides = array<i32>} : memref<64x1152xbf16, #tpu.memory_space<vmem>>, vector<64x128xbf16>,
    %136 = vector.shape_cast %131 : vector<4x16x128xbf16> to vector<64x128xbf16>
    %c0_95 = arith.constant 0 : index
    %c640_96 = arith.constant 640 : index
    %137 = vector.load %arg11[%c0_95, %c640_96] : memref<64x1152xbf16, #tpu.memory_space<vmem>>, vector<64x128xbf16>
    tpu.vector_store %arg11[%c0_95, %c640_96], %136 {strides = array<i32>} : memref<64x1152xbf16, #tpu.memory_space<vmem>>, vector<64x128xbf16>,
    %c0_97 = arith.constant 0 : index
    %c2_98 = arith.constant 2 : index
    %c0_99 = arith.constant 0 : index
    %138 = vector.load %arg10[%c0_97, %c2_98, %c0_99] : memref<6x18x128xf32, #tpu.memory_space<vmem>>, vector<6x16x128xf32>
    %139 = arith.truncf %138 : vector<6x16x128xf32> to vector<6x16x128xbf16>
    %140 = vector.extract_strided_slice %139 {offsets = [1, 0, 0], sizes = [4, 16, 128], strides = [1, 1, 1]} : vector<6x16x128xbf16> to vector<4x16x128xbf16>
    %141 = vector.extract_strided_slice %139 {offsets = [0, 0, 96], sizes = [4, 16, 32], strides = [1, 1, 1]} : vector<6x16x128xbf16> to vector<4x16x32xbf16>
    %142 = vector.extract_strided_slice %140 {offsets = [0, 0, 0], sizes = [4, 16, 96], strides = [1, 1, 1]} : vector<4x16x128xbf16> to vector<4x16x96xbf16>
    %143 = tpu.concatenate %141, %142 in 2 : vector<4x16x32xbf16>, vector<4x16x96xbf16> -> vector<4x16x128xbf16>
    %144 = vector.extract_strided_slice %140 {offsets = [0, 0, 32], sizes = [4, 16, 96], strides = [1, 1, 1]} : vector<4x16x128xbf16> to vector<4x16x96xbf16>
    %145 = vector.extract_strided_slice %139 {offsets = [2, 0, 0], sizes = [4, 16, 32], strides = [1, 1, 1]} : vector<6x16x128xbf16> to vector<4x16x32xbf16>
    %146 = tpu.concatenate %144, %145 in 2 : vector<4x16x96xbf16>, vector<4x16x32xbf16> -> vector<4x16x128xbf16>
    %147 = vector.shape_cast %143 : vector<4x16x128xbf16> to vector<64x128xbf16>
    %c0_100 = arith.constant 0 : index
    %c768_101 = arith.constant 768 : index
    %148 = vector.load %arg11[%c0_100, %c768_101] : memref<64x1152xbf16, #tpu.memory_space<vmem>>, vector<64x128xbf16>
    tpu.vector_store %arg11[%c0_100, %c768_101], %147 {strides = array<i32>} : memref<64x1152xbf16, #tpu.memory_space<vmem>>, vector<64x128xbf16>,
    %149 = vector.shape_cast %140 : vector<4x16x128xbf16> to vector<64x128xbf16>
    %c0_102 = arith.constant 0 : index
    %c896_103 = arith.constant 896 : index
    %150 = vector.load %arg11[%c0_102, %c896_103] : memref<64x1152xbf16, #tpu.memory_space<vmem>>, vector<64x128xbf16>
    tpu.vector_store %arg11[%c0_102, %c896_103], %149 {strides = array<i32>} : memref<64x1152xbf16, #tpu.memory_space<vmem>>, vector<64x128xbf16>,
    %151 = vector.shape_cast %146 : vector<4x16x128xbf16> to vector<64x128xbf16>
    %c0_104 = arith.constant 0 : index
    %c1024_105 = arith.constant 1024 : index
    %152 = vector.load %arg11[%c0_104, %c1024_105] : memref<64x1152xbf16, #tpu.memory_space<vmem>>, vector<64x128xbf16>
    tpu.vector_store %arg11[%c0_104, %c1024_105], %151 {strides = array<i32>} : memref<64x1152xbf16, #tpu.memory_space<vmem>>, vector<64x128xbf16>,
    %c0_106 = arith.constant 0 : index
    %c0_107 = arith.constant 0 : index
    %153 = vector.load %arg11[%c0_106, %c0_107] : memref<64x1152xbf16, #tpu.memory_space<vmem>>, vector<64x1152xbf16>
    %c1_108 = arith.constant 1 : index
    %c0_109 = arith.constant 0 : index
    %c0_110 = arith.constant 0 : index
    %154 = vector.load %arg2[%c1_108, %c0_109, %c0_110] : memref<4x1152x128xbf16, #tpu.memory_space<vmem>>, vector<1x1152x128xbf16>
    %155 = vector.shape_cast %154 : vector<1x1152x128xbf16> to vector<1152x128xbf16>
    %cst_111 = arith.constant dense<0.000000e+00> : vector<64x128xf32>
    %156 = tpu.matmul %153, %155, %cst_111 {dimension_numbers = #tpu.dot_dimension_numbers<[1], [0], [0], [1], [0, 0, 1, 1], [], []>} : vector<64x1152xbf16>, vector<1152x128xbf16>, vector<64x128xf32> -> vector<64x128xf32>
    %c1_112 = arith.constant 1 : index
    %c0_113 = arith.constant 0 : index
    %c0_114 = arith.constant 0 : index
    %157 = vector.load %arg3[%c1_112, %c0_113, %c0_114] : memref<4x1x128xf32, #tpu.memory_space<vmem>>, vector<1x1x128xf32>
    %158 = vector.shape_cast %157 : vector<1x1x128xf32> to vector<1x128xf32>
    %159 = vector.broadcast %158 : vector<1x128xf32> to vector<64x128xf32>
    %160 = arith.addf %156, %159 : vector<64x128xf32>
    %cst_115 = arith.constant dense<0.000000e+00> : vector<128xf32>
    %161 = vector.multi_reduction <add>, %160, %cst_115 [0] : vector<64x128xf32> to vector<128xf32>
    %162 = vector.shape_cast %161 : vector<128xf32> to vector<1x128xf32>
    %163 = arith.mulf %160, %160 : vector<64x128xf32>
    %cst_116 = arith.constant dense<0.000000e+00> : vector<128xf32>
    %164 = vector.multi_reduction <add>, %163, %cst_116 [0] : vector<64x128xf32> to vector<128xf32>
    %165 = vector.shape_cast %164 : vector<128xf32> to vector<1x128xf32>
    %166 = vector.shape_cast %162 : vector<1x128xf32> to vector<1x1x128xf32>
    %cst_117 = arith.constant dense<0.000000e+00> : vector<1xf32>
    %167 = vector.multi_reduction <add>, %166, %cst_117 [1, 2] : vector<1x1x128xf32> to vector<1xf32>
    %168 = vector.shape_cast %167 : vector<1xf32> to vector<1x1x1xf32>
    %169 = vector.extract %168[0, 0, 0] : f32 from vector<1x1x1xf32>
    %cst_118 = arith.constant 1.22070313E-4 : f32
    %170 = arith.mulf %169, %cst_118 : f32
    %171 = vector.shape_cast %165 : vector<1x128xf32> to vector<1x1x128xf32>
    %cst_119 = arith.constant dense<0.000000e+00> : vector<1xf32>
    %172 = vector.multi_reduction <add>, %171, %cst_119 [1, 2] : vector<1x1x128xf32> to vector<1xf32>
    %173 = vector.shape_cast %172 : vector<1xf32> to vector<1x1x1xf32>
    %174 = vector.extract %173[0, 0, 0] : f32 from vector<1x1x1xf32>
    %cst_120 = arith.constant 1.22070313E-4 : f32
    %175 = arith.mulf %174, %cst_120 : f32
    %176 = arith.mulf %170, %170 : f32
    %177 = arith.subf %175, %176 : f32
    %cst_121 = arith.constant 0.000000e+00 : f32
    %178 = arith.maximumf %177, %cst_121 : f32
    %179 = vector.broadcast %170 : f32 to vector<64x128xf32>
    %180 = arith.subf %160, %179 : vector<64x128xf32>
    %cst_122 = arith.constant 9.99999974E-6 : f32
    %181 = arith.addf %178, %cst_122 : f32
    %182 = math.rsqrt %181 : f32
    %183 = vector.broadcast %182 : f32 to vector<64x128xf32>
    %184 = arith.mulf %180, %183 : vector<64x128xf32>
    %c1_123 = arith.constant 1 : index
    %c0_124 = arith.constant 0 : index
    %c0_125 = arith.constant 0 : index
    %185 = vector.load %arg4[%c1_123, %c0_124, %c0_125] : memref<4x64x128xbf16, #tpu.memory_space<vmem>>, vector<1x64x128xbf16>
    %186 = vector.shape_cast %185 : vector<1x64x128xbf16> to vector<64x128xbf16>
    %187 = arith.extf %186 : vector<64x128xbf16> to vector<64x128xf32>
    %188 = arith.mulf %184, %187 : vector<64x128xf32>
    %c1_126 = arith.constant 1 : index
    %c0_127 = arith.constant 0 : index
    %c0_128 = arith.constant 0 : index
    %189 = vector.load %arg5[%c1_126, %c0_127, %c0_128] : memref<4x64x128xbf16, #tpu.memory_space<vmem>>, vector<1x64x128xbf16>
    %190 = vector.shape_cast %189 : vector<1x64x128xbf16> to vector<64x128xbf16>
    %191 = arith.extf %190 : vector<64x128xbf16> to vector<64x128xf32>
    %192 = arith.addf %188, %191 : vector<64x128xf32>
    %cst_129 = arith.constant 0.000000e+00 : f32
    %193 = vector.broadcast %cst_129 : f32 to vector<64x128xf32>
    %194 = arith.maximumf %192, %193 : vector<64x128xf32>
    %195 = vector.shape_cast %194 : vector<64x128xf32> to vector<4x16x128xf32>
    %c1_130 = arith.constant 1 : index
    %c1_131 = arith.constant 1 : index
    %c0_132 = arith.constant 0 : index
    %196 = vector.load %arg9[%c1_130, %c1_131, %c0_132] : memref<6x18x128xf32, #tpu.memory_space<vmem>>, vector<4x16x128xf32>
    tpu.vector_store %arg9[%c1_130, %c1_131, %c0_132], %195 {strides = array<i32>} : memref<6x18x128xf32, #tpu.memory_space<vmem>>, vector<4x16x128xf32>,
    %c0_133 = arith.constant 0 : index
    %c0_134 = arith.constant 0 : index
    %c0_135 = arith.constant 0 : index
    %197 = vector.load %arg9[%c0_133, %c0_134, %c0_135] : memref<6x18x128xf32, #tpu.memory_space<vmem>>, vector<6x16x128xf32>
    %198 = arith.truncf %197 : vector<6x16x128xf32> to vector<6x16x128xbf16>
    %199 = vector.extract_strided_slice %198 {offsets = [1, 0, 0], sizes = [4, 16, 128], strides = [1, 1, 1]} : vector<6x16x128xbf16> to vector<4x16x128xbf16>
    %200 = vector.extract_strided_slice %198 {offsets = [0, 0, 96], sizes = [4, 16, 32], strides = [1, 1, 1]} : vector<6x16x128xbf16> to vector<4x16x32xbf16>
    %201 = vector.extract_strided_slice %199 {offsets = [0, 0, 0], sizes = [4, 16, 96], strides = [1, 1, 1]} : vector<4x16x128xbf16> to vector<4x16x96xbf16>
    %202 = tpu.concatenate %200, %201 in 2 : vector<4x16x32xbf16>, vector<4x16x96xbf16> -> vector<4x16x128xbf16>
    %203 = vector.extract_strided_slice %199 {offsets = [0, 0, 32], sizes = [4, 16, 96], strides = [1, 1, 1]} : vector<4x16x128xbf16> to vector<4x16x96xbf16>
    %204 = vector.extract_strided_slice %198 {offsets = [2, 0, 0], sizes = [4, 16, 32], strides = [1, 1, 1]} : vector<6x16x128xbf16> to vector<4x16x32xbf16>
    %205 = tpu.concatenate %203, %204 in 2 : vector<4x16x96xbf16>, vector<4x16x32xbf16> -> vector<4x16x128xbf16>
    %206 = vector.shape_cast %202 : vector<4x16x128xbf16> to vector<64x128xbf16>
    %c0_136 = arith.constant 0 : index
    %c0_137 = arith.constant 0 : index
    %207 = vector.load %arg11[%c0_136, %c0_137] : memref<64x1152xbf16, #tpu.memory_space<vmem>>, vector<64x128xbf16>
    tpu.vector_store %arg11[%c0_136, %c0_137], %206 {strides = array<i32>} : memref<64x1152xbf16, #tpu.memory_space<vmem>>, vector<64x128xbf16>,
    %208 = vector.shape_cast %199 : vector<4x16x128xbf16> to vector<64x128xbf16>
    %c0_138 = arith.constant 0 : index
    %c128_139 = arith.constant 128 : index
    %209 = vector.load %arg11[%c0_138, %c128_139] : memref<64x1152xbf16, #tpu.memory_space<vmem>>, vector<64x128xbf16>
    tpu.vector_store %arg11[%c0_138, %c128_139], %208 {strides = array<i32>} : memref<64x1152xbf16, #tpu.memory_space<vmem>>, vector<64x128xbf16>,
    %210 = vector.shape_cast %205 : vector<4x16x128xbf16> to vector<64x128xbf16>
    %c0_140 = arith.constant 0 : index
    %c256_141 = arith.constant 256 : index
    %211 = vector.load %arg11[%c0_140, %c256_141] : memref<64x1152xbf16, #tpu.memory_space<vmem>>, vector<64x128xbf16>
    tpu.vector_store %arg11[%c0_140, %c256_141], %210 {strides = array<i32>} : memref<64x1152xbf16, #tpu.memory_space<vmem>>, vector<64x128xbf16>,
    %c0_142 = arith.constant 0 : index
    %c1_143 = arith.constant 1 : index
    %c0_144 = arith.constant 0 : index
    %212 = vector.load %arg9[%c0_142, %c1_143, %c0_144] : memref<6x18x128xf32, #tpu.memory_space<vmem>>, vector<6x16x128xf32>
    %213 = arith.truncf %212 : vector<6x16x128xf32> to vector<6x16x128xbf16>
    %214 = vector.extract_strided_slice %213 {offsets = [1, 0, 0], sizes = [4, 16, 128], strides = [1, 1, 1]} : vector<6x16x128xbf16> to vector<4x16x128xbf16>
    %215 = vector.extract_strided_slice %213 {offsets = [0, 0, 96], sizes = [4, 16, 32], strides = [1, 1, 1]} : vector<6x16x128xbf16> to vector<4x16x32xbf16>
    %216 = vector.extract_strided_slice %214 {offsets = [0, 0, 0], sizes = [4, 16, 96], strides = [1, 1, 1]} : vector<4x16x128xbf16> to vector<4x16x96xbf16>
    %217 = tpu.concatenate %215, %216 in 2 : vector<4x16x32xbf16>, vector<4x16x96xbf16> -> vector<4x16x128xbf16>
    %218 = vector.extract_strided_slice %214 {offsets = [0, 0, 32], sizes = [4, 16, 96], strides = [1, 1, 1]} : vector<4x16x128xbf16> to vector<4x16x96xbf16>
    %219 = vector.extract_strided_slice %213 {offsets = [2, 0, 0], sizes = [4, 16, 32], strides = [1, 1, 1]} : vector<6x16x128xbf16> to vector<4x16x32xbf16>
    %220 = tpu.concatenate %218, %219 in 2 : vector<4x16x96xbf16>, vector<4x16x32xbf16> -> vector<4x16x128xbf16>
    %221 = vector.shape_cast %217 : vector<4x16x128xbf16> to vector<64x128xbf16>
    %c0_145 = arith.constant 0 : index
    %c384_146 = arith.constant 384 : index
    %222 = vector.load %arg11[%c0_145, %c384_146] : memref<64x1152xbf16, #tpu.memory_space<vmem>>, vector<64x128xbf16>
    tpu.vector_store %arg11[%c0_145, %c384_146], %221 {strides = array<i32>} : memref<64x1152xbf16, #tpu.memory_space<vmem>>, vector<64x128xbf16>,
    %223 = vector.shape_cast %214 : vector<4x16x128xbf16> to vector<64x128xbf16>
    %c0_147 = arith.constant 0 : index
    %c512_148 = arith.constant 512 : index
    %224 = vector.load %arg11[%c0_147, %c512_148] : memref<64x1152xbf16, #tpu.memory_space<vmem>>, vector<64x128xbf16>
    tpu.vector_store %arg11[%c0_147, %c512_148], %223 {strides = array<i32>} : memref<64x1152xbf16, #tpu.memory_space<vmem>>, vector<64x128xbf16>,
    %225 = vector.shape_cast %220 : vector<4x16x128xbf16> to vector<64x128xbf16>
    %c0_149 = arith.constant 0 : index
    %c640_150 = arith.constant 640 : index
    %226 = vector.load %arg11[%c0_149, %c640_150] : memref<64x1152xbf16, #tpu.memory_space<vmem>>, vector<64x128xbf16>
    tpu.vector_store %arg11[%c0_149, %c640_150], %225 {strides = array<i32>} : memref<64x1152xbf16, #tpu.memory_space<vmem>>, vector<64x128xbf16>,
    %c0_151 = arith.constant 0 : index
    %c2_152 = arith.constant 2 : index
    %c0_153 = arith.constant 0 : index
    %227 = vector.load %arg9[%c0_151, %c2_152, %c0_153] : memref<6x18x128xf32, #tpu.memory_space<vmem>>, vector<6x16x128xf32>
    %228 = arith.truncf %227 : vector<6x16x128xf32> to vector<6x16x128xbf16>
    %229 = vector.extract_strided_slice %228 {offsets = [1, 0, 0], sizes = [4, 16, 128], strides = [1, 1, 1]} : vector<6x16x128xbf16> to vector<4x16x128xbf16>
    %230 = vector.extract_strided_slice %228 {offsets = [0, 0, 96], sizes = [4, 16, 32], strides = [1, 1, 1]} : vector<6x16x128xbf16> to vector<4x16x32xbf16>
    %231 = vector.extract_strided_slice %229 {offsets = [0, 0, 0], sizes = [4, 16, 96], strides = [1, 1, 1]} : vector<4x16x128xbf16> to vector<4x16x96xbf16>
    %232 = tpu.concatenate %230, %231 in 2 : vector<4x16x32xbf16>, vector<4x16x96xbf16> -> vector<4x16x128xbf16>
    %233 = vector.extract_strided_slice %229 {offsets = [0, 0, 32], sizes = [4, 16, 96], strides = [1, 1, 1]} : vector<4x16x128xbf16> to vector<4x16x96xbf16>
    %234 = vector.extract_strided_slice %228 {offsets = [2, 0, 0], sizes = [4, 16, 32], strides = [1, 1, 1]} : vector<6x16x128xbf16> to vector<4x16x32xbf16>
    %235 = tpu.concatenate %233, %234 in 2 : vector<4x16x96xbf16>, vector<4x16x32xbf16> -> vector<4x16x128xbf16>
    %236 = vector.shape_cast %232 : vector<4x16x128xbf16> to vector<64x128xbf16>
    %c0_154 = arith.constant 0 : index
    %c768_155 = arith.constant 768 : index
    %237 = vector.load %arg11[%c0_154, %c768_155] : memref<64x1152xbf16, #tpu.memory_space<vmem>>, vector<64x128xbf16>
    tpu.vector_store %arg11[%c0_154, %c768_155], %236 {strides = array<i32>} : memref<64x1152xbf16, #tpu.memory_space<vmem>>, vector<64x128xbf16>,
    %238 = vector.shape_cast %229 : vector<4x16x128xbf16> to vector<64x128xbf16>
    %c0_156 = arith.constant 0 : index
    %c896_157 = arith.constant 896 : index
    %239 = vector.load %arg11[%c0_156, %c896_157] : memref<64x1152xbf16, #tpu.memory_space<vmem>>, vector<64x128xbf16>
    tpu.vector_store %arg11[%c0_156, %c896_157], %238 {strides = array<i32>} : memref<64x1152xbf16, #tpu.memory_space<vmem>>, vector<64x128xbf16>,
    %240 = vector.shape_cast %235 : vector<4x16x128xbf16> to vector<64x128xbf16>
    %c0_158 = arith.constant 0 : index
    %c1024_159 = arith.constant 1024 : index
    %241 = vector.load %arg11[%c0_158, %c1024_159] : memref<64x1152xbf16, #tpu.memory_space<vmem>>, vector<64x128xbf16>
    tpu.vector_store %arg11[%c0_158, %c1024_159], %240 {strides = array<i32>} : memref<64x1152xbf16, #tpu.memory_space<vmem>>, vector<64x128xbf16>,
    %c0_160 = arith.constant 0 : index
    %c0_161 = arith.constant 0 : index
    %242 = vector.load %arg11[%c0_160, %c0_161] : memref<64x1152xbf16, #tpu.memory_space<vmem>>, vector<64x1152xbf16>
    %c2_162 = arith.constant 2 : index
    %c0_163 = arith.constant 0 : index
    %c0_164 = arith.constant 0 : index
    %243 = vector.load %arg2[%c2_162, %c0_163, %c0_164] : memref<4x1152x128xbf16, #tpu.memory_space<vmem>>, vector<1x1152x128xbf16>
    %244 = vector.shape_cast %243 : vector<1x1152x128xbf16> to vector<1152x128xbf16>
    %cst_165 = arith.constant dense<0.000000e+00> : vector<64x128xf32>
    %245 = tpu.matmul %242, %244, %cst_165 {dimension_numbers = #tpu.dot_dimension_numbers<[1], [0], [0], [1], [0, 0, 1, 1], [], []>} : vector<64x1152xbf16>, vector<1152x128xbf16>, vector<64x128xf32> -> vector<64x128xf32>
    %c2_166 = arith.constant 2 : index
    %c0_167 = arith.constant 0 : index
    %c0_168 = arith.constant 0 : index
    %246 = vector.load %arg3[%c2_166, %c0_167, %c0_168] : memref<4x1x128xf32, #tpu.memory_space<vmem>>, vector<1x1x128xf32>
    %247 = vector.shape_cast %246 : vector<1x1x128xf32> to vector<1x128xf32>
    %248 = vector.broadcast %247 : vector<1x128xf32> to vector<64x128xf32>
    %249 = arith.addf %245, %248 : vector<64x128xf32>
    %cst_169 = arith.constant dense<0.000000e+00> : vector<128xf32>
    %250 = vector.multi_reduction <add>, %249, %cst_169 [0] : vector<64x128xf32> to vector<128xf32>
    %251 = vector.shape_cast %250 : vector<128xf32> to vector<1x128xf32>
    %252 = arith.mulf %249, %249 : vector<64x128xf32>
    %cst_170 = arith.constant dense<0.000000e+00> : vector<128xf32>
    %253 = vector.multi_reduction <add>, %252, %cst_170 [0] : vector<64x128xf32> to vector<128xf32>
    %254 = vector.shape_cast %253 : vector<128xf32> to vector<1x128xf32>
    %255 = vector.shape_cast %251 : vector<1x128xf32> to vector<1x1x128xf32>
    %cst_171 = arith.constant dense<0.000000e+00> : vector<1xf32>
    %256 = vector.multi_reduction <add>, %255, %cst_171 [1, 2] : vector<1x1x128xf32> to vector<1xf32>
    %257 = vector.shape_cast %256 : vector<1xf32> to vector<1x1x1xf32>
    %258 = vector.extract %257[0, 0, 0] : f32 from vector<1x1x1xf32>
    %cst_172 = arith.constant 1.22070313E-4 : f32
    %259 = arith.mulf %258, %cst_172 : f32
    %260 = vector.shape_cast %254 : vector<1x128xf32> to vector<1x1x128xf32>
    %cst_173 = arith.constant dense<0.000000e+00> : vector<1xf32>
    %261 = vector.multi_reduction <add>, %260, %cst_173 [1, 2] : vector<1x1x128xf32> to vector<1xf32>
    %262 = vector.shape_cast %261 : vector<1xf32> to vector<1x1x1xf32>
    %263 = vector.extract %262[0, 0, 0] : f32 from vector<1x1x1xf32>
    %cst_174 = arith.constant 1.22070313E-4 : f32
    %264 = arith.mulf %263, %cst_174 : f32
    %265 = arith.mulf %259, %259 : f32
    %266 = arith.subf %264, %265 : f32
    %cst_175 = arith.constant 0.000000e+00 : f32
    %267 = arith.maximumf %266, %cst_175 : f32
    %268 = vector.broadcast %259 : f32 to vector<64x128xf32>
    %269 = arith.subf %249, %268 : vector<64x128xf32>
    %cst_176 = arith.constant 9.99999974E-6 : f32
    %270 = arith.addf %267, %cst_176 : f32
    %271 = math.rsqrt %270 : f32
    %272 = vector.broadcast %271 : f32 to vector<64x128xf32>
    %273 = arith.mulf %269, %272 : vector<64x128xf32>
    %c2_177 = arith.constant 2 : index
    %c0_178 = arith.constant 0 : index
    %c0_179 = arith.constant 0 : index
    %274 = vector.load %arg4[%c2_177, %c0_178, %c0_179] : memref<4x64x128xbf16, #tpu.memory_space<vmem>>, vector<1x64x128xbf16>
    %275 = vector.shape_cast %274 : vector<1x64x128xbf16> to vector<64x128xbf16>
    %276 = arith.extf %275 : vector<64x128xbf16> to vector<64x128xf32>
    %277 = arith.mulf %273, %276 : vector<64x128xf32>
    %c2_180 = arith.constant 2 : index
    %c0_181 = arith.constant 0 : index
    %c0_182 = arith.constant 0 : index
    %278 = vector.load %arg5[%c2_180, %c0_181, %c0_182] : memref<4x64x128xbf16, #tpu.memory_space<vmem>>, vector<1x64x128xbf16>
    %279 = vector.shape_cast %278 : vector<1x64x128xbf16> to vector<64x128xbf16>
    %280 = arith.extf %279 : vector<64x128xbf16> to vector<64x128xf32>
    %281 = arith.addf %277, %280 : vector<64x128xf32>
    %cst_183 = arith.constant 0.000000e+00 : f32
    %282 = vector.broadcast %cst_183 : f32 to vector<64x128xf32>
    %283 = arith.maximumf %281, %282 : vector<64x128xf32>
    %284 = vector.shape_cast %283 : vector<64x128xf32> to vector<4x16x128xf32>
    %c1_184 = arith.constant 1 : index
    %c1_185 = arith.constant 1 : index
    %c0_186 = arith.constant 0 : index
    %285 = vector.load %arg10[%c1_184, %c1_185, %c0_186] : memref<6x18x128xf32, #tpu.memory_space<vmem>>, vector<4x16x128xf32>
    tpu.vector_store %arg10[%c1_184, %c1_185, %c0_186], %284 {strides = array<i32>} : memref<6x18x128xf32, #tpu.memory_space<vmem>>, vector<4x16x128xf32>,
    %c0_187 = arith.constant 0 : index
    %c0_188 = arith.constant 0 : index
    %c0_189 = arith.constant 0 : index
    %286 = vector.load %arg10[%c0_187, %c0_188, %c0_189] : memref<6x18x128xf32, #tpu.memory_space<vmem>>, vector<6x16x128xf32>
    %287 = arith.truncf %286 : vector<6x16x128xf32> to vector<6x16x128xbf16>
    %288 = vector.extract_strided_slice %287 {offsets = [1, 0, 0], sizes = [4, 16, 128], strides = [1, 1, 1]} : vector<6x16x128xbf16> to vector<4x16x128xbf16>
    %289 = vector.extract_strided_slice %287 {offsets = [0, 0, 96], sizes = [4, 16, 32], strides = [1, 1, 1]} : vector<6x16x128xbf16> to vector<4x16x32xbf16>
    %290 = vector.extract_strided_slice %288 {offsets = [0, 0, 0], sizes = [4, 16, 96], strides = [1, 1, 1]} : vector<4x16x128xbf16> to vector<4x16x96xbf16>
    %291 = tpu.concatenate %289, %290 in 2 : vector<4x16x32xbf16>, vector<4x16x96xbf16> -> vector<4x16x128xbf16>
    %292 = vector.extract_strided_slice %288 {offsets = [0, 0, 32], sizes = [4, 16, 96], strides = [1, 1, 1]} : vector<4x16x128xbf16> to vector<4x16x96xbf16>
    %293 = vector.extract_strided_slice %287 {offsets = [2, 0, 0], sizes = [4, 16, 32], strides = [1, 1, 1]} : vector<6x16x128xbf16> to vector<4x16x32xbf16>
    %294 = tpu.concatenate %292, %293 in 2 : vector<4x16x96xbf16>, vector<4x16x32xbf16> -> vector<4x16x128xbf16>
    %295 = vector.shape_cast %291 : vector<4x16x128xbf16> to vector<64x128xbf16>
    %c0_190 = arith.constant 0 : index
    %c0_191 = arith.constant 0 : index
    %296 = vector.load %arg11[%c0_190, %c0_191] : memref<64x1152xbf16, #tpu.memory_space<vmem>>, vector<64x128xbf16>
    tpu.vector_store %arg11[%c0_190, %c0_191], %295 {strides = array<i32>} : memref<64x1152xbf16, #tpu.memory_space<vmem>>, vector<64x128xbf16>,
    %297 = vector.shape_cast %288 : vector<4x16x128xbf16> to vector<64x128xbf16>
    %c0_192 = arith.constant 0 : index
    %c128_193 = arith.constant 128 : index
    %298 = vector.load %arg11[%c0_192, %c128_193] : memref<64x1152xbf16, #tpu.memory_space<vmem>>, vector<64x128xbf16>
    tpu.vector_store %arg11[%c0_192, %c128_193], %297 {strides = array<i32>} : memref<64x1152xbf16, #tpu.memory_space<vmem>>, vector<64x128xbf16>,
    %299 = vector.shape_cast %294 : vector<4x16x128xbf16> to vector<64x128xbf16>
    %c0_194 = arith.constant 0 : index
    %c256_195 = arith.constant 256 : index
    %300 = vector.load %arg11[%c0_194, %c256_195] : memref<64x1152xbf16, #tpu.memory_space<vmem>>, vector<64x128xbf16>
    tpu.vector_store %arg11[%c0_194, %c256_195], %299 {strides = array<i32>} : memref<64x1152xbf16, #tpu.memory_space<vmem>>, vector<64x128xbf16>,
    %c0_196 = arith.constant 0 : index
    %c1_197 = arith.constant 1 : index
    %c0_198 = arith.constant 0 : index
    %301 = vector.load %arg10[%c0_196, %c1_197, %c0_198] : memref<6x18x128xf32, #tpu.memory_space<vmem>>, vector<6x16x128xf32>
    %302 = arith.truncf %301 : vector<6x16x128xf32> to vector<6x16x128xbf16>
    %303 = vector.extract_strided_slice %302 {offsets = [1, 0, 0], sizes = [4, 16, 128], strides = [1, 1, 1]} : vector<6x16x128xbf16> to vector<4x16x128xbf16>
    %304 = vector.extract_strided_slice %302 {offsets = [0, 0, 96], sizes = [4, 16, 32], strides = [1, 1, 1]} : vector<6x16x128xbf16> to vector<4x16x32xbf16>
    %305 = vector.extract_strided_slice %303 {offsets = [0, 0, 0], sizes = [4, 16, 96], strides = [1, 1, 1]} : vector<4x16x128xbf16> to vector<4x16x96xbf16>
    %306 = tpu.concatenate %304, %305 in 2 : vector<4x16x32xbf16>, vector<4x16x96xbf16> -> vector<4x16x128xbf16>
    %307 = vector.extract_strided_slice %303 {offsets = [0, 0, 32], sizes = [4, 16, 96], strides = [1, 1, 1]} : vector<4x16x128xbf16> to vector<4x16x96xbf16>
    %308 = vector.extract_strided_slice %302 {offsets = [2, 0, 0], sizes = [4, 16, 32], strides = [1, 1, 1]} : vector<6x16x128xbf16> to vector<4x16x32xbf16>
    %309 = tpu.concatenate %307, %308 in 2 : vector<4x16x96xbf16>, vector<4x16x32xbf16> -> vector<4x16x128xbf16>
    %310 = vector.shape_cast %306 : vector<4x16x128xbf16> to vector<64x128xbf16>
    %c0_199 = arith.constant 0 : index
    %c384_200 = arith.constant 384 : index
    %311 = vector.load %arg11[%c0_199, %c384_200] : memref<64x1152xbf16, #tpu.memory_space<vmem>>, vector<64x128xbf16>
    tpu.vector_store %arg11[%c0_199, %c384_200], %310 {strides = array<i32>} : memref<64x1152xbf16, #tpu.memory_space<vmem>>, vector<64x128xbf16>,
    %312 = vector.shape_cast %303 : vector<4x16x128xbf16> to vector<64x128xbf16>
    %c0_201 = arith.constant 0 : index
    %c512_202 = arith.constant 512 : index
    %313 = vector.load %arg11[%c0_201, %c512_202] : memref<64x1152xbf16, #tpu.memory_space<vmem>>, vector<64x128xbf16>
    tpu.vector_store %arg11[%c0_201, %c512_202], %312 {strides = array<i32>} : memref<64x1152xbf16, #tpu.memory_space<vmem>>, vector<64x128xbf16>,
    %314 = vector.shape_cast %309 : vector<4x16x128xbf16> to vector<64x128xbf16>
    %c0_203 = arith.constant 0 : index
    %c640_204 = arith.constant 640 : index
    %315 = vector.load %arg11[%c0_203, %c640_204] : memref<64x1152xbf16, #tpu.memory_space<vmem>>, vector<64x128xbf16>
    tpu.vector_store %arg11[%c0_203, %c640_204], %314 {strides = array<i32>} : memref<64x1152xbf16, #tpu.memory_space<vmem>>, vector<64x128xbf16>,
    %c0_205 = arith.constant 0 : index
    %c2_206 = arith.constant 2 : index
    %c0_207 = arith.constant 0 : index
    %316 = vector.load %arg10[%c0_205, %c2_206, %c0_207] : memref<6x18x128xf32, #tpu.memory_space<vmem>>, vector<6x16x128xf32>
    %317 = arith.truncf %316 : vector<6x16x128xf32> to vector<6x16x128xbf16>
    %318 = vector.extract_strided_slice %317 {offsets = [1, 0, 0], sizes = [4, 16, 128], strides = [1, 1, 1]} : vector<6x16x128xbf16> to vector<4x16x128xbf16>
    %319 = vector.extract_strided_slice %317 {offsets = [0, 0, 96], sizes = [4, 16, 32], strides = [1, 1, 1]} : vector<6x16x128xbf16> to vector<4x16x32xbf16>
    %320 = vector.extract_strided_slice %318 {offsets = [0, 0, 0], sizes = [4, 16, 96], strides = [1, 1, 1]} : vector<4x16x128xbf16> to vector<4x16x96xbf16>
    %321 = tpu.concatenate %319, %320 in 2 : vector<4x16x32xbf16>, vector<4x16x96xbf16> -> vector<4x16x128xbf16>
    %322 = vector.extract_strided_slice %318 {offsets = [0, 0, 32], sizes = [4, 16, 96], strides = [1, 1, 1]} : vector<4x16x128xbf16> to vector<4x16x96xbf16>
    %323 = vector.extract_strided_slice %317 {offsets = [2, 0, 0], sizes = [4, 16, 32], strides = [1, 1, 1]} : vector<6x16x128xbf16> to vector<4x16x32xbf16>
    %324 = tpu.concatenate %322, %323 in 2 : vector<4x16x96xbf16>, vector<4x16x32xbf16> -> vector<4x16x128xbf16>
    %325 = vector.shape_cast %321 : vector<4x16x128xbf16> to vector<64x128xbf16>
    %c0_208 = arith.constant 0 : index
    %c768_209 = arith.constant 768 : index
    %326 = vector.load %arg11[%c0_208, %c768_209] : memref<64x1152xbf16, #tpu.memory_space<vmem>>, vector<64x128xbf16>
    tpu.vector_store %arg11[%c0_208, %c768_209], %325 {strides = array<i32>} : memref<64x1152xbf16, #tpu.memory_space<vmem>>, vector<64x128xbf16>,
    %327 = vector.shape_cast %318 : vector<4x16x128xbf16> to vector<64x128xbf16>
    %c0_210 = arith.constant 0 : index
    %c896_211 = arith.constant 896 : index
    %328 = vector.load %arg11[%c0_210, %c896_211] : memref<64x1152xbf16, #tpu.memory_space<vmem>>, vector<64x128xbf16>
    tpu.vector_store %arg11[%c0_210, %c896_211], %327 {strides = array<i32>} : memref<64x1152xbf16, #tpu.memory_space<vmem>>, vector<64x128xbf16>,
    %329 = vector.shape_cast %324 : vector<4x16x128xbf16> to vector<64x128xbf16>
    %c0_212 = arith.constant 0 : index
    %c1024_213 = arith.constant 1024 : index
    %330 = vector.load %arg11[%c0_212, %c1024_213] : memref<64x1152xbf16, #tpu.memory_space<vmem>>, vector<64x128xbf16>
    tpu.vector_store %arg11[%c0_212, %c1024_213], %329 {strides = array<i32>} : memref<64x1152xbf16, #tpu.memory_space<vmem>>, vector<64x128xbf16>,
    %c0_214 = arith.constant 0 : index
    %c0_215 = arith.constant 0 : index
    %331 = vector.load %arg11[%c0_214, %c0_215] : memref<64x1152xbf16, #tpu.memory_space<vmem>>, vector<64x1152xbf16>
    %c3 = arith.constant 3 : index
    %c0_216 = arith.constant 0 : index
    %c0_217 = arith.constant 0 : index
    %332 = vector.load %arg2[%c3, %c0_216, %c0_217] : memref<4x1152x128xbf16, #tpu.memory_space<vmem>>, vector<1x1152x128xbf16>
    %333 = vector.shape_cast %332 : vector<1x1152x128xbf16> to vector<1152x128xbf16>
    %cst_218 = arith.constant dense<0.000000e+00> : vector<64x128xf32>
    %334 = tpu.matmul %331, %333, %cst_218 {dimension_numbers = #tpu.dot_dimension_numbers<[1], [0], [0], [1], [0, 0, 1, 1], [], []>} : vector<64x1152xbf16>, vector<1152x128xbf16>, vector<64x128xf32> -> vector<64x128xf32>
    %c3_219 = arith.constant 3 : index
    %c0_220 = arith.constant 0 : index
    %c0_221 = arith.constant 0 : index
    %335 = vector.load %arg3[%c3_219, %c0_220, %c0_221] : memref<4x1x128xf32, #tpu.memory_space<vmem>>, vector<1x1x128xf32>
    %336 = vector.shape_cast %335 : vector<1x1x128xf32> to vector<1x128xf32>
    %337 = vector.broadcast %336 : vector<1x128xf32> to vector<64x128xf32>
    %338 = arith.addf %334, %337 : vector<64x128xf32>
    %cst_222 = arith.constant dense<0.000000e+00> : vector<128xf32>
    %339 = vector.multi_reduction <add>, %338, %cst_222 [0] : vector<64x128xf32> to vector<128xf32>
    %340 = vector.shape_cast %339 : vector<128xf32> to vector<1x128xf32>
    %341 = arith.mulf %338, %338 : vector<64x128xf32>
    %cst_223 = arith.constant dense<0.000000e+00> : vector<128xf32>
    %342 = vector.multi_reduction <add>, %341, %cst_223 [0] : vector<64x128xf32> to vector<128xf32>
    %343 = vector.shape_cast %342 : vector<128xf32> to vector<1x128xf32>
    %344 = vector.shape_cast %340 : vector<1x128xf32> to vector<1x1x128xf32>
    %cst_224 = arith.constant dense<0.000000e+00> : vector<1xf32>
    %345 = vector.multi_reduction <add>, %344, %cst_224 [1, 2] : vector<1x1x128xf32> to vector<1xf32>
    %346 = vector.shape_cast %345 : vector<1xf32> to vector<1x1x1xf32>
    %347 = vector.extract %346[0, 0, 0] : f32 from vector<1x1x1xf32>
    %cst_225 = arith.constant 4.8828125E-4 : f32
    %348 = arith.mulf %347, %cst_225 : f32
    %349 = vector.shape_cast %343 : vector<1x128xf32> to vector<1x1x128xf32>
    %cst_226 = arith.constant dense<0.000000e+00> : vector<1xf32>
    %350 = vector.multi_reduction <add>, %349, %cst_226 [1, 2] : vector<1x1x128xf32> to vector<1xf32>
    %351 = vector.shape_cast %350 : vector<1xf32> to vector<1x1x1xf32>
    %352 = vector.extract %351[0, 0, 0] : f32 from vector<1x1x1xf32>
    %cst_227 = arith.constant 4.8828125E-4 : f32
    %353 = arith.mulf %352, %cst_227 : f32
    %354 = arith.mulf %348, %348 : f32
    %355 = arith.subf %353, %354 : f32
    %cst_228 = arith.constant 0.000000e+00 : f32
    %356 = arith.maximumf %355, %cst_228 : f32
    %357 = vector.broadcast %348 : f32 to vector<64x128xf32>
    %358 = arith.subf %338, %357 : vector<64x128xf32>
    %cst_229 = arith.constant 9.99999974E-6 : f32
    %359 = arith.addf %356, %cst_229 : f32
    %360 = math.rsqrt %359 : f32
    %361 = vector.broadcast %360 : f32 to vector<64x128xf32>
    %362 = arith.mulf %358, %361 : vector<64x128xf32>
    %c3_230 = arith.constant 3 : index
    %c0_231 = arith.constant 0 : index
    %c0_232 = arith.constant 0 : index
    %363 = vector.load %arg4[%c3_230, %c0_231, %c0_232] : memref<4x64x128xbf16, #tpu.memory_space<vmem>>, vector<1x64x128xbf16>
    %364 = vector.shape_cast %363 : vector<1x64x128xbf16> to vector<64x128xbf16>
    %365 = arith.extf %364 : vector<64x128xbf16> to vector<64x128xf32>
    %366 = arith.mulf %362, %365 : vector<64x128xf32>
    %c3_233 = arith.constant 3 : index
    %c0_234 = arith.constant 0 : index
    %c0_235 = arith.constant 0 : index
    %367 = vector.load %arg5[%c3_233, %c0_234, %c0_235] : memref<4x64x128xbf16, #tpu.memory_space<vmem>>, vector<1x64x128xbf16>
    %368 = vector.shape_cast %367 : vector<1x64x128xbf16> to vector<64x128xbf16>
    %369 = arith.extf %368 : vector<64x128xbf16> to vector<64x128xf32>
    %370 = arith.addf %366, %369 : vector<64x128xf32>
    %cst_236 = arith.constant 0.000000e+00 : f32
    %371 = vector.broadcast %cst_236 : f32 to vector<64x128xf32>
    %372 = arith.maximumf %370, %371 : vector<64x128xf32>
    %cst_237 = arith.constant dense<0.000000e+00> : vector<128xf32>
    %373 = vector.multi_reduction <add>, %372, %cst_237 [0] : vector<64x128xf32> to vector<128xf32>
    %374 = vector.shape_cast %373 : vector<128xf32> to vector<1x128xf32>
    %375 = vector.extract_strided_slice %374 {offsets = [0, 0], sizes = [1, 32], strides = [1, 1]} : vector<1x128xf32> to vector<1x32xf32>
    %376 = vector.extract_strided_slice %374 {offsets = [0, 32], sizes = [1, 32], strides = [1, 1]} : vector<1x128xf32> to vector<1x32xf32>
    %377 = arith.addf %375, %376 : vector<1x32xf32>
    %378 = vector.extract_strided_slice %374 {offsets = [0, 64], sizes = [1, 32], strides = [1, 1]} : vector<1x128xf32> to vector<1x32xf32>
    %379 = arith.addf %377, %378 : vector<1x32xf32>
    %380 = vector.extract_strided_slice %374 {offsets = [0, 96], sizes = [1, 32], strides = [1, 1]} : vector<1x128xf32> to vector<1x32xf32>
    %381 = arith.addf %379, %380 : vector<1x32xf32>
    %cst_238 = arith.constant 3.906250e-03 : f32
    %382 = vector.broadcast %cst_238 : f32 to vector<1x32xf32>
    %383 = arith.mulf %381, %382 : vector<1x32xf32>
    %384 = arith.truncf %383 : vector<1x32xf32> to vector<1x32xbf16>
    %c0_239 = arith.constant 0 : index
    %c0_240 = arith.constant 0 : index
    %385 = vector.load %arg6[%c0_239, %c0_240] : memref<32x128xbf16, #tpu.memory_space<vmem>>, vector<32x128xbf16>
    %cst_241 = arith.constant dense<0.000000e+00> : vector<1x128xf32>
    %386 = tpu.matmul %384, %385, %cst_241 {dimension_numbers = #tpu.dot_dimension_numbers<[1], [0], [0], [1], [0, 0, 1, 1], [], []>} : vector<1x32xbf16>, vector<32x128xbf16>, vector<1x128xf32> -> vector<1x128xf32>
    %c0_242 = arith.constant 0 : index
    %c0_243 = arith.constant 0 : index
    %387 = vector.load %arg7[%c0_242, %c0_243] : memref<1x128xf32, #tpu.memory_space<vmem>>, vector<1x128xf32>
    %388 = arith.addf %386, %387 : vector<1x128xf32>
    %cst_244 = arith.constant 0.000000e+00 : f32
    %389 = vector.broadcast %cst_244 : f32 to vector<1x128xf32>
    %390 = arith.subf %389, %388 : vector<1x128xf32>
    %391 = math.exp %390 : vector<1x128xf32>
    %cst_245 = arith.constant 1.000000e+00 : f32
    %392 = vector.broadcast %cst_245 : f32 to vector<1x128xf32>
    %393 = arith.addf %392, %391 : vector<1x128xf32>
    %cst_246 = arith.constant 1.000000e+00 : f32
    %394 = vector.broadcast %cst_246 : f32 to vector<1x128xf32>
    %395 = arith.divf %394, %393 : vector<1x128xf32>
    %396 = vector.shape_cast %395 : vector<1x128xf32> to vector<1x1x128xf32>
    %c0_247 = arith.constant 0 : index
    %c0_248 = arith.constant 0 : index
    %c0_249 = arith.constant 0 : index
    %397 = vector.load %arg8[%c0_247, %c0_248, %c0_249] : memref<1x1x128xf32, #tpu.memory_space<vmem>>, vector<1x1x128xf32>
    tpu.vector_store %arg8[%c0_247, %c0_248, %c0_249], %396 {strides = array<i32>} : memref<1x1x128xf32, #tpu.memory_space<vmem>>, vector<1x1x128xf32>,
    return
  }
  func.func @transform_0(%arg0: i32) -> (i32, i32, i32, i32) {
    %c0_i32 = arith.constant 0 : i32
    %c0_i32_0 = arith.constant 0 : i32
    %c0_i32_1 = arith.constant 0 : i32
    %c0_i32_2 = arith.constant 0 : i32
    return %arg0, %c0_i32, %c0_i32_0, %c0_i32_1 : i32, i32, i32, i32
  }
  func.func @transform_1(%arg0: i32) -> (i32, i32, i32) {
    %c0_i32 = arith.constant 0 : i32
    %c0_i32_0 = arith.constant 0 : i32
    %c0_i32_1 = arith.constant 0 : i32
    %c0_i32_2 = arith.constant 0 : i32
    return %c0_i32, %c0_i32_0, %c0_i32_1 : i32, i32, i32
  }
  func.func @transform_2(%arg0: i32) -> (i32, i32, i32) {
    %c0_i32 = arith.constant 0 : i32
    %c0_i32_0 = arith.constant 0 : i32
    %c0_i32_1 = arith.constant 0 : i32
    %c0_i32_2 = arith.constant 0 : i32
    return %c0_i32, %c0_i32_0, %c0_i32_1 : i32, i32, i32
  }
  func.func @transform_3(%arg0: i32) -> (i32, i32, i32) {
    %c0_i32 = arith.constant 0 : i32
    %c0_i32_0 = arith.constant 0 : i32
    %c0_i32_1 = arith.constant 0 : i32
    %c0_i32_2 = arith.constant 0 : i32
    return %c0_i32, %c0_i32_0, %c0_i32_1 : i32, i32, i32
  }
  func.func @transform_4(%arg0: i32) -> (i32, i32, i32) {
    %c0_i32 = arith.constant 0 : i32
    %c0_i32_0 = arith.constant 0 : i32
    %c0_i32_1 = arith.constant 0 : i32
    %c0_i32_2 = arith.constant 0 : i32
    return %c0_i32, %c0_i32_0, %c0_i32_1 : i32, i32, i32
  }
  func.func @transform_5(%arg0: i32) -> (i32, i32) {
    %c0_i32 = arith.constant 0 : i32
    %c0_i32_0 = arith.constant 0 : i32
    %c0_i32_1 = arith.constant 0 : i32
    return %c0_i32, %c0_i32_0 : i32, i32
  }
  func.func @transform_6(%arg0: i32) -> (i32, i32) {
    %c0_i32 = arith.constant 0 : i32
    %c0_i32_0 = arith.constant 0 : i32
    %c0_i32_1 = arith.constant 0 : i32
    return %c0_i32, %c0_i32_0 : i32, i32
  }
  func.func @transform_7(%arg0: i32) -> (i32, i32, i32) {
    %c0_i32 = arith.constant 0 : i32
    %c0_i32_0 = arith.constant 0 : i32
    %c0_i32_1 = arith.constant 0 : i32
    return %arg0, %c0_i32, %c0_i32_0 : i32, i32, i32
  }
}

</mosaic_0001>

<llo_original>
// kernel: tpu_custom_call.1
$region0: #{tpu_custom_call.1}
  #allocation0 [shape = 'u32[]', space=smem, size = 0x4, offset = 0x4, fixed_abs, tag = 'smem constant byte address 0x4 - core index']
  #allocation1 [shape = 'u32[144,128]{1,0:T(1,128)}', space=vmem, size = 0x12000, scoped, tag = 'internal scratch']
  #allocation2 [shape = 'f32[6,18,128]{2,1,0:T(8,128)}', space=vmem, size = 0x12000, scoped, tag = 'scratch operand']
  #allocation3 [shape = 'f32[6,18,128]{2,1,0:T(8,128)}', space=vmem, size = 0x12000, scoped, tag = 'scratch operand']
  #allocation4 [shape = 'bf16[64,1152]{1,0:T(8,128)(2,1)}', space=vmem, size = 0x24000, scoped, tag = 'scratch operand']
  %s0 = inlined_call_operand.hbm [shape: f32[2,4,16,128], index: 0, kind: input, shape index: {}]
  %s1 = inlined_call_operand.hbm [shape: bf16[4,1152,128], index: 1, kind: input, shape index: {}]
  %s2 = inlined_call_operand.hbm [shape: f32[4,1,128], index: 2, kind: input, shape index: {}]
  %s3 = inlined_call_operand.hbm [shape: bf16[4,64,128], index: 3, kind: input, shape index: {}]
  %s4 = inlined_call_operand.hbm [shape: bf16[4,64,128], index: 4, kind: input, shape index: {}]
  %s5 = inlined_call_operand.hbm [shape: bf16[32,128], index: 5, kind: input, shape index: {}]
  %s6 = inlined_call_operand.hbm [shape: f32[1,128], index: 6, kind: input, shape index: {}]
  %s7 = inlined_call_operand.hbm [shape: f32[2,1,128], index: 7, kind: output, shape index: {}]
  %s8 = sld [smem:[#allocation0]]
  $region89: #{tpu_custom_call.1} parent=0
    _
  %s10 = ssub.s32 1, %s8
  %s11 = scalar_select 0, %s10, %s8
  $region1: #{tpu_custom_call.1} parent=0
    #allocation5 [shape = 'u8[65536]{0}', space=vmem, size = 0x10000, scoped, tag = 'input window, operand 0']
    #allocation6 [shape = 's32[2]{0}', space=sflag, size = 0x8, scoped, tag = 'scoped memory for tpu_custom_call.1']
    #allocation7 [shape = 's32[2]{0}', space=sflag, size = 0x8, scoped, tag = 'scoped memory for tpu_custom_call.1']
    #allocation8 [shape = 'u8[1179648]{0}', space=vmem, size = 0x120000, scoped, tag = 'input window, operand 1, single buffered']
    #allocation9 [shape = 's32[1]{0}', space=sflag, size = 0x4, scoped, tag = 'scoped memory for tpu_custom_call.1']
    #allocation10 [shape = 'u8[2048]{0}', space=vmem, size = 0x800, scoped, tag = 'input window, operand 2, single buffered']
    #allocation11 [shape = 'u8[65536]{0}', space=vmem, size = 0x10000, scoped, tag = 'input window, operand 3, single buffered']
    #allocation12 [shape = 's32[1]{0}', space=sflag, size = 0x4, scoped, tag = 'scoped memory for tpu_custom_call.1']
    #allocation13 [shape = 'u8[65536]{0}', space=vmem, size = 0x10000, scoped, tag = 'input window, operand 4, single buffered']
    #allocation14 [shape = 'u8[8192]{0}', space=vmem, size = 0x2000, scoped, tag = 'input window, operand 5, single buffered']
    #allocation15 [shape = 's32[1]{0}', space=sflag, size = 0x4, scoped, tag = 'scoped memory for tpu_custom_call.1']
    #allocation16 [shape = 'u8[512]{0}', space=vmem, size = 0x400, scoped, tag = 'input window, operand 6, single buffered']
    #allocation17 [shape = 'u8[1024]{0}', space=vmem, size = 0x400, scoped, tag = 'output window, operand 0']
    %12 = vsyncpa [#allocation6], 0
    %s13 = scalar_lea.sflag [#allocation6], 1
    %14 = vsyncpa %s13, 0
    %15 = vsyncpa [#allocation9], 0
    %16 = vsyncpa [#allocation12], 0
    %17 = vsyncpa [#allocation15], 0
    %18 = vsyncpa [#allocation7], 0
    %s19 = scalar_lea.sflag [#allocation7], 1
    %20 = vsyncpa %s19, 0
    loop: start=0, step=1, limit=4
    $region2: #{tpu_custom_call.1} parent=1 // loop_pre_header
      _
    $region3: #{tpu_custom_call.1} parent=1 // loop_header
      %s22 = sphi 0, %s26
      %p23 = scmp.ge.s32.totalorder %s22, 4
      %s32 = sphi 0, %s34
      %s35 = sphi 0, %s32
      %s36 = sphi 0, %s35
      %s52 = sphi 0, %s36
      %s56 = sphi 0, %s56
      %s58 = sphi 0, %s56
      %s59 = sphi 0, %s58
      %s73 = sphi 0, %s59
      %s77 = sphi 0, %s77
      %s79 = sphi 0, %s77
      %s80 = sphi 0, %s79
      %s94 = sphi 0, %s80
      %s98 = sphi 0, %s98
      %s100 = sphi 0, %s98
      %s101 = sphi 0, %s100
      %s115 = sphi 0, %s101
      %s119 = sphi 0, %s119
      %s121 = sphi 0, %s119
      %s122 = sphi 0, %s121
      %s136 = sphi 0, %s122
      %s140 = sphi 0, %s140
      %s142 = sphi 0, %s140
      %s143 = sphi 0, %s142
      %s157 = sphi 0, %s143
      %s161 = sphi 0, %s161
      %s163 = sphi 0, %s161
      %s164 = sphi 0, %s163
      %s178 = sphi 0, %s164
      %s184 = sphi 0, %s186
      %s187 = sphi 0, %s184
      %s188 = sphi 0, %s187
      %s204 = sphi 0, %s188
    $region4: #{tpu_custom_call.1} parent=1 // loop_header_branch
      %25 = sbr.rel (%p23) target = $region8
    $region5: #{tpu_custom_call.1} parent=1 // loop_body
      %s27 = ssub.s32 %s22, 1
      %s28 = ssub.s32 %s22, 2
      %s29 = sadd.s32 %s22, 1
      %s30 = ssub.s32 %s22, %s29
      %p31 = scmp.eq.s32.totalorder %s30, 0
      %s33 = sadd.s32 %s32, 1
      %s34 = scalar_select %p31, %s32, %s33
      %p37 = pneg %p31
      %p38 = scmp.eq.s32.totalorder %s22, 1
      %p39 = por %p37, %p38
      %p40 = scmp.ne.s32.totalorder %s32, %s35
      %p41 = scmp.eq.s32.totalorder %s22, 0
      %p42 = por %p40, %p41
      %p43 = scmp.ne.s32.totalorder %s32, %s35
      %p44 = scmp.eq.s32.totalorder %s27, 1
      %p45 = por %p43, %p44
      %p46 = scmp.ne.s32.totalorder %s35, %s36
      %p47 = scmp.eq.s32.totalorder %s27, 0
      %p48 = por %p46, %p47
      %p49 = scmp.ne.s32.totalorder %s35, %s36
      %p50 = scmp.eq.s32.totalorder %s28, 1
      %p51 = por %p49, %p50
      %p53 = scmp.ne.s32.totalorder %s36, %s52
      %p54 = scmp.eq.s32.totalorder %s28, 0
      %p55 = por %p53, %p54
      %s57 = sadd.s32 %s56, 1
      %p60 = scmp.eq.s32.totalorder %s22, 1
      %p61 = scmp.ne.s32.totalorder %s56, %s58
      %p62 = scmp.eq.s32.totalorder %s22, 0
      %p63 = por %p61, %p62
      %p64 = scmp.ne.s32.totalorder %s56, %s58
      %p65 = scmp.eq.s32.totalorder %s27, 1
      %p66 = por %p64, %p65
      %p67 = scmp.ne.s32.totalorder %s58, %s59
      %p68 = scmp.eq.s32.totalorder %s27, 0
      %p69 = por %p67, %p68
      %p70 = scmp.ne.s32.totalorder %s58, %s59
      %p71 = scmp.eq.s32.totalorder %s28, 1
      %p72 = por %p70, %p71
      %p74 = scmp.ne.s32.totalorder %s59, %s73
      %p75 = scmp.eq.s32.totalorder %s28, 0
      %p76 = por %p74, %p75
      %s78 = sadd.s32 %s77, 1
      %p81 = scmp.eq.s32.totalorder %s22, 1
      %p82 = scmp.ne.s32.totalorder %s77, %s79
      %p83 = scmp.eq.s32.totalorder %s22, 0
      %p84 = por %p82, %p83
      %p85 = scmp.ne.s32.totalorder %s77, %s79
      %p86 = scmp.eq.s32.totalorder %s27, 1
      %p87 = por %p85, %p86
      %p88 = scmp.ne.s32.totalorder %s79, %s80
      %p89 = scmp.eq.s32.totalorder %s27, 0
      %p90 = por %p88, %p89
      %p91 = scmp.ne.s32.totalorder %s79, %s80
      %p92 = scmp.eq.s32.totalorder %s28, 1
      %p93 = por %p91, %p92
      %p95 = scmp.ne.s32.totalorder %s80, %s94
      %p96 = scmp.eq.s32.totalorder %s28, 0
      %p97 = por %p95, %p96
      %s99 = sadd.s32 %s98, 1
      %p102 = scmp.eq.s32.totalorder %s22, 1
      %p103 = scmp.ne.s32.totalorder %s98, %s100
      %p104 = scmp.eq.s32.totalorder %s22, 0
      %p105 = por %p103, %p104
      %p106 = scmp.ne.s32.totalorder %s98, %s100
      %p107 = scmp.eq.s32.totalorder %s27, 1
      %p108 = por %p106, %p107
      %p109 = scmp.ne.s32.totalorder %s100, %s101
      %p110 = scmp.eq.s32.totalorder %s27, 0
      %p111 = por %p109, %p110
      %p112 = scmp.ne.s32.totalorder %s100, %s101
      %p113 = scmp.eq.s32.totalorder %s28, 1
      %p114 = por %p112, %p113
      %p116 = scmp.ne.s32.totalorder %s101, %s115
      %p117 = scmp.eq.s32.totalorder %s28, 0
      %p118 = por %p116, %p117
      %s120 = sadd.s32 %s119, 1
      %p123 = scmp.eq.s32.totalorder %s22, 1
      %p124 = scmp.ne.s32.totalorder %s119, %s121
      %p125 = scmp.eq.s32.totalorder %s22, 0
      %p126 = por %p124, %p125
      %p127 = scmp.ne.s32.totalorder %s119, %s121
      %p128 = scmp.eq.s32.totalorder %s27, 1
      %p129 = por %p127, %p128
      %p130 = scmp.ne.s32.totalorder %s121, %s122
      %p131 = scmp.eq.s32.totalorder %s27, 0
      %p132 = por %p130, %p131
      %p133 = scmp.ne.s32.totalorder %s121, %s122
      %p134 = scmp.eq.s32.totalorder %s28, 1
      %p135 = por %p133, %p134
      %p137 = scmp.ne.s32.totalorder %s122, %s136
      %p138 = scmp.eq.s32.totalorder %s28, 0
      %p139 = por %p137, %p138
      %s141 = sadd.s32 %s140, 1
      %p144 = scmp.eq.s32.totalorder %s22, 1
      %p145 = scmp.ne.s32.totalorder %s140, %s142
      %p146 = scmp.eq.s32.totalorder %s22, 0
      %p147 = por %p145, %p146
      %p148 = scmp.ne.s32.totalorder %s140, %s142
      %p149 = scmp.eq.s32.totalorder %s27, 1
      %p150 = por %p148, %p149
      %p151 = scmp.ne.s32.totalorder %s142, %s143
      %p152 = scmp.eq.s32.totalorder %s27, 0
      %p153 = por %p151, %p152
      %p154 = scmp.ne.s32.totalorder %s142, %s143
      %p155 = scmp.eq.s32.totalorder %s28, 1
      %p156 = por %p154, %p155
      %p158 = scmp.ne.s32.totalorder %s143, %s157
      %p159 = scmp.eq.s32.totalorder %s28, 0
      %p160 = por %p158, %p159
      %s162 = sadd.s32 %s161, 1
      %p165 = scmp.eq.s32.totalorder %s22, 1
      %p166 = scmp.ne.s32.totalorder %s161, %s163
      %p167 = scmp.eq.s32.totalorder %s22, 0
      %p168 = por %p166, %p167
      %p169 = scmp.ne.s32.totalorder %s161, %s163
      %p170 = scmp.eq.s32.totalorder %s27, 1
      %p171 = por %p169, %p170
      %p172 = scmp.ne.s32.totalorder %s163, %s164
      %p173 = scmp.eq.s32.totalorder %s27, 0
      %p174 = por %p172, %p173
      %p175 = scmp.ne.s32.totalorder %s163, %s164
      %p176 = scmp.eq.s32.totalorder %s28, 1
      %p177 = por %p175, %p176
      %p179 = scmp.ne.s32.totalorder %s164, %s178
      %p180 = scmp.eq.s32.totalorder %s28, 0
      %p181 = por %p179, %p180
      %s182 = ssub.s32 %s22, %s29
      %p183 = scmp.eq.s32.totalorder %s182, 0
      %s185 = sadd.s32 %s184, 1
      %s186 = scalar_select %p183, %s184, %s185
      %p189 = pneg %p183
      %p190 = scmp.eq.s32.totalorder %s22, 1
      %p191 = por %p189, %p190
      %p192 = scmp.ne.s32.totalorder %s184, %s187
      %p193 = scmp.eq.s32.totalorder %s22, 0
      %p194 = por %p192, %p193
      %p195 = scmp.ne.s32.totalorder %s184, %s187
      %p196 = scmp.eq.s32.totalorder %s27, 1
      %p197 = por %p195, %p196
      %p198 = scmp.ne.s32.totalorder %s187, %s188
      %p199 = scmp.eq.s32.totalorder %s27, 0
      %p200 = por %p198, %p199
      %p201 = scmp.ne.s32.totalorder %s187, %s188
      %p202 = scmp.eq.s32.totalorder %s28, 1
      %p203 = por %p201, %p202
      %p205 = scmp.ne.s32.totalorder %s188, %s204
      %p206 = scmp.eq.s32.totalorder %s28, 0
      %p207 = por %p205, %p206
      %p208 = scmp.le.s32.totalorder 1, %s22
      %p209 = scmp.lt.s32.totalorder %s22, 3
      %p210 = pnand %p208, %p209
      %p211 = pneg %p210
      // Predicated region
      $region9: #{tpu_custom_call.1} parent=5 // pred_check
        _
      $region10: #{tpu_custom_call.1} parent=5 // pred_check_branch
        %213 = sbr.rel (%p210) target = $region12
      $region11: #{tpu_custom_call.1} parent=5 // pred_region
        %s214 = ssub.s32 %s22, 1
        // Predicated region
        $region13: #{tpu_custom_call.1} parent=11 // pred_check
          %p215 = pneg %p69
        $region14: #{tpu_custom_call.1} parent=11 // pred_check_branch
          %217 = sbr.rel (%p215) target = $region16
        $region15: #{tpu_custom_call.1} parent=11 // pred_region
          %s219 = ssub.s32 36864, 36864
          %220 = vsyncadd [#allocation9], %s219
          %s221 = sshll.u32 [#allocation8], 4
          %s222 = int_to_ptr.vmem [resolvable:$true] %s221
          %227 = dma.hbm_to_vmem [thread:$0]  %s1, 36864, %s222, [#allocation9], 64, 64, 4
        $region16: #{tpu_custom_call.1} parent=11 // pred_fallthru
          _
        // Predicated region
        $region17: #{tpu_custom_call.1} parent=11 // pred_check
          %p228 = pneg %p90
        $region18: #{tpu_custom_call.1} parent=11 // pred_check_branch
          %230 = sbr.rel (%p228) target = $region20
        $region19: #{tpu_custom_call.1} parent=11 // pred_region
          %s232 = ssub.s32 64, 64
          %233 = vsyncadd [#allocation9], %s232
          %s234 = sshll.u32 [#allocation10], 4
          %s235 = int_to_ptr.vmem [resolvable:$true] %s234
          %240 = dma.hbm_to_vmem [thread:$0]  %s2, 64, %s235, [#allocation9], 16, 16, 1
        $region20: #{tpu_custom_call.1} parent=11 // pred_fallthru
          _
        // Predicated region
        $region21: #{tpu_custom_call.1} parent=11 // pred_check
          %p241 = pneg %p111
        $region22: #{tpu_custom_call.1} parent=11 // pred_check_branch
          %243 = sbr.rel (%p241) target = $region24
        $region23: #{tpu_custom_call.1} parent=11 // pred_region
          %s245 = ssub.s32 2048, 2048
          %246 = vsyncadd [#allocation12], %s245
          %s247 = sshll.u32 [#allocation11], 4
          %s248 = int_to_ptr.vmem [resolvable:$true] %s247
          %253 = dma.hbm_to_vmem [thread:$0]  %s3, 2048, %s248, [#allocation12], 64, 64, 4
        $region24: #{tpu_custom_call.1} parent=11 // pred_fallthru
          _
        // Predicated region
        $region25: #{tpu_custom_call.1} parent=11 // pred_check
          %p254 = pneg %p132
        $region26: #{tpu_custom_call.1} parent=11 // pred_check_branch
          %256 = sbr.rel (%p254) target = $region28
        $region27: #{tpu_custom_call.1} parent=11 // pred_region
          %s258 = ssub.s32 2048, 2048
          %259 = vsyncadd [#allocation12], %s258
          %s260 = sshll.u32 [#allocation13], 4
          %s261 = int_to_ptr.vmem [resolvable:$true] %s260
          %266 = dma.hbm_to_vmem [thread:$0]  %s4, 2048, %s261, [#allocation12], 64, 64, 4
        $region28: #{tpu_custom_call.1} parent=11 // pred_fallthru
          _
        // Predicated region
        $region29: #{tpu_custom_call.1} parent=11 // pred_check
          %p267 = pneg %p153
        $region30: #{tpu_custom_call.1} parent=11 // pred_check_branch
          %269 = sbr.rel (%p267) target = $region32
        $region31: #{tpu_custom_call.1} parent=11 // pred_region
          %s271 = ssub.s32 256, 256
          %272 = vsyncadd [#allocation15], %s271
          %s273 = sshll.u32 [#allocation14], 4
          %s274 = int_to_ptr.vmem [resolvable:$true] %s273
          %279 = dma.hbm_to_vmem [thread:$0]  %s5, 256, %s274, [#allocation15], 64, 64, 4
        $region32: #{tpu_custom_call.1} parent=11 // pred_fallthru
          _
        // Predicated region
        $region33: #{tpu_custom_call.1} parent=11 // pred_check
          %p280 = pneg %p174
        $region34: #{tpu_custom_call.1} parent=11 // pred_check_branch
          %282 = sbr.rel (%p280) target = $region36
        $region35: #{tpu_custom_call.1} parent=11 // pred_region
          %s284 = ssub.s32 16, 16
          %285 = vsyncadd [#allocation15], %s284
          %s287 = sshll.u32 [#allocation16], 4
          %s288 = int_to_ptr.vmem [resolvable:$true] %s287
          %290 = dma.hbm_to_vmem [thread:$0]  %s6, 16, %s288, [#allocation15]
        $region36: #{tpu_custom_call.1} parent=11 // pred_fallthru
          _
      $region12: #{tpu_custom_call.1} parent=5 // pred_fallthru
        _
      %p291 = scmp.lt.s32.totalorder %s22, 2
      // Predicated region
      $region37: #{tpu_custom_call.1} parent=5 // pred_check
        %p292 = pneg %p291
      $region38: #{tpu_custom_call.1} parent=5 // pred_check_branch
        %294 = sbr.rel (%p292) target = $region40
      $region39: #{tpu_custom_call.1} parent=5 // pred_region
        // Predicated region
        $region41: #{tpu_custom_call.1} parent=39 // pred_check
          %p295 = pneg %p42
        $region42: #{tpu_custom_call.1} parent=39 // pred_check_branch
          %297 = sbr.rel (%p295) target = $region44
        $region43: #{tpu_custom_call.1} parent=39 // pred_region
          %s298 = sand.u32 %s32, 1
          %s299 = scalar_lea.sflag [#allocation6], %s298
          %s300 = sand.u32 %s32, 1
          %s301 = smul.addr %s300, 64
          %s302 = scalar_lea.vmem [#allocation5], %s301
          %s304 = ssub.s32 1024, 1024
          %305 = vsyncadd %s299, %s304
          %s306 = smul.addr %s22, 8
          %s307 = smul.addr %s306, 128
          %s308 = scalar_lea.hbm %s0, %s307
          %s309 = sshll.u32 %s302, 4
          %s310 = int_to_ptr.vmem [resolvable:$true] %s309
          %315 = dma.hbm_to_vmem [thread:$0]  %s308, 1024, %s310, %s299, 128, 128, 8
        $region44: #{tpu_custom_call.1} parent=39 // pred_fallthru
          _
      $region40: #{tpu_custom_call.1} parent=5 // pred_fallthru
        _
      %p316 = scmp.le.s32.totalorder 1, %s22
      %p317 = scmp.lt.s32.totalorder %s22, 3
      %p318 = pnand %p316, %p317
      %p319 = pneg %p318
      // Predicated region
      $region45: #{tpu_custom_call.1} parent=5 // pred_check
        _
      $region46: #{tpu_custom_call.1} parent=5 // pred_check_branch
        %321 = sbr.rel (%p318) target = $region48
      $region47: #{tpu_custom_call.1} parent=5 // pred_region
        %s322 = ssub.s32 %s22, 1
        %s323 = sand.u32 %s35, 1
        %s324 = scalar_lea.sflag [#allocation6], %s323
        %s325 = sand.u32 %s35, 1
        %s326 = smul.addr %s325, 64
        %s327 = scalar_lea.vmem [#allocation5], %s326
        // Predicated region
        $region49: #{tpu_custom_call.1} parent=47 // pred_check
          %p328 = pneg %p48
        $region50: #{tpu_custom_call.1} parent=47 // pred_check_branch
          %330 = sbr.rel (%p328) target = $region52
        $region51: #{tpu_custom_call.1} parent=47 // pred_region
          %331 = dma.done %s324, 1024
        $region52: #{tpu_custom_call.1} parent=47 // pred_fallthru
          _
        // Predicated region
        $region53: #{tpu_custom_call.1} parent=47 // pred_check
          %p332 = pneg %p69
        $region54: #{tpu_custom_call.1} parent=47 // pred_check_branch
          %334 = sbr.rel (%p332) target = $region56
        $region55: #{tpu_custom_call.1} parent=47 // pred_region
          %335 = dma.done [#allocation9], 36864
        $region56: #{tpu_custom_call.1} parent=47 // pred_fallthru
          _
        // Predicated region
        $region57: #{tpu_custom_call.1} parent=47 // pred_check
          %p336 = pneg %p90
        $region58: #{tpu_custom_call.1} parent=47 // pred_check_branch
          %338 = sbr.rel (%p336) target = $region60
        $region59: #{tpu_custom_call.1} parent=47 // pred_region
          %339 = dma.done [#allocation9], 64
        $region60: #{tpu_custom_call.1} parent=47 // pred_fallthru
          _
        // Predicated region
        $region61: #{tpu_custom_call.1} parent=47 // pred_check
          %p340 = pneg %p111
        $region62: #{tpu_custom_call.1} parent=47 // pred_check_branch
          %342 = sbr.rel (%p340) target = $region64
        $region63: #{tpu_custom_call.1} parent=47 // pred_region
          %343 = dma.done [#allocation12], 2048
        $region64: #{tpu_custom_call.1} parent=47 // pred_fallthru
          _
        // Predicated region
        $region65: #{tpu_custom_call.1} parent=47 // pred_check
          %p344 = pneg %p132
        $region66: #{tpu_custom_call.1} parent=47 // pred_check_branch
          %346 = sbr.rel (%p344) target = $region68
        $region67: #{tpu_custom_call.1} parent=47 // pred_region
          %347 = dma.done [#allocation12], 2048
        $region68: #{tpu_custom_call.1} parent=47 // pred_fallthru
          _
        // Predicated region
        $region69: #{tpu_custom_call.1} parent=47 // pred_check
          %p348 = pneg %p153
        $region70: #{tpu_custom_call.1} parent=47 // pred_check_branch
          %350 = sbr.rel (%p348) target = $region72
        $region71: #{tpu_custom_call.1} parent=47 // pred_region
          %351 = dma.done [#allocation15], 256
        $region72: #{tpu_custom_call.1} parent=47 // pred_fallthru
          _
        // Predicated region
        $region73: #{tpu_custom_call.1} parent=47 // pred_check
          %p352 = pneg %p174
        $region74: #{tpu_custom_call.1} parent=47 // pred_check_branch
          %354 = sbr.rel (%p352) target = $region76
        $region75: #{tpu_custom_call.1} parent=47 // pred_region
          %355 = dma.done [#allocation15], 16
        $region76: #{tpu_custom_call.1} parent=47 // pred_fallthru
          _
        %s356 = sand.u32 %s35, 1
        %s357 = scalar_lea.sflag [#allocation6], %s356
        %s358 = sand.u32 %s35, 1
        %s359 = smul.addr %s358, 64
        %s360 = scalar_lea.vmem [#allocation5], %s359
        %p361 = pneg %p48
        %p362 = pneg %p45
        %p363 = pneg %p69
        %p364 = pneg %p66
        %p365 = pneg %p90
        %p366 = pneg %p87
        %p367 = pneg %p111
        %p368 = pneg %p108
        %p369 = pneg %p132
        %p370 = pneg %p129
        %p371 = pneg %p153
        %p372 = pneg %p150
        %p373 = pneg %p174
        %p374 = pneg %p171
        %p375 = pneg %p200
        %p376 = pneg %p197
        %s377 = sand.u32 %s187, 1
        %s378 = scalar_lea.sflag [#allocation7], %s377
        %s379 = sand.u32 %s187, 1
        %s380 = scalar_lea.vmem [#allocation17], %s379
        %382 = vst [vmem:[#allocation2] sm:$0xff] 0.0
        %383 = vst [vmem:[#allocation2 + $0x8] sm:$0xff] 0.0
        %384 = vst [vmem:[#allocation2 + $0x10] sm:$0x3] 0.0
        %s385 = scalar_lea.vmem [#allocation2], 120
        %386 = vst [vmem:[%s385] sm:$0xff] 0.0
        %387 = vst [vmem:[%s385 + $0x8] sm:$0xff] 0.0
        %388 = vst [vmem:[%s385 + $0x10] sm:$0x3] 0.0
        %389 = vst [vmem:[#allocation2] sm:$0x1] 0.0
        %390 = vst [vmem:[#allocation2 + $0x18] sm:$0x1] 0.0
        %391 = vst [vmem:[#allocation2 + $0x30] sm:$0x1] 0.0
        %392 = vst [vmem:[#allocation2 + $0x48] sm:$0x1] 0.0
        %393 = vst [vmem:[#allocation2 + $0x60] sm:$0x1] 0.0
        %394 = vst [vmem:[#allocation2 + $0x78] sm:$0x1] 0.0
        %395 = vst [vmem:[#allocation2 + $0x11] sm:$0x1] 0.0
        %396 = vst [vmem:[#allocation2 + $0x29] sm:$0x1] 0.0
        %397 = vst [vmem:[#allocation2 + $0x41] sm:$0x1] 0.0
        %398 = vst [vmem:[#allocation2 + $0x59] sm:$0x1] 0.0
        %399 = vst [vmem:[#allocation2 + $0x71] sm:$0x1] 0.0
        %400 = vst [vmem:[#allocation2 + $0x89] sm:$0x1] 0.0
        %401 = vst [vmem:[#allocation3] sm:$0xff] 0.0
        %402 = vst [vmem:[#allocation3 + $0x8] sm:$0xff] 0.0
        %403 = vst [vmem:[#allocation3 + $0x10] sm:$0x3] 0.0
        %s404 = scalar_lea.vmem [#allocation3], 120
        %405 = vst [vmem:[%s404] sm:$0xff] 0.0
        %406 = vst [vmem:[%s404 + $0x8] sm:$0xff] 0.0
        %407 = vst [vmem:[%s404 + $0x10] sm:$0x3] 0.0
        %408 = vst [vmem:[#allocation3] sm:$0x1] 0.0
        %409 = vst [vmem:[#allocation3 + $0x18] sm:$0x1] 0.0
        %410 = vst [vmem:[#allocation3 + $0x30] sm:$0x1] 0.0
        %411 = vst [vmem:[#allocation3 + $0x48] sm:$0x1] 0.0
        %412 = vst [vmem:[#allocation3 + $0x60] sm:$0x1] 0.0
        %413 = vst [vmem:[#allocation3 + $0x78] sm:$0x1] 0.0
        %414 = vst [vmem:[#allocation3 + $0x11] sm:$0x1] 0.0
        %415 = vst [vmem:[#allocation3 + $0x29] sm:$0x1] 0.0
        %416 = vst [vmem:[#allocation3 + $0x41] sm:$0x1] 0.0
        %417 = vst [vmem:[#allocation3 + $0x59] sm:$0x1] 0.0
        %418 = vst [vmem:[#allocation3 + $0x71] sm:$0x1] 0.0
        %419 = vst [vmem:[#allocation3 + $0x89] sm:$0x1] 0.0
        %v420 = vld [vmem:[%s327] sm:$0xff]
        %v421 = vld [vmem:[%s327 + $0x8] sm:$0xff]
        %v422 = vld [vmem:[%s327 + $0x10] sm:$0xff]
        %v423 = vld [vmem:[%s327 + $0x18] sm:$0xff]
        %v424 = vld [vmem:[%s327 + $0x20] sm:$0xff]
        %v425 = vld [vmem:[%s327 + $0x28] sm:$0xff]
        %v426 = vld [vmem:[%s327 + $0x30] sm:$0xff]
        %v427 = vld [vmem:[%s327 + $0x38] sm:$0xff]
        %s428 = scalar_lea.vmem [#allocation2], 24
        %429 = vst [vmem:[%s428 + $0x1] sm:$0xff] %v420
        %430 = vst [vmem:[%s428 + $0x9] sm:$0xff] %v421
        %431 = vst [vmem:[%s428 + $0x19] sm:$0xff] %v422
        %432 = vst [vmem:[%s428 + $0x21] sm:$0xff] %v423
        %433 = vst [vmem:[%s428 + $0x31] sm:$0xff] %v424
        %434 = vst [vmem:[%s428 + $0x39] sm:$0xff] %v425
        %435 = vst [vmem:[%s428 + $0x49] sm:$0xff] %v426
        %436 = vst [vmem:[%s428 + $0x51] sm:$0xff] %v427
        %v437 = vld [vmem:[#allocation2] sm:$0xff]
        %v438 = vld [vmem:[#allocation2 + $0x8] sm:$0xff]
        %v439 = vld [vmem:[#allocation2 + $0x18] sm:$0xff]
        %v440 = vld [vmem:[#allocation2 + $0x20] sm:$0xff]
        %v441 = vld [vmem:[#allocation2 + $0x30] sm:$0xff]
        %v442 = vld [vmem:[#allocation2 + $0x38] sm:$0xff]
        %v443 = vld [vmem:[#allocation2 + $0x48] sm:$0xff]
        %v444 = vld [vmem:[#allocation2 + $0x50] sm:$0xff]
        %v445 = vld [vmem:[#allocation2 + $0x60] sm:$0xff]
        %v446 = vld [vmem:[#allocation2 + $0x68] sm:$0xff]
        %v447 = vld [vmem:[#allocation2 + $0x78] sm:$0xff]
        %v448 = vld [vmem:[#allocation2 + $0x80] sm:$0xff]
        %v449 = vpack.c.bf16 %v438, %v437
        %v450 = vpack.c.bf16 %v440, %v439
        %v451 = vpack.c.bf16 %v442, %v441
        %v452 = vpack.c.bf16 %v444, %v443
        %v453 = vpack.c.bf16 %v446, %v445
        %v454 = vpack.c.bf16 %v448, %v447
        %459 = vrot.lane.b32.xlu0 %v449, 32
        %v460 = vpop.permute.xlu0 %459
        %461 = vrot.lane.b32.xlu0 %v450, 32
        %v462 = vpop.permute.xlu0 %461
        %463 = vrot.lane.b32.xlu0 %v451, 32
        %v464 = vpop.permute.xlu0 %463
        %465 = vrot.lane.b32.xlu0 %v452, 32
        %v466 = vpop.permute.xlu0 %465
        %468 = vrot.lane.b32.xlu0 %v453, 32
        %v469 = vpop.permute.xlu0 %468
        %vm470 = vcmask 261120
        %v473 = vsel %vm470, %v460, %v462
        %v475 = vsel %vm470, %v462, %v464
        %v477 = vsel %vm470, %v464, %v466
        %v479 = vsel %vm470, %v466, %v469
        %480 = vrot.lane.b32.xlu0 %v450, 96
        %v481 = vpop.permute.xlu0 %480
        %482 = vrot.lane.b32.xlu0 %v451, 96
        %v483 = vpop.permute.xlu0 %482
        %484 = vrot.lane.b32.xlu0 %v452, 96
        %v485 = vpop.permute.xlu0 %484
        %486 = vrot.lane.b32.xlu0 %v453, 96
        %v487 = vpop.permute.xlu0 %486
        %489 = vrot.lane.b32.xlu0 %v454, 96
        %v490 = vpop.permute.xlu0 %489
        %vm491 = vcmask 785408
        %v494 = vsel %vm491, %v481, %v483
        %v496 = vsel %vm491, %v483, %v485
        %v498 = vsel %vm491, %v485, %v487
        %v500 = vsel %vm491, %v487, %v490
        %v505 = vunpack.c.l.b16 %v473
        %v506 = vunpack.c.h.b16 %v473
        %v507 = vunpack.c.l.b16 %v475
        %v508 = vunpack.c.h.b16 %v475
        %v509 = vunpack.c.l.b16 %v477
        %v510 = vunpack.c.h.b16 %v477
        %v511 = vunpack.c.l.b16 %v479
        %v512 = vunpack.c.h.b16 %v479
        %v513 = vpack.c.b16 %v505, %v505
        %v514 = vpack.c.b16 %v506, %v506
        %v515 = vpack.c.b16 %v507, %v507
        %v516 = vpack.c.b16 %v508, %v508
        %v517 = vpack.c.b16 %v509, %v509
        %v518 = vpack.c.b16 %v510, %v510
        %v519 = vpack.c.b16 %v511, %v511
        %v520 = vpack.c.b16 %v512, %v512
        %529 = vst [vmem:[#allocation4] sm:$0xf] %v513
        %530 = vst [vmem:[#allocation4 + $0x24] sm:$0xf] %v514
        %531 = vst [vmem:[#allocation4 + $0x48] sm:$0xf] %v515
        %532 = vst [vmem:[#allocation4 + $0x6c] sm:$0xf] %v516
        %533 = vst [vmem:[#allocation4 + $0x90] sm:$0xf] %v517
        %534 = vst [vmem:[#allocation4 + $0xb4] sm:$0xf] %v518
        %535 = vst [vmem:[#allocation4 + $0xd8] sm:$0xf] %v519
        %536 = vst [vmem:[#allocation4 + $0xfc] sm:$0xf] %v520
        %v537 = vunpack.c.l.b16 %v450
        %v538 = vunpack.c.h.b16 %v450
        %v539 = vunpack.c.l.b16 %v451
        %v540 = vunpack.c.h.b16 %v451
        %v541 = vunpack.c.l.b16 %v452
        %v542 = vunpack.c.h.b16 %v452
        %v543 = vunpack.c.l.b16 %v453
        %v544 = vunpack.c.h.b16 %v453
        %v545 = vpack.c.b16 %v537, %v537
        %v546 = vpack.c.b16 %v538, %v538
        %v547 = vpack.c.b16 %v539, %v539
        %v548 = vpack.c.b16 %v540, %v540
        %v549 = vpack.c.b16 %v541, %v541
        %v550 = vpack.c.b16 %v542, %v542
        %v551 = vpack.c.b16 %v543, %v543
        %v552 = vpack.c.b16 %v544, %v544
        %561 = vst [vmem:[#allocation4 + $0x4] sm:$0xf] %v545
        %562 = vst [vmem:[#allocation4 + $0x28] sm:$0xf] %v546
        %563 = vst [vmem:[#allocation4 + $0x4c] sm:$0xf] %v547
        %564 = vst [vmem:[#allocation4 + $0x70] sm:$0xf] %v548
        %565 = vst [vmem:[#allocation4 + $0x94] sm:$0xf] %v549
        %566 = vst [vmem:[#allocation4 + $0xb8] sm:$0xf] %v550
        %567 = vst [vmem:[#allocation4 + $0xdc] sm:$0xf] %v551
        %568 = vst [vmem:[#allocation4 + $0x100] sm:$0xf] %v552
        %v573 = vunpack.c.l.b16 %v494
        %v574 = vunpack.c.h.b16 %v494
        %v575 = vunpack.c.l.b16 %v496
        %v576 = vunpack.c.h.b16 %v496
        %v577 = vunpack.c.l.b16 %v498
        %v578 = vunpack.c.h.b16 %v498
        %v579 = vunpack.c.l.b16 %v500
        %v580 = vunpack.c.h.b16 %v500
        %v581 = vpack.c.b16 %v573, %v573
        %v582 = vpack.c.b16 %v574, %v574
        %v583 = vpack.c.b16 %v575, %v575
        %v584 = vpack.c.b16 %v576, %v576
        %v585 = vpack.c.b16 %v577, %v577
        %v586 = vpack.c.b16 %v578, %v578
        %v587 = vpack.c.b16 %v579, %v579
        %v588 = vpack.c.b16 %v580, %v580
        %597 = vst [vmem:[#allocation4 + $0x8] sm:$0xf] %v581
        %598 = vst [vmem:[#allocation4 + $0x2c] sm:$0xf] %v582
        %599 = vst [vmem:[#allocation4 + $0x50] sm:$0xf] %v583
        %600 = vst [vmem:[#allocation4 + $0x74] sm:$0xf] %v584
        %601 = vst [vmem:[#allocation4 + $0x98] sm:$0xf] %v585
        %602 = vst [vmem:[#allocation4 + $0xbc] sm:$0xf] %v586
        %603 = vst [vmem:[#allocation4 + $0xe0] sm:$0xf] %v587
        %604 = vst [vmem:[#allocation4 + $0x104] sm:$0xf] %v588
        %v605 = vld [vmem:[#allocation2 + $0x1] sm:$0xff]
        %v606 = vld [vmem:[#allocation2 + $0x9] sm:$0xff]
        %v607 = vld [vmem:[#allocation2 + $0x19] sm:$0xff]
        %v608 = vld [vmem:[#allocation2 + $0x21] sm:$0xff]
        %v609 = vld [vmem:[#allocation2 + $0x31] sm:$0xff]
        %v610 = vld [vmem:[#allocation2 + $0x39] sm:$0xff]
        %v611 = vld [vmem:[#allocation2 + $0x49] sm:$0xff]
        %v612 = vld [vmem:[#allocation2 + $0x51] sm:$0xff]
        %v613 = vld [vmem:[#allocation2 + $0x61] sm:$0xff]
        %v614 = vld [vmem:[#allocation2 + $0x69] sm:$0xff]
        %v615 = vld [vmem:[#allocation2 + $0x79] sm:$0xff]
        %v616 = vld [vmem:[#allocation2 + $0x81] sm:$0xff]
        %v617 = vpack.c.bf16 %v606, %v605
        %v618 = vpack.c.bf16 %v608, %v607
        %v619 = vpack.c.bf16 %v610, %v609
        %v620 = vpack.c.bf16 %v612, %v611
        %v621 = vpack.c.bf16 %v614, %v613
        %v622 = vpack.c.bf16 %v616, %v615
        %627 = vrot.lane.b32.xlu0 %v617, 32
        %v628 = vpop.permute.xlu0 %627
        %629 = vrot.lane.b32.xlu0 %v618, 32
        %v630 = vpop.permute.xlu0 %629
        %631 = vrot.lane.b32.xlu0 %v619, 32
        %v632 = vpop.permute.xlu0 %631
        %633 = vrot.lane.b32.xlu0 %v620, 32
        %v634 = vpop.permute.xlu0 %633
        %636 = vrot.lane.b32.xlu0 %v621, 32
        %v637 = vpop.permute.xlu0 %636
        %v640 = vsel %vm470, %v628, %v630
        %v642 = vsel %vm470, %v630, %v632
        %v644 = vsel %vm470, %v632, %v634
        %v646 = vsel %vm470, %v634, %v637
        %647 = vrot.lane.b32.xlu0 %v618, 96
        %v648 = vpop.permute.xlu0 %647
        %649 = vrot.lane.b32.xlu0 %v619, 96
        %v650 = vpop.permute.xlu0 %649
        %651 = vrot.lane.b32.xlu0 %v620, 96
        %v652 = vpop.permute.xlu0 %651
        %653 = vrot.lane.b32.xlu0 %v621, 96
        %v654 = vpop.permute.xlu0 %653
        %656 = vrot.lane.b32.xlu0 %v622, 96
        %v657 = vpop.permute.xlu0 %656
        %v660 = vsel %vm491, %v648, %v650
        %v662 = vsel %vm491, %v650, %v652
        %v664 = vsel %vm491, %v652, %v654
        %v666 = vsel %vm491, %v654, %v657
        %v671 = vunpack.c.l.b16 %v640
        %v672 = vunpack.c.h.b16 %v640
        %v673 = vunpack.c.l.b16 %v642
        %v674 = vunpack.c.h.b16 %v642
        %v675 = vunpack.c.l.b16 %v644
        %v676 = vunpack.c.h.b16 %v644
        %v677 = vunpack.c.l.b16 %v646
        %v678 = vunpack.c.h.b16 %v646
        %v679 = vpack.c.b16 %v671, %v671
        %v680 = vpack.c.b16 %v672, %v672
        %v681 = vpack.c.b16 %v673, %v673
        %v682 = vpack.c.b16 %v674, %v674
        %v683 = vpack.c.b16 %v675, %v675
        %v684 = vpack.c.b16 %v676, %v676
        %v685 = vpack.c.b16 %v677, %v677
        %v686 = vpack.c.b16 %v678, %v678
        %695 = vst [vmem:[#allocation4 + $0xc] sm:$0xf] %v679
        %696 = vst [vmem:[#allocation4 + $0x30] sm:$0xf] %v680
        %697 = vst [vmem:[#allocation4 + $0x54] sm:$0xf] %v681
        %698 = vst [vmem:[#allocation4 + $0x78] sm:$0xf] %v682
        %699 = vst [vmem:[#allocation4 + $0x9c] sm:$0xf] %v683
        %700 = vst [vmem:[#allocation4 + $0xc0] sm:$0xf] %v684
        %701 = vst [vmem:[#allocation4 + $0xe4] sm:$0xf] %v685
        %702 = vst [vmem:[#allocation4 + $0x108] sm:$0xf] %v686
        %v703 = vunpack.c.l.b16 %v618
        %v704 = vunpack.c.h.b16 %v618
        %v705 = vunpack.c.l.b16 %v619
        %v706 = vunpack.c.h.b16 %v619
        %v707 = vunpack.c.l.b16 %v620
        %v708 = vunpack.c.h.b16 %v620
        %v709 = vunpack.c.l.b16 %v621
        %v710 = vunpack.c.h.b16 %v621
        %v711 = vpack.c.b16 %v703, %v703
        %v712 = vpack.c.b16 %v704, %v704
        %v713 = vpack.c.b16 %v705, %v705
        %v714 = vpack.c.b16 %v706, %v706
        %v715 = vpack.c.b16 %v707, %v707
        %v716 = vpack.c.b16 %v708, %v708
        %v717 = vpack.c.b16 %v709, %v709
        %v718 = vpack.c.b16 %v710, %v710
        %727 = vst [vmem:[#allocation4 + $0x10] sm:$0xf] %v711
        %728 = vst [vmem:[#allocation4 + $0x34] sm:$0xf] %v712
        %729 = vst [vmem:[#allocation4 + $0x58] sm:$0xf] %v713
        %730 = vst [vmem:[#allocation4 + $0x7c] sm:$0xf] %v714
        %731 = vst [vmem:[#allocation4 + $0xa0] sm:$0xf] %v715
        %732 = vst [vmem:[#allocation4 + $0xc4] sm:$0xf] %v716
        %733 = vst [vmem:[#allocation4 + $0xe8] sm:$0xf] %v717
        %734 = vst [vmem:[#allocation4 + $0x10c] sm:$0xf] %v718
        %v739 = vunpack.c.l.b16 %v660
        %v740 = vunpack.c.h.b16 %v660
        %v741 = vunpack.c.l.b16 %v662
        %v742 = vunpack.c.h.b16 %v662
        %v743 = vunpack.c.l.b16 %v664
        %v744 = vunpack.c.h.b16 %v664
        %v745 = vunpack.c.l.b16 %v666
        %v746 = vunpack.c.h.b16 %v666
        %v747 = vpack.c.b16 %v739, %v739
        %v748 = vpack.c.b16 %v740, %v740
        %v749 = vpack.c.b16 %v741, %v741
        %v750 = vpack.c.b16 %v742, %v742
        %v751 = vpack.c.b16 %v743, %v743
        %v752 = vpack.c.b16 %v744, %v744
        %v753 = vpack.c.b16 %v745, %v745
        %v754 = vpack.c.b16 %v746, %v746
        %763 = vst [vmem:[#allocation4 + $0x14] sm:$0xf] %v747
        %764 = vst [vmem:[#allocation4 + $0x38] sm:$0xf] %v748
        %765 = vst [vmem:[#allocation4 + $0x5c] sm:$0xf] %v749
        %766 = vst [vmem:[#allocation4 + $0x80] sm:$0xf] %v750
        %767 = vst [vmem:[#allocation4 + $0xa4] sm:$0xf] %v751
        %768 = vst [vmem:[#allocation4 + $0xc8] sm:$0xf] %v752
        %769 = vst [vmem:[#allocation4 + $0xec] sm:$0xf] %v753
        %770 = vst [vmem:[#allocation4 + $0x110] sm:$0xf] %v754
        %v771 = vld [vmem:[#allocation2 + $0x2] sm:$0xff]
        %v772 = vld [vmem:[#allocation2 + $0xa] sm:$0xff]
        %v773 = vld [vmem:[#allocation2 + $0x1a] sm:$0xff]
        %v774 = vld [vmem:[#allocation2 + $0x22] sm:$0xff]
        %v775 = vld [vmem:[#allocation2 + $0x32] sm:$0xff]
        %v776 = vld [vmem:[#allocation2 + $0x3a] sm:$0xff]
        %v777 = vld [vmem:[#allocation2 + $0x4a] sm:$0xff]
        %v778 = vld [vmem:[#allocation2 + $0x52] sm:$0xff]
        %v779 = vld [vmem:[#allocation2 + $0x62] sm:$0xff]
        %v780 = vld [vmem:[#allocation2 + $0x6a] sm:$0xff]
        %v781 = vld [vmem:[#allocation2 + $0x7a] sm:$0xff]
        %v782 = vld [vmem:[#allocation2 + $0x82] sm:$0xff]
        %v783 = vpack.c.bf16 %v772, %v771
        %v784 = vpack.c.bf16 %v774, %v773
        %v785 = vpack.c.bf16 %v776, %v775
        %v786 = vpack.c.bf16 %v778, %v777
        %v787 = vpack.c.bf16 %v780, %v779
        %v788 = vpack.c.bf16 %v782, %v781
        %793 = vrot.lane.b32.xlu0 %v783, 32
        %v794 = vpop.permute.xlu0 %793
        %795 = vrot.lane.b32.xlu0 %v784, 32
        %v796 = vpop.permute.xlu0 %795
        %797 = vrot.lane.b32.xlu0 %v785, 32
        %v798 = vpop.permute.xlu0 %797
        %799 = vrot.lane.b32.xlu0 %v786, 32
        %v800 = vpop.permute.xlu0 %799
        %802 = vrot.lane.b32.xlu0 %v787, 32
        %v803 = vpop.permute.xlu0 %802
        %v806 = vsel %vm470, %v794, %v796
        %v808 = vsel %vm470, %v796, %v798
        %v810 = vsel %vm470, %v798, %v800
        %v812 = vsel %vm470, %v800, %v803
        %813 = vrot.lane.b32.xlu0 %v784, 96
        %v814 = vpop.permute.xlu0 %813
        %815 = vrot.lane.b32.xlu0 %v785, 96
        %v816 = vpop.permute.xlu0 %815
        %817 = vrot.lane.b32.xlu0 %v786, 96
        %v818 = vpop.permute.xlu0 %817
        %819 = vrot.lane.b32.xlu0 %v787, 96
        %v820 = vpop.permute.xlu0 %819
        %822 = vrot.lane.b32.xlu0 %v788, 96
        %v823 = vpop.permute.xlu0 %822
        %v826 = vsel %vm491, %v814, %v816
        %v828 = vsel %vm491, %v816, %v818
        %v830 = vsel %vm491, %v818, %v820
        %v832 = vsel %vm491, %v820, %v823
        %v837 = vunpack.c.l.b16 %v806
        %v838 = vunpack.c.h.b16 %v806
        %v839 = vunpack.c.l.b16 %v808
        %v840 = vunpack.c.h.b16 %v808
        %v841 = vunpack.c.l.b16 %v810
        %v842 = vunpack.c.h.b16 %v810
        %v843 = vunpack.c.l.b16 %v812
        %v844 = vunpack.c.h.b16 %v812
        %v845 = vpack.c.b16 %v837, %v837
        %v846 = vpack.c.b16 %v838, %v838
        %v847 = vpack.c.b16 %v839, %v839
        %v848 = vpack.c.b16 %v840, %v840
        %v849 = vpack.c.b16 %v841, %v841
        %v850 = vpack.c.b16 %v842, %v842
        %v851 = vpack.c.b16 %v843, %v843
        %v852 = vpack.c.b16 %v844, %v844
        %861 = vst [vmem:[#allocation4 + $0x18] sm:$0xf] %v845
        %862 = vst [vmem:[#allocation4 + $0x3c] sm:$0xf] %v846
        %863 = vst [vmem:[#allocation4 + $0x60] sm:$0xf] %v847
        %864 = vst [vmem:[#allocation4 + $0x84] sm:$0xf] %v848
        %865 = vst [vmem:[#allocation4 + $0xa8] sm:$0xf] %v849
        %866 = vst [vmem:[#allocation4 + $0xcc] sm:$0xf] %v850
        %867 = vst [vmem:[#allocation4 + $0xf0] sm:$0xf] %v851
        %868 = vst [vmem:[#allocation4 + $0x114] sm:$0xf] %v852
        %v869 = vunpack.c.l.b16 %v784
        %v870 = vunpack.c.h.b16 %v784
        %v871 = vunpack.c.l.b16 %v785
        %v872 = vunpack.c.h.b16 %v785
        %v873 = vunpack.c.l.b16 %v786
        %v874 = vunpack.c.h.b16 %v786
        %v875 = vunpack.c.l.b16 %v787
        %v876 = vunpack.c.h.b16 %v787
        %v877 = vpack.c.b16 %v869, %v869
        %v878 = vpack.c.b16 %v870, %v870
        %v879 = vpack.c.b16 %v871, %v871
        %v880 = vpack.c.b16 %v872, %v872
        %v881 = vpack.c.b16 %v873, %v873
        %v882 = vpack.c.b16 %v874, %v874
        %v883 = vpack.c.b16 %v875, %v875
        %v884 = vpack.c.b16 %v876, %v876
        %893 = vst [vmem:[#allocation4 + $0x1c] sm:$0xf] %v877
        %894 = vst [vmem:[#allocation4 + $0x40] sm:$0xf] %v878
        %895 = vst [vmem:[#allocation4 + $0x64] sm:$0xf] %v879
        %896 = vst [vmem:[#allocation4 + $0x88] sm:$0xf] %v880
        %897 = vst [vmem:[#allocation4 + $0xac] sm:$0xf] %v881
        %898 = vst [vmem:[#allocation4 + $0xd0] sm:$0xf] %v882
        %899 = vst [vmem:[#allocation4 + $0xf4] sm:$0xf] %v883
        %900 = vst [vmem:[#allocation4 + $0x118] sm:$0xf] %v884
        %v905 = vunpack.c.l.b16 %v826
        %v906 = vunpack.c.h.b16 %v826
        %v907 = vunpack.c.l.b16 %v828
        %v908 = vunpack.c.h.b16 %v828
        %v909 = vunpack.c.l.b16 %v830
        %v910 = vunpack.c.h.b16 %v830
        %v911 = vunpack.c.l.b16 %v832
        %v912 = vunpack.c.h.b16 %v832
        %v913 = vpack.c.b16 %v905, %v905
        %v914 = vpack.c.b16 %v906, %v906
        %v915 = vpack.c.b16 %v907, %v907
        %v916 = vpack.c.b16 %v908, %v908
        %v917 = vpack.c.b16 %v909, %v909
        %v918 = vpack.c.b16 %v910, %v910
        %v919 = vpack.c.b16 %v911, %v911
        %v920 = vpack.c.b16 %v912, %v912
        %929 = vst [vmem:[#allocation4 + $0x20] sm:$0xf] %v913
        %930 = vst [vmem:[#allocation4 + $0x44] sm:$0xf] %v914
        %931 = vst [vmem:[#allocation4 + $0x68] sm:$0xf] %v915
        %932 = vst [vmem:[#allocation4 + $0x8c] sm:$0xf] %v916
        %933 = vst [vmem:[#allocation4 + $0xb0] sm:$0xf] %v917
        %934 = vst [vmem:[#allocation4 + $0xd4] sm:$0xf] %v918
        %935 = vst [vmem:[#allocation4 + $0xf8] sm:$0xf] %v919
        %936 = vst [vmem:[#allocation4 + $0x11c] sm:$0xf] %v920
        %v937 = vld [vmem:[#allocation4] sm:$0xff]
        %v938 = vld [vmem:[#allocation4 + $0x8] sm:$0xff]
        %v939 = vld [vmem:[#allocation4 + $0x10] sm:$0xff]
        %v940 = vld [vmem:[#allocation4 + $0x18] sm:$0xff]
        %v941 = vld [vmem:[#allocation4 + $0x20] sm:$0xf]
        %v942 = vld [vmem:[#allocation4 + $0x24] sm:$0xff]
        %v943 = vld [vmem:[#allocation4 + $0x2c] sm:$0xff]
        %v944 = vld [vmem:[#allocation4 + $0x34] sm:$0xff]
        %v945 = vld [vmem:[#allocation4 + $0x3c] sm:$0xff]
        %v946 = vld [vmem:[#allocation4 + $0x44] sm:$0xf]
        %v947 = vld [vmem:[#allocation4 + $0x48] sm:$0xff]
        %v948 = vld [vmem:[#allocation4 + $0x50] sm:$0xff]
        %v949 = vld [vmem:[#allocation4 + $0x58] sm:$0xff]
        %v950 = vld [vmem:[#allocation4 + $0x60] sm:$0xff]
        %v951 = vld [vmem:[#allocation4 + $0x68] sm:$0xf]
        %v952 = vld [vmem:[#allocation4 + $0x6c] sm:$0xff]
        %v953 = vld [vmem:[#allocation4 + $0x74] sm:$0xff]
        %v954 = vld [vmem:[#allocation4 + $0x7c] sm:$0xff]
        %v955 = vld [vmem:[#allocation4 + $0x84] sm:$0xff]
        %v956 = vld [vmem:[#allocation4 + $0x8c] sm:$0xf]
        %v957 = vld [vmem:[#allocation4 + $0x90] sm:$0xff]
        %v958 = vld [vmem:[#allocation4 + $0x98] sm:$0xff]
        %v959 = vld [vmem:[#allocation4 + $0xa0] sm:$0xff]
        %v960 = vld [vmem:[#allocation4 + $0xa8] sm:$0xff]
        %v961 = vld [vmem:[#allocation4 + $0xb0] sm:$0xf]
        %v962 = vld [vmem:[#allocation4 + $0xb4] sm:$0xff]
        %v963 = vld [vmem:[#allocation4 + $0xbc] sm:$0xff]
        %v964 = vld [vmem:[#allocation4 + $0xc4] sm:$0xff]
        %v965 = vld [vmem:[#allocation4 + $0xcc] sm:$0xff]
        %v966 = vld [vmem:[#allocation4 + $0xd4] sm:$0xf]
        %v967 = vld [vmem:[#allocation4 + $0xd8] sm:$0xff]
        %v968 = vld [vmem:[#allocation4 + $0xe0] sm:$0xff]
        %v969 = vld [vmem:[#allocation4 + $0xe8] sm:$0xff]
        %v970 = vld [vmem:[#allocation4 + $0xf0] sm:$0xff]
        %v971 = vld [vmem:[#allocation4 + $0xf8] sm:$0xf]
        %v972 = vld [vmem:[#allocation4 + $0xfc] sm:$0xff]
        %v973 = vld [vmem:[#allocation4 + $0x104] sm:$0xff]
        %v974 = vld [vmem:[#allocation4 + $0x10c] sm:$0xff]
        %v975 = vld [vmem:[#allocation4 + $0x114] sm:$0xff]
        %v976 = vld [vmem:[#allocation4 + $0x11c] sm:$0xf]
        %v977 = vld [vmem:[#allocation8] sm:$0xf]
        %v978 = vld [vmem:[#allocation8 + $0x4] sm:$0xf]
        %v979 = vld [vmem:[#allocation8 + $0x8] sm:$0xf]
        %v980 = vld [vmem:[#allocation8 + $0xc] sm:$0xf]
        %v981 = vld [vmem:[#allocation8 + $0x10] sm:$0xf]
        %v982 = vld [vmem:[#allocation8 + $0x14] sm:$0xf]
        %v983 = vld [vmem:[#allocation8 + $0x18] sm:$0xf]
        %v984 = vld [vmem:[#allocation8 + $0x1c] sm:$0xf]
        %v985 = vld [vmem:[#allocation8 + $0x20] sm:$0xf]
        %v986 = vld [vmem:[#allocation8 + $0x24] sm:$0xf]
        %v987 = vld [vmem:[#allocation8 + $0x28] sm:$0xf]
        %v988 = vld [vmem:[#allocation8 + $0x2c] sm:$0xf]
        %v989 = vld [vmem:[#allocation8 + $0x30] sm:$0xf]
        %v990 = vld [vmem:[#allocation8 + $0x34] sm:$0xf]
        %v991 = vld [vmem:[#allocation8 + $0x38] sm:$0xf]
        %v992 = vld [vmem:[#allocation8 + $0x3c] sm:$0xf]
        %v993 = vld [vmem:[#allocation8 + $0x40] sm:$0xf]
        %v994 = vld [vmem:[#allocation8 + $0x44] sm:$0xf]
        %v995 = vld [vmem:[#allocation8 + $0x48] sm:$0xf]
        %v996 = vld [vmem:[#allocation8 + $0x4c] sm:$0xf]
        %v997 = vld [vmem:[#allocation8 + $0x50] sm:$0xf]
        %v998 = vld [vmem:[#allocation8 + $0x54] sm:$0xf]
        %v999 = vld [vmem:[#allocation8 + $0x58] sm:$0xf]
        %v1000 = vld [vmem:[#allocation8 + $0x5c] sm:$0xf]
        %v1001 = vld [vmem:[#allocation8 + $0x60] sm:$0xf]
        %v1002 = vld [vmem:[#allocation8 + $0x64] sm:$0xf]
        %v1003 = vld [vmem:[#allocation8 + $0x68] sm:$0xf]
        %v1004 = vld [vmem:[#allocation8 + $0x6c] sm:$0xf]
        %v1005 = vld [vmem:[#allocation8 + $0x70] sm:$0xf]
        %v1006 = vld [vmem:[#allocation8 + $0x74] sm:$0xf]
        %v1007 = vld [vmem:[#allocation8 + $0x78] sm:$0xf]
        %v1008 = vld [vmem:[#allocation8 + $0x7c] sm:$0xf]
        %v1009 = vld [vmem:[#allocation8 + $0x80] sm:$0xf]
        %v1010 = vld [vmem:[#allocation8 + $0x84] sm:$0xf]
        %v1011 = vld [vmem:[#allocation8 + $0x88] sm:$0xf]
        %v1012 = vld [vmem:[#allocation8 + $0x8c] sm:$0xf]
        %v1013 = vld [vmem:[#allocation8 + $0x90] sm:$0xf]
        %v1014 = vld [vmem:[#allocation8 + $0x94] sm:$0xf]
        %v1015 = vld [vmem:[#allocation8 + $0x98] sm:$0xf]
        %v1016 = vld [vmem:[#allocation8 + $0x9c] sm:$0xf]
        %v1017 = vld [vmem:[#allocation8 + $0xa0] sm:$0xf]
        %v1018 = vld [vmem:[#allocation8 + $0xa4] sm:$0xf]
        %v1019 = vld [vmem:[#allocation8 + $0xa8] sm:$0xf]
        %v1020 = vld [vmem:[#allocation8 + $0xac] sm:$0xf]
        %v1021 = vld [vmem:[#allocation8 + $0xb0] sm:$0xf]
        %v1022 = vld [vmem:[#allocation8 + $0xb4] sm:$0xf]
        %v1023 = vld [vmem:[#allocation8 + $0xb8] sm:$0xf]
        %v1024 = vld [vmem:[#allocation8 + $0xbc] sm:$0xf]
        %v1025 = vld [vmem:[#allocation8 + $0xc0] sm:$0xf]
        %v1026 = vld [vmem:[#allocation8 + $0xc4] sm:$0xf]
        %v1027 = vld [vmem:[#allocation8 + $0xc8] sm:$0xf]
        %v1028 = vld [vmem:[#allocation8 + $0xcc] sm:$0xf]
        %v1029 = vld [vmem:[#allocation8 + $0xd0] sm:$0xf]
        %v1030 = vld [vmem:[#allocation8 + $0xd4] sm:$0xf]
        %v1031 = vld [vmem:[#allocation8 + $0xd8] sm:$0xf]
        %v1032 = vld [vmem:[#allocation8 + $0xdc] sm:$0xf]
        %v1033 = vld [vmem:[#allocation8 + $0xe0] sm:$0xf]
        %v1034 = vld [vmem:[#allocation8 + $0xe4] sm:$0xf]
        %v1035 = vld [vmem:[#allocation8 + $0xe8] sm:$0xf]
        %v1036 = vld [vmem:[#allocation8 + $0xec] sm:$0xf]
        %v1037 = vld [vmem:[#allocation8 + $0xf0] sm:$0xf]
        %v1038 = vld [vmem:[#allocation8 + $0xf4] sm:$0xf]
        %v1039 = vld [vmem:[#allocation8 + $0xf8] sm:$0xf]
        %v1040 = vld [vmem:[#allocation8 + $0xfc] sm:$0xf]
        %v1041 = vld [vmem:[#allocation8 + $0x100] sm:$0xf]
        %v1042 = vld [vmem:[#allocation8 + $0x104] sm:$0xf]
        %v1043 = vld [vmem:[#allocation8 + $0x108] sm:$0xf]
        %v1044 = vld [vmem:[#allocation8 + $0x10c] sm:$0xf]
        %v1045 = vld [vmem:[#allocation8 + $0x110] sm:$0xf]
        %v1046 = vld [vmem:[#allocation8 + $0x114] sm:$0xf]
        %v1047 = vld [vmem:[#allocation8 + $0x118] sm:$0xf]
        %v1048 = vld [vmem:[#allocation8 + $0x11c] sm:$0xf]
        %v1049 = vld [vmem:[#allocation8 + $0x120] sm:$0xf]
        %v1050 = vld [vmem:[#allocation8 + $0x124] sm:$0xf]
        %v1051 = vld [vmem:[#allocation8 + $0x128] sm:$0xf]
        %v1052 = vld [vmem:[#allocation8 + $0x12c] sm:$0xf]
        %v1053 = vld [vmem:[#allocation8 + $0x130] sm:$0xf]
        %v1054 = vld [vmem:[#allocation8 + $0x134] sm:$0xf]
        %v1055 = vld [vmem:[#allocation8 + $0x138] sm:$0xf]
        %v1056 = vld [vmem:[#allocation8 + $0x13c] sm:$0xf]
        %v1057 = vld [vmem:[#allocation8 + $0x140] sm:$0xf]
        %v1058 = vld [vmem:[#allocation8 + $0x144] sm:$0xf]
        %v1059 = vld [vmem:[#allocation8 + $0x148] sm:$0xf]
        %v1060 = vld [vmem:[#allocation8 + $0x14c] sm:$0xf]
        %v1061 = vld [vmem:[#allocation8 + $0x150] sm:$0xf]
        %v1062 = vld [vmem:[#allocation8 + $0x154] sm:$0xf]
        %v1063 = vld [vmem:[#allocation8 + $0x158] sm:$0xf]
        %v1064 = vld [vmem:[#allocation8 + $0x15c] sm:$0xf]
        %v1065 = vld [vmem:[#allocation8 + $0x160] sm:$0xf]
        %v1066 = vld [vmem:[#allocation8 + $0x164] sm:$0xf]
        %v1067 = vld [vmem:[#allocation8 + $0x168] sm:$0xf]
        %v1068 = vld [vmem:[#allocation8 + $0x16c] sm:$0xf]
        %v1069 = vld [vmem:[#allocation8 + $0x170] sm:$0xf]
        %v1070 = vld [vmem:[#allocation8 + $0x174] sm:$0xf]
        %v1071 = vld [vmem:[#allocation8 + $0x178] sm:$0xf]
        %v1072 = vld [vmem:[#allocation8 + $0x17c] sm:$0xf]
        %v1073 = vld [vmem:[#allocation8 + $0x180] sm:$0xf]
        %v1074 = vld [vmem:[#allocation8 + $0x184] sm:$0xf]
        %v1075 = vld [vmem:[#allocation8 + $0x188] sm:$0xf]
        %v1076 = vld [vmem:[#allocation8 + $0x18c] sm:$0xf]
        %v1077 = vld [vmem:[#allocation8 + $0x190] sm:$0xf]
        %v1078 = vld [vmem:[#allocation8 + $0x194] sm:$0xf]
        %v1079 = vld [vmem:[#allocation8 + $0x198] sm:$0xf]
        %v1080 = vld [vmem:[#allocation8 + $0x19c] sm:$0xf]
        %v1081 = vld [vmem:[#allocation8 + $0x1a0] sm:$0xf]
        %v1082 = vld [vmem:[#allocation8 + $0x1a4] sm:$0xf]
        %v1083 = vld [vmem:[#allocation8 + $0x1a8] sm:$0xf]
        %v1084 = vld [vmem:[#allocation8 + $0x1ac] sm:$0xf]
        %v1085 = vld [vmem:[#allocation8 + $0x1b0] sm:$0xf]
        %v1086 = vld [vmem:[#allocation8 + $0x1b4] sm:$0xf]
        %v1087 = vld [vmem:[#allocation8 + $0x1b8] sm:$0xf]
        %v1088 = vld [vmem:[#allocation8 + $0x1bc] sm:$0xf]
        %v1089 = vld [vmem:[#allocation8 + $0x1c0] sm:$0xf]
        %v1090 = vld [vmem:[#allocation8 + $0x1c4] sm:$0xf]
        %v1091 = vld [vmem:[#allocation8 + $0x1c8] sm:$0xf]
        %v1092 = vld [vmem:[#allocation8 + $0x1cc] sm:$0xf]
        %v1093 = vld [vmem:[#allocation8 + $0x1d0] sm:$0xf]
        %v1094 = vld [vmem:[#allocation8 + $0x1d4] sm:$0xf]
        %v1095 = vld [vmem:[#allocation8 + $0x1d8] sm:$0xf]
        %v1096 = vld [vmem:[#allocation8 + $0x1dc] sm:$0xf]
        %v1097 = vld [vmem:[#allocation8 + $0x1e0] sm:$0xf]
        %v1098 = vld [vmem:[#allocation8 + $0x1e4] sm:$0xf]
        %v1099 = vld [vmem:[#allocation8 + $0x1e8] sm:$0xf]
        %v1100 = vld [vmem:[#allocation8 + $0x1ec] sm:$0xf]
        %v1101 = vld [vmem:[#allocation8 + $0x1f0] sm:$0xf]
        %v1102 = vld [vmem:[#allocation8 + $0x1f4] sm:$0xf]
        %v1103 = vld [vmem:[#allocation8 + $0x1f8] sm:$0xf]
        %v1104 = vld [vmem:[#allocation8 + $0x1fc] sm:$0xf]
        %v1105 = vld [vmem:[#allocation8 + $0x200] sm:$0xf]
        %v1106 = vld [vmem:[#allocation8 + $0x204] sm:$0xf]
        %v1107 = vld [vmem:[#allocation8 + $0x208] sm:$0xf]
        %v1108 = vld [vmem:[#allocation8 + $0x20c] sm:$0xf]
        %v1109 = vld [vmem:[#allocation8 + $0x210] sm:$0xf]
        %v1110 = vld [vmem:[#allocation8 + $0x214] sm:$0xf]
        %v1111 = vld [vmem:[#allocation8 + $0x218] sm:$0xf]
        %v1112 = vld [vmem:[#allocation8 + $0x21c] sm:$0xf]
        %v1113 = vld [vmem:[#allocation8 + $0x220] sm:$0xf]
        %v1114 = vld [vmem:[#allocation8 + $0x224] sm:$0xf]
        %v1115 = vld [vmem:[#allocation8 + $0x228] sm:$0xf]
        %v1116 = vld [vmem:[#allocation8 + $0x22c] sm:$0xf]
        %v1117 = vld [vmem:[#allocation8 + $0x230] sm:$0xf]
        %v1118 = vld [vmem:[#allocation8 + $0x234] sm:$0xf]
        %v1119 = vld [vmem:[#allocation8 + $0x238] sm:$0xf]
        %v1120 = vld [vmem:[#allocation8 + $0x23c] sm:$0xf]
        %v1121 = vld [vmem:[#allocation10] sm:$0x1]
        %v1123 = vlaneseq
        %v1124 = vshrl.u32 %v1123, 7
        %v1125 = vsub.s32 0, %v1124
        %v1126 = vrot.slane %v1121, %v1125
        %v1168 = vunpack.c.l.b16 %v937
        %v1169 = vunpack.c.h.b16 %v937
        %v1170 = vunpack.c.l.b16 %v938
        %v1171 = vunpack.c.h.b16 %v938
        %v1172 = vunpack.c.l.b16 %v939
        %v1173 = vunpack.c.h.b16 %v939
        %v1174 = vunpack.c.l.b16 %v940
        %v1175 = vunpack.c.h.b16 %v940
        %v1176 = vunpack.c.l.b16 %v941
        %v1177 = vunpack.c.l.b16 %v942
        %v1178 = vunpack.c.h.b16 %v942
        %v1179 = vunpack.c.l.b16 %v943
        %v1180 = vunpack.c.h.b16 %v943
        %v1181 = vunpack.c.l.b16 %v944
        %v1182 = vunpack.c.h.b16 %v944
        %v1183 = vunpack.c.l.b16 %v945
        %v1184 = vunpack.c.h.b16 %v945
        %v1185 = vunpack.c.l.b16 %v946
        %v1186 = vunpack.c.l.b16 %v947
        %v1187 = vunpack.c.h.b16 %v947
        %v1188 = vunpack.c.l.b16 %v948
        %v1189 = vunpack.c.h.b16 %v948
        %v1190 = vunpack.c.l.b16 %v949
        %v1191 = vunpack.c.h.b16 %v949
        %v1192 = vunpack.c.l.b16 %v950
        %v1193 = vunpack.c.h.b16 %v950
        %v1194 = vunpack.c.l.b16 %v951
        %v1195 = vunpack.c.l.b16 %v952
        %v1196 = vunpack.c.h.b16 %v952
        %v1197 = vunpack.c.l.b16 %v953
        %v1198 = vunpack.c.h.b16 %v953
        %v1199 = vunpack.c.l.b16 %v954
        %v1200 = vunpack.c.h.b16 %v954
        %v1201 = vunpack.c.l.b16 %v955
        %v1202 = vunpack.c.h.b16 %v955
        %v1203 = vunpack.c.l.b16 %v956
        %v1204 = vunpack.c.l.b16 %v957
        %v1205 = vunpack.c.h.b16 %v957
        %v1206 = vunpack.c.l.b16 %v958
        %v1207 = vunpack.c.h.b16 %v958
        %v1208 = vunpack.c.l.b16 %v959
        %v1209 = vunpack.c.h.b16 %v959
        %v1210 = vunpack.c.l.b16 %v960
        %v1211 = vunpack.c.h.b16 %v960
        %v1212 = vunpack.c.l.b16 %v961
        %v1213 = vunpack.c.l.b16 %v962
        %v1214 = vunpack.c.h.b16 %v962
        %v1215 = vunpack.c.l.b16 %v963
        %v1216 = vunpack.c.h.b16 %v963
        %v1217 = vunpack.c.l.b16 %v964
        %v1218 = vunpack.c.h.b16 %v964
        %v1219 = vunpack.c.l.b16 %v965
        %v1220 = vunpack.c.h.b16 %v965
        %v1221 = vunpack.c.l.b16 %v966
        %v1222 = vunpack.c.l.b16 %v967
        %v1223 = vunpack.c.h.b16 %v967
        %v1224 = vunpack.c.l.b16 %v968
        %v1225 = vunpack.c.h.b16 %v968
        %v1226 = vunpack.c.l.b16 %v969
        %v1227 = vunpack.c.h.b16 %v969
        %v1228 = vunpack.c.l.b16 %v970
        %v1229 = vunpack.c.h.b16 %v970
        %v1230 = vunpack.c.l.b16 %v971
        %v1231 = vunpack.c.l.b16 %v972
        %v1232 = vunpack.c.h.b16 %v972
        %v1233 = vunpack.c.l.b16 %v973
        %v1234 = vunpack.c.h.b16 %v973
        %v1235 = vunpack.c.l.b16 %v974
        %v1236 = vunpack.c.h.b16 %v974
        %v1237 = vunpack.c.l.b16 %v975
        %v1238 = vunpack.c.h.b16 %v975
        %v1239 = vunpack.c.l.b16 %v976
        %v1240 = vpack.c.b16 %v1177, %v1168
        %v1241 = vpack.c.b16 %v1178, %v1169
        %v1242 = vpack.c.b16 %v1179, %v1170
        %v1243 = vpack.c.b16 %v1180, %v1171
        %v1244 = vpack.c.b16 %v1181, %v1172
        %v1245 = vpack.c.b16 %v1182, %v1173
        %v1246 = vpack.c.b16 %v1183, %v1174
        %v1247 = vpack.c.b16 %v1184, %v1175
        %v1248 = vpack.c.b16 %v1185, %v1176
        %v1249 = vpack.c.b16 %v1195, %v1186
        %v1250 = vpack.c.b16 %v1196, %v1187
        %v1251 = vpack.c.b16 %v1197, %v1188
        %v1252 = vpack.c.b16 %v1198, %v1189
        %v1253 = vpack.c.b16 %v1199, %v1190
        %v1254 = vpack.c.b16 %v1200, %v1191
        %v1255 = vpack.c.b16 %v1201, %v1192
        %v1256 = vpack.c.b16 %v1202, %v1193
        %v1257 = vpack.c.b16 %v1203, %v1194
        %v1258 = vpack.c.b16 %v1213, %v1204
        %v1259 = vpack.c.b16 %v1214, %v1205
        %v1260 = vpack.c.b16 %v1215, %v1206
        %v1261 = vpack.c.b16 %v1216, %v1207
        %v1262 = vpack.c.b16 %v1217, %v1208
        %v1263 = vpack.c.b16 %v1218, %v1209
        %v1264 = vpack.c.b16 %v1219, %v1210
        %v1265 = vpack.c.b16 %v1220, %v1211
        %v1266 = vpack.c.b16 %v1221, %v1212
        %v1267 = vpack.c.b16 %v1231, %v1222
        %v1268 = vpack.c.b16 %v1232, %v1223
        %v1269 = vpack.c.b16 %v1233, %v1224
        %v1270 = vpack.c.b16 %v1234, %v1225
        %v1271 = vpack.c.b16 %v1235, %v1226
        %v1272 = vpack.c.b16 %v1236, %v1227
        %v1273 = vpack.c.b16 %v1237, %v1228
        %v1274 = vpack.c.b16 %v1238, %v1229
        %v1275 = vpack.c.b16 %v1239, %v1230
        %v1456 = vunpack.c.l.b16 %v977
        %v1457 = vunpack.c.l.b16 %v978
        %v1458 = vunpack.c.l.b16 %v979
        %v1459 = vunpack.c.l.b16 %v980
        %v1460 = vunpack.c.l.b16 %v981
        %v1461 = vunpack.c.l.b16 %v982
        %v1462 = vunpack.c.l.b16 %v983
        %v1463 = vunpack.c.l.b16 %v984
        %v1464 = vunpack.c.l.b16 %v985
        %v1465 = vunpack.c.l.b16 %v986
        %v1466 = vunpack.c.l.b16 %v987
        %v1467 = vunpack.c.l.b16 %v988
        %v1468 = vunpack.c.l.b16 %v989
        %v1469 = vunpack.c.l.b16 %v990
        %v1470 = vunpack.c.l.b16 %v991
        %v1471 = vunpack.c.l.b16 %v992
        %v1472 = vunpack.c.l.b16 %v993
        %v1473 = vunpack.c.l.b16 %v994
        %v1474 = vunpack.c.l.b16 %v995
        %v1475 = vunpack.c.l.b16 %v996
        %v1476 = vunpack.c.l.b16 %v997
        %v1477 = vunpack.c.l.b16 %v998
        %v1478 = vunpack.c.l.b16 %v999
        %v1479 = vunpack.c.l.b16 %v1000
        %v1480 = vunpack.c.l.b16 %v1001
        %v1481 = vunpack.c.l.b16 %v1002
        %v1482 = vunpack.c.l.b16 %v1003
        %v1483 = vunpack.c.l.b16 %v1004
        %v1484 = vunpack.c.l.b16 %v1005
        %v1485 = vunpack.c.l.b16 %v1006
        %v1486 = vunpack.c.l.b16 %v1007
        %v1487 = vunpack.c.l.b16 %v1008
        %v1488 = vunpack.c.l.b16 %v1009
        %v1489 = vunpack.c.l.b16 %v1010
        %v1490 = vunpack.c.l.b16 %v1011
        %v1491 = vunpack.c.l.b16 %v1012
        %v1492 = vunpack.c.l.b16 %v1013
        %v1493 = vunpack.c.l.b16 %v1014
        %v1494 = vunpack.c.l.b16 %v1015
        %v1495 = vunpack.c.l.b16 %v1016
        %v1496 = vunpack.c.l.b16 %v1017
        %v1497 = vunpack.c.l.b16 %v1018
        %v1498 = vunpack.c.l.b16 %v1019
        %v1499 = vunpack.c.l.b16 %v1020
        %v1500 = vunpack.c.l.b16 %v1021
        %v1501 = vunpack.c.l.b16 %v1022
        %v1502 = vunpack.c.l.b16 %v1023
        %v1503 = vunpack.c.l.b16 %v1024
        %v1504 = vunpack.c.l.b16 %v1025
        %v1505 = vunpack.c.l.b16 %v1026
        %v1506 = vunpack.c.l.b16 %v1027
        %v1507 = vunpack.c.l.b16 %v1028
        %v1508 = vunpack.c.l.b16 %v1029
        %v1509 = vunpack.c.l.b16 %v1030
        %v1510 = vunpack.c.l.b16 %v1031
        %v1511 = vunpack.c.l.b16 %v1032
        %v1512 = vunpack.c.l.b16 %v1033
        %v1513 = vunpack.c.l.b16 %v1034
        %v1514 = vunpack.c.l.b16 %v1035
        %v1515 = vunpack.c.l.b16 %v1036
        %v1516 = vunpack.c.l.b16 %v1037
        %v1517 = vunpack.c.l.b16 %v1038
        %v1518 = vunpack.c.l.b16 %v1039
        %v1519 = vunpack.c.l.b16 %v1040
        %v1520 = vunpack.c.l.b16 %v1041
        %v1521 = vunpack.c.l.b16 %v1042
        %v1522 = vunpack.c.l.b16 %v1043
        %v1523 = vunpack.c.l.b16 %v1044
        %v1524 = vunpack.c.l.b16 %v1045
        %v1525 = vunpack.c.l.b16 %v1046
        %v1526 = vunpack.c.l.b16 %v1047
        %v1527 = vunpack.c.l.b16 %v1048
        %v1528 = vunpack.c.l.b16 %v1049
        %v1529 = vunpack.c.l.b16 %v1050
        %v1530 = vunpack.c.l.b16 %v1051
        %v1531 = vunpack.c.l.b16 %v1052
        %v1532 = vunpack.c.l.b16 %v1053
        %v1533 = vunpack.c.l.b16 %v1054
        %v1534 = vunpack.c.l.b16 %v1055
        %v1535 = vunpack.c.l.b16 %v1056
        %v1536 = vunpack.c.l.b16 %v1057
        %v1537 = vunpack.c.l.b16 %v1058
        %v1538 = vunpack.c.l.b16 %v1059
        %v1539 = vunpack.c.l.b16 %v1060
        %v1540 = vunpack.c.l.b16 %v1061
        %v1541 = vunpack.c.l.b16 %v1062
        %v1542 = vunpack.c.l.b16 %v1063
        %v1543 = vunpack.c.l.b16 %v1064
        %v1544 = vunpack.c.l.b16 %v1065
        %v1545 = vunpack.c.l.b16 %v1066
        %v1546 = vunpack.c.l.b16 %v1067
        %v1547 = vunpack.c.l.b16 %v1068
        %v1548 = vunpack.c.l.b16 %v1069
        %v1549 = vunpack.c.l.b16 %v1070
        %v1550 = vunpack.c.l.b16 %v1071
        %v1551 = vunpack.c.l.b16 %v1072
        %v1552 = vunpack.c.l.b16 %v1073
        %v1553 = vunpack.c.l.b16 %v1074
        %v1554 = vunpack.c.l.b16 %v1075
        %v1555 = vunpack.c.l.b16 %v1076
        %v1556 = vunpack.c.l.b16 %v1077
        %v1557 = vunpack.c.l.b16 %v1078
        %v1558 = vunpack.c.l.b16 %v1079
        %v1559 = vunpack.c.l.b16 %v1080
        %v1560 = vunpack.c.l.b16 %v1081
        %v1561 = vunpack.c.l.b16 %v1082
        %v1562 = vunpack.c.l.b16 %v1083
        %v1563 = vunpack.c.l.b16 %v1084
        %v1564 = vunpack.c.l.b16 %v1085
        %v1565 = vunpack.c.l.b16 %v1086
        %v1566 = vunpack.c.l.b16 %v1087
        %v1567 = vunpack.c.l.b16 %v1088
        %v1568 = vunpack.c.l.b16 %v1089
        %v1569 = vunpack.c.l.b16 %v1090
        %v1570 = vunpack.c.l.b16 %v1091
        %v1571 = vunpack.c.l.b16 %v1092
        %v1572 = vunpack.c.l.b16 %v1093
        %v1573 = vunpack.c.l.b16 %v1094
        %v1574 = vunpack.c.l.b16 %v1095
        %v1575 = vunpack.c.l.b16 %v1096
        %v1576 = vunpack.c.l.b16 %v1097
        %v1577 = vunpack.c.l.b16 %v1098
        %v1578 = vunpack.c.l.b16 %v1099
        %v1579 = vunpack.c.l.b16 %v1100
        %v1580 = vunpack.c.l.b16 %v1101
        %v1581 = vunpack.c.l.b16 %v1102
        %v1582 = vunpack.c.l.b16 %v1103
        %v1583 = vunpack.c.l.b16 %v1104
        %v1584 = vunpack.c.l.b16 %v1105
        %v1585 = vunpack.c.l.b16 %v1106
        %v1586 = vunpack.c.l.b16 %v1107
        %v1587 = vunpack.c.l.b16 %v1108
        %v1588 = vunpack.c.l.b16 %v1109
        %v1589 = vunpack.c.l.b16 %v1110
        %v1590 = vunpack.c.l.b16 %v1111
        %v1591 = vunpack.c.l.b16 %v1112
        %v1592 = vunpack.c.l.b16 %v1113
        %v1593 = vunpack.c.l.b16 %v1114
        %v1594 = vunpack.c.l.b16 %v1115
        %v1595 = vunpack.c.l.b16 %v1116
        %v1596 = vunpack.c.l.b16 %v1117
        %v1597 = vunpack.c.l.b16 %v1118
        %v1598 = vunpack.c.l.b16 %v1119
        %v1599 = vunpack.c.l.b16 %v1120
        %v1600 = vpack.c.b16 %v1457, %v1456
        %v1601 = vpack.c.b16 %v1459, %v1458
        %v1602 = vpack.c.b16 %v1461, %v1460
        %v1603 = vpack.c.b16 %v1463, %v1462
        %v1604 = vpack.c.b16 %v1465, %v1464
        %v1605 = vpack.c.b16 %v1467, %v1466
        %v1606 = vpack.c.b16 %v1469, %v1468
        %v1607 = vpack.c.b16 %v1471, %v1470
        %v1608 = vpack.c.b16 %v1473, %v1472
        %v1609 = vpack.c.b16 %v1475, %v1474
        %v1610 = vpack.c.b16 %v1477, %v1476
        %v1611 = vpack.c.b16 %v1479, %v1478
        %v1612 = vpack.c.b16 %v1481, %v1480
        %v1613 = vpack.c.b16 %v1483, %v1482
        %v1614 = vpack.c.b16 %v1485, %v1484
        %v1615 = vpack.c.b16 %v1487, %v1486
        %v1616 = vpack.c.b16 %v1489, %v1488
        %v1617 = vpack.c.b16 %v1491, %v1490
        %v1618 = vpack.c.b16 %v1493, %v1492
        %v1619 = vpack.c.b16 %v1495, %v1494
        %v1620 = vpack.c.b16 %v1497, %v1496
        %v1621 = vpack.c.b16 %v1499, %v1498
        %v1622 = vpack.c.b16 %v1501, %v1500
        %v1623 = vpack.c.b16 %v1503, %v1502
        %v1624 = vpack.c.b16 %v1505, %v1504
        %v1625 = vpack.c.b16 %v1507, %v1506
        %v1626 = vpack.c.b16 %v1509, %v1508
        %v1627 = vpack.c.b16 %v1511, %v1510
        %v1628 = vpack.c.b16 %v1513, %v1512
        %v1629 = vpack.c.b16 %v1515, %v1514
        %v1630 = vpack.c.b16 %v1517, %v1516
        %v1631 = vpack.c.b16 %v1519, %v1518
        %v1632 = vpack.c.b16 %v1521, %v1520
        %v1633 = vpack.c.b16 %v1523, %v1522
        %v1634 = vpack.c.b16 %v1525, %v1524
        %v1635 = vpack.c.b16 %v1527, %v1526
        %v1636 = vpack.c.b16 %v1529, %v1528
        %v1637 = vpack.c.b16 %v1531, %v1530
        %v1638 = vpack.c.b16 %v1533, %v1532
        %v1639 = vpack.c.b16 %v1535, %v1534
        %v1640 = vpack.c.b16 %v1537, %v1536
        %v1641 = vpack.c.b16 %v1539, %v1538
        %v1642 = vpack.c.b16 %v1541, %v1540
        %v1643 = vpack.c.b16 %v1543, %v1542
        %v1644 = vpack.c.b16 %v1545, %v1544
        %v1645 = vpack.c.b16 %v1547, %v1546
        %v1646 = vpack.c.b16 %v1549, %v1548
        %v1647 = vpack.c.b16 %v1551, %v1550
        %v1648 = vpack.c.b16 %v1553, %v1552
        %v1649 = vpack.c.b16 %v1555, %v1554
        %v1650 = vpack.c.b16 %v1557, %v1556
        %v1651 = vpack.c.b16 %v1559, %v1558
        %v1652 = vpack.c.b16 %v1561, %v1560
        %v1653 = vpack.c.b16 %v1563, %v1562
        %v1654 = vpack.c.b16 %v1565, %v1564
        %v1655 = vpack.c.b16 %v1567, %v1566
        %v1656 = vpack.c.b16 %v1569, %v1568
        %v1657 = vpack.c.b16 %v1571, %v1570
        %v1658 = vpack.c.b16 %v1573, %v1572
        %v1659 = vpack.c.b16 %v1575, %v1574
        %v1660 = vpack.c.b16 %v1577, %v1576
        %v1661 = vpack.c.b16 %v1579, %v1578
        %v1662 = vpack.c.b16 %v1581, %v1580
        %v1663 = vpack.c.b16 %v1583, %v1582
        %v1664 = vpack.c.b16 %v1585, %v1584
        %v1665 = vpack.c.b16 %v1587, %v1586
        %v1666 = vpack.c.b16 %v1589, %v1588
        %v1667 = vpack.c.b16 %v1591, %v1590
        %v1668 = vpack.c.b16 %v1593, %v1592
        %v1669 = vpack.c.b16 %v1595, %v1594
        %v1670 = vpack.c.b16 %v1597, %v1596
        %v1671 = vpack.c.b16 %v1599, %v1598
        %1744 = vmatprep.subr.bf16.mxu0 0
        %1745 = vmatpush1.bf16.msra.mxu0 %v1607
        %1746 = vmatprep.subr.bf16.mxu0 0
        %1747 = vmatpush1.bf16.msra.mxu0 %v1606
        %1748 = vmatprep.subr.bf16.mxu0 0
        %1749 = vmatpush1.bf16.msra.mxu0 %v1605
        %1750 = vmatprep.subr.bf16.mxu0 0
        %1751 = vmatpush1.bf16.msra.mxu0 %v1604
        %1752 = vmatprep.subr.bf16.mxu0 0
        %1753 = vmatpush1.bf16.msra.mxu0 %v1603
        %1754 = vmatprep.subr.bf16.mxu0 0
        %1755 = vmatpush1.bf16.msra.mxu0 %v1602
        %1756 = vmatprep.subr.bf16.mxu0 0
        %1757 = vmatpush1.bf16.msra.mxu0 %v1601
        %1758 = vmatprep.subr.bf16.mxu0 0
        %1759 = vmatpush1.bf16.msra.mxu0 %v1600
        %1760 = vmatprep.subr.bf16.mxu0 0
        %1761 = vmatpush2.bf16.msra.mxu0 %v1615
        %1762 = vmatprep.subr.bf16.mxu0 0
        %1763 = vmatpush2.bf16.msra.mxu0 %v1614
        %1764 = vmatprep.subr.bf16.mxu0 0
        %1765 = vmatpush2.bf16.msra.mxu0 %v1613
        %1766 = vmatprep.subr.bf16.mxu0 0
        %1767 = vmatpush2.bf16.msra.mxu0 %v1612
        %1768 = vmatprep.subr.bf16.mxu0 0
        %1769 = vmatpush2.bf16.msra.mxu0 %v1611
        %1770 = vmatprep.subr.bf16.mxu0 0
        %1771 = vmatpush2.bf16.msra.mxu0 %v1610
        %1772 = vmatprep.subr.bf16.mxu0 0
        %1773 = vmatpush2.bf16.msra.mxu0 %v1609
        %1774 = vmatprep.subr.bf16.mxu0 0
        %1775 = vmatpush2.bf16.msra.mxu0 %v1608
        %1776 = vmatprep.mubr.bf16.mxu0 %v1241
        %1777 = vmatmul.mubr.bf16.gmra.mxu0 %v1240
        %v1778 = vpop.f32.mrf.mxu0
        %v1779 = vadd.f32 %v1126, %v1778
        %v1780 = vpop.f32.mrf.mxu0
        %v1781 = vpop.f32.mrf.mxu0
        %v1782 = vadd.f32 %v1126, %v1781
        %v1783 = vpop.f32.mrf.mxu0
        %1784 = vmatprep.mubr.bf16.mxu0 %v1250
        %1785 = vmatmul.mubr.bf16.gmra.mxu0 %v1249
        %v1786 = vpop.f32.mrf.mxu0
        %v1787 = vadd.f32 %v1126, %v1786
        %v1788 = vpop.f32.mrf.mxu0
        %v1789 = vpop.f32.mrf.mxu0
        %v1790 = vadd.f32 %v1126, %v1789
        %v1791 = vpop.f32.mrf.mxu0
        %1792 = vmatprep.mubr.bf16.mxu0 %v1259
        %1793 = vmatmul.mubr.bf16.gmra.mxu0 %v1258
        %v1794 = vpop.f32.mrf.mxu0
        %v1795 = vadd.f32 %v1126, %v1794
        %v1796 = vpop.f32.mrf.mxu0
        %v1797 = vpop.f32.mrf.mxu0
        %v1798 = vadd.f32 %v1126, %v1797
        %v1799 = vpop.f32.mrf.mxu0
        %1800 = vmatprep.mubr.bf16.mxu0 %v1268
        %1801 = vmatmul.mubr.bf16.gmra.mxu0 %v1267
        %v1802 = vpop.f32.mrf.mxu0
        %v1803 = vadd.f32 %v1126, %v1802
        %v1804 = vpop.f32.mrf.mxu0
        %v1805 = vpop.f32.mrf.mxu0
        %v1806 = vadd.f32 %v1126, %v1805
        %v1807 = vpop.f32.mrf.mxu0
        %1808 = vdwg.mxu0
        %1809 = vmatprep.subr.bf16.mxu0 0
        %1810 = vmatpush1.bf16.msra.mxu0 %v1623
        %1811 = vmatprep.subr.bf16.mxu0 0
        %1812 = vmatpush1.bf16.msra.mxu0 %v1622
        %1813 = vmatprep.subr.bf16.mxu0 0
        %1814 = vmatpush1.bf16.msra.mxu0 %v1621
        %1815 = vmatprep.subr.bf16.mxu0 0
        %1816 = vmatpush1.bf16.msra.mxu0 %v1620
        %1817 = vmatprep.subr.bf16.mxu0 0
        %1818 = vmatpush1.bf16.msra.mxu0 %v1619
        %1819 = vmatprep.subr.bf16.mxu0 0
        %1820 = vmatpush1.bf16.msra.mxu0 %v1618
        %1821 = vmatprep.subr.bf16.mxu0 0
        %1822 = vmatpush1.bf16.msra.mxu0 %v1617
        %1823 = vmatprep.subr.bf16.mxu0 0
        %1824 = vmatpush1.bf16.msra.mxu0 %v1616
        %1825 = vmatprep.subr.bf16.mxu0 0
        %1826 = vmatpush2.bf16.msra.mxu0 %v1631
        %1827 = vmatprep.subr.bf16.mxu0 0
        %1828 = vmatpush2.bf16.msra.mxu0 %v1630
        %1829 = vmatprep.subr.bf16.mxu0 0
        %1830 = vmatpush2.bf16.msra.mxu0 %v1629
        %1831 = vmatprep.subr.bf16.mxu0 0
        %1832 = vmatpush2.bf16.msra.mxu0 %v1628
        %1833 = vmatprep.subr.bf16.mxu0 0
        %1834 = vmatpush2.bf16.msra.mxu0 %v1627
        %1835 = vmatprep.subr.bf16.mxu0 0
        %1836 = vmatpush2.bf16.msra.mxu0 %v1626
        %1837 = vmatprep.subr.bf16.mxu0 0
        %1838 = vmatpush2.bf16.msra.mxu0 %v1625
        %1839 = vmatprep.subr.bf16.mxu0 0
        %1840 = vmatpush2.bf16.msra.mxu0 %v1624
        %1841 = vmatprep.mubr.bf16.mxu0 %v1243
        %1842 = vmatmul.mubr.bf16.gmra.mxu0 %v1242
        %v1843 = vpop.f32.mrf.mxu0
        %v1844 = vadd.f32 %v1779, %v1843
        %v1845 = vpop.f32.mrf.mxu0
        %v1846 = vpop.f32.mrf.mxu0
        %v1847 = vadd.f32 %v1782, %v1846
        %v1848 = vpop.f32.mrf.mxu0
        %1849 = vmatprep.mubr.bf16.mxu0 %v1252
        %1850 = vmatmul.mubr.bf16.gmra.mxu0 %v1251
        %v1851 = vpop.f32.mrf.mxu0
        %v1852 = vadd.f32 %v1787, %v1851
        %v1853 = vpop.f32.mrf.mxu0
        %v1854 = vpop.f32.mrf.mxu0
        %v1855 = vadd.f32 %v1790, %v1854
        %v1856 = vpop.f32.mrf.mxu0
        %1857 = vmatprep.mubr.bf16.mxu0 %v1261
        %1858 = vmatmul.mubr.bf16.gmra.mxu0 %v1260
        %v1859 = vpop.f32.mrf.mxu0
        %v1860 = vadd.f32 %v1795, %v1859
        %v1861 = vpop.f32.mrf.mxu0
        %v1862 = vpop.f32.mrf.mxu0
        %v1863 = vadd.f32 %v1798, %v1862
        %v1864 = vpop.f32.mrf.mxu0
        %1865 = vmatprep.mubr.bf16.mxu0 %v1270
        %1866 = vmatmul.mubr.bf16.gmra.mxu0 %v1269
        %v1867 = vpop.f32.mrf.mxu0
        %v1868 = vadd.f32 %v1803, %v1867
        %v1869 = vpop.f32.mrf.mxu0
        %v1870 = vpop.f32.mrf.mxu0
        %v1871 = vadd.f32 %v1806, %v1870
        %v1872 = vpop.f32.mrf.mxu0
        %1873 = vdwg.mxu0
        %1874 = vmatprep.subr.bf16.mxu0 0
        %1875 = vmatpush1.bf16.msra.mxu0 %v1639
        %1876 = vmatprep.subr.bf16.mxu0 0
        %1877 = vmatpush1.bf16.msra.mxu0 %v1638
        %1878 = vmatprep.subr.bf16.mxu0 0
        %1879 = vmatpush1.bf16.msra.mxu0 %v1637
        %1880 = vmatprep.subr.bf16.mxu0 0
        %1881 = vmatpush1.bf16.msra.mxu0 %v1636
        %1882 = vmatprep.subr.bf16.mxu0 0
        %1883 = vmatpush1.bf16.msra.mxu0 %v1635
        %1884 = vmatprep.subr.bf16.mxu0 0
        %1885 = vmatpush1.bf16.msra.mxu0 %v1634
        %1886 = vmatprep.subr.bf16.mxu0 0
        %1887 = vmatpush1.bf16.msra.mxu0 %v1633
        %1888 = vmatprep.subr.bf16.mxu0 0
        %1889 = vmatpush1.bf16.msra.mxu0 %v1632
        %1890 = vmatprep.subr.bf16.mxu0 0
        %1891 = vmatpush2.bf16.msra.mxu0 %v1647
        %1892 = vmatprep.subr.bf16.mxu0 0
        %1893 = vmatpush2.bf16.msra.mxu0 %v1646
        %1894 = vmatprep.subr.bf16.mxu0 0
        %1895 = vmatpush2.bf16.msra.mxu0 %v1645
        %1896 = vmatprep.subr.bf16.mxu0 0
        %1897 = vmatpush2.bf16.msra.mxu0 %v1644
        %1898 = vmatprep.subr.bf16.mxu0 0
        %1899 = vmatpush2.bf16.msra.mxu0 %v1643
        %1900 = vmatprep.subr.bf16.mxu0 0
        %1901 = vmatpush2.bf16.msra.mxu0 %v1642
        %1902 = vmatprep.subr.bf16.mxu0 0
        %1903 = vmatpush2.bf16.msra.mxu0 %v1641
        %1904 = vmatprep.subr.bf16.mxu0 0
        %1905 = vmatpush2.bf16.msra.mxu0 %v1640
        %1906 = vmatprep.mubr.bf16.mxu0 %v1245
        %1907 = vmatmul.mubr.bf16.gmra.mxu0 %v1244
        %v1908 = vpop.f32.mrf.mxu0
        %v1909 = vadd.f32 %v1844, %v1908
        %v1910 = vpop.f32.mrf.mxu0
        %v1911 = vpop.f32.mrf.mxu0
        %v1912 = vadd.f32 %v1847, %v1911
        %v1913 = vpop.f32.mrf.mxu0
        %1914 = vmatprep.mubr.bf16.mxu0 %v1254
        %1915 = vmatmul.mubr.bf16.gmra.mxu0 %v1253
        %v1916 = vpop.f32.mrf.mxu0
        %v1917 = vadd.f32 %v1852, %v1916
        %v1918 = vpop.f32.mrf.mxu0
        %v1919 = vpop.f32.mrf.mxu0
        %v1920 = vadd.f32 %v1855, %v1919
        %v1921 = vpop.f32.mrf.mxu0
        %1922 = vmatprep.mubr.bf16.mxu0 %v1263
        %1923 = vmatmul.mubr.bf16.gmra.mxu0 %v1262
        %v1924 = vpop.f32.mrf.mxu0
        %v1925 = vadd.f32 %v1860, %v1924
        %v1926 = vpop.f32.mrf.mxu0
        %v1927 = vpop.f32.mrf.mxu0
        %v1928 = vadd.f32 %v1863, %v1927
        %v1929 = vpop.f32.mrf.mxu0
        %1930 = vmatprep.mubr.bf16.mxu0 %v1272
        %1931 = vmatmul.mubr.bf16.gmra.mxu0 %v1271
        %v1932 = vpop.f32.mrf.mxu0
        %v1933 = vadd.f32 %v1868, %v1932
        %v1934 = vpop.f32.mrf.mxu0
        %v1935 = vpop.f32.mrf.mxu0
        %v1936 = vadd.f32 %v1871, %v1935
        %v1937 = vpop.f32.mrf.mxu0
        %1938 = vdwg.mxu0
        %1939 = vmatprep.subr.bf16.mxu0 0
        %1940 = vmatpush1.bf16.msra.mxu0 %v1655
        %1941 = vmatprep.subr.bf16.mxu0 0
        %1942 = vmatpush1.bf16.msra.mxu0 %v1654
        %1943 = vmatprep.subr.bf16.mxu0 0
        %1944 = vmatpush1.bf16.msra.mxu0 %v1653
        %1945 = vmatprep.subr.bf16.mxu0 0
        %1946 = vmatpush1.bf16.msra.mxu0 %v1652
        %1947 = vmatprep.subr.bf16.mxu0 0
        %1948 = vmatpush1.bf16.msra.mxu0 %v1651
        %1949 = vmatprep.subr.bf16.mxu0 0
        %1950 = vmatpush1.bf16.msra.mxu0 %v1650
        %1951 = vmatprep.subr.bf16.mxu0 0
        %1952 = vmatpush1.bf16.msra.mxu0 %v1649
        %1953 = vmatprep.subr.bf16.mxu0 0
        %1954 = vmatpush1.bf16.msra.mxu0 %v1648
        %1955 = vmatprep.subr.bf16.mxu0 0
        %1956 = vmatpush2.bf16.msra.mxu0 %v1663
        %1957 = vmatprep.subr.bf16.mxu0 0
        %1958 = vmatpush2.bf16.msra.mxu0 %v1662
        %1959 = vmatprep.subr.bf16.mxu0 0
        %1960 = vmatpush2.bf16.msra.mxu0 %v1661
        %1961 = vmatprep.subr.bf16.mxu0 0
        %1962 = vmatpush2.bf16.msra.mxu0 %v1660
        %1963 = vmatprep.subr.bf16.mxu0 0
        %1964 = vmatpush2.bf16.msra.mxu0 %v1659
        %1965 = vmatprep.subr.bf16.mxu0 0
        %1966 = vmatpush2.bf16.msra.mxu0 %v1658
        %1967 = vmatprep.subr.bf16.mxu0 0
        %1968 = vmatpush2.bf16.msra.mxu0 %v1657
        %1969 = vmatprep.subr.bf16.mxu0 0
        %1970 = vmatpush2.bf16.msra.mxu0 %v1656
        %1971 = vmatprep.mubr.bf16.mxu0 %v1247
        %1972 = vmatmul.mubr.bf16.gmra.mxu0 %v1246
        %v1973 = vpop.f32.mrf.mxu0
        %v1974 = vadd.f32 %v1909, %v1973
        %v1975 = vpop.f32.mrf.mxu0
        %v1976 = vpop.f32.mrf.mxu0
        %v1977 = vadd.f32 %v1912, %v1976
        %v1978 = vpop.f32.mrf.mxu0
        %1979 = vmatprep.mubr.bf16.mxu0 %v1256
        %1980 = vmatmul.mubr.bf16.gmra.mxu0 %v1255
        %v1981 = vpop.f32.mrf.mxu0
        %v1982 = vadd.f32 %v1917, %v1981
        %v1983 = vpop.f32.mrf.mxu0
        %v1984 = vpop.f32.mrf.mxu0
        %v1985 = vadd.f32 %v1920, %v1984
        %v1986 = vpop.f32.mrf.mxu0
        %1987 = vmatprep.mubr.bf16.mxu0 %v1265
        %1988 = vmatmul.mubr.bf16.gmra.mxu0 %v1264
        %v1989 = vpop.f32.mrf.mxu0
        %v1990 = vadd.f32 %v1925, %v1989
        %v1991 = vpop.f32.mrf.mxu0
        %v1992 = vpop.f32.mrf.mxu0
        %v1993 = vadd.f32 %v1928, %v1992
        %v1994 = vpop.f32.mrf.mxu0
        %1995 = vmatprep.mubr.bf16.mxu0 %v1274
        %1996 = vmatmul.mubr.bf16.gmra.mxu0 %v1273
        %v1997 = vpop.f32.mrf.mxu0
        %v1998 = vadd.f32 %v1933, %v1997
        %v1999 = vpop.f32.mrf.mxu0
        %v2000 = vpop.f32.mrf.mxu0
        %v2001 = vadd.f32 %v1936, %v2000
        %v2002 = vpop.f32.mrf.mxu0
        %2003 = vdwg.mxu0
        %2004 = vmatprep.subr.bf16.mxu0 0
        %2005 = vmatpush1.bf16.msra.mxu0 %v1671
        %2006 = vmatprep.subr.bf16.mxu0 0
        %2007 = vmatpush1.bf16.msra.mxu0 %v1670
        %2008 = vmatprep.subr.bf16.mxu0 0
        %2009 = vmatpush1.bf16.msra.mxu0 %v1669
        %2010 = vmatprep.subr.bf16.mxu0 0
        %2011 = vmatpush1.bf16.msra.mxu0 %v1668
        %2012 = vmatprep.subr.bf16.mxu0 0
        %2013 = vmatpush1.bf16.msra.mxu0 %v1667
        %2014 = vmatprep.subr.bf16.mxu0 0
        %2015 = vmatpush1.bf16.msra.mxu0 %v1666
        %2016 = vmatprep.subr.bf16.mxu0 0
        %2017 = vmatpush1.bf16.msra.mxu0 %v1665
        %2018 = vmatprep.subr.bf16.mxu0 0
        %2019 = vmatpush1.bf16.msra.mxu0 %v1664
        %2020 = vmatprep.subr.bf16.mxu0 0
        %2021 = vmatpush2.bf16.msra.mxu0 0
        %2022 = vmatprep.subr.bf16.mxu0 0
        %2023 = vmatpush2.bf16.msra.mxu0 0
        %2024 = vmatprep.subr.bf16.mxu0 0
        %2025 = vmatpush2.bf16.msra.mxu0 0
        %2026 = vmatprep.subr.bf16.mxu0 0
        %2027 = vmatpush2.bf16.msra.mxu0 0
        %2028 = vmatprep.subr.bf16.mxu0 0
        %2029 = vmatpush2.bf16.msra.mxu0 0
        %2030 = vmatprep.subr.bf16.mxu0 0
        %2031 = vmatpush2.bf16.msra.mxu0 0
        %2032 = vmatprep.subr.bf16.mxu0 0
        %2033 = vmatpush2.bf16.msra.mxu0 0
        %2034 = vmatprep.subr.bf16.mxu0 0
        %2035 = vmatpush2.bf16.msra.mxu0 0
        %2036 = vmatprep.mubr.bf16.mxu0 0
        %2037 = vmatmul.mubr.bf16.gmra.mxu0 %v1248
        %v2038 = vpop.f32.mrf.mxu0
        %v2039 = vadd.f32 %v1974, %v2038
        %v2040 = vpop.f32.mrf.mxu0
        %v2041 = vpop.f32.mrf.mxu0
        %v2042 = vadd.f32 %v1977, %v2041
        %v2043 = vpop.f32.mrf.mxu0
        %2044 = vmatprep.mubr.bf16.mxu0 0
        %2045 = vmatmul.mubr.bf16.gmra.mxu0 %v1257
        %v2046 = vpop.f32.mrf.mxu0
        %v2047 = vadd.f32 %v1982, %v2046
        %v2048 = vpop.f32.mrf.mxu0
        %v2049 = vpop.f32.mrf.mxu0
        %v2050 = vadd.f32 %v1985, %v2049
        %v2051 = vpop.f32.mrf.mxu0
        %2052 = vmatprep.mubr.bf16.mxu0 0
        %2053 = vmatmul.mubr.bf16.gmra.mxu0 %v1266
        %v2054 = vpop.f32.mrf.mxu0
        %v2055 = vadd.f32 %v1990, %v2054
        %v2056 = vpop.f32.mrf.mxu0
        %v2057 = vpop.f32.mrf.mxu0
        %v2058 = vadd.f32 %v1993, %v2057
        %v2059 = vpop.f32.mrf.mxu0
        %2060 = vmatprep.mubr.bf16.mxu0 0
        %2061 = vmatmul.mubr.bf16.gmra.mxu0 %v1275
        %v2062 = vpop.f32.mrf.mxu0
        %v2063 = vadd.f32 %v1998, %v2062
        %v2064 = vpop.f32.mrf.mxu0
        %v2065 = vpop.f32.mrf.mxu0
        %v2066 = vadd.f32 %v2001, %v2065
        %v2067 = vpop.f32.mrf.mxu0
        %2068 = vdwg.mxu0
        %v2069 = vadd.f32 %v2039, %v2042
        %v2070 = vadd.f32 %v2069, %v2047
        %v2071 = vadd.f32 %v2070, %v2050
        %v2072 = vadd.f32 %v2071, %v2055
        %v2073 = vadd.f32 %v2072, %v2058
        %v2074 = vadd.f32 %v2073, %v2063
        %v2075 = vadd.f32 %v2074, %v2066
        %v2076 = vrot.slane %v2075, 4
        %v2077 = vadd.f32 %v2075, %v2076
        %v2078 = vrot.slane %v2077, 2
        %v2079 = vadd.f32 %v2077, %v2078
        %v2080 = vrot.slane %v2079, 1
        %v2081 = vadd.f32 %v2079, %v2080
        %v2082 = vmul.f32 %v2039, %v2039
        %v2083 = vmul.f32 %v2042, %v2042
        %v2084 = vmul.f32 %v2047, %v2047
        %v2085 = vmul.f32 %v2050, %v2050
        %v2086 = vmul.f32 %v2055, %v2055
        %v2087 = vmul.f32 %v2058, %v2058
        %v2088 = vmul.f32 %v2063, %v2063
        %v2089 = vmul.f32 %v2066, %v2066
        %v2090 = vadd.f32 %v2082, %v2083
        %v2091 = vadd.f32 %v2090, %v2084
        %v2092 = vadd.f32 %v2091, %v2085
        %v2093 = vadd.f32 %v2092, %v2086
        %v2094 = vadd.f32 %v2093, %v2087
        %v2095 = vadd.f32 %v2094, %v2088
        %v2096 = vadd.f32 %v2095, %v2089
        %v2097 = vrot.slane %v2096, 4
        %v2098 = vadd.f32 %v2096, %v2097
        %v2099 = vrot.slane %v2098, 2
        %v2100 = vadd.f32 %v2098, %v2099
        %v2101 = vrot.slane %v2100, 1
        %v2102 = vadd.f32 %v2100, %v2101
        %vm2103 = vcmask 1040384
        %v2104 = vsel %vm2103, %v2081, 0.0
        %2105 = vadd.xlane.f32.xlu0 %v2104
        %v2106 = vpop.xlane.xlu0 %2105
        %v2107 = vrot.slane %v2106, 4
        %v2108 = vadd.f32 %v2106, %v2107
        %v2109 = vrot.slane %v2108, 2
        %v2110 = vadd.f32 %v2108, %v2109
        %v2111 = vrot.slane %v2110, 1
        %v2112 = vadd.f32 %v2110, %v2111
        %s2113 = vtos %v2112
        %s2114 = smul.f32 %s2113, 0.00012207031
        %v2115 = vsel %vm2103, %v2102, 0.0
        %2116 = vadd.xlane.f32.xlu0 %v2115
        %v2117 = vpop.xlane.xlu0 %2116
        %v2118 = vrot.slane %v2117, 4
        %v2119 = vadd.f32 %v2117, %v2118
        %v2120 = vrot.slane %v2119, 2
        %v2121 = vadd.f32 %v2119, %v2120
        %v2122 = vrot.slane %v2121, 1
        %v2123 = vadd.f32 %v2121, %v2122
        %s2124 = vtos %v2123
        %s2125 = smul.f32 %s2124, 0.00012207031
        %s2126 = smul.f32 %s2114, %s2114
        %s2127 = ssub.f32 %s2125, %s2126
        %s2128 = smax.f32 %s2127, 0.0
        %v2129 = vstv %s2114
        %v2130 = vsub.f32 %v2039, %v2129
        %v2131 = vsub.f32 %v2042, %v2129
        %v2132 = vsub.f32 %v2047, %v2129
        %v2133 = vsub.f32 %v2050, %v2129
        %v2134 = vsub.f32 %v2055, %v2129
        %v2135 = vsub.f32 %v2058, %v2129
        %v2136 = vsub.f32 %v2063, %v2129
        %v2137 = vsub.f32 %v2066, %v2129
        %s2138 = sadd.f32 %s2128, 1e-05
        %v2139 = vstv %s2138
        %v2140 = vrsqrt.pop %v2139
        %s2141 = vtos %v2140
        %v2142 = vstv %s2141
        %v2143 = vmul.f32 %v2130, %v2142
        %v2144 = vmul.f32 %v2131, %v2142
        %v2145 = vmul.f32 %v2132, %v2142
        %v2146 = vmul.f32 %v2133, %v2142
        %v2147 = vmul.f32 %v2134, %v2142
        %v2148 = vmul.f32 %v2135, %v2142
        %v2149 = vmul.f32 %v2136, %v2142
        %v2150 = vmul.f32 %v2137, %v2142
        %v2151 = vld [vmem:[#allocation11] sm:$0xf]
        %v2152 = vld [vmem:[#allocation11 + $0x4] sm:$0xf]
        %v2153 = vld [vmem:[#allocation11 + $0x8] sm:$0xf]
        %v2154 = vld [vmem:[#allocation11 + $0xc] sm:$0xf]
        %v2155 = vld [vmem:[#allocation11 + $0x10] sm:$0xf]
        %v2156 = vld [vmem:[#allocation11 + $0x14] sm:$0xf]
        %v2157 = vld [vmem:[#allocation11 + $0x18] sm:$0xf]
        %v2158 = vld [vmem:[#allocation11 + $0x1c] sm:$0xf]
        %v2159 = vunpack.c.l.bf16 %v2151
        %v2160 = vunpack.c.l.bf16 %v2152
        %v2161 = vunpack.c.l.bf16 %v2153
        %v2162 = vunpack.c.l.bf16 %v2154
        %v2163 = vunpack.c.l.bf16 %v2155
        %v2164 = vunpack.c.l.bf16 %v2156
        %v2165 = vunpack.c.l.bf16 %v2157
        %v2166 = vunpack.c.l.bf16 %v2158
        %v2167 = vmul.f32 %v2143, %v2159
        %v2168 = vmul.f32 %v2144, %v2160
        %v2169 = vmul.f32 %v2145, %v2161
        %v2170 = vmul.f32 %v2146, %v2162
        %v2171 = vmul.f32 %v2147, %v2163
        %v2172 = vmul.f32 %v2148, %v2164
        %v2173 = vmul.f32 %v2149, %v2165
        %v2174 = vmul.f32 %v2150, %v2166
        %v2175 = vld [vmem:[#allocation13] sm:$0xf]
        %v2176 = vld [vmem:[#allocation13 + $0x4] sm:$0xf]
        %v2177 = vld [vmem:[#allocation13 + $0x8] sm:$0xf]
        %v2178 = vld [vmem:[#allocation13 + $0xc] sm:$0xf]
        %v2179 = vld [vmem:[#allocation13 + $0x10] sm:$0xf]
        %v2180 = vld [vmem:[#allocation13 + $0x14] sm:$0xf]
        %v2181 = vld [vmem:[#allocation13 + $0x18] sm:$0xf]
        %v2182 = vld [vmem:[#allocation13 + $0x1c] sm:$0xf]
        %v2183 = vunpack.c.l.bf16 %v2175
        %v2184 = vunpack.c.l.bf16 %v2176
        %v2185 = vunpack.c.l.bf16 %v2177
        %v2186 = vunpack.c.l.bf16 %v2178
        %v2187 = vunpack.c.l.bf16 %v2179
        %v2188 = vunpack.c.l.bf16 %v2180
        %v2189 = vunpack.c.l.bf16 %v2181
        %v2190 = vunpack.c.l.bf16 %v2182
        %v2191 = vadd.f32 %v2167, %v2183
        %v2192 = vadd.f32 %v2168, %v2184
        %v2193 = vadd.f32 %v2169, %v2185
        %v2194 = vadd.f32 %v2170, %v2186
        %v2195 = vadd.f32 %v2171, %v2187
        %v2196 = vadd.f32 %v2172, %v2188
        %v2197 = vadd.f32 %v2173, %v2189
        %v2198 = vadd.f32 %v2174, %v2190
        %v2199 = vmax.f32 %v2191, 0.0
        %v2200 = vmax.f32 %v2192, 0.0
        %v2201 = vmax.f32 %v2193, 0.0
        %v2202 = vmax.f32 %v2194, 0.0
        %v2203 = vmax.f32 %v2195, 0.0
        %v2204 = vmax.f32 %v2196, 0.0
        %v2205 = vmax.f32 %v2197, 0.0
        %v2206 = vmax.f32 %v2198, 0.0
        %s2207 = scalar_lea.vmem [#allocation3], 24
        %2208 = vst [vmem:[%s2207 + $0x1] sm:$0xff] %v2199
        %2209 = vst [vmem:[%s2207 + $0x9] sm:$0xff] %v2200
        %2210 = vst [vmem:[%s2207 + $0x19] sm:$0xff] %v2201
        %2211 = vst [vmem:[%s2207 + $0x21] sm:$0xff] %v2202
        %2212 = vst [vmem:[%s2207 + $0x31] sm:$0xff] %v2203
        %2213 = vst [vmem:[%s2207 + $0x39] sm:$0xff] %v2204
        %2214 = vst [vmem:[%s2207 + $0x49] sm:$0xff] %v2205
        %2215 = vst [vmem:[%s2207 + $0x51] sm:$0xff] %v2206
        %v2216 = vld [vmem:[#allocation3] sm:$0xff]
        %v2217 = vld [vmem:[#allocation3 + $0x8] sm:$0xff]
        %v2218 = vld [vmem:[#allocation3 + $0x18] sm:$0xff]
        %v2219 = vld [vmem:[#allocation3 + $0x20] sm:$0xff]
        %v2220 = vld [vmem:[#allocation3 + $0x30] sm:$0xff]
        %v2221 = vld [vmem:[#allocation3 + $0x38] sm:$0xff]
        %v2222 = vld [vmem:[#allocation3 + $0x48] sm:$0xff]
        %v2223 = vld [vmem:[#allocation3 + $0x50] sm:$0xff]
        %v2224 = vld [vmem:[#allocation3 + $0x60] sm:$0xff]
        %v2225 = vld [vmem:[#allocation3 + $0x68] sm:$0xff]
        %v2226 = vld [vmem:[#allocation3 + $0x78] sm:$0xff]
        %v2227 = vld [vmem:[#allocation3 + $0x80] sm:$0xff]
        %v2228 = vpack.c.bf16 %v2217, %v2216
        %v2229 = vpack.c.bf16 %v2219, %v2218
        %v2230 = vpack.c.bf16 %v2221, %v2220
        %v2231 = vpack.c.bf16 %v2223, %v2222
        %v2232 = vpack.c.bf16 %v2225, %v2224
        %v2233 = vpack.c.bf16 %v2227, %v2226
        %2238 = vrot.lane.b32.xlu0 %v2228, 32
        %v2239 = vpop.permute.xlu0 %2238
        %2240 = vrot.lane.b32.xlu0 %v2229, 32
        %v2241 = vpop.permute.xlu0 %2240
        %2242 = vrot.lane.b32.xlu0 %v2230, 32
        %v2243 = vpop.permute.xlu0 %2242
        %2244 = vrot.lane.b32.xlu0 %v2231, 32
        %v2245 = vpop.permute.xlu0 %2244
        %2247 = vrot.lane.b32.xlu0 %v2232, 32
        %v2248 = vpop.permute.xlu0 %2247
        %v2251 = vsel %vm470, %v2239, %v2241
        %v2253 = vsel %vm470, %v2241, %v2243
        %v2255 = vsel %vm470, %v2243, %v2245
        %v2257 = vsel %vm470, %v2245, %v2248
        %2258 = vrot.lane.b32.xlu0 %v2229, 96
        %v2259 = vpop.permute.xlu0 %2258
        %2260 = vrot.lane.b32.xlu0 %v2230, 96
        %v2261 = vpop.permute.xlu0 %2260
        %2262 = vrot.lane.b32.xlu0 %v2231, 96
        %v2263 = vpop.permute.xlu0 %2262
        %2264 = vrot.lane.b32.xlu0 %v2232, 96
        %v2265 = vpop.permute.xlu0 %2264
        %2267 = vrot.lane.b32.xlu0 %v2233, 96
        %v2268 = vpop.permute.xlu0 %2267
        %v2271 = vsel %vm491, %v2259, %v2261
        %v2273 = vsel %vm491, %v2261, %v2263
        %v2275 = vsel %vm491, %v2263, %v2265
        %v2277 = vsel %vm491, %v2265, %v2268
        %v2282 = vunpack.c.l.b16 %v2251
        %v2283 = vunpack.c.h.b16 %v2251
        %v2284 = vunpack.c.l.b16 %v2253
        %v2285 = vunpack.c.h.b16 %v2253
        %v2286 = vunpack.c.l.b16 %v2255
        %v2287 = vunpack.c.h.b16 %v2255
        %v2288 = vunpack.c.l.b16 %v2257
        %v2289 = vunpack.c.h.b16 %v2257
        %v2290 = vpack.c.b16 %v2282, %v2282
        %v2291 = vpack.c.b16 %v2283, %v2283
        %v2292 = vpack.c.b16 %v2284, %v2284
        %v2293 = vpack.c.b16 %v2285, %v2285
        %v2294 = vpack.c.b16 %v2286, %v2286
        %v2295 = vpack.c.b16 %v2287, %v2287
        %v2296 = vpack.c.b16 %v2288, %v2288
        %v2297 = vpack.c.b16 %v2289, %v2289
        %2306 = vst [vmem:[#allocation4] sm:$0xf] %v2290
        %2307 = vst [vmem:[#allocation4 + $0x24] sm:$0xf] %v2291
        %2308 = vst [vmem:[#allocation4 + $0x48] sm:$0xf] %v2292
        %2309 = vst [vmem:[#allocation4 + $0x6c] sm:$0xf] %v2293
        %2310 = vst [vmem:[#allocation4 + $0x90] sm:$0xf] %v2294
        %2311 = vst [vmem:[#allocation4 + $0xb4] sm:$0xf] %v2295
        %2312 = vst [vmem:[#allocation4 + $0xd8] sm:$0xf] %v2296
        %2313 = vst [vmem:[#allocation4 + $0xfc] sm:$0xf] %v2297
        %v2314 = vunpack.c.l.b16 %v2229
        %v2315 = vunpack.c.h.b16 %v2229
        %v2316 = vunpack.c.l.b16 %v2230
        %v2317 = vunpack.c.h.b16 %v2230
        %v2318 = vunpack.c.l.b16 %v2231
        %v2319 = vunpack.c.h.b16 %v2231
        %v2320 = vunpack.c.l.b16 %v2232
        %v2321 = vunpack.c.h.b16 %v2232
        %v2322 = vpack.c.b16 %v2314, %v2314
        %v2323 = vpack.c.b16 %v2315, %v2315
        %v2324 = vpack.c.b16 %v2316, %v2316
        %v2325 = vpack.c.b16 %v2317, %v2317
        %v2326 = vpack.c.b16 %v2318, %v2318
        %v2327 = vpack.c.b16 %v2319, %v2319
        %v2328 = vpack.c.b16 %v2320, %v2320
        %v2329 = vpack.c.b16 %v2321, %v2321
        %2338 = vst [vmem:[#allocation4 + $0x4] sm:$0xf] %v2322
        %2339 = vst [vmem:[#allocation4 + $0x28] sm:$0xf] %v2323
        %2340 = vst [vmem:[#allocation4 + $0x4c] sm:$0xf] %v2324
        %2341 = vst [vmem:[#allocation4 + $0x70] sm:$0xf] %v2325
        %2342 = vst [vmem:[#allocation4 + $0x94] sm:$0xf] %v2326
        %2343 = vst [vmem:[#allocation4 + $0xb8] sm:$0xf] %v2327
        %2344 = vst [vmem:[#allocation4 + $0xdc] sm:$0xf] %v2328
        %2345 = vst [vmem:[#allocation4 + $0x100] sm:$0xf] %v2329
        %v2350 = vunpack.c.l.b16 %v2271
        %v2351 = vunpack.c.h.b16 %v2271
        %v2352 = vunpack.c.l.b16 %v2273
        %v2353 = vunpack.c.h.b16 %v2273
        %v2354 = vunpack.c.l.b16 %v2275
        %v2355 = vunpack.c.h.b16 %v2275
        %v2356 = vunpack.c.l.b16 %v2277
        %v2357 = vunpack.c.h.b16 %v2277
        %v2358 = vpack.c.b16 %v2350, %v2350
        %v2359 = vpack.c.b16 %v2351, %v2351
        %v2360 = vpack.c.b16 %v2352, %v2352
        %v2361 = vpack.c.b16 %v2353, %v2353
        %v2362 = vpack.c.b16 %v2354, %v2354
        %v2363 = vpack.c.b16 %v2355, %v2355
        %v2364 = vpack.c.b16 %v2356, %v2356
        %v2365 = vpack.c.b16 %v2357, %v2357
        %2374 = vst [vmem:[#allocation4 + $0x8] sm:$0xf] %v2358
        %2375 = vst [vmem:[#allocation4 + $0x2c] sm:$0xf] %v2359
        %2376 = vst [vmem:[#allocation4 + $0x50] sm:$0xf] %v2360
        %2377 = vst [vmem:[#allocation4 + $0x74] sm:$0xf] %v2361
        %2378 = vst [vmem:[#allocation4 + $0x98] sm:$0xf] %v2362
        %2379 = vst [vmem:[#allocation4 + $0xbc] sm:$0xf] %v2363
        %2380 = vst [vmem:[#allocation4 + $0xe0] sm:$0xf] %v2364
        %2381 = vst [vmem:[#allocation4 + $0x104] sm:$0xf] %v2365
        %v2382 = vld [vmem:[#allocation3 + $0x1] sm:$0xff]
        %v2383 = vld [vmem:[#allocation3 + $0x9] sm:$0xff]
        %v2384 = vld [vmem:[#allocation3 + $0x19] sm:$0xff]
        %v2385 = vld [vmem:[#allocation3 + $0x21] sm:$0xff]
        %v2386 = vld [vmem:[#allocation3 + $0x31] sm:$0xff]
        %v2387 = vld [vmem:[#allocation3 + $0x39] sm:$0xff]
        %v2388 = vld [vmem:[#allocation3 + $0x49] sm:$0xff]
        %v2389 = vld [vmem:[#allocation3 + $0x51] sm:$0xff]
        %v2390 = vld [vmem:[#allocation3 + $0x61] sm:$0xff]
        %v2391 = vld [vmem:[#allocation3 + $0x69] sm:$0xff]
        %v2392 = vld [vmem:[#allocation3 + $0x79] sm:$0xff]
        %v2393 = vld [vmem:[#allocation3 + $0x81] sm:$0xff]
        %v2394 = vpack.c.bf16 %v2383, %v2382
        %v2395 = vpack.c.bf16 %v2385, %v2384
        %v2396 = vpack.c.bf16 %v2387, %v2386
        %v2397 = vpack.c.bf16 %v2389, %v2388
        %v2398 = vpack.c.bf16 %v2391, %v2390
        %v2399 = vpack.c.bf16 %v2393, %v2392
        %2404 = vrot.lane.b32.xlu0 %v2394, 32
        %v2405 = vpop.permute.xlu0 %2404
        %2406 = vrot.lane.b32.xlu0 %v2395, 32
        %v2407 = vpop.permute.xlu0 %2406
        %2408 = vrot.lane.b32.xlu0 %v2396, 32
        %v2409 = vpop.permute.xlu0 %2408
        %2410 = vrot.lane.b32.xlu0 %v2397, 32
        %v2411 = vpop.permute.xlu0 %2410
        %2413 = vrot.lane.b32.xlu0 %v2398, 32
        %v2414 = vpop.permute.xlu0 %2413
        %v2417 = vsel %vm470, %v2405, %v2407
        %v2419 = vsel %vm470, %v2407, %v2409
        %v2421 = vsel %vm470, %v2409, %v2411
        %v2423 = vsel %vm470, %v2411, %v2414
        %2424 = vrot.lane.b32.xlu0 %v2395, 96
        %v2425 = vpop.permute.xlu0 %2424
        %2426 = vrot.lane.b32.xlu0 %v2396, 96
        %v2427 = vpop.permute.xlu0 %2426
        %2428 = vrot.lane.b32.xlu0 %v2397, 96
        %v2429 = vpop.permute.xlu0 %2428
        %2430 = vrot.lane.b32.xlu0 %v2398, 96
        %v2431 = vpop.permute.xlu0 %2430
        %2433 = vrot.lane.b32.xlu0 %v2399, 96
        %v2434 = vpop.permute.xlu0 %2433
        %v2437 = vsel %vm491, %v2425, %v2427
        %v2439 = vsel %vm491, %v2427, %v2429
        %v2441 = vsel %vm491, %v2429, %v2431
        %v2443 = vsel %vm491, %v2431, %v2434
        %v2448 = vunpack.c.l.b16 %v2417
        %v2449 = vunpack.c.h.b16 %v2417
        %v2450 = vunpack.c.l.b16 %v2419
        %v2451 = vunpack.c.h.b16 %v2419
        %v2452 = vunpack.c.l.b16 %v2421
        %v2453 = vunpack.c.h.b16 %v2421
        %v2454 = vunpack.c.l.b16 %v2423
        %v2455 = vunpack.c.h.b16 %v2423
        %v2456 = vpack.c.b16 %v2448, %v2448
        %v2457 = vpack.c.b16 %v2449, %v2449
        %v2458 = vpack.c.b16 %v2450, %v2450
        %v2459 = vpack.c.b16 %v2451, %v2451
        %v2460 = vpack.c.b16 %v2452, %v2452
        %v2461 = vpack.c.b16 %v2453, %v2453
        %v2462 = vpack.c.b16 %v2454, %v2454
        %v2463 = vpack.c.b16 %v2455, %v2455
        %2472 = vst [vmem:[#allocation4 + $0xc] sm:$0xf] %v2456
        %2473 = vst [vmem:[#allocation4 + $0x30] sm:$0xf] %v2457
        %2474 = vst [vmem:[#allocation4 + $0x54] sm:$0xf] %v2458
        %2475 = vst [vmem:[#allocation4 + $0x78] sm:$0xf] %v2459
        %2476 = vst [vmem:[#allocation4 + $0x9c] sm:$0xf] %v2460
        %2477 = vst [vmem:[#allocation4 + $0xc0] sm:$0xf] %v2461
        %2478 = vst [vmem:[#allocation4 + $0xe4] sm:$0xf] %v2462
        %2479 = vst [vmem:[#allocation4 + $0x108] sm:$0xf] %v2463
        %v2480 = vunpack.c.l.b16 %v2395
        %v2481 = vunpack.c.h.b16 %v2395
        %v2482 = vunpack.c.l.b16 %v2396
        %v2483 = vunpack.c.h.b16 %v2396
        %v2484 = vunpack.c.l.b16 %v2397
        %v2485 = vunpack.c.h.b16 %v2397
        %v2486 = vunpack.c.l.b16 %v2398
        %v2487 = vunpack.c.h.b16 %v2398
        %v2488 = vpack.c.b16 %v2480, %v2480
        %v2489 = vpack.c.b16 %v2481, %v2481
        %v2490 = vpack.c.b16 %v2482, %v2482
        %v2491 = vpack.c.b16 %v2483, %v2483
        %v2492 = vpack.c.b16 %v2484, %v2484
        %v2493 = vpack.c.b16 %v2485, %v2485
        %v2494 = vpack.c.b16 %v2486, %v2486
        %v2495 = vpack.c.b16 %v2487, %v2487
        %2504 = vst [vmem:[#allocation4 + $0x10] sm:$0xf] %v2488
        %2505 = vst [vmem:[#allocation4 + $0x34] sm:$0xf] %v2489
        %2506 = vst [vmem:[#allocation4 + $0x58] sm:$0xf] %v2490
        %2507 = vst [vmem:[#allocation4 + $0x7c] sm:$0xf] %v2491
        %2508 = vst [vmem:[#allocation4 + $0xa0] sm:$0xf] %v2492
        %2509 = vst [vmem:[#allocation4 + $0xc4] sm:$0xf] %v2493
        %2510 = vst [vmem:[#allocation4 + $0xe8] sm:$0xf] %v2494
        %2511 = vst [vmem:[#allocation4 + $0x10c] sm:$0xf] %v2495
        %v2516 = vunpack.c.l.b16 %v2437
        %v2517 = vunpack.c.h.b16 %v2437
        %v2518 = vunpack.c.l.b16 %v2439
        %v2519 = vunpack.c.h.b16 %v2439
        %v2520 = vunpack.c.l.b16 %v2441
        %v2521 = vunpack.c.h.b16 %v2441
        %v2522 = vunpack.c.l.b16 %v2443
        %v2523 = vunpack.c.h.b16 %v2443
        %v2524 = vpack.c.b16 %v2516, %v2516
        %v2525 = vpack.c.b16 %v2517, %v2517
        %v2526 = vpack.c.b16 %v2518, %v2518
        %v2527 = vpack.c.b16 %v2519, %v2519
        %v2528 = vpack.c.b16 %v2520, %v2520
        %v2529 = vpack.c.b16 %v2521, %v2521
        %v2530 = vpack.c.b16 %v2522, %v2522
        %v2531 = vpack.c.b16 %v2523, %v2523
        %2540 = vst [vmem:[#allocation4 + $0x14] sm:$0xf] %v2524
        %2541 = vst [vmem:[#allocation4 + $0x38] sm:$0xf] %v2525
        %2542 = vst [vmem:[#allocation4 + $0x5c] sm:$0xf] %v2526
        %2543 = vst [vmem:[#allocation4 + $0x80] sm:$0xf] %v2527
        %2544 = vst [vmem:[#allocation4 + $0xa4] sm:$0xf] %v2528
        %2545 = vst [vmem:[#allocation4 + $0xc8] sm:$0xf] %v2529
        %2546 = vst [vmem:[#allocation4 + $0xec] sm:$0xf] %v2530
        %2547 = vst [vmem:[#allocation4 + $0x110] sm:$0xf] %v2531
        %v2548 = vld [vmem:[#allocation3 + $0x2] sm:$0xff]
        %v2549 = vld [vmem:[#allocation3 + $0xa] sm:$0xff]
        %v2550 = vld [vmem:[#allocation3 + $0x1a] sm:$0xff]
        %v2551 = vld [vmem:[#allocation3 + $0x22] sm:$0xff]
        %v2552 = vld [vmem:[#allocation3 + $0x32] sm:$0xff]
        %v2553 = vld [vmem:[#allocation3 + $0x3a] sm:$0xff]
        %v2554 = vld [vmem:[#allocation3 + $0x4a] sm:$0xff]
        %v2555 = vld [vmem:[#allocation3 + $0x52] sm:$0xff]
        %v2556 = vld [vmem:[#allocation3 + $0x62] sm:$0xff]
        %v2557 = vld [vmem:[#allocation3 + $0x6a] sm:$0xff]
        %v2558 = vld [vmem:[#allocation3 + $0x7a] sm:$0xff]
        %v2559 = vld [vmem:[#allocation3 + $0x82] sm:$0xff]
        %v2560 = vpack.c.bf16 %v2549, %v2548
        %v2561 = vpack.c.bf16 %v2551, %v2550
        %v2562 = vpack.c.bf16 %v2553, %v2552
        %v2563 = vpack.c.bf16 %v2555, %v2554
        %v2564 = vpack.c.bf16 %v2557, %v2556
        %v2565 = vpack.c.bf16 %v2559, %v2558
        %2570 = vrot.lane.b32.xlu0 %v2560, 32
        %v2571 = vpop.permute.xlu0 %2570
        %2572 = vrot.lane.b32.xlu0 %v2561, 32
        %v2573 = vpop.permute.xlu0 %2572
        %2574 = vrot.lane.b32.xlu0 %v2562, 32
        %v2575 = vpop.permute.xlu0 %2574
        %2576 = vrot.lane.b32.xlu0 %v2563, 32
        %v2577 = vpop.permute.xlu0 %2576
        %2579 = vrot.lane.b32.xlu0 %v2564, 32
        %v2580 = vpop.permute.xlu0 %2579
        %v2583 = vsel %vm470, %v2571, %v2573
        %v2585 = vsel %vm470, %v2573, %v2575
        %v2587 = vsel %vm470, %v2575, %v2577
        %v2589 = vsel %vm470, %v2577, %v2580
        %2590 = vrot.lane.b32.xlu0 %v2561, 96
        %v2591 = vpop.permute.xlu0 %2590
        %2592 = vrot.lane.b32.xlu0 %v2562, 96
        %v2593 = vpop.permute.xlu0 %2592
        %2594 = vrot.lane.b32.xlu0 %v2563, 96
        %v2595 = vpop.permute.xlu0 %2594
        %2596 = vrot.lane.b32.xlu0 %v2564, 96
        %v2597 = vpop.permute.xlu0 %2596
        %2599 = vrot.lane.b32.xlu0 %v2565, 96
        %v2600 = vpop.permute.xlu0 %2599
        %v2603 = vsel %vm491, %v2591, %v2593
        %v2605 = vsel %vm491, %v2593, %v2595
        %v2607 = vsel %vm491, %v2595, %v2597
        %v2609 = vsel %vm491, %v2597, %v2600
        %v2614 = vunpack.c.l.b16 %v2583
        %v2615 = vunpack.c.h.b16 %v2583
        %v2616 = vunpack.c.l.b16 %v2585
        %v2617 = vunpack.c.h.b16 %v2585
        %v2618 = vunpack.c.l.b16 %v2587
        %v2619 = vunpack.c.h.b16 %v2587
        %v2620 = vunpack.c.l.b16 %v2589
        %v2621 = vunpack.c.h.b16 %v2589
        %v2622 = vpack.c.b16 %v2614, %v2614
        %v2623 = vpack.c.b16 %v2615, %v2615
        %v2624 = vpack.c.b16 %v2616, %v2616
        %v2625 = vpack.c.b16 %v2617, %v2617
        %v2626 = vpack.c.b16 %v2618, %v2618
        %v2627 = vpack.c.b16 %v2619, %v2619
        %v2628 = vpack.c.b16 %v2620, %v2620
        %v2629 = vpack.c.b16 %v2621, %v2621
        %2638 = vst [vmem:[#allocation4 + $0x18] sm:$0xf] %v2622
        %2639 = vst [vmem:[#allocation4 + $0x3c] sm:$0xf] %v2623
        %2640 = vst [vmem:[#allocation4 + $0x60] sm:$0xf] %v2624
        %2641 = vst [vmem:[#allocation4 + $0x84] sm:$0xf] %v2625
        %2642 = vst [vmem:[#allocation4 + $0xa8] sm:$0xf] %v2626
        %2643 = vst [vmem:[#allocation4 + $0xcc] sm:$0xf] %v2627
        %2644 = vst [vmem:[#allocation4 + $0xf0] sm:$0xf] %v2628
        %2645 = vst [vmem:[#allocation4 + $0x114] sm:$0xf] %v2629
        %v2646 = vunpack.c.l.b16 %v2561
        %v2647 = vunpack.c.h.b16 %v2561
        %v2648 = vunpack.c.l.b16 %v2562
        %v2649 = vunpack.c.h.b16 %v2562
        %v2650 = vunpack.c.l.b16 %v2563
        %v2651 = vunpack.c.h.b16 %v2563
        %v2652 = vunpack.c.l.b16 %v2564
        %v2653 = vunpack.c.h.b16 %v2564
        %v2654 = vpack.c.b16 %v2646, %v2646
        %v2655 = vpack.c.b16 %v2647, %v2647
        %v2656 = vpack.c.b16 %v2648, %v2648
        %v2657 = vpack.c.b16 %v2649, %v2649
        %v2658 = vpack.c.b16 %v2650, %v2650
        %v2659 = vpack.c.b16 %v2651, %v2651
        %v2660 = vpack.c.b16 %v2652, %v2652
        %v2661 = vpack.c.b16 %v2653, %v2653
        %2670 = vst [vmem:[#allocation4 + $0x1c] sm:$0xf] %v2654
        %2671 = vst [vmem:[#allocation4 + $0x40] sm:$0xf] %v2655
        %2672 = vst [vmem:[#allocation4 + $0x64] sm:$0xf] %v2656
        %2673 = vst [vmem:[#allocation4 + $0x88] sm:$0xf] %v2657
        %2674 = vst [vmem:[#allocation4 + $0xac] sm:$0xf] %v2658
        %2675 = vst [vmem:[#allocation4 + $0xd0] sm:$0xf] %v2659
        %2676 = vst [vmem:[#allocation4 + $0xf4] sm:$0xf] %v2660
        %2677 = vst [vmem:[#allocation4 + $0x118] sm:$0xf] %v2661
        %v2682 = vunpack.c.l.b16 %v2603
        %v2683 = vunpack.c.h.b16 %v2603
        %v2684 = vunpack.c.l.b16 %v2605
        %v2685 = vunpack.c.h.b16 %v2605
        %v2686 = vunpack.c.l.b16 %v2607
        %v2687 = vunpack.c.h.b16 %v2607
        %v2688 = vunpack.c.l.b16 %v2609
        %v2689 = vunpack.c.h.b16 %v2609
        %v2690 = vpack.c.b16 %v2682, %v2682
        %v2691 = vpack.c.b16 %v2683, %v2683
        %v2692 = vpack.c.b16 %v2684, %v2684
        %v2693 = vpack.c.b16 %v2685, %v2685
        %v2694 = vpack.c.b16 %v2686, %v2686
        %v2695 = vpack.c.b16 %v2687, %v2687
        %v2696 = vpack.c.b16 %v2688, %v2688
        %v2697 = vpack.c.b16 %v2689, %v2689
        %2706 = vst [vmem:[#allocation4 + $0x20] sm:$0xf] %v2690
        %2707 = vst [vmem:[#allocation4 + $0x44] sm:$0xf] %v2691
        %2708 = vst [vmem:[#allocation4 + $0x68] sm:$0xf] %v2692
        %2709 = vst [vmem:[#allocation4 + $0x8c] sm:$0xf] %v2693
        %2710 = vst [vmem:[#allocation4 + $0xb0] sm:$0xf] %v2694
        %2711 = vst [vmem:[#allocation4 + $0xd4] sm:$0xf] %v2695
        %2712 = vst [vmem:[#allocation4 + $0xf8] sm:$0xf] %v2696
        %2713 = vst [vmem:[#allocation4 + $0x11c] sm:$0xf] %v2697
        %v2714 = vld [vmem:[#allocation4] sm:$0xff]
        %v2715 = vld [vmem:[#allocation4 + $0x8] sm:$0xff]
        %v2716 = vld [vmem:[#allocation4 + $0x10] sm:$0xff]
        %v2717 = vld [vmem:[#allocation4 + $0x18] sm:$0xff]
        %v2718 = vld [vmem:[#allocation4 + $0x20] sm:$0xf]
        %v2719 = vld [vmem:[#allocation4 + $0x24] sm:$0xff]
        %v2720 = vld [vmem:[#allocation4 + $0x2c] sm:$0xff]
        %v2721 = vld [vmem:[#allocation4 + $0x34] sm:$0xff]
        %v2722 = vld [vmem:[#allocation4 + $0x3c] sm:$0xff]
        %v2723 = vld [vmem:[#allocation4 + $0x44] sm:$0xf]
        %v2724 = vld [vmem:[#allocation4 + $0x48] sm:$0xff]
        %v2725 = vld [vmem:[#allocation4 + $0x50] sm:$0xff]
        %v2726 = vld [vmem:[#allocation4 + $0x58] sm:$0xff]
        %v2727 = vld [vmem:[#allocation4 + $0x60] sm:$0xff]
        %v2728 = vld [vmem:[#allocation4 + $0x68] sm:$0xf]
        %v2729 = vld [vmem:[#allocation4 + $0x6c] sm:$0xff]
        %v2730 = vld [vmem:[#allocation4 + $0x74] sm:$0xff]
        %v2731 = vld [vmem:[#allocation4 + $0x7c] sm:$0xff]
        %v2732 = vld [vmem:[#allocation4 + $0x84] sm:$0xff]
        %v2733 = vld [vmem:[#allocation4 + $0x8c] sm:$0xf]
        %v2734 = vld [vmem:[#allocation4 + $0x90] sm:$0xff]
        %v2735 = vld [vmem:[#allocation4 + $0x98] sm:$0xff]
        %v2736 = vld [vmem:[#allocation4 + $0xa0] sm:$0xff]
        %v2737 = vld [vmem:[#allocation4 + $0xa8] sm:$0xff]
        %v2738 = vld [vmem:[#allocation4 + $0xb0] sm:$0xf]
        %v2739 = vld [vmem:[#allocation4 + $0xb4] sm:$0xff]
        %v2740 = vld [vmem:[#allocation4 + $0xbc] sm:$0xff]
        %v2741 = vld [vmem:[#allocation4 + $0xc4] sm:$0xff]
        %v2742 = vld [vmem:[#allocation4 + $0xcc] sm:$0xff]
        %v2743 = vld [vmem:[#allocation4 + $0xd4] sm:$0xf]
        %v2744 = vld [vmem:[#allocation4 + $0xd8] sm:$0xff]
        %v2745 = vld [vmem:[#allocation4 + $0xe0] sm:$0xff]
        %v2746 = vld [vmem:[#allocation4 + $0xe8] sm:$0xff]
        %v2747 = vld [vmem:[#allocation4 + $0xf0] sm:$0xff]
        %v2748 = vld [vmem:[#allocation4 + $0xf8] sm:$0xf]
        %v2749 = vld [vmem:[#allocation4 + $0xfc] sm:$0xff]
        %v2750 = vld [vmem:[#allocation4 + $0x104] sm:$0xff]
        %v2751 = vld [vmem:[#allocation4 + $0x10c] sm:$0xff]
        %v2752 = vld [vmem:[#allocation4 + $0x114] sm:$0xff]
        %v2753 = vld [vmem:[#allocation4 + $0x11c] sm:$0xf]
        %s2754 = scalar_lea.vmem [#allocation8], 576
        %v2755 = vld [vmem:[%s2754] sm:$0xf]
        %v2756 = vld [vmem:[%s2754 + $0x4] sm:$0xf]
        %v2757 = vld [vmem:[%s2754 + $0x8] sm:$0xf]
        %v2758 = vld [vmem:[%s2754 + $0xc] sm:$0xf]
        %v2759 = vld [vmem:[%s2754 + $0x10] sm:$0xf]
        %v2760 = vld [vmem:[%s2754 + $0x14] sm:$0xf]
        %v2761 = vld [vmem:[%s2754 + $0x18] sm:$0xf]
        %v2762 = vld [vmem:[%s2754 + $0x1c] sm:$0xf]
        %v2763 = vld [vmem:[%s2754 + $0x20] sm:$0xf]
        %v2764 = vld [vmem:[%s2754 + $0x24] sm:$0xf]
        %v2765 = vld [vmem:[%s2754 + $0x28] sm:$0xf]
        %v2766 = vld [vmem:[%s2754 + $0x2c] sm:$0xf]
        %v2767 = vld [vmem:[%s2754 + $0x30] sm:$0xf]
        %v2768 = vld [vmem:[%s2754 + $0x34] sm:$0xf]
        %v2769 = vld [vmem:[%s2754 + $0x38] sm:$0xf]
        %v2770 = vld [vmem:[%s2754 + $0x3c] sm:$0xf]
        %v2771 = vld [vmem:[%s2754 + $0x40] sm:$0xf]
        %v2772 = vld [vmem:[%s2754 + $0x44] sm:$0xf]
        %v2773 = vld [vmem:[%s2754 + $0x48] sm:$0xf]
        %v2774 = vld [vmem:[%s2754 + $0x4c] sm:$0xf]
        %v2775 = vld [vmem:[%s2754 + $0x50] sm:$0xf]
        %v2776 = vld [vmem:[%s2754 + $0x54] sm:$0xf]
        %v2777 = vld [vmem:[%s2754 + $0x58] sm:$0xf]
        %v2778 = vld [vmem:[%s2754 + $0x5c] sm:$0xf]
        %v2779 = vld [vmem:[%s2754 + $0x60] sm:$0xf]
        %v2780 = vld [vmem:[%s2754 + $0x64] sm:$0xf]
        %v2781 = vld [vmem:[%s2754 + $0x68] sm:$0xf]
        %v2782 = vld [vmem:[%s2754 + $0x6c] sm:$0xf]
        %v2783 = vld [vmem:[%s2754 + $0x70] sm:$0xf]
        %v2784 = vld [vmem:[%s2754 + $0x74] sm:$0xf]
        %v2785 = vld [vmem:[%s2754 + $0x78] sm:$0xf]
        %v2786 = vld [vmem:[%s2754 + $0x7c] sm:$0xf]
        %v2787 = vld [vmem:[%s2754 + $0x80] sm:$0xf]
        %v2788 = vld [vmem:[%s2754 + $0x84] sm:$0xf]
        %v2789 = vld [vmem:[%s2754 + $0x88] sm:$0xf]
        %v2790 = vld [vmem:[%s2754 + $0x8c] sm:$0xf]
        %v2791 = vld [vmem:[%s2754 + $0x90] sm:$0xf]
        %v2792 = vld [vmem:[%s2754 + $0x94] sm:$0xf]
        %v2793 = vld [vmem:[%s2754 + $0x98] sm:$0xf]
        %v2794 = vld [vmem:[%s2754 + $0x9c] sm:$0xf]
        %v2795 = vld [vmem:[%s2754 + $0xa0] sm:$0xf]
        %v2796 = vld [vmem:[%s2754 + $0xa4] sm:$0xf]
        %v2797 = vld [vmem:[%s2754 + $0xa8] sm:$0xf]
        %v2798 = vld [vmem:[%s2754 + $0xac] sm:$0xf]
        %v2799 = vld [vmem:[%s2754 + $0xb0] sm:$0xf]
        %v2800 = vld [vmem:[%s2754 + $0xb4] sm:$0xf]
        %v2801 = vld [vmem:[%s2754 + $0xb8] sm:$0xf]
        %v2802 = vld [vmem:[%s2754 + $0xbc] sm:$0xf]
        %v2803 = vld [vmem:[%s2754 + $0xc0] sm:$0xf]
        %v2804 = vld [vmem:[%s2754 + $0xc4] sm:$0xf]
        %v2805 = vld [vmem:[%s2754 + $0xc8] sm:$0xf]
        %v2806 = vld [vmem:[%s2754 + $0xcc] sm:$0xf]
        %v2807 = vld [vmem:[%s2754 + $0xd0] sm:$0xf]
        %v2808 = vld [vmem:[%s2754 + $0xd4] sm:$0xf]
        %v2809 = vld [vmem:[%s2754 + $0xd8] sm:$0xf]
        %v2810 = vld [vmem:[%s2754 + $0xdc] sm:$0xf]
        %v2811 = vld [vmem:[%s2754 + $0xe0] sm:$0xf]
        %v2812 = vld [vmem:[%s2754 + $0xe4] sm:$0xf]
        %v2813 = vld [vmem:[%s2754 + $0xe8] sm:$0xf]
        %v2814 = vld [vmem:[%s2754 + $0xec] sm:$0xf]
        %v2815 = vld [vmem:[%s2754 + $0xf0] sm:$0xf]
        %v2816 = vld [vmem:[%s2754 + $0xf4] sm:$0xf]
        %v2817 = vld [vmem:[%s2754 + $0xf8] sm:$0xf]
        %v2818 = vld [vmem:[%s2754 + $0xfc] sm:$0xf]
        %v2819 = vld [vmem:[%s2754 + $0x100] sm:$0xf]
        %v2820 = vld [vmem:[%s2754 + $0x104] sm:$0xf]
        %v2821 = vld [vmem:[%s2754 + $0x108] sm:$0xf]
        %v2822 = vld [vmem:[%s2754 + $0x10c] sm:$0xf]
        %v2823 = vld [vmem:[%s2754 + $0x110] sm:$0xf]
        %v2824 = vld [vmem:[%s2754 + $0x114] sm:$0xf]
        %v2825 = vld [vmem:[%s2754 + $0x118] sm:$0xf]
        %v2826 = vld [vmem:[%s2754 + $0x11c] sm:$0xf]
        %v2827 = vld [vmem:[%s2754 + $0x120] sm:$0xf]
        %v2828 = vld [vmem:[%s2754 + $0x124] sm:$0xf]
        %v2829 = vld [vmem:[%s2754 + $0x128] sm:$0xf]
        %v2830 = vld [vmem:[%s2754 + $0x12c] sm:$0xf]
        %v2831 = vld [vmem:[%s2754 + $0x130] sm:$0xf]
        %v2832 = vld [vmem:[%s2754 + $0x134] sm:$0xf]
        %v2833 = vld [vmem:[%s2754 + $0x138] sm:$0xf]
        %v2834 = vld [vmem:[%s2754 + $0x13c] sm:$0xf]
        %v2835 = vld [vmem:[%s2754 + $0x140] sm:$0xf]
        %v2836 = vld [vmem:[%s2754 + $0x144] sm:$0xf]
        %v2837 = vld [vmem:[%s2754 + $0x148] sm:$0xf]
        %v2838 = vld [vmem:[%s2754 + $0x14c] sm:$0xf]
        %v2839 = vld [vmem:[%s2754 + $0x150] sm:$0xf]
        %v2840 = vld [vmem:[%s2754 + $0x154] sm:$0xf]
        %v2841 = vld [vmem:[%s2754 + $0x158] sm:$0xf]
        %v2842 = vld [vmem:[%s2754 + $0x15c] sm:$0xf]
        %v2843 = vld [vmem:[%s2754 + $0x160] sm:$0xf]
        %v2844 = vld [vmem:[%s2754 + $0x164] sm:$0xf]
        %v2845 = vld [vmem:[%s2754 + $0x168] sm:$0xf]
        %v2846 = vld [vmem:[%s2754 + $0x16c] sm:$0xf]
        %v2847 = vld [vmem:[%s2754 + $0x170] sm:$0xf]
        %v2848 = vld [vmem:[%s2754 + $0x174] sm:$0xf]
        %v2849 = vld [vmem:[%s2754 + $0x178] sm:$0xf]
        %v2850 = vld [vmem:[%s2754 + $0x17c] sm:$0xf]
        %v2851 = vld [vmem:[%s2754 + $0x180] sm:$0xf]
        %v2852 = vld [vmem:[%s2754 + $0x184] sm:$0xf]
        %v2853 = vld [vmem:[%s2754 + $0x188] sm:$0xf]
        %v2854 = vld [vmem:[%s2754 + $0x18c] sm:$0xf]
        %v2855 = vld [vmem:[%s2754 + $0x190] sm:$0xf]
        %v2856 = vld [vmem:[%s2754 + $0x194] sm:$0xf]
        %v2857 = vld [vmem:[%s2754 + $0x198] sm:$0xf]
        %v2858 = vld [vmem:[%s2754 + $0x19c] sm:$0xf]
        %v2859 = vld [vmem:[%s2754 + $0x1a0] sm:$0xf]
        %v2860 = vld [vmem:[%s2754 + $0x1a4] sm:$0xf]
        %v2861 = vld [vmem:[%s2754 + $0x1a8] sm:$0xf]
        %v2862 = vld [vmem:[%s2754 + $0x1ac] sm:$0xf]
        %v2863 = vld [vmem:[%s2754 + $0x1b0] sm:$0xf]
        %v2864 = vld [vmem:[%s2754 + $0x1b4] sm:$0xf]
        %v2865 = vld [vmem:[%s2754 + $0x1b8] sm:$0xf]
        %v2866 = vld [vmem:[%s2754 + $0x1bc] sm:$0xf]
        %v2867 = vld [vmem:[%s2754 + $0x1c0] sm:$0xf]
        %v2868 = vld [vmem:[%s2754 + $0x1c4] sm:$0xf]
        %v2869 = vld [vmem:[%s2754 + $0x1c8] sm:$0xf]
        %v2870 = vld [vmem:[%s2754 + $0x1cc] sm:$0xf]
        %v2871 = vld [vmem:[%s2754 + $0x1d0] sm:$0xf]
        %v2872 = vld [vmem:[%s2754 + $0x1d4] sm:$0xf]
        %v2873 = vld [vmem:[%s2754 + $0x1d8] sm:$0xf]
        %v2874 = vld [vmem:[%s2754 + $0x1dc] sm:$0xf]
        %v2875 = vld [vmem:[%s2754 + $0x1e0] sm:$0xf]
        %v2876 = vld [vmem:[%s2754 + $0x1e4] sm:$0xf]
        %v2877 = vld [vmem:[%s2754 + $0x1e8] sm:$0xf]
        %v2878 = vld [vmem:[%s2754 + $0x1ec] sm:$0xf]
        %v2879 = vld [vmem:[%s2754 + $0x1f0] sm:$0xf]
        %v2880 = vld [vmem:[%s2754 + $0x1f4] sm:$0xf]
        %v2881 = vld [vmem:[%s2754 + $0x1f8] sm:$0xf]
        %v2882 = vld [vmem:[%s2754 + $0x1fc] sm:$0xf]
        %v2883 = vld [vmem:[%s2754 + $0x200] sm:$0xf]
        %v2884 = vld [vmem:[%s2754 + $0x204] sm:$0xf]
        %v2885 = vld [vmem:[%s2754 + $0x208] sm:$0xf]
        %v2886 = vld [vmem:[%s2754 + $0x20c] sm:$0xf]
        %v2887 = vld [vmem:[%s2754 + $0x210] sm:$0xf]
        %v2888 = vld [vmem:[%s2754 + $0x214] sm:$0xf]
        %v2889 = vld [vmem:[%s2754 + $0x218] sm:$0xf]
        %v2890 = vld [vmem:[%s2754 + $0x21c] sm:$0xf]
        %v2891 = vld [vmem:[%s2754 + $0x220] sm:$0xf]
        %v2892 = vld [vmem:[%s2754 + $0x224] sm:$0xf]
        %v2893 = vld [vmem:[%s2754 + $0x228] sm:$0xf]
        %v2894 = vld [vmem:[%s2754 + $0x22c] sm:$0xf]
        %v2895 = vld [vmem:[%s2754 + $0x230] sm:$0xf]
        %v2896 = vld [vmem:[%s2754 + $0x234] sm:$0xf]
        %v2897 = vld [vmem:[%s2754 + $0x238] sm:$0xf]
        %v2898 = vld [vmem:[%s2754 + $0x23c] sm:$0xf]
        %s2899 = scalar_lea.vmem [#allocation10], 1
        %v2900 = vld [vmem:[%s2899] sm:$0x1]
        %v2902 = vlaneseq
        %v2903 = vshrl.u32 %v2902, 7
        %v2904 = vsub.s32 0, %v2903
        %v2905 = vrot.slane %v2900, %v2904
        %v2947 = vunpack.c.l.b16 %v2714
        %v2948 = vunpack.c.h.b16 %v2714
        %v2949 = vunpack.c.l.b16 %v2715
        %v2950 = vunpack.c.h.b16 %v2715
        %v2951 = vunpack.c.l.b16 %v2716
        %v2952 = vunpack.c.h.b16 %v2716
        %v2953 = vunpack.c.l.b16 %v2717
        %v2954 = vunpack.c.h.b16 %v2717
        %v2955 = vunpack.c.l.b16 %v2718
        %v2956 = vunpack.c.l.b16 %v2719
        %v2957 = vunpack.c.h.b16 %v2719
        %v2958 = vunpack.c.l.b16 %v2720
        %v2959 = vunpack.c.h.b16 %v2720
        %v2960 = vunpack.c.l.b16 %v2721
        %v2961 = vunpack.c.h.b16 %v2721
        %v2962 = vunpack.c.l.b16 %v2722
        %v2963 = vunpack.c.h.b16 %v2722
        %v2964 = vunpack.c.l.b16 %v2723
        %v2965 = vunpack.c.l.b16 %v2724
        %v2966 = vunpack.c.h.b16 %v2724
        %v2967 = vunpack.c.l.b16 %v2725
        %v2968 = vunpack.c.h.b16 %v2725
        %v2969 = vunpack.c.l.b16 %v2726
        %v2970 = vunpack.c.h.b16 %v2726
        %v2971 = vunpack.c.l.b16 %v2727
        %v2972 = vunpack.c.h.b16 %v2727
        %v2973 = vunpack.c.l.b16 %v2728
        %v2974 = vunpack.c.l.b16 %v2729
        %v2975 = vunpack.c.h.b16 %v2729
        %v2976 = vunpack.c.l.b16 %v2730
        %v2977 = vunpack.c.h.b16 %v2730
        %v2978 = vunpack.c.l.b16 %v2731
        %v2979 = vunpack.c.h.b16 %v2731
        %v2980 = vunpack.c.l.b16 %v2732
        %v2981 = vunpack.c.h.b16 %v2732
        %v2982 = vunpack.c.l.b16 %v2733
        %v2983 = vunpack.c.l.b16 %v2734
        %v2984 = vunpack.c.h.b16 %v2734
        %v2985 = vunpack.c.l.b16 %v2735
        %v2986 = vunpack.c.h.b16 %v2735
        %v2987 = vunpack.c.l.b16 %v2736
        %v2988 = vunpack.c.h.b16 %v2736
        %v2989 = vunpack.c.l.b16 %v2737
        %v2990 = vunpack.c.h.b16 %v2737
        %v2991 = vunpack.c.l.b16 %v2738
        %v2992 = vunpack.c.l.b16 %v2739
        %v2993 = vunpack.c.h.b16 %v2739
        %v2994 = vunpack.c.l.b16 %v2740
        %v2995 = vunpack.c.h.b16 %v2740
        %v2996 = vunpack.c.l.b16 %v2741
        %v2997 = vunpack.c.h.b16 %v2741
        %v2998 = vunpack.c.l.b16 %v2742
        %v2999 = vunpack.c.h.b16 %v2742
        %v3000 = vunpack.c.l.b16 %v2743
        %v3001 = vunpack.c.l.b16 %v2744
        %v3002 = vunpack.c.h.b16 %v2744
        %v3003 = vunpack.c.l.b16 %v2745
        %v3004 = vunpack.c.h.b16 %v2745
        %v3005 = vunpack.c.l.b16 %v2746
        %v3006 = vunpack.c.h.b16 %v2746
        %v3007 = vunpack.c.l.b16 %v2747
        %v3008 = vunpack.c.h.b16 %v2747
        %v3009 = vunpack.c.l.b16 %v2748
        %v3010 = vunpack.c.l.b16 %v2749
        %v3011 = vunpack.c.h.b16 %v2749
        %v3012 = vunpack.c.l.b16 %v2750
        %v3013 = vunpack.c.h.b16 %v2750
        %v3014 = vunpack.c.l.b16 %v2751
        %v3015 = vunpack.c.h.b16 %v2751
        %v3016 = vunpack.c.l.b16 %v2752
        %v3017 = vunpack.c.h.b16 %v2752
        %v3018 = vunpack.c.l.b16 %v2753
        %v3019 = vpack.c.b16 %v2956, %v2947
        %v3020 = vpack.c.b16 %v2957, %v2948
        %v3021 = vpack.c.b16 %v2958, %v2949
        %v3022 = vpack.c.b16 %v2959, %v2950
        %v3023 = vpack.c.b16 %v2960, %v2951
        %v3024 = vpack.c.b16 %v2961, %v2952
        %v3025 = vpack.c.b16 %v2962, %v2953
        %v3026 = vpack.c.b16 %v2963, %v2954
        %v3027 = vpack.c.b16 %v2964, %v2955
        %v3028 = vpack.c.b16 %v2974, %v2965
        %v3029 = vpack.c.b16 %v2975, %v2966
        %v3030 = vpack.c.b16 %v2976, %v2967
        %v3031 = vpack.c.b16 %v2977, %v2968
        %v3032 = vpack.c.b16 %v2978, %v2969
        %v3033 = vpack.c.b16 %v2979, %v2970
        %v3034 = vpack.c.b16 %v2980, %v2971
        %v3035 = vpack.c.b16 %v2981, %v2972
        %v3036 = vpack.c.b16 %v2982, %v2973
        %v3037 = vpack.c.b16 %v2992, %v2983
        %v3038 = vpack.c.b16 %v2993, %v2984
        %v3039 = vpack.c.b16 %v2994, %v2985
        %v3040 = vpack.c.b16 %v2995, %v2986
        %v3041 = vpack.c.b16 %v2996, %v2987
        %v3042 = vpack.c.b16 %v2997, %v2988
        %v3043 = vpack.c.b16 %v2998, %v2989
        %v3044 = vpack.c.b16 %v2999, %v2990
        %v3045 = vpack.c.b16 %v3000, %v2991
        %v3046 = vpack.c.b16 %v3010, %v3001
        %v3047 = vpack.c.b16 %v3011, %v3002
        %v3048 = vpack.c.b16 %v3012, %v3003
        %v3049 = vpack.c.b16 %v3013, %v3004
        %v3050 = vpack.c.b16 %v3014, %v3005
        %v3051 = vpack.c.b16 %v3015, %v3006
        %v3052 = vpack.c.b16 %v3016, %v3007
        %v3053 = vpack.c.b16 %v3017, %v3008
        %v3054 = vpack.c.b16 %v3018, %v3009
        %v3235 = vunpack.c.l.b16 %v2755
        %v3236 = vunpack.c.l.b16 %v2756
        %v3237 = vunpack.c.l.b16 %v2757
        %v3238 = vunpack.c.l.b16 %v2758
        %v3239 = vunpack.c.l.b16 %v2759
        %v3240 = vunpack.c.l.b16 %v2760
        %v3241 = vunpack.c.l.b16 %v2761
        %v3242 = vunpack.c.l.b16 %v2762
        %v3243 = vunpack.c.l.b16 %v2763
        %v3244 = vunpack.c.l.b16 %v2764
        %v3245 = vunpack.c.l.b16 %v2765
        %v3246 = vunpack.c.l.b16 %v2766
        %v3247 = vunpack.c.l.b16 %v2767
        %v3248 = vunpack.c.l.b16 %v2768
        %v3249 = vunpack.c.l.b16 %v2769
        %v3250 = vunpack.c.l.b16 %v2770
        %v3251 = vunpack.c.l.b16 %v2771
        %v3252 = vunpack.c.l.b16 %v2772
        %v3253 = vunpack.c.l.b16 %v2773
        %v3254 = vunpack.c.l.b16 %v2774
        %v3255 = vunpack.c.l.b16 %v2775
        %v3256 = vunpack.c.l.b16 %v2776
        %v3257 = vunpack.c.l.b16 %v2777
        %v3258 = vunpack.c.l.b16 %v2778
        %v3259 = vunpack.c.l.b16 %v2779
        %v3260 = vunpack.c.l.b16 %v2780
        %v3261 = vunpack.c.l.b16 %v2781
        %v3262 = vunpack.c.l.b16 %v2782
        %v3263 = vunpack.c.l.b16 %v2783
        %v3264 = vunpack.c.l.b16 %v2784
        %v3265 = vunpack.c.l.b16 %v2785
        %v3266 = vunpack.c.l.b16 %v2786
        %v3267 = vunpack.c.l.b16 %v2787
        %v3268 = vunpack.c.l.b16 %v2788
        %v3269 = vunpack.c.l.b16 %v2789
        %v3270 = vunpack.c.l.b16 %v2790
        %v3271 = vunpack.c.l.b16 %v2791
        %v3272 = vunpack.c.l.b16 %v2792
        %v3273 = vunpack.c.l.b16 %v2793
        %v3274 = vunpack.c.l.b16 %v2794
        %v3275 = vunpack.c.l.b16 %v2795
        %v3276 = vunpack.c.l.b16 %v2796
        %v3277 = vunpack.c.l.b16 %v2797
        %v3278 = vunpack.c.l.b16 %v2798
        %v3279 = vunpack.c.l.b16 %v2799
        %v3280 = vunpack.c.l.b16 %v2800
        %v3281 = vunpack.c.l.b16 %v2801
        %v3282 = vunpack.c.l.b16 %v2802
        %v3283 = vunpack.c.l.b16 %v2803
        %v3284 = vunpack.c.l.b16 %v2804
        %v3285 = vunpack.c.l.b16 %v2805
        %v3286 = vunpack.c.l.b16 %v2806
        %v3287 = vunpack.c.l.b16 %v2807
        %v3288 = vunpack.c.l.b16 %v2808
        %v3289 = vunpack.c.l.b16 %v2809
        %v3290 = vunpack.c.l.b16 %v2810
        %v3291 = vunpack.c.l.b16 %v2811
        %v3292 = vunpack.c.l.b16 %v2812
        %v3293 = vunpack.c.l.b16 %v2813
        %v3294 = vunpack.c.l.b16 %v2814
        %v3295 = vunpack.c.l.b16 %v2815
        %v3296 = vunpack.c.l.b16 %v2816
        %v3297 = vunpack.c.l.b16 %v2817
        %v3298 = vunpack.c.l.b16 %v2818
        %v3299 = vunpack.c.l.b16 %v2819
        %v3300 = vunpack.c.l.b16 %v2820
        %v3301 = vunpack.c.l.b16 %v2821
        %v3302 = vunpack.c.l.b16 %v2822
        %v3303 = vunpack.c.l.b16 %v2823
        %v3304 = vunpack.c.l.b16 %v2824
        %v3305 = vunpack.c.l.b16 %v2825
        %v3306 = vunpack.c.l.b16 %v2826
        %v3307 = vunpack.c.l.b16 %v2827
        %v3308 = vunpack.c.l.b16 %v2828
        %v3309 = vunpack.c.l.b16 %v2829
        %v3310 = vunpack.c.l.b16 %v2830
        %v3311 = vunpack.c.l.b16 %v2831
        %v3312 = vunpack.c.l.b16 %v2832
        %v3313 = vunpack.c.l.b16 %v2833
        %v3314 = vunpack.c.l.b16 %v2834
        %v3315 = vunpack.c.l.b16 %v2835
        %v3316 = vunpack.c.l.b16 %v2836
        %v3317 = vunpack.c.l.b16 %v2837
        %v3318 = vunpack.c.l.b16 %v2838
        %v3319 = vunpack.c.l.b16 %v2839
        %v3320 = vunpack.c.l.b16 %v2840
        %v3321 = vunpack.c.l.b16 %v2841
        %v3322 = vunpack.c.l.b16 %v2842
        %v3323 = vunpack.c.l.b16 %v2843
        %v3324 = vunpack.c.l.b16 %v2844
        %v3325 = vunpack.c.l.b16 %v2845
        %v3326 = vunpack.c.l.b16 %v2846
        %v3327 = vunpack.c.l.b16 %v2847
        %v3328 = vunpack.c.l.b16 %v2848
        %v3329 = vunpack.c.l.b16 %v2849
        %v3330 = vunpack.c.l.b16 %v2850
        %v3331 = vunpack.c.l.b16 %v2851
        %v3332 = vunpack.c.l.b16 %v2852
        %v3333 = vunpack.c.l.b16 %v2853
        %v3334 = vunpack.c.l.b16 %v2854
        %v3335 = vunpack.c.l.b16 %v2855
        %v3336 = vunpack.c.l.b16 %v2856
        %v3337 = vunpack.c.l.b16 %v2857
        %v3338 = vunpack.c.l.b16 %v2858
        %v3339 = vunpack.c.l.b16 %v2859
        %v3340 = vunpack.c.l.b16 %v2860
        %v3341 = vunpack.c.l.b16 %v2861
        %v3342 = vunpack.c.l.b16 %v2862
        %v3343 = vunpack.c.l.b16 %v2863
        %v3344 = vunpack.c.l.b16 %v2864
        %v3345 = vunpack.c.l.b16 %v2865
        %v3346 = vunpack.c.l.b16 %v2866
        %v3347 = vunpack.c.l.b16 %v2867
        %v3348 = vunpack.c.l.b16 %v2868
        %v3349 = vunpack.c.l.b16 %v2869
        %v3350 = vunpack.c.l.b16 %v2870
        %v3351 = vunpack.c.l.b16 %v2871
        %v3352 = vunpack.c.l.b16 %v2872
        %v3353 = vunpack.c.l.b16 %v2873
        %v3354 = vunpack.c.l.b16 %v2874
        %v3355 = vunpack.c.l.b16 %v2875
        %v3356 = vunpack.c.l.b16 %v2876
        %v3357 = vunpack.c.l.b16 %v2877
        %v3358 = vunpack.c.l.b16 %v2878
        %v3359 = vunpack.c.l.b16 %v2879
        %v3360 = vunpack.c.l.b16 %v2880
        %v3361 = vunpack.c.l.b16 %v2881
        %v3362 = vunpack.c.l.b16 %v2882
        %v3363 = vunpack.c.l.b16 %v2883
        %v3364 = vunpack.c.l.b16 %v2884
        %v3365 = vunpack.c.l.b16 %v2885
        %v3366 = vunpack.c.l.b16 %v2886
        %v3367 = vunpack.c.l.b16 %v2887
        %v3368 = vunpack.c.l.b16 %v2888
        %v3369 = vunpack.c.l.b16 %v2889
        %v3370 = vunpack.c.l.b16 %v2890
        %v3371 = vunpack.c.l.b16 %v2891
        %v3372 = vunpack.c.l.b16 %v2892
        %v3373 = vunpack.c.l.b16 %v2893
        %v3374 = vunpack.c.l.b16 %v2894
        %v3375 = vunpack.c.l.b16 %v2895
        %v3376 = vunpack.c.l.b16 %v2896
        %v3377 = vunpack.c.l.b16 %v2897
        %v3378 = vunpack.c.l.b16 %v2898
        %v3379 = vpack.c.b16 %v3236, %v3235
        %v3380 = vpack.c.b16 %v3238, %v3237
        %v3381 = vpack.c.b16 %v3240, %v3239
        %v3382 = vpack.c.b16 %v3242, %v3241
        %v3383 = vpack.c.b16 %v3244, %v3243
        %v3384 = vpack.c.b16 %v3246, %v3245
        %v3385 = vpack.c.b16 %v3248, %v3247
        %v3386 = vpack.c.b16 %v3250, %v3249
        %v3387 = vpack.c.b16 %v3252, %v3251
        %v3388 = vpack.c.b16 %v3254, %v3253
        %v3389 = vpack.c.b16 %v3256, %v3255
        %v3390 = vpack.c.b16 %v3258, %v3257
        %v3391 = vpack.c.b16 %v3260, %v3259
        %v3392 = vpack.c.b16 %v3262, %v3261
        %v3393 = vpack.c.b16 %v3264, %v3263
        %v3394 = vpack.c.b16 %v3266, %v3265
        %v3395 = vpack.c.b16 %v3268, %v3267
        %v3396 = vpack.c.b16 %v3270, %v3269
        %v3397 = vpack.c.b16 %v3272, %v3271
        %v3398 = vpack.c.b16 %v3274, %v3273
        %v3399 = vpack.c.b16 %v3276, %v3275
        %v3400 = vpack.c.b16 %v3278, %v3277
        %v3401 = vpack.c.b16 %v3280, %v3279
        %v3402 = vpack.c.b16 %v3282, %v3281
        %v3403 = vpack.c.b16 %v3284, %v3283
        %v3404 = vpack.c.b16 %v3286, %v3285
        %v3405 = vpack.c.b16 %v3288, %v3287
        %v3406 = vpack.c.b16 %v3290, %v3289
        %v3407 = vpack.c.b16 %v3292, %v3291
        %v3408 = vpack.c.b16 %v3294, %v3293
        %v3409 = vpack.c.b16 %v3296, %v3295
        %v3410 = vpack.c.b16 %v3298, %v3297
        %v3411 = vpack.c.b16 %v3300, %v3299
        %v3412 = vpack.c.b16 %v3302, %v3301
        %v3413 = vpack.c.b16 %v3304, %v3303
        %v3414 = vpack.c.b16 %v3306, %v3305
        %v3415 = vpack.c.b16 %v3308, %v3307
        %v3416 = vpack.c.b16 %v3310, %v3309
        %v3417 = vpack.c.b16 %v3312, %v3311
        %v3418 = vpack.c.b16 %v3314, %v3313
        %v3419 = vpack.c.b16 %v3316, %v3315
        %v3420 = vpack.c.b16 %v3318, %v3317
        %v3421 = vpack.c.b16 %v3320, %v3319
        %v3422 = vpack.c.b16 %v3322, %v3321
        %v3423 = vpack.c.b16 %v3324, %v3323
        %v3424 = vpack.c.b16 %v3326, %v3325
        %v3425 = vpack.c.b16 %v3328, %v3327
        %v3426 = vpack.c.b16 %v3330, %v3329
        %v3427 = vpack.c.b16 %v3332, %v3331
        %v3428 = vpack.c.b16 %v3334, %v3333
        %v3429 = vpack.c.b16 %v3336, %v3335
        %v3430 = vpack.c.b16 %v3338, %v3337
        %v3431 = vpack.c.b16 %v3340, %v3339
        %v3432 = vpack.c.b16 %v3342, %v3341
        %v3433 = vpack.c.b16 %v3344, %v3343
        %v3434 = vpack.c.b16 %v3346, %v3345
        %v3435 = vpack.c.b16 %v3348, %v3347
        %v3436 = vpack.c.b16 %v3350, %v3349
        %v3437 = vpack.c.b16 %v3352, %v3351
        %v3438 = vpack.c.b16 %v3354, %v3353
        %v3439 = vpack.c.b16 %v3356, %v3355
        %v3440 = vpack.c.b16 %v3358, %v3357
        %v3441 = vpack.c.b16 %v3360, %v3359
        %v3442 = vpack.c.b16 %v3362, %v3361
        %v3443 = vpack.c.b16 %v3364, %v3363
        %v3444 = vpack.c.b16 %v3366, %v3365
        %v3445 = vpack.c.b16 %v3368, %v3367
        %v3446 = vpack.c.b16 %v3370, %v3369
        %v3447 = vpack.c.b16 %v3372, %v3371
        %v3448 = vpack.c.b16 %v3374, %v3373
        %v3449 = vpack.c.b16 %v3376, %v3375
        %v3450 = vpack.c.b16 %v3378, %v3377
        %3523 = vmatprep.subr.bf16.mxu0 0
        %3524 = vmatpush1.bf16.msra.mxu0 %v3386
        %3525 = vmatprep.subr.bf16.mxu0 0
        %3526 = vmatpush1.bf16.msra.mxu0 %v3385
        %3527 = vmatprep.subr.bf16.mxu0 0
        %3528 = vmatpush1.bf16.msra.mxu0 %v3384
        %3529 = vmatprep.subr.bf16.mxu0 0
        %3530 = vmatpush1.bf16.msra.mxu0 %v3383
        %3531 = vmatprep.subr.bf16.mxu0 0
        %3532 = vmatpush1.bf16.msra.mxu0 %v3382
        %3533 = vmatprep.subr.bf16.mxu0 0
        %3534 = vmatpush1.bf16.msra.mxu0 %v3381
        %3535 = vmatprep.subr.bf16.mxu0 0
        %3536 = vmatpush1.bf16.msra.mxu0 %v3380
        %3537 = vmatprep.subr.bf16.mxu0 0
        %3538 = vmatpush1.bf16.msra.mxu0 %v3379
        %3539 = vmatprep.subr.bf16.mxu0 0
        %3540 = vmatpush2.bf16.msra.mxu0 %v3394
        %3541 = vmatprep.subr.bf16.mxu0 0
        %3542 = vmatpush2.bf16.msra.mxu0 %v3393
        %3543 = vmatprep.subr.bf16.mxu0 0
        %3544 = vmatpush2.bf16.msra.mxu0 %v3392
        %3545 = vmatprep.subr.bf16.mxu0 0
        %3546 = vmatpush2.bf16.msra.mxu0 %v3391
        %3547 = vmatprep.subr.bf16.mxu0 0
        %3548 = vmatpush2.bf16.msra.mxu0 %v3390
        %3549 = vmatprep.subr.bf16.mxu0 0
        %3550 = vmatpush2.bf16.msra.mxu0 %v3389
        %3551 = vmatprep.subr.bf16.mxu0 0
        %3552 = vmatpush2.bf16.msra.mxu0 %v3388
        %3553 = vmatprep.subr.bf16.mxu0 0
        %3554 = vmatpush2.bf16.msra.mxu0 %v3387
        %3555 = vmatprep.mubr.bf16.mxu0 %v3020
        %3556 = vmatmul.mubr.bf16.gmra.mxu0 %v3019
        %v3557 = vpop.f32.mrf.mxu0
        %v3558 = vadd.f32 %v2905, %v3557
        %v3559 = vpop.f32.mrf.mxu0
        %v3560 = vpop.f32.mrf.mxu0
        %v3561 = vadd.f32 %v2905, %v3560
        %v3562 = vpop.f32.mrf.mxu0
        %3563 = vmatprep.mubr.bf16.mxu0 %v3029
        %3564 = vmatmul.mubr.bf16.gmra.mxu0 %v3028
        %v3565 = vpop.f32.mrf.mxu0
        %v3566 = vadd.f32 %v2905, %v3565
        %v3567 = vpop.f32.mrf.mxu0
        %v3568 = vpop.f32.mrf.mxu0
        %v3569 = vadd.f32 %v2905, %v3568
        %v3570 = vpop.f32.mrf.mxu0
        %3571 = vmatprep.mubr.bf16.mxu0 %v3038
        %3572 = vmatmul.mubr.bf16.gmra.mxu0 %v3037
        %v3573 = vpop.f32.mrf.mxu0
        %v3574 = vadd.f32 %v2905, %v3573
        %v3575 = vpop.f32.mrf.mxu0
        %v3576 = vpop.f32.mrf.mxu0
        %v3577 = vadd.f32 %v2905, %v3576
        %v3578 = vpop.f32.mrf.mxu0
        %3579 = vmatprep.mubr.bf16.mxu0 %v3047
        %3580 = vmatmul.mubr.bf16.gmra.mxu0 %v3046
        %v3581 = vpop.f32.mrf.mxu0
        %v3582 = vadd.f32 %v2905, %v3581
        %v3583 = vpop.f32.mrf.mxu0
        %v3584 = vpop.f32.mrf.mxu0
        %v3585 = vadd.f32 %v2905, %v3584
        %v3586 = vpop.f32.mrf.mxu0
        %3587 = vdwg.mxu0
        %3588 = vmatprep.subr.bf16.mxu0 0
        %3589 = vmatpush1.bf16.msra.mxu0 %v3402
        %3590 = vmatprep.subr.bf16.mxu0 0
        %3591 = vmatpush1.bf16.msra.mxu0 %v3401
        %3592 = vmatprep.subr.bf16.mxu0 0
        %3593 = vmatpush1.bf16.msra.mxu0 %v3400
        %3594 = vmatprep.subr.bf16.mxu0 0
        %3595 = vmatpush1.bf16.msra.mxu0 %v3399
        %3596 = vmatprep.subr.bf16.mxu0 0
        %3597 = vmatpush1.bf16.msra.mxu0 %v3398
        %3598 = vmatprep.subr.bf16.mxu0 0
        %3599 = vmatpush1.bf16.msra.mxu0 %v3397
        %3600 = vmatprep.subr.bf16.mxu0 0
        %3601 = vmatpush1.bf16.msra.mxu0 %v3396
        %3602 = vmatprep.subr.bf16.mxu0 0
        %3603 = vmatpush1.bf16.msra.mxu0 %v3395
        %3604 = vmatprep.subr.bf16.mxu0 0
        %3605 = vmatpush2.bf16.msra.mxu0 %v3410
        %3606 = vmatprep.subr.bf16.mxu0 0
        %3607 = vmatpush2.bf16.msra.mxu0 %v3409
        %3608 = vmatprep.subr.bf16.mxu0 0
        %3609 = vmatpush2.bf16.msra.mxu0 %v3408
        %3610 = vmatprep.subr.bf16.mxu0 0
        %3611 = vmatpush2.bf16.msra.mxu0 %v3407
        %3612 = vmatprep.subr.bf16.mxu0 0
        %3613 = vmatpush2.bf16.msra.mxu0 %v3406
        %3614 = vmatprep.subr.bf16.mxu0 0
        %3615 = vmatpush2.bf16.msra.mxu0 %v3405
        %3616 = vmatprep.subr.bf16.mxu0 0
        %3617 = vmatpush2.bf16.msra.mxu0 %v3404
        %3618 = vmatprep.subr.bf16.mxu0 0
        %3619 = vmatpush2.bf16.msra.mxu0 %v3403
        %3620 = vmatprep.mubr.bf16.mxu0 %v3022
        %3621 = vmatmul.mubr.bf16.gmra.mxu0 %v3021
        %v3622 = vpop.f32.mrf.mxu0
        %v3623 = vadd.f32 %v3558, %v3622
        %v3624 = vpop.f32.mrf.mxu0
        %v3625 = vpop.f32.mrf.mxu0
        %v3626 = vadd.f32 %v3561, %v3625
        %v3627 = vpop.f32.mrf.mxu0
        %3628 = vmatprep.mubr.bf16.mxu0 %v3031
        %3629 = vmatmul.mubr.bf16.gmra.mxu0 %v3030
        %v3630 = vpop.f32.mrf.mxu0
        %v3631 = vadd.f32 %v3566, %v3630
        %v3632 = vpop.f32.mrf.mxu0
        %v3633 = vpop.f32.mrf.mxu0
        %v3634 = vadd.f32 %v3569, %v3633
        %v3635 = vpop.f32.mrf.mxu0
        %3636 = vmatprep.mubr.bf16.mxu0 %v3040
        %3637 = vmatmul.mubr.bf16.gmra.mxu0 %v3039
        %v3638 = vpop.f32.mrf.mxu0
        %v3639 = vadd.f32 %v3574, %v3638
        %v3640 = vpop.f32.mrf.mxu0
        %v3641 = vpop.f32.mrf.mxu0
        %v3642 = vadd.f32 %v3577, %v3641
        %v3643 = vpop.f32.mrf.mxu0
        %3644 = vmatprep.mubr.bf16.mxu0 %v3049
        %3645 = vmatmul.mubr.bf16.gmra.mxu0 %v3048
        %v3646 = vpop.f32.mrf.mxu0
        %v3647 = vadd.f32 %v3582, %v3646
        %v3648 = vpop.f32.mrf.mxu0
        %v3649 = vpop.f32.mrf.mxu0
        %v3650 = vadd.f32 %v3585, %v3649
        %v3651 = vpop.f32.mrf.mxu0
        %3652 = vdwg.mxu0
        %3653 = vmatprep.subr.bf16.mxu0 0
        %3654 = vmatpush1.bf16.msra.mxu0 %v3418
        %3655 = vmatprep.subr.bf16.mxu0 0
        %3656 = vmatpush1.bf16.msra.mxu0 %v3417
        %3657 = vmatprep.subr.bf16.mxu0 0
        %3658 = vmatpush1.bf16.msra.mxu0 %v3416
        %3659 = vmatprep.subr.bf16.mxu0 0
        %3660 = vmatpush1.bf16.msra.mxu0 %v3415
        %3661 = vmatprep.subr.bf16.mxu0 0
        %3662 = vmatpush1.bf16.msra.mxu0 %v3414
        %3663 = vmatprep.subr.bf16.mxu0 0
        %3664 = vmatpush1.bf16.msra.mxu0 %v3413
        %3665 = vmatprep.subr.bf16.mxu0 0
        %3666 = vmatpush1.bf16.msra.mxu0 %v3412
        %3667 = vmatprep.subr.bf16.mxu0 0
        %3668 = vmatpush1.bf16.msra.mxu0 %v3411
        %3669 = vmatprep.subr.bf16.mxu0 0
        %3670 = vmatpush2.bf16.msra.mxu0 %v3426
        %3671 = vmatprep.subr.bf16.mxu0 0
        %3672 = vmatpush2.bf16.msra.mxu0 %v3425
        %3673 = vmatprep.subr.bf16.mxu0 0
        %3674 = vmatpush2.bf16.msra.mxu0 %v3424
        %3675 = vmatprep.subr.bf16.mxu0 0
        %3676 = vmatpush2.bf16.msra.mxu0 %v3423
        %3677 = vmatprep.subr.bf16.mxu0 0
        %3678 = vmatpush2.bf16.msra.mxu0 %v3422
        %3679 = vmatprep.subr.bf16.mxu0 0
        %3680 = vmatpush2.bf16.msra.mxu0 %v3421
        %3681 = vmatprep.subr.bf16.mxu0 0
        %3682 = vmatpush2.bf16.msra.mxu0 %v3420
        %3683 = vmatprep.subr.bf16.mxu0 0
        %3684 = vmatpush2.bf16.msra.mxu0 %v3419
        %3685 = vmatprep.mubr.bf16.mxu0 %v3024
        %3686 = vmatmul.mubr.bf16.gmra.mxu0 %v3023
        %v3687 = vpop.f32.mrf.mxu0
        %v3688 = vadd.f32 %v3623, %v3687
        %v3689 = vpop.f32.mrf.mxu0
        %v3690 = vpop.f32.mrf.mxu0
        %v3691 = vadd.f32 %v3626, %v3690
        %v3692 = vpop.f32.mrf.mxu0
        %3693 = vmatprep.mubr.bf16.mxu0 %v3033
        %3694 = vmatmul.mubr.bf16.gmra.mxu0 %v3032
        %v3695 = vpop.f32.mrf.mxu0
        %v3696 = vadd.f32 %v3631, %v3695
        %v3697 = vpop.f32.mrf.mxu0
        %v3698 = vpop.f32.mrf.mxu0
        %v3699 = vadd.f32 %v3634, %v3698
        %v3700 = vpop.f32.mrf.mxu0
        %3701 = vmatprep.mubr.bf16.mxu0 %v3042
        %3702 = vmatmul.mubr.bf16.gmra.mxu0 %v3041
        %v3703 = vpop.f32.mrf.mxu0
        %v3704 = vadd.f32 %v3639, %v3703
        %v3705 = vpop.f32.mrf.mxu0
        %v3706 = vpop.f32.mrf.mxu0
        %v3707 = vadd.f32 %v3642, %v3706
        %v3708 = vpop.f32.mrf.mxu0
        %3709 = vmatprep.mubr.bf16.mxu0 %v3051
        %3710 = vmatmul.mubr.bf16.gmra.mxu0 %v3050
        %v3711 = vpop.f32.mrf.mxu0
        %v3712 = vadd.f32 %v3647, %v3711
        %v3713 = vpop.f32.mrf.mxu0
        %v3714 = vpop.f32.mrf.mxu0
        %v3715 = vadd.f32 %v3650, %v3714
        %v3716 = vpop.f32.mrf.mxu0
        %3717 = vdwg.mxu0
        %3718 = vmatprep.subr.bf16.mxu0 0
        %3719 = vmatpush1.bf16.msra.mxu0 %v3434
        %3720 = vmatprep.subr.bf16.mxu0 0
        %3721 = vmatpush1.bf16.msra.mxu0 %v3433
        %3722 = vmatprep.subr.bf16.mxu0 0
        %3723 = vmatpush1.bf16.msra.mxu0 %v3432
        %3724 = vmatprep.subr.bf16.mxu0 0
        %3725 = vmatpush1.bf16.msra.mxu0 %v3431
        %3726 = vmatprep.subr.bf16.mxu0 0
        %3727 = vmatpush1.bf16.msra.mxu0 %v3430
        %3728 = vmatprep.subr.bf16.mxu0 0
        %3729 = vmatpush1.bf16.msra.mxu0 %v3429
        %3730 = vmatprep.subr.bf16.mxu0 0
        %3731 = vmatpush1.bf16.msra.mxu0 %v3428
        %3732 = vmatprep.subr.bf16.mxu0 0
        %3733 = vmatpush1.bf16.msra.mxu0 %v3427
        %3734 = vmatprep.subr.bf16.mxu0 0
        %3735 = vmatpush2.bf16.msra.mxu0 %v3442
        %3736 = vmatprep.subr.bf16.mxu0 0
        %3737 = vmatpush2.bf16.msra.mxu0 %v3441
        %3738 = vmatprep.subr.bf16.mxu0 0
        %3739 = vmatpush2.bf16.msra.mxu0 %v3440
        %3740 = vmatprep.subr.bf16.mxu0 0
        %3741 = vmatpush2.bf16.msra.mxu0 %v3439
        %3742 = vmatprep.subr.bf16.mxu0 0
        %3743 = vmatpush2.bf16.msra.mxu0 %v3438
        %3744 = vmatprep.subr.bf16.mxu0 0
        %3745 = vmatpush2.bf16.msra.mxu0 %v3437
        %3746 = vmatprep.subr.bf16.mxu0 0
        %3747 = vmatpush2.bf16.msra.mxu0 %v3436
        %3748 = vmatprep.subr.bf16.mxu0 0
        %3749 = vmatpush2.bf16.msra.mxu0 %v3435
        %3750 = vmatprep.mubr.bf16.mxu0 %v3026
        %3751 = vmatmul.mubr.bf16.gmra.mxu0 %v3025
        %v3752 = vpop.f32.mrf.mxu0
        %v3753 = vadd.f32 %v3688, %v3752
        %v3754 = vpop.f32.mrf.mxu0
        %v3755 = vpop.f32.mrf.mxu0
        %v3756 = vadd.f32 %v3691, %v3755
        %v3757 = vpop.f32.mrf.mxu0
        %3758 = vmatprep.mubr.bf16.mxu0 %v3035
        %3759 = vmatmul.mubr.bf16.gmra.mxu0 %v3034
        %v3760 = vpop.f32.mrf.mxu0
        %v3761 = vadd.f32 %v3696, %v3760
        %v3762 = vpop.f32.mrf.mxu0
        %v3763 = vpop.f32.mrf.mxu0
        %v3764 = vadd.f32 %v3699, %v3763
        %v3765 = vpop.f32.mrf.mxu0
        %3766 = vmatprep.mubr.bf16.mxu0 %v3044
        %3767 = vmatmul.mubr.bf16.gmra.mxu0 %v3043
        %v3768 = vpop.f32.mrf.mxu0
        %v3769 = vadd.f32 %v3704, %v3768
        %v3770 = vpop.f32.mrf.mxu0
        %v3771 = vpop.f32.mrf.mxu0
        %v3772 = vadd.f32 %v3707, %v3771
        %v3773 = vpop.f32.mrf.mxu0
        %3774 = vmatprep.mubr.bf16.mxu0 %v3053
        %3775 = vmatmul.mubr.bf16.gmra.mxu0 %v3052
        %v3776 = vpop.f32.mrf.mxu0
        %v3777 = vadd.f32 %v3712, %v3776
        %v3778 = vpop.f32.mrf.mxu0
        %v3779 = vpop.f32.mrf.mxu0
        %v3780 = vadd.f32 %v3715, %v3779
        %v3781 = vpop.f32.mrf.mxu0
        %3782 = vdwg.mxu0
        %3783 = vmatprep.subr.bf16.mxu0 0
        %3784 = vmatpush1.bf16.msra.mxu0 %v3450
        %3785 = vmatprep.subr.bf16.mxu0 0
        %3786 = vmatpush1.bf16.msra.mxu0 %v3449
        %3787 = vmatprep.subr.bf16.mxu0 0
        %3788 = vmatpush1.bf16.msra.mxu0 %v3448
        %3789 = vmatprep.subr.bf16.mxu0 0
        %3790 = vmatpush1.bf16.msra.mxu0 %v3447
        %3791 = vmatprep.subr.bf16.mxu0 0
        %3792 = vmatpush1.bf16.msra.mxu0 %v3446
        %3793 = vmatprep.subr.bf16.mxu0 0
        %3794 = vmatpush1.bf16.msra.mxu0 %v3445
        %3795 = vmatprep.subr.bf16.mxu0 0
        %3796 = vmatpush1.bf16.msra.mxu0 %v3444
        %3797 = vmatprep.subr.bf16.mxu0 0
        %3798 = vmatpush1.bf16.msra.mxu0 %v3443
        %3799 = vmatprep.subr.bf16.mxu0 0
        %3800 = vmatpush2.bf16.msra.mxu0 0
        %3801 = vmatprep.subr.bf16.mxu0 0
        %3802 = vmatpush2.bf16.msra.mxu0 0
        %3803 = vmatprep.subr.bf16.mxu0 0
        %3804 = vmatpush2.bf16.msra.mxu0 0
        %3805 = vmatprep.subr.bf16.mxu0 0
        %3806 = vmatpush2.bf16.msra.mxu0 0
        %3807 = vmatprep.subr.bf16.mxu0 0
        %3808 = vmatpush2.bf16.msra.mxu0 0
        %3809 = vmatprep.subr.bf16.mxu0 0
        %3810 = vmatpush2.bf16.msra.mxu0 0
        %3811 = vmatprep.subr.bf16.mxu0 0
        %3812 = vmatpush2.bf16.msra.mxu0 0
        %3813 = vmatprep.subr.bf16.mxu0 0
        %3814 = vmatpush2.bf16.msra.mxu0 0
        %3815 = vmatprep.mubr.bf16.mxu0 0
        %3816 = vmatmul.mubr.bf16.gmra.mxu0 %v3027
        %v3817 = vpop.f32.mrf.mxu0
        %v3818 = vadd.f32 %v3753, %v3817
        %v3819 = vpop.f32.mrf.mxu0
        %v3820 = vpop.f32.mrf.mxu0
        %v3821 = vadd.f32 %v3756, %v3820
        %v3822 = vpop.f32.mrf.mxu0
        %3823 = vmatprep.mubr.bf16.mxu0 0
        %3824 = vmatmul.mubr.bf16.gmra.mxu0 %v3036
        %v3825 = vpop.f32.mrf.mxu0
        %v3826 = vadd.f32 %v3761, %v3825
        %v3827 = vpop.f32.mrf.mxu0
        %v3828 = vpop.f32.mrf.mxu0
        %v3829 = vadd.f32 %v3764, %v3828
        %v3830 = vpop.f32.mrf.mxu0
        %3831 = vmatprep.mubr.bf16.mxu0 0
        %3832 = vmatmul.mubr.bf16.gmra.mxu0 %v3045
        %v3833 = vpop.f32.mrf.mxu0
        %v3834 = vadd.f32 %v3769, %v3833
        %v3835 = vpop.f32.mrf.mxu0
        %v3836 = vpop.f32.mrf.mxu0
        %v3837 = vadd.f32 %v3772, %v3836
        %v3838 = vpop.f32.mrf.mxu0
        %3839 = vmatprep.mubr.bf16.mxu0 0
        %3840 = vmatmul.mubr.bf16.gmra.mxu0 %v3054
        %v3841 = vpop.f32.mrf.mxu0
        %v3842 = vadd.f32 %v3777, %v3841
        %v3843 = vpop.f32.mrf.mxu0
        %v3844 = vpop.f32.mrf.mxu0
        %v3845 = vadd.f32 %v3780, %v3844
        %v3846 = vpop.f32.mrf.mxu0
        %3847 = vdwg.mxu0
        %v3848 = vadd.f32 %v3818, %v3821
        %v3849 = vadd.f32 %v3848, %v3826
        %v3850 = vadd.f32 %v3849, %v3829
        %v3851 = vadd.f32 %v3850, %v3834
        %v3852 = vadd.f32 %v3851, %v3837
        %v3853 = vadd.f32 %v3852, %v3842
        %v3854 = vadd.f32 %v3853, %v3845
        %v3855 = vrot.slane %v3854, 4
        %v3856 = vadd.f32 %v3854, %v3855
        %v3857 = vrot.slane %v3856, 2
        %v3858 = vadd.f32 %v3856, %v3857
        %v3859 = vrot.slane %v3858, 1
        %v3860 = vadd.f32 %v3858, %v3859
        %v3861 = vmul.f32 %v3818, %v3818
        %v3862 = vmul.f32 %v3821, %v3821
        %v3863 = vmul.f32 %v3826, %v3826
        %v3864 = vmul.f32 %v3829, %v3829
        %v3865 = vmul.f32 %v3834, %v3834
        %v3866 = vmul.f32 %v3837, %v3837
        %v3867 = vmul.f32 %v3842, %v3842
        %v3868 = vmul.f32 %v3845, %v3845
        %v3869 = vadd.f32 %v3861, %v3862
        %v3870 = vadd.f32 %v3869, %v3863
        %v3871 = vadd.f32 %v3870, %v3864
        %v3872 = vadd.f32 %v3871, %v3865
        %v3873 = vadd.f32 %v3872, %v3866
        %v3874 = vadd.f32 %v3873, %v3867
        %v3875 = vadd.f32 %v3874, %v3868
        %v3876 = vrot.slane %v3875, 4
        %v3877 = vadd.f32 %v3875, %v3876
        %v3878 = vrot.slane %v3877, 2
        %v3879 = vadd.f32 %v3877, %v3878
        %v3880 = vrot.slane %v3879, 1
        %v3881 = vadd.f32 %v3879, %v3880
        %v3882 = vsel %vm2103, %v3860, 0.0
        %3883 = vadd.xlane.f32.xlu0 %v3882
        %v3884 = vpop.xlane.xlu0 %3883
        %v3885 = vrot.slane %v3884, 4
        %v3886 = vadd.f32 %v3884, %v3885
        %v3887 = vrot.slane %v3886, 2
        %v3888 = vadd.f32 %v3886, %v3887
        %v3889 = vrot.slane %v3888, 1
        %v3890 = vadd.f32 %v3888, %v3889
        %s3891 = vtos %v3890
        %s3892 = smul.f32 %s3891, 0.00012207031
        %v3893 = vsel %vm2103, %v3881, 0.0
        %3894 = vadd.xlane.f32.xlu0 %v3893
        %v3895 = vpop.xlane.xlu0 %3894
        %v3896 = vrot.slane %v3895, 4
        %v3897 = vadd.f32 %v3895, %v3896
        %v3898 = vrot.slane %v3897, 2
        %v3899 = vadd.f32 %v3897, %v3898
        %v3900 = vrot.slane %v3899, 1
        %v3901 = vadd.f32 %v3899, %v3900
        %s3902 = vtos %v3901
        %s3903 = smul.f32 %s3902, 0.00012207031
        %s3904 = smul.f32 %s3892, %s3892
        %s3905 = ssub.f32 %s3903, %s3904
        %s3906 = smax.f32 %s3905, 0.0
        %v3907 = vstv %s3892
        %v3908 = vsub.f32 %v3818, %v3907
        %v3909 = vsub.f32 %v3821, %v3907
        %v3910 = vsub.f32 %v3826, %v3907
        %v3911 = vsub.f32 %v3829, %v3907
        %v3912 = vsub.f32 %v3834, %v3907
        %v3913 = vsub.f32 %v3837, %v3907
        %v3914 = vsub.f32 %v3842, %v3907
        %v3915 = vsub.f32 %v3845, %v3907
        %s3916 = sadd.f32 %s3906, 1e-05
        %v3917 = vstv %s3916
        %v3918 = vrsqrt.pop %v3917
        %s3919 = vtos %v3918
        %v3920 = vstv %s3919
        %v3921 = vmul.f32 %v3908, %v3920
        %v3922 = vmul.f32 %v3909, %v3920
        %v3923 = vmul.f32 %v3910, %v3920
        %v3924 = vmul.f32 %v3911, %v3920
        %v3925 = vmul.f32 %v3912, %v3920
        %v3926 = vmul.f32 %v3913, %v3920
        %v3927 = vmul.f32 %v3914, %v3920
        %v3928 = vmul.f32 %v3915, %v3920
        %s3929 = scalar_lea.vmem [#allocation11], 32
        %v3930 = vld [vmem:[%s3929] sm:$0xf]
        %v3931 = vld [vmem:[%s3929 + $0x4] sm:$0xf]
        %v3932 = vld [vmem:[%s3929 + $0x8] sm:$0xf]
        %v3933 = vld [vmem:[%s3929 + $0xc] sm:$0xf]
        %v3934 = vld [vmem:[%s3929 + $0x10] sm:$0xf]
        %v3935 = vld [vmem:[%s3929 + $0x14] sm:$0xf]
        %v3936 = vld [vmem:[%s3929 + $0x18] sm:$0xf]
        %v3937 = vld [vmem:[%s3929 + $0x1c] sm:$0xf]
        %v3938 = vunpack.c.l.bf16 %v3930
        %v3939 = vunpack.c.l.bf16 %v3931
        %v3940 = vunpack.c.l.bf16 %v3932
        %v3941 = vunpack.c.l.bf16 %v3933
        %v3942 = vunpack.c.l.bf16 %v3934
        %v3943 = vunpack.c.l.bf16 %v3935
        %v3944 = vunpack.c.l.bf16 %v3936
        %v3945 = vunpack.c.l.bf16 %v3937
        %v3946 = vmul.f32 %v3921, %v3938
        %v3947 = vmul.f32 %v3922, %v3939
        %v3948 = vmul.f32 %v3923, %v3940
        %v3949 = vmul.f32 %v3924, %v3941
        %v3950 = vmul.f32 %v3925, %v3942
        %v3951 = vmul.f32 %v3926, %v3943
        %v3952 = vmul.f32 %v3927, %v3944
        %v3953 = vmul.f32 %v3928, %v3945
        %s3954 = scalar_lea.vmem [#allocation13], 32
        %v3955 = vld [vmem:[%s3954] sm:$0xf]
        %v3956 = vld [vmem:[%s3954 + $0x4] sm:$0xf]
        %v3957 = vld [vmem:[%s3954 + $0x8] sm:$0xf]
        %v3958 = vld [vmem:[%s3954 + $0xc] sm:$0xf]
        %v3959 = vld [vmem:[%s3954 + $0x10] sm:$0xf]
        %v3960 = vld [vmem:[%s3954 + $0x14] sm:$0xf]
        %v3961 = vld [vmem:[%s3954 + $0x18] sm:$0xf]
        %v3962 = vld [vmem:[%s3954 + $0x1c] sm:$0xf]
        %v3963 = vunpack.c.l.bf16 %v3955
        %v3964 = vunpack.c.l.bf16 %v3956
        %v3965 = vunpack.c.l.bf16 %v3957
        %v3966 = vunpack.c.l.bf16 %v3958
        %v3967 = vunpack.c.l.bf16 %v3959
        %v3968 = vunpack.c.l.bf16 %v3960
        %v3969 = vunpack.c.l.bf16 %v3961
        %v3970 = vunpack.c.l.bf16 %v3962
        %v3971 = vadd.f32 %v3946, %v3963
        %v3972 = vadd.f32 %v3947, %v3964
        %v3973 = vadd.f32 %v3948, %v3965
        %v3974 = vadd.f32 %v3949, %v3966
        %v3975 = vadd.f32 %v3950, %v3967
        %v3976 = vadd.f32 %v3951, %v3968
        %v3977 = vadd.f32 %v3952, %v3969
        %v3978 = vadd.f32 %v3953, %v3970
        %v3979 = vmax.f32 %v3971, 0.0
        %v3980 = vmax.f32 %v3972, 0.0
        %v3981 = vmax.f32 %v3973, 0.0
        %v3982 = vmax.f32 %v3974, 0.0
        %v3983 = vmax.f32 %v3975, 0.0
        %v3984 = vmax.f32 %v3976, 0.0
        %v3985 = vmax.f32 %v3977, 0.0
        %v3986 = vmax.f32 %v3978, 0.0
        %3987 = vst [vmem:[%s428 + $0x1] sm:$0xff] %v3979
        %3988 = vst [vmem:[%s428 + $0x9] sm:$0xff] %v3980
        %3989 = vst [vmem:[%s428 + $0x19] sm:$0xff] %v3981
        %3990 = vst [vmem:[%s428 + $0x21] sm:$0xff] %v3982
        %3991 = vst [vmem:[%s428 + $0x31] sm:$0xff] %v3983
        %3992 = vst [vmem:[%s428 + $0x39] sm:$0xff] %v3984
        %3993 = vst [vmem:[%s428 + $0x49] sm:$0xff] %v3985
        %3994 = vst [vmem:[%s428 + $0x51] sm:$0xff] %v3986
        %v3995 = vld [vmem:[#allocation2] sm:$0xff]
        %v3996 = vld [vmem:[#allocation2 + $0x8] sm:$0xff]
        %v3997 = vld [vmem:[#allocation2 + $0x18] sm:$0xff]
        %v3998 = vld [vmem:[#allocation2 + $0x20] sm:$0xff]
        %v3999 = vld [vmem:[#allocation2 + $0x30] sm:$0xff]
        %v4000 = vld [vmem:[#allocation2 + $0x38] sm:$0xff]
        %v4001 = vld [vmem:[#allocation2 + $0x48] sm:$0xff]
        %v4002 = vld [vmem:[#allocation2 + $0x50] sm:$0xff]
        %v4003 = vld [vmem:[#allocation2 + $0x60] sm:$0xff]
        %v4004 = vld [vmem:[#allocation2 + $0x68] sm:$0xff]
        %v4005 = vld [vmem:[#allocation2 + $0x78] sm:$0xff]
        %v4006 = vld [vmem:[#allocation2 + $0x80] sm:$0xff]
        %v4007 = vpack.c.bf16 %v3996, %v3995
        %v4008 = vpack.c.bf16 %v3998, %v3997
        %v4009 = vpack.c.bf16 %v4000, %v3999
        %v4010 = vpack.c.bf16 %v4002, %v4001
        %v4011 = vpack.c.bf16 %v4004, %v4003
        %v4012 = vpack.c.bf16 %v4006, %v4005
        %4017 = vrot.lane.b32.xlu0 %v4007, 32
        %v4018 = vpop.permute.xlu0 %4017
        %4019 = vrot.lane.b32.xlu0 %v4008, 32
        %v4020 = vpop.permute.xlu0 %4019
        %4021 = vrot.lane.b32.xlu0 %v4009, 32
        %v4022 = vpop.permute.xlu0 %4021
        %4023 = vrot.lane.b32.xlu0 %v4010, 32
        %v4024 = vpop.permute.xlu0 %4023
        %4026 = vrot.lane.b32.xlu0 %v4011, 32
        %v4027 = vpop.permute.xlu0 %4026
        %v4030 = vsel %vm470, %v4018, %v4020
        %v4032 = vsel %vm470, %v4020, %v4022
        %v4034 = vsel %vm470, %v4022, %v4024
        %v4036 = vsel %vm470, %v4024, %v4027
        %4037 = vrot.lane.b32.xlu0 %v4008, 96
        %v4038 = vpop.permute.xlu0 %4037
        %4039 = vrot.lane.b32.xlu0 %v4009, 96
        %v4040 = vpop.permute.xlu0 %4039
        %4041 = vrot.lane.b32.xlu0 %v4010, 96
        %v4042 = vpop.permute.xlu0 %4041
        %4043 = vrot.lane.b32.xlu0 %v4011, 96
        %v4044 = vpop.permute.xlu0 %4043
        %4046 = vrot.lane.b32.xlu0 %v4012, 96
        %v4047 = vpop.permute.xlu0 %4046
        %v4050 = vsel %vm491, %v4038, %v4040
        %v4052 = vsel %vm491, %v4040, %v4042
        %v4054 = vsel %vm491, %v4042, %v4044
        %v4056 = vsel %vm491, %v4044, %v4047
        %v4061 = vunpack.c.l.b16 %v4030
        %v4062 = vunpack.c.h.b16 %v4030
        %v4063 = vunpack.c.l.b16 %v4032
        %v4064 = vunpack.c.h.b16 %v4032
        %v4065 = vunpack.c.l.b16 %v4034
        %v4066 = vunpack.c.h.b16 %v4034
        %v4067 = vunpack.c.l.b16 %v4036
        %v4068 = vunpack.c.h.b16 %v4036
        %v4069 = vpack.c.b16 %v4061, %v4061
        %v4070 = vpack.c.b16 %v4062, %v4062
        %v4071 = vpack.c.b16 %v4063, %v4063
        %v4072 = vpack.c.b16 %v4064, %v4064
        %v4073 = vpack.c.b16 %v4065, %v4065
        %v4074 = vpack.c.b16 %v4066, %v4066
        %v4075 = vpack.c.b16 %v4067, %v4067
        %v4076 = vpack.c.b16 %v4068, %v4068
        %4085 = vst [vmem:[#allocation4] sm:$0xf] %v4069
        %4086 = vst [vmem:[#allocation4 + $0x24] sm:$0xf] %v4070
        %4087 = vst [vmem:[#allocation4 + $0x48] sm:$0xf] %v4071
        %4088 = vst [vmem:[#allocation4 + $0x6c] sm:$0xf] %v4072
        %4089 = vst [vmem:[#allocation4 + $0x90] sm:$0xf] %v4073
        %4090 = vst [vmem:[#allocation4 + $0xb4] sm:$0xf] %v4074
        %4091 = vst [vmem:[#allocation4 + $0xd8] sm:$0xf] %v4075
        %4092 = vst [vmem:[#allocation4 + $0xfc] sm:$0xf] %v4076
        %v4093 = vunpack.c.l.b16 %v4008
        %v4094 = vunpack.c.h.b16 %v4008
        %v4095 = vunpack.c.l.b16 %v4009
        %v4096 = vunpack.c.h.b16 %v4009
        %v4097 = vunpack.c.l.b16 %v4010
        %v4098 = vunpack.c.h.b16 %v4010
        %v4099 = vunpack.c.l.b16 %v4011
        %v4100 = vunpack.c.h.b16 %v4011
        %v4101 = vpack.c.b16 %v4093, %v4093
        %v4102 = vpack.c.b16 %v4094, %v4094
        %v4103 = vpack.c.b16 %v4095, %v4095
        %v4104 = vpack.c.b16 %v4096, %v4096
        %v4105 = vpack.c.b16 %v4097, %v4097
        %v4106 = vpack.c.b16 %v4098, %v4098
        %v4107 = vpack.c.b16 %v4099, %v4099
        %v4108 = vpack.c.b16 %v4100, %v4100
        %4117 = vst [vmem:[#allocation4 + $0x4] sm:$0xf] %v4101
        %4118 = vst [vmem:[#allocation4 + $0x28] sm:$0xf] %v4102
        %4119 = vst [vmem:[#allocation4 + $0x4c] sm:$0xf] %v4103
        %4120 = vst [vmem:[#allocation4 + $0x70] sm:$0xf] %v4104
        %4121 = vst [vmem:[#allocation4 + $0x94] sm:$0xf] %v4105
        %4122 = vst [vmem:[#allocation4 + $0xb8] sm:$0xf] %v4106
        %4123 = vst [vmem:[#allocation4 + $0xdc] sm:$0xf] %v4107
        %4124 = vst [vmem:[#allocation4 + $0x100] sm:$0xf] %v4108
        %v4129 = vunpack.c.l.b16 %v4050
        %v4130 = vunpack.c.h.b16 %v4050
        %v4131 = vunpack.c.l.b16 %v4052
        %v4132 = vunpack.c.h.b16 %v4052
        %v4133 = vunpack.c.l.b16 %v4054
        %v4134 = vunpack.c.h.b16 %v4054
        %v4135 = vunpack.c.l.b16 %v4056
        %v4136 = vunpack.c.h.b16 %v4056
        %v4137 = vpack.c.b16 %v4129, %v4129
        %v4138 = vpack.c.b16 %v4130, %v4130
        %v4139 = vpack.c.b16 %v4131, %v4131
        %v4140 = vpack.c.b16 %v4132, %v4132
        %v4141 = vpack.c.b16 %v4133, %v4133
        %v4142 = vpack.c.b16 %v4134, %v4134
        %v4143 = vpack.c.b16 %v4135, %v4135
        %v4144 = vpack.c.b16 %v4136, %v4136
        %4153 = vst [vmem:[#allocation4 + $0x8] sm:$0xf] %v4137
        %4154 = vst [vmem:[#allocation4 + $0x2c] sm:$0xf] %v4138
        %4155 = vst [vmem:[#allocation4 + $0x50] sm:$0xf] %v4139
        %4156 = vst [vmem:[#allocation4 + $0x74] sm:$0xf] %v4140
        %4157 = vst [vmem:[#allocation4 + $0x98] sm:$0xf] %v4141
        %4158 = vst [vmem:[#allocation4 + $0xbc] sm:$0xf] %v4142
        %4159 = vst [vmem:[#allocation4 + $0xe0] sm:$0xf] %v4143
        %4160 = vst [vmem:[#allocation4 + $0x104] sm:$0xf] %v4144
        %v4161 = vld [vmem:[#allocation2 + $0x1] sm:$0xff]
        %v4162 = vld [vmem:[#allocation2 + $0x9] sm:$0xff]
        %v4163 = vld [vmem:[#allocation2 + $0x19] sm:$0xff]
        %v4164 = vld [vmem:[#allocation2 + $0x21] sm:$0xff]
        %v4165 = vld [vmem:[#allocation2 + $0x31] sm:$0xff]
        %v4166 = vld [vmem:[#allocation2 + $0x39] sm:$0xff]
        %v4167 = vld [vmem:[#allocation2 + $0x49] sm:$0xff]
        %v4168 = vld [vmem:[#allocation2 + $0x51] sm:$0xff]
        %v4169 = vld [vmem:[#allocation2 + $0x61] sm:$0xff]
        %v4170 = vld [vmem:[#allocation2 + $0x69] sm:$0xff]
        %v4171 = vld [vmem:[#allocation2 + $0x79] sm:$0xff]
        %v4172 = vld [vmem:[#allocation2 + $0x81] sm:$0xff]
        %v4173 = vpack.c.bf16 %v4162, %v4161
        %v4174 = vpack.c.bf16 %v4164, %v4163
        %v4175 = vpack.c.bf16 %v4166, %v4165
        %v4176 = vpack.c.bf16 %v4168, %v4167
        %v4177 = vpack.c.bf16 %v4170, %v4169
        %v4178 = vpack.c.bf16 %v4172, %v4171
        %4183 = vrot.lane.b32.xlu0 %v4173, 32
        %v4184 = vpop.permute.xlu0 %4183
        %4185 = vrot.lane.b32.xlu0 %v4174, 32
        %v4186 = vpop.permute.xlu0 %4185
        %4187 = vrot.lane.b32.xlu0 %v4175, 32
        %v4188 = vpop.permute.xlu0 %4187
        %4189 = vrot.lane.b32.xlu0 %v4176, 32
        %v4190 = vpop.permute.xlu0 %4189
        %4192 = vrot.lane.b32.xlu0 %v4177, 32
        %v4193 = vpop.permute.xlu0 %4192
        %v4196 = vsel %vm470, %v4184, %v4186
        %v4198 = vsel %vm470, %v4186, %v4188
        %v4200 = vsel %vm470, %v4188, %v4190
        %v4202 = vsel %vm470, %v4190, %v4193
        %4203 = vrot.lane.b32.xlu0 %v4174, 96
        %v4204 = vpop.permute.xlu0 %4203
        %4205 = vrot.lane.b32.xlu0 %v4175, 96
        %v4206 = vpop.permute.xlu0 %4205
        %4207 = vrot.lane.b32.xlu0 %v4176, 96
        %v4208 = vpop.permute.xlu0 %4207
        %4209 = vrot.lane.b32.xlu0 %v4177, 96
        %v4210 = vpop.permute.xlu0 %4209
        %4212 = vrot.lane.b32.xlu0 %v4178, 96
        %v4213 = vpop.permute.xlu0 %4212
        %v4216 = vsel %vm491, %v4204, %v4206
        %v4218 = vsel %vm491, %v4206, %v4208
        %v4220 = vsel %vm491, %v4208, %v4210
        %v4222 = vsel %vm491, %v4210, %v4213
        %v4227 = vunpack.c.l.b16 %v4196
        %v4228 = vunpack.c.h.b16 %v4196
        %v4229 = vunpack.c.l.b16 %v4198
        %v4230 = vunpack.c.h.b16 %v4198
        %v4231 = vunpack.c.l.b16 %v4200
        %v4232 = vunpack.c.h.b16 %v4200
        %v4233 = vunpack.c.l.b16 %v4202
        %v4234 = vunpack.c.h.b16 %v4202
        %v4235 = vpack.c.b16 %v4227, %v4227
        %v4236 = vpack.c.b16 %v4228, %v4228
        %v4237 = vpack.c.b16 %v4229, %v4229
        %v4238 = vpack.c.b16 %v4230, %v4230
        %v4239 = vpack.c.b16 %v4231, %v4231
        %v4240 = vpack.c.b16 %v4232, %v4232
        %v4241 = vpack.c.b16 %v4233, %v4233
        %v4242 = vpack.c.b16 %v4234, %v4234
        %4251 = vst [vmem:[#allocation4 + $0xc] sm:$0xf] %v4235
        %4252 = vst [vmem:[#allocation4 + $0x30] sm:$0xf] %v4236
        %4253 = vst [vmem:[#allocation4 + $0x54] sm:$0xf] %v4237
        %4254 = vst [vmem:[#allocation4 + $0x78] sm:$0xf] %v4238
        %4255 = vst [vmem:[#allocation4 + $0x9c] sm:$0xf] %v4239
        %4256 = vst [vmem:[#allocation4 + $0xc0] sm:$0xf] %v4240
        %4257 = vst [vmem:[#allocation4 + $0xe4] sm:$0xf] %v4241
        %4258 = vst [vmem:[#allocation4 + $0x108] sm:$0xf] %v4242
        %v4259 = vunpack.c.l.b16 %v4174
        %v4260 = vunpack.c.h.b16 %v4174
        %v4261 = vunpack.c.l.b16 %v4175
        %v4262 = vunpack.c.h.b16 %v4175
        %v4263 = vunpack.c.l.b16 %v4176
        %v4264 = vunpack.c.h.b16 %v4176
        %v4265 = vunpack.c.l.b16 %v4177
        %v4266 = vunpack.c.h.b16 %v4177
        %v4267 = vpack.c.b16 %v4259, %v4259
        %v4268 = vpack.c.b16 %v4260, %v4260
        %v4269 = vpack.c.b16 %v4261, %v4261
        %v4270 = vpack.c.b16 %v4262, %v4262
        %v4271 = vpack.c.b16 %v4263, %v4263
        %v4272 = vpack.c.b16 %v4264, %v4264
        %v4273 = vpack.c.b16 %v4265, %v4265
        %v4274 = vpack.c.b16 %v4266, %v4266
        %4283 = vst [vmem:[#allocation4 + $0x10] sm:$0xf] %v4267
        %4284 = vst [vmem:[#allocation4 + $0x34] sm:$0xf] %v4268
        %4285 = vst [vmem:[#allocation4 + $0x58] sm:$0xf] %v4269
        %4286 = vst [vmem:[#allocation4 + $0x7c] sm:$0xf] %v4270
        %4287 = vst [vmem:[#allocation4 + $0xa0] sm:$0xf] %v4271
        %4288 = vst [vmem:[#allocation4 + $0xc4] sm:$0xf] %v4272
        %4289 = vst [vmem:[#allocation4 + $0xe8] sm:$0xf] %v4273
        %4290 = vst [vmem:[#allocation4 + $0x10c] sm:$0xf] %v4274
        %v4295 = vunpack.c.l.b16 %v4216
        %v4296 = vunpack.c.h.b16 %v4216
        %v4297 = vunpack.c.l.b16 %v4218
        %v4298 = vunpack.c.h.b16 %v4218
        %v4299 = vunpack.c.l.b16 %v4220
        %v4300 = vunpack.c.h.b16 %v4220
        %v4301 = vunpack.c.l.b16 %v4222
        %v4302 = vunpack.c.h.b16 %v4222
        %v4303 = vpack.c.b16 %v4295, %v4295
        %v4304 = vpack.c.b16 %v4296, %v4296
        %v4305 = vpack.c.b16 %v4297, %v4297
        %v4306 = vpack.c.b16 %v4298, %v4298
        %v4307 = vpack.c.b16 %v4299, %v4299
        %v4308 = vpack.c.b16 %v4300, %v4300
        %v4309 = vpack.c.b16 %v4301, %v4301
        %v4310 = vpack.c.b16 %v4302, %v4302
        %4319 = vst [vmem:[#allocation4 + $0x14] sm:$0xf] %v4303
        %4320 = vst [vmem:[#allocation4 + $0x38] sm:$0xf] %v4304
        %4321 = vst [vmem:[#allocation4 + $0x5c] sm:$0xf] %v4305
        %4322 = vst [vmem:[#allocation4 + $0x80] sm:$0xf] %v4306
        %4323 = vst [vmem:[#allocation4 + $0xa4] sm:$0xf] %v4307
        %4324 = vst [vmem:[#allocation4 + $0xc8] sm:$0xf] %v4308
        %4325 = vst [vmem:[#allocation4 + $0xec] sm:$0xf] %v4309
        %4326 = vst [vmem:[#allocation4 + $0x110] sm:$0xf] %v4310
        %v4327 = vld [vmem:[#allocation2 + $0x2] sm:$0xff]
        %v4328 = vld [vmem:[#allocation2 + $0xa] sm:$0xff]
        %v4329 = vld [vmem:[#allocation2 + $0x1a] sm:$0xff]
        %v4330 = vld [vmem:[#allocation2 + $0x22] sm:$0xff]
        %v4331 = vld [vmem:[#allocation2 + $0x32] sm:$0xff]
        %v4332 = vld [vmem:[#allocation2 + $0x3a] sm:$0xff]
        %v4333 = vld [vmem:[#allocation2 + $0x4a] sm:$0xff]
        %v4334 = vld [vmem:[#allocation2 + $0x52] sm:$0xff]
        %v4335 = vld [vmem:[#allocation2 + $0x62] sm:$0xff]
        %v4336 = vld [vmem:[#allocation2 + $0x6a] sm:$0xff]
        %v4337 = vld [vmem:[#allocation2 + $0x7a] sm:$0xff]
        %v4338 = vld [vmem:[#allocation2 + $0x82] sm:$0xff]
        %v4339 = vpack.c.bf16 %v4328, %v4327
        %v4340 = vpack.c.bf16 %v4330, %v4329
        %v4341 = vpack.c.bf16 %v4332, %v4331
        %v4342 = vpack.c.bf16 %v4334, %v4333
        %v4343 = vpack.c.bf16 %v4336, %v4335
        %v4344 = vpack.c.bf16 %v4338, %v4337
        %4349 = vrot.lane.b32.xlu0 %v4339, 32
        %v4350 = vpop.permute.xlu0 %4349
        %4351 = vrot.lane.b32.xlu0 %v4340, 32
        %v4352 = vpop.permute.xlu0 %4351
        %4353 = vrot.lane.b32.xlu0 %v4341, 32
        %v4354 = vpop.permute.xlu0 %4353
        %4355 = vrot.lane.b32.xlu0 %v4342, 32
        %v4356 = vpop.permute.xlu0 %4355
        %4358 = vrot.lane.b32.xlu0 %v4343, 32
        %v4359 = vpop.permute.xlu0 %4358
        %v4362 = vsel %vm470, %v4350, %v4352
        %v4364 = vsel %vm470, %v4352, %v4354
        %v4366 = vsel %vm470, %v4354, %v4356
        %v4368 = vsel %vm470, %v4356, %v4359
        %4369 = vrot.lane.b32.xlu0 %v4340, 96
        %v4370 = vpop.permute.xlu0 %4369
        %4371 = vrot.lane.b32.xlu0 %v4341, 96
        %v4372 = vpop.permute.xlu0 %4371
        %4373 = vrot.lane.b32.xlu0 %v4342, 96
        %v4374 = vpop.permute.xlu0 %4373
        %4375 = vrot.lane.b32.xlu0 %v4343, 96
        %v4376 = vpop.permute.xlu0 %4375
        %4378 = vrot.lane.b32.xlu0 %v4344, 96
        %v4379 = vpop.permute.xlu0 %4378
        %v4382 = vsel %vm491, %v4370, %v4372
        %v4384 = vsel %vm491, %v4372, %v4374
        %v4386 = vsel %vm491, %v4374, %v4376
        %v4388 = vsel %vm491, %v4376, %v4379
        %v4393 = vunpack.c.l.b16 %v4362
        %v4394 = vunpack.c.h.b16 %v4362
        %v4395 = vunpack.c.l.b16 %v4364
        %v4396 = vunpack.c.h.b16 %v4364
        %v4397 = vunpack.c.l.b16 %v4366
        %v4398 = vunpack.c.h.b16 %v4366
        %v4399 = vunpack.c.l.b16 %v4368
        %v4400 = vunpack.c.h.b16 %v4368
        %v4401 = vpack.c.b16 %v4393, %v4393
        %v4402 = vpack.c.b16 %v4394, %v4394
        %v4403 = vpack.c.b16 %v4395, %v4395
        %v4404 = vpack.c.b16 %v4396, %v4396
        %v4405 = vpack.c.b16 %v4397, %v4397
        %v4406 = vpack.c.b16 %v4398, %v4398
        %v4407 = vpack.c.b16 %v4399, %v4399
        %v4408 = vpack.c.b16 %v4400, %v4400
        %4417 = vst [vmem:[#allocation4 + $0x18] sm:$0xf] %v4401
        %4418 = vst [vmem:[#allocation4 + $0x3c] sm:$0xf] %v4402
        %4419 = vst [vmem:[#allocation4 + $0x60] sm:$0xf] %v4403
        %4420 = vst [vmem:[#allocation4 + $0x84] sm:$0xf] %v4404
        %4421 = vst [vmem:[#allocation4 + $0xa8] sm:$0xf] %v4405
        %4422 = vst [vmem:[#allocation4 + $0xcc] sm:$0xf] %v4406
        %4423 = vst [vmem:[#allocation4 + $0xf0] sm:$0xf] %v4407
        %4424 = vst [vmem:[#allocation4 + $0x114] sm:$0xf] %v4408
        %v4425 = vunpack.c.l.b16 %v4340
        %v4426 = vunpack.c.h.b16 %v4340
        %v4427 = vunpack.c.l.b16 %v4341
        %v4428 = vunpack.c.h.b16 %v4341
        %v4429 = vunpack.c.l.b16 %v4342
        %v4430 = vunpack.c.h.b16 %v4342
        %v4431 = vunpack.c.l.b16 %v4343
        %v4432 = vunpack.c.h.b16 %v4343
        %v4433 = vpack.c.b16 %v4425, %v4425
        %v4434 = vpack.c.b16 %v4426, %v4426
        %v4435 = vpack.c.b16 %v4427, %v4427
        %v4436 = vpack.c.b16 %v4428, %v4428
        %v4437 = vpack.c.b16 %v4429, %v4429
        %v4438 = vpack.c.b16 %v4430, %v4430
        %v4439 = vpack.c.b16 %v4431, %v4431
        %v4440 = vpack.c.b16 %v4432, %v4432
        %4449 = vst [vmem:[#allocation4 + $0x1c] sm:$0xf] %v4433
        %4450 = vst [vmem:[#allocation4 + $0x40] sm:$0xf] %v4434
        %4451 = vst [vmem:[#allocation4 + $0x64] sm:$0xf] %v4435
        %4452 = vst [vmem:[#allocation4 + $0x88] sm:$0xf] %v4436
        %4453 = vst [vmem:[#allocation4 + $0xac] sm:$0xf] %v4437
        %4454 = vst [vmem:[#allocation4 + $0xd0] sm:$0xf] %v4438
        %4455 = vst [vmem:[#allocation4 + $0xf4] sm:$0xf] %v4439
        %4456 = vst [vmem:[#allocation4 + $0x118] sm:$0xf] %v4440
        %v4461 = vunpack.c.l.b16 %v4382
        %v4462 = vunpack.c.h.b16 %v4382
        %v4463 = vunpack.c.l.b16 %v4384
        %v4464 = vunpack.c.h.b16 %v4384
        %v4465 = vunpack.c.l.b16 %v4386
        %v4466 = vunpack.c.h.b16 %v4386
        %v4467 = vunpack.c.l.b16 %v4388
        %v4468 = vunpack.c.h.b16 %v4388
        %v4469 = vpack.c.b16 %v4461, %v4461
        %v4470 = vpack.c.b16 %v4462, %v4462
        %v4471 = vpack.c.b16 %v4463, %v4463
        %v4472 = vpack.c.b16 %v4464, %v4464
        %v4473 = vpack.c.b16 %v4465, %v4465
        %v4474 = vpack.c.b16 %v4466, %v4466
        %v4475 = vpack.c.b16 %v4467, %v4467
        %v4476 = vpack.c.b16 %v4468, %v4468
        %4485 = vst [vmem:[#allocation4 + $0x20] sm:$0xf] %v4469
        %4486 = vst [vmem:[#allocation4 + $0x44] sm:$0xf] %v4470
        %4487 = vst [vmem:[#allocation4 + $0x68] sm:$0xf] %v4471
        %4488 = vst [vmem:[#allocation4 + $0x8c] sm:$0xf] %v4472
        %4489 = vst [vmem:[#allocation4 + $0xb0] sm:$0xf] %v4473
        %4490 = vst [vmem:[#allocation4 + $0xd4] sm:$0xf] %v4474
        %4491 = vst [vmem:[#allocation4 + $0xf8] sm:$0xf] %v4475
        %4492 = vst [vmem:[#allocation4 + $0x11c] sm:$0xf] %v4476
        %v4493 = vld [vmem:[#allocation4] sm:$0xff]
        %v4494 = vld [vmem:[#allocation4 + $0x8] sm:$0xff]
        %v4495 = vld [vmem:[#allocation4 + $0x10] sm:$0xff]
        %v4496 = vld [vmem:[#allocation4 + $0x18] sm:$0xff]
        %v4497 = vld [vmem:[#allocation4 + $0x20] sm:$0xf]
        %v4498 = vld [vmem:[#allocation4 + $0x24] sm:$0xff]
        %v4499 = vld [vmem:[#allocation4 + $0x2c] sm:$0xff]
        %v4500 = vld [vmem:[#allocation4 + $0x34] sm:$0xff]
        %v4501 = vld [vmem:[#allocation4 + $0x3c] sm:$0xff]
        %v4502 = vld [vmem:[#allocation4 + $0x44] sm:$0xf]
        %v4503 = vld [vmem:[#allocation4 + $0x48] sm:$0xff]
        %v4504 = vld [vmem:[#allocation4 + $0x50] sm:$0xff]
        %v4505 = vld [vmem:[#allocation4 + $0x58] sm:$0xff]
        %v4506 = vld [vmem:[#allocation4 + $0x60] sm:$0xff]
        %v4507 = vld [vmem:[#allocation4 + $0x68] sm:$0xf]
        %v4508 = vld [vmem:[#allocation4 + $0x6c] sm:$0xff]
        %v4509 = vld [vmem:[#allocation4 + $0x74] sm:$0xff]
        %v4510 = vld [vmem:[#allocation4 + $0x7c] sm:$0xff]
        %v4511 = vld [vmem:[#allocation4 + $0x84] sm:$0xff]
        %v4512 = vld [vmem:[#allocation4 + $0x8c] sm:$0xf]
        %v4513 = vld [vmem:[#allocation4 + $0x90] sm:$0xff]
        %v4514 = vld [vmem:[#allocation4 + $0x98] sm:$0xff]
        %v4515 = vld [vmem:[#allocation4 + $0xa0] sm:$0xff]
        %v4516 = vld [vmem:[#allocation4 + $0xa8] sm:$0xff]
        %v4517 = vld [vmem:[#allocation4 + $0xb0] sm:$0xf]
        %v4518 = vld [vmem:[#allocation4 + $0xb4] sm:$0xff]
        %v4519 = vld [vmem:[#allocation4 + $0xbc] sm:$0xff]
        %v4520 = vld [vmem:[#allocation4 + $0xc4] sm:$0xff]
        %v4521 = vld [vmem:[#allocation4 + $0xcc] sm:$0xff]
        %v4522 = vld [vmem:[#allocation4 + $0xd4] sm:$0xf]
        %v4523 = vld [vmem:[#allocation4 + $0xd8] sm:$0xff]
        %v4524 = vld [vmem:[#allocation4 + $0xe0] sm:$0xff]
        %v4525 = vld [vmem:[#allocation4 + $0xe8] sm:$0xff]
        %v4526 = vld [vmem:[#allocation4 + $0xf0] sm:$0xff]
        %v4527 = vld [vmem:[#allocation4 + $0xf8] sm:$0xf]
        %v4528 = vld [vmem:[#allocation4 + $0xfc] sm:$0xff]
        %v4529 = vld [vmem:[#allocation4 + $0x104] sm:$0xff]
        %v4530 = vld [vmem:[#allocation4 + $0x10c] sm:$0xff]
        %v4531 = vld [vmem:[#allocation4 + $0x114] sm:$0xff]
        %v4532 = vld [vmem:[#allocation4 + $0x11c] sm:$0xf]
        %s4533 = scalar_lea.vmem [#allocation8], 1152
        %v4534 = vld [vmem:[%s4533] sm:$0xf]
        %v4535 = vld [vmem:[%s4533 + $0x4] sm:$0xf]
        %v4536 = vld [vmem:[%s4533 + $0x8] sm:$0xf]
        %v4537 = vld [vmem:[%s4533 + $0xc] sm:$0xf]
        %v4538 = vld [vmem:[%s4533 + $0x10] sm:$0xf]
        %v4539 = vld [vmem:[%s4533 + $0x14] sm:$0xf]
        %v4540 = vld [vmem:[%s4533 + $0x18] sm:$0xf]
        %v4541 = vld [vmem:[%s4533 + $0x1c] sm:$0xf]
        %v4542 = vld [vmem:[%s4533 + $0x20] sm:$0xf]
        %v4543 = vld [vmem:[%s4533 + $0x24] sm:$0xf]
        %v4544 = vld [vmem:[%s4533 + $0x28] sm:$0xf]
        %v4545 = vld [vmem:[%s4533 + $0x2c] sm:$0xf]
        %v4546 = vld [vmem:[%s4533 + $0x30] sm:$0xf]
        %v4547 = vld [vmem:[%s4533 + $0x34] sm:$0xf]
        %v4548 = vld [vmem:[%s4533 + $0x38] sm:$0xf]
        %v4549 = vld [vmem:[%s4533 + $0x3c] sm:$0xf]
        %v4550 = vld [vmem:[%s4533 + $0x40] sm:$0xf]
        %v4551 = vld [vmem:[%s4533 + $0x44] sm:$0xf]
        %v4552 = vld [vmem:[%s4533 + $0x48] sm:$0xf]
        %v4553 = vld [vmem:[%s4533 + $0x4c] sm:$0xf]
        %v4554 = vld [vmem:[%s4533 + $0x50] sm:$0xf]
        %v4555 = vld [vmem:[%s4533 + $0x54] sm:$0xf]
        %v4556 = vld [vmem:[%s4533 + $0x58] sm:$0xf]
        %v4557 = vld [vmem:[%s4533 + $0x5c] sm:$0xf]
        %v4558 = vld [vmem:[%s4533 + $0x60] sm:$0xf]
        %v4559 = vld [vmem:[%s4533 + $0x64] sm:$0xf]
        %v4560 = vld [vmem:[%s4533 + $0x68] sm:$0xf]
        %v4561 = vld [vmem:[%s4533 + $0x6c] sm:$0xf]
        %v4562 = vld [vmem:[%s4533 + $0x70] sm:$0xf]
        %v4563 = vld [vmem:[%s4533 + $0x74] sm:$0xf]
        %v4564 = vld [vmem:[%s4533 + $0x78] sm:$0xf]
        %v4565 = vld [vmem:[%s4533 + $0x7c] sm:$0xf]
        %v4566 = vld [vmem:[%s4533 + $0x80] sm:$0xf]
        %v4567 = vld [vmem:[%s4533 + $0x84] sm:$0xf]
        %v4568 = vld [vmem:[%s4533 + $0x88] sm:$0xf]
        %v4569 = vld [vmem:[%s4533 + $0x8c] sm:$0xf]
        %v4570 = vld [vmem:[%s4533 + $0x90] sm:$0xf]
        %v4571 = vld [vmem:[%s4533 + $0x94] sm:$0xf]
        %v4572 = vld [vmem:[%s4533 + $0x98] sm:$0xf]
        %v4573 = vld [vmem:[%s4533 + $0x9c] sm:$0xf]
        %v4574 = vld [vmem:[%s4533 + $0xa0] sm:$0xf]
        %v4575 = vld [vmem:[%s4533 + $0xa4] sm:$0xf]
        %v4576 = vld [vmem:[%s4533 + $0xa8] sm:$0xf]
        %v4577 = vld [vmem:[%s4533 + $0xac] sm:$0xf]
        %v4578 = vld [vmem:[%s4533 + $0xb0] sm:$0xf]
        %v4579 = vld [vmem:[%s4533 + $0xb4] sm:$0xf]
        %v4580 = vld [vmem:[%s4533 + $0xb8] sm:$0xf]
        %v4581 = vld [vmem:[%s4533 + $0xbc] sm:$0xf]
        %v4582 = vld [vmem:[%s4533 + $0xc0] sm:$0xf]
        %v4583 = vld [vmem:[%s4533 + $0xc4] sm:$0xf]
        %v4584 = vld [vmem:[%s4533 + $0xc8] sm:$0xf]
        %v4585 = vld [vmem:[%s4533 + $0xcc] sm:$0xf]
        %v4586 = vld [vmem:[%s4533 + $0xd0] sm:$0xf]
        %v4587 = vld [vmem:[%s4533 + $0xd4] sm:$0xf]
        %v4588 = vld [vmem:[%s4533 + $0xd8] sm:$0xf]
        %v4589 = vld [vmem:[%s4533 + $0xdc] sm:$0xf]
        %v4590 = vld [vmem:[%s4533 + $0xe0] sm:$0xf]
        %v4591 = vld [vmem:[%s4533 + $0xe4] sm:$0xf]
        %v4592 = vld [vmem:[%s4533 + $0xe8] sm:$0xf]
        %v4593 = vld [vmem:[%s4533 + $0xec] sm:$0xf]
        %v4594 = vld [vmem:[%s4533 + $0xf0] sm:$0xf]
        %v4595 = vld [vmem:[%s4533 + $0xf4] sm:$0xf]
        %v4596 = vld [vmem:[%s4533 + $0xf8] sm:$0xf]
        %v4597 = vld [vmem:[%s4533 + $0xfc] sm:$0xf]
        %v4598 = vld [vmem:[%s4533 + $0x100] sm:$0xf]
        %v4599 = vld [vmem:[%s4533 + $0x104] sm:$0xf]
        %v4600 = vld [vmem:[%s4533 + $0x108] sm:$0xf]
        %v4601 = vld [vmem:[%s4533 + $0x10c] sm:$0xf]
        %v4602 = vld [vmem:[%s4533 + $0x110] sm:$0xf]
        %v4603 = vld [vmem:[%s4533 + $0x114] sm:$0xf]
        %v4604 = vld [vmem:[%s4533 + $0x118] sm:$0xf]
        %v4605 = vld [vmem:[%s4533 + $0x11c] sm:$0xf]
        %v4606 = vld [vmem:[%s4533 + $0x120] sm:$0xf]
        %v4607 = vld [vmem:[%s4533 + $0x124] sm:$0xf]
        %v4608 = vld [vmem:[%s4533 + $0x128] sm:$0xf]
        %v4609 = vld [vmem:[%s4533 + $0x12c] sm:$0xf]
        %v4610 = vld [vmem:[%s4533 + $0x130] sm:$0xf]
        %v4611 = vld [vmem:[%s4533 + $0x134] sm:$0xf]
        %v4612 = vld [vmem:[%s4533 + $0x138] sm:$0xf]
        %v4613 = vld [vmem:[%s4533 + $0x13c] sm:$0xf]
        %v4614 = vld [vmem:[%s4533 + $0x140] sm:$0xf]
        %v4615 = vld [vmem:[%s4533 + $0x144] sm:$0xf]
        %v4616 = vld [vmem:[%s4533 + $0x148] sm:$0xf]
        %v4617 = vld [vmem:[%s4533 + $0x14c] sm:$0xf]
        %v4618 = vld [vmem:[%s4533 + $0x150] sm:$0xf]
        %v4619 = vld [vmem:[%s4533 + $0x154] sm:$0xf]
        %v4620 = vld [vmem:[%s4533 + $0x158] sm:$0xf]
        %v4621 = vld [vmem:[%s4533 + $0x15c] sm:$0xf]
        %v4622 = vld [vmem:[%s4533 + $0x160] sm:$0xf]
        %v4623 = vld [vmem:[%s4533 + $0x164] sm:$0xf]
        %v4624 = vld [vmem:[%s4533 + $0x168] sm:$0xf]
        %v4625 = vld [vmem:[%s4533 + $0x16c] sm:$0xf]
        %v4626 = vld [vmem:[%s4533 + $0x170] sm:$0xf]
        %v4627 = vld [vmem:[%s4533 + $0x174] sm:$0xf]
        %v4628 = vld [vmem:[%s4533 + $0x178] sm:$0xf]
        %v4629 = vld [vmem:[%s4533 + $0x17c] sm:$0xf]
        %v4630 = vld [vmem:[%s4533 + $0x180] sm:$0xf]
        %v4631 = vld [vmem:[%s4533 + $0x184] sm:$0xf]
        %v4632 = vld [vmem:[%s4533 + $0x188] sm:$0xf]
        %v4633 = vld [vmem:[%s4533 + $0x18c] sm:$0xf]
        %v4634 = vld [vmem:[%s4533 + $0x190] sm:$0xf]
        %v4635 = vld [vmem:[%s4533 + $0x194] sm:$0xf]
        %v4636 = vld [vmem:[%s4533 + $0x198] sm:$0xf]
        %v4637 = vld [vmem:[%s4533 + $0x19c] sm:$0xf]
        %v4638 = vld [vmem:[%s4533 + $0x1a0] sm:$0xf]
        %v4639 = vld [vmem:[%s4533 + $0x1a4] sm:$0xf]
        %v4640 = vld [vmem:[%s4533 + $0x1a8] sm:$0xf]
        %v4641 = vld [vmem:[%s4533 + $0x1ac] sm:$0xf]
        %v4642 = vld [vmem:[%s4533 + $0x1b0] sm:$0xf]
        %v4643 = vld [vmem:[%s4533 + $0x1b4] sm:$0xf]
        %v4644 = vld [vmem:[%s4533 + $0x1b8] sm:$0xf]
        %v4645 = vld [vmem:[%s4533 + $0x1bc] sm:$0xf]
        %v4646 = vld [vmem:[%s4533 + $0x1c0] sm:$0xf]
        %v4647 = vld [vmem:[%s4533 + $0x1c4] sm:$0xf]
        %v4648 = vld [vmem:[%s4533 + $0x1c8] sm:$0xf]
        %v4649 = vld [vmem:[%s4533 + $0x1cc] sm:$0xf]
        %v4650 = vld [vmem:[%s4533 + $0x1d0] sm:$0xf]
        %v4651 = vld [vmem:[%s4533 + $0x1d4] sm:$0xf]
        %v4652 = vld [vmem:[%s4533 + $0x1d8] sm:$0xf]
        %v4653 = vld [vmem:[%s4533 + $0x1dc] sm:$0xf]
        %v4654 = vld [vmem:[%s4533 + $0x1e0] sm:$0xf]
        %v4655 = vld [vmem:[%s4533 + $0x1e4] sm:$0xf]
        %v4656 = vld [vmem:[%s4533 + $0x1e8] sm:$0xf]
        %v4657 = vld [vmem:[%s4533 + $0x1ec] sm:$0xf]
        %v4658 = vld [vmem:[%s4533 + $0x1f0] sm:$0xf]
        %v4659 = vld [vmem:[%s4533 + $0x1f4] sm:$0xf]
        %v4660 = vld [vmem:[%s4533 + $0x1f8] sm:$0xf]
        %v4661 = vld [vmem:[%s4533 + $0x1fc] sm:$0xf]
        %v4662 = vld [vmem:[%s4533 + $0x200] sm:$0xf]
        %v4663 = vld [vmem:[%s4533 + $0x204] sm:$0xf]
        %v4664 = vld [vmem:[%s4533 + $0x208] sm:$0xf]
        %v4665 = vld [vmem:[%s4533 + $0x20c] sm:$0xf]
        %v4666 = vld [vmem:[%s4533 + $0x210] sm:$0xf]
        %v4667 = vld [vmem:[%s4533 + $0x214] sm:$0xf]
        %v4668 = vld [vmem:[%s4533 + $0x218] sm:$0xf]
        %v4669 = vld [vmem:[%s4533 + $0x21c] sm:$0xf]
        %v4670 = vld [vmem:[%s4533 + $0x220] sm:$0xf]
        %v4671 = vld [vmem:[%s4533 + $0x224] sm:$0xf]
        %v4672 = vld [vmem:[%s4533 + $0x228] sm:$0xf]
        %v4673 = vld [vmem:[%s4533 + $0x22c] sm:$0xf]
        %v4674 = vld [vmem:[%s4533 + $0x230] sm:$0xf]
        %v4675 = vld [vmem:[%s4533 + $0x234] sm:$0xf]
        %v4676 = vld [vmem:[%s4533 + $0x238] sm:$0xf]
        %v4677 = vld [vmem:[%s4533 + $0x23c] sm:$0xf]
        %s4678 = scalar_lea.vmem [#allocation10], 2
        %v4679 = vld [vmem:[%s4678] sm:$0x1]
        %v4681 = vlaneseq
        %v4682 = vshrl.u32 %v4681, 7
        %v4683 = vsub.s32 0, %v4682
        %v4684 = vrot.slane %v4679, %v4683
        %v4726 = vunpack.c.l.b16 %v4493
        %v4727 = vunpack.c.h.b16 %v4493
        %v4728 = vunpack.c.l.b16 %v4494
        %v4729 = vunpack.c.h.b16 %v4494
        %v4730 = vunpack.c.l.b16 %v4495
        %v4731 = vunpack.c.h.b16 %v4495
        %v4732 = vunpack.c.l.b16 %v4496
        %v4733 = vunpack.c.h.b16 %v4496
        %v4734 = vunpack.c.l.b16 %v4497
        %v4735 = vunpack.c.l.b16 %v4498
        %v4736 = vunpack.c.h.b16 %v4498
        %v4737 = vunpack.c.l.b16 %v4499
        %v4738 = vunpack.c.h.b16 %v4499
        %v4739 = vunpack.c.l.b16 %v4500
        %v4740 = vunpack.c.h.b16 %v4500
        %v4741 = vunpack.c.l.b16 %v4501
        %v4742 = vunpack.c.h.b16 %v4501
        %v4743 = vunpack.c.l.b16 %v4502
        %v4744 = vunpack.c.l.b16 %v4503
        %v4745 = vunpack.c.h.b16 %v4503
        %v4746 = vunpack.c.l.b16 %v4504
        %v4747 = vunpack.c.h.b16 %v4504
        %v4748 = vunpack.c.l.b16 %v4505
        %v4749 = vunpack.c.h.b16 %v4505
        %v4750 = vunpack.c.l.b16 %v4506
        %v4751 = vunpack.c.h.b16 %v4506
        %v4752 = vunpack.c.l.b16 %v4507
        %v4753 = vunpack.c.l.b16 %v4508
        %v4754 = vunpack.c.h.b16 %v4508
        %v4755 = vunpack.c.l.b16 %v4509
        %v4756 = vunpack.c.h.b16 %v4509
        %v4757 = vunpack.c.l.b16 %v4510
        %v4758 = vunpack.c.h.b16 %v4510
        %v4759 = vunpack.c.l.b16 %v4511
        %v4760 = vunpack.c.h.b16 %v4511
        %v4761 = vunpack.c.l.b16 %v4512
        %v4762 = vunpack.c.l.b16 %v4513
        %v4763 = vunpack.c.h.b16 %v4513
        %v4764 = vunpack.c.l.b16 %v4514
        %v4765 = vunpack.c.h.b16 %v4514
        %v4766 = vunpack.c.l.b16 %v4515
        %v4767 = vunpack.c.h.b16 %v4515
        %v4768 = vunpack.c.l.b16 %v4516
        %v4769 = vunpack.c.h.b16 %v4516
        %v4770 = vunpack.c.l.b16 %v4517
        %v4771 = vunpack.c.l.b16 %v4518
        %v4772 = vunpack.c.h.b16 %v4518
        %v4773 = vunpack.c.l.b16 %v4519
        %v4774 = vunpack.c.h.b16 %v4519
        %v4775 = vunpack.c.l.b16 %v4520
        %v4776 = vunpack.c.h.b16 %v4520
        %v4777 = vunpack.c.l.b16 %v4521
        %v4778 = vunpack.c.h.b16 %v4521
        %v4779 = vunpack.c.l.b16 %v4522
        %v4780 = vunpack.c.l.b16 %v4523
        %v4781 = vunpack.c.h.b16 %v4523
        %v4782 = vunpack.c.l.b16 %v4524
        %v4783 = vunpack.c.h.b16 %v4524
        %v4784 = vunpack.c.l.b16 %v4525
        %v4785 = vunpack.c.h.b16 %v4525
        %v4786 = vunpack.c.l.b16 %v4526
        %v4787 = vunpack.c.h.b16 %v4526
        %v4788 = vunpack.c.l.b16 %v4527
        %v4789 = vunpack.c.l.b16 %v4528
        %v4790 = vunpack.c.h.b16 %v4528
        %v4791 = vunpack.c.l.b16 %v4529
        %v4792 = vunpack.c.h.b16 %v4529
        %v4793 = vunpack.c.l.b16 %v4530
        %v4794 = vunpack.c.h.b16 %v4530
        %v4795 = vunpack.c.l.b16 %v4531
        %v4796 = vunpack.c.h.b16 %v4531
        %v4797 = vunpack.c.l.b16 %v4532
        %v4798 = vpack.c.b16 %v4735, %v4726
        %v4799 = vpack.c.b16 %v4736, %v4727
        %v4800 = vpack.c.b16 %v4737, %v4728
        %v4801 = vpack.c.b16 %v4738, %v4729
        %v4802 = vpack.c.b16 %v4739, %v4730
        %v4803 = vpack.c.b16 %v4740, %v4731
        %v4804 = vpack.c.b16 %v4741, %v4732
        %v4805 = vpack.c.b16 %v4742, %v4733
        %v4806 = vpack.c.b16 %v4743, %v4734
        %v4807 = vpack.c.b16 %v4753, %v4744
        %v4808 = vpack.c.b16 %v4754, %v4745
        %v4809 = vpack.c.b16 %v4755, %v4746
        %v4810 = vpack.c.b16 %v4756, %v4747
        %v4811 = vpack.c.b16 %v4757, %v4748
        %v4812 = vpack.c.b16 %v4758, %v4749
        %v4813 = vpack.c.b16 %v4759, %v4750
        %v4814 = vpack.c.b16 %v4760, %v4751
        %v4815 = vpack.c.b16 %v4761, %v4752
        %v4816 = vpack.c.b16 %v4771, %v4762
        %v4817 = vpack.c.b16 %v4772, %v4763
        %v4818 = vpack.c.b16 %v4773, %v4764
        %v4819 = vpack.c.b16 %v4774, %v4765
        %v4820 = vpack.c.b16 %v4775, %v4766
        %v4821 = vpack.c.b16 %v4776, %v4767
        %v4822 = vpack.c.b16 %v4777, %v4768
        %v4823 = vpack.c.b16 %v4778, %v4769
        %v4824 = vpack.c.b16 %v4779, %v4770
        %v4825 = vpack.c.b16 %v4789, %v4780
        %v4826 = vpack.c.b16 %v4790, %v4781
        %v4827 = vpack.c.b16 %v4791, %v4782
        %v4828 = vpack.c.b16 %v4792, %v4783
        %v4829 = vpack.c.b16 %v4793, %v4784
        %v4830 = vpack.c.b16 %v4794, %v4785
        %v4831 = vpack.c.b16 %v4795, %v4786
        %v4832 = vpack.c.b16 %v4796, %v4787
        %v4833 = vpack.c.b16 %v4797, %v4788
        %v5014 = vunpack.c.l.b16 %v4534
        %v5015 = vunpack.c.l.b16 %v4535
        %v5016 = vunpack.c.l.b16 %v4536
        %v5017 = vunpack.c.l.b16 %v4537
        %v5018 = vunpack.c.l.b16 %v4538
        %v5019 = vunpack.c.l.b16 %v4539
        %v5020 = vunpack.c.l.b16 %v4540
        %v5021 = vunpack.c.l.b16 %v4541
        %v5022 = vunpack.c.l.b16 %v4542
        %v5023 = vunpack.c.l.b16 %v4543
        %v5024 = vunpack.c.l.b16 %v4544
        %v5025 = vunpack.c.l.b16 %v4545
        %v5026 = vunpack.c.l.b16 %v4546
        %v5027 = vunpack.c.l.b16 %v4547
        %v5028 = vunpack.c.l.b16 %v4548
        %v5029 = vunpack.c.l.b16 %v4549
        %v5030 = vunpack.c.l.b16 %v4550
        %v5031 = vunpack.c.l.b16 %v4551
        %v5032 = vunpack.c.l.b16 %v4552
        %v5033 = vunpack.c.l.b16 %v4553
        %v5034 = vunpack.c.l.b16 %v4554
        %v5035 = vunpack.c.l.b16 %v4555
        %v5036 = vunpack.c.l.b16 %v4556
        %v5037 = vunpack.c.l.b16 %v4557
        %v5038 = vunpack.c.l.b16 %v4558
        %v5039 = vunpack.c.l.b16 %v4559
        %v5040 = vunpack.c.l.b16 %v4560
        %v5041 = vunpack.c.l.b16 %v4561
        %v5042 = vunpack.c.l.b16 %v4562
        %v5043 = vunpack.c.l.b16 %v4563
        %v5044 = vunpack.c.l.b16 %v4564
        %v5045 = vunpack.c.l.b16 %v4565
        %v5046 = vunpack.c.l.b16 %v4566
        %v5047 = vunpack.c.l.b16 %v4567
        %v5048 = vunpack.c.l.b16 %v4568
        %v5049 = vunpack.c.l.b16 %v4569
        %v5050 = vunpack.c.l.b16 %v4570
        %v5051 = vunpack.c.l.b16 %v4571
        %v5052 = vunpack.c.l.b16 %v4572
        %v5053 = vunpack.c.l.b16 %v4573
        %v5054 = vunpack.c.l.b16 %v4574
        %v5055 = vunpack.c.l.b16 %v4575
        %v5056 = vunpack.c.l.b16 %v4576
        %v5057 = vunpack.c.l.b16 %v4577
        %v5058 = vunpack.c.l.b16 %v4578
        %v5059 = vunpack.c.l.b16 %v4579
        %v5060 = vunpack.c.l.b16 %v4580
        %v5061 = vunpack.c.l.b16 %v4581
        %v5062 = vunpack.c.l.b16 %v4582
        %v5063 = vunpack.c.l.b16 %v4583
        %v5064 = vunpack.c.l.b16 %v4584
        %v5065 = vunpack.c.l.b16 %v4585
        %v5066 = vunpack.c.l.b16 %v4586
        %v5067 = vunpack.c.l.b16 %v4587
        %v5068 = vunpack.c.l.b16 %v4588
        %v5069 = vunpack.c.l.b16 %v4589
        %v5070 = vunpack.c.l.b16 %v4590
        %v5071 = vunpack.c.l.b16 %v4591
        %v5072 = vunpack.c.l.b16 %v4592
        %v5073 = vunpack.c.l.b16 %v4593
        %v5074 = vunpack.c.l.b16 %v4594
        %v5075 = vunpack.c.l.b16 %v4595
        %v5076 = vunpack.c.l.b16 %v4596
        %v5077 = vunpack.c.l.b16 %v4597
        %v5078 = vunpack.c.l.b16 %v4598
        %v5079 = vunpack.c.l.b16 %v4599
        %v5080 = vunpack.c.l.b16 %v4600
        %v5081 = vunpack.c.l.b16 %v4601
        %v5082 = vunpack.c.l.b16 %v4602
        %v5083 = vunpack.c.l.b16 %v4603
        %v5084 = vunpack.c.l.b16 %v4604
        %v5085 = vunpack.c.l.b16 %v4605
        %v5086 = vunpack.c.l.b16 %v4606
        %v5087 = vunpack.c.l.b16 %v4607
        %v5088 = vunpack.c.l.b16 %v4608
        %v5089 = vunpack.c.l.b16 %v4609
        %v5090 = vunpack.c.l.b16 %v4610
        %v5091 = vunpack.c.l.b16 %v4611
        %v5092 = vunpack.c.l.b16 %v4612
        %v5093 = vunpack.c.l.b16 %v4613
        %v5094 = vunpack.c.l.b16 %v4614
        %v5095 = vunpack.c.l.b16 %v4615
        %v5096 = vunpack.c.l.b16 %v4616
        %v5097 = vunpack.c.l.b16 %v4617
        %v5098 = vunpack.c.l.b16 %v4618
        %v5099 = vunpack.c.l.b16 %v4619
        %v5100 = vunpack.c.l.b16 %v4620
        %v5101 = vunpack.c.l.b16 %v4621
        %v5102 = vunpack.c.l.b16 %v4622
        %v5103 = vunpack.c.l.b16 %v4623
        %v5104 = vunpack.c.l.b16 %v4624
        %v5105 = vunpack.c.l.b16 %v4625
        %v5106 = vunpack.c.l.b16 %v4626
        %v5107 = vunpack.c.l.b16 %v4627
        %v5108 = vunpack.c.l.b16 %v4628
        %v5109 = vunpack.c.l.b16 %v4629
        %v5110 = vunpack.c.l.b16 %v4630
        %v5111 = vunpack.c.l.b16 %v4631
        %v5112 = vunpack.c.l.b16 %v4632
        %v5113 = vunpack.c.l.b16 %v4633
        %v5114 = vunpack.c.l.b16 %v4634
        %v5115 = vunpack.c.l.b16 %v4635
        %v5116 = vunpack.c.l.b16 %v4636
        %v5117 = vunpack.c.l.b16 %v4637
        %v5118 = vunpack.c.l.b16 %v4638
        %v5119 = vunpack.c.l.b16 %v4639
        %v5120 = vunpack.c.l.b16 %v4640
        %v5121 = vunpack.c.l.b16 %v4641
        %v5122 = vunpack.c.l.b16 %v4642
        %v5123 = vunpack.c.l.b16 %v4643
        %v5124 = vunpack.c.l.b16 %v4644
        %v5125 = vunpack.c.l.b16 %v4645
        %v5126 = vunpack.c.l.b16 %v4646
        %v5127 = vunpack.c.l.b16 %v4647
        %v5128 = vunpack.c.l.b16 %v4648
        %v5129 = vunpack.c.l.b16 %v4649
        %v5130 = vunpack.c.l.b16 %v4650
        %v5131 = vunpack.c.l.b16 %v4651
        %v5132 = vunpack.c.l.b16 %v4652
        %v5133 = vunpack.c.l.b16 %v4653
        %v5134 = vunpack.c.l.b16 %v4654
        %v5135 = vunpack.c.l.b16 %v4655
        %v5136 = vunpack.c.l.b16 %v4656
        %v5137 = vunpack.c.l.b16 %v4657
        %v5138 = vunpack.c.l.b16 %v4658
        %v5139 = vunpack.c.l.b16 %v4659
        %v5140 = vunpack.c.l.b16 %v4660
        %v5141 = vunpack.c.l.b16 %v4661
        %v5142 = vunpack.c.l.b16 %v4662
        %v5143 = vunpack.c.l.b16 %v4663
        %v5144 = vunpack.c.l.b16 %v4664
        %v5145 = vunpack.c.l.b16 %v4665
        %v5146 = vunpack.c.l.b16 %v4666
        %v5147 = vunpack.c.l.b16 %v4667
        %v5148 = vunpack.c.l.b16 %v4668
        %v5149 = vunpack.c.l.b16 %v4669
        %v5150 = vunpack.c.l.b16 %v4670
        %v5151 = vunpack.c.l.b16 %v4671
        %v5152 = vunpack.c.l.b16 %v4672
        %v5153 = vunpack.c.l.b16 %v4673
        %v5154 = vunpack.c.l.b16 %v4674
        %v5155 = vunpack.c.l.b16 %v4675
        %v5156 = vunpack.c.l.b16 %v4676
        %v5157 = vunpack.c.l.b16 %v4677
        %v5158 = vpack.c.b16 %v5015, %v5014
        %v5159 = vpack.c.b16 %v5017, %v5016
        %v5160 = vpack.c.b16 %v5019, %v5018
        %v5161 = vpack.c.b16 %v5021, %v5020
        %v5162 = vpack.c.b16 %v5023, %v5022
        %v5163 = vpack.c.b16 %v5025, %v5024
        %v5164 = vpack.c.b16 %v5027, %v5026
        %v5165 = vpack.c.b16 %v5029, %v5028
        %v5166 = vpack.c.b16 %v5031, %v5030
        %v5167 = vpack.c.b16 %v5033, %v5032
        %v5168 = vpack.c.b16 %v5035, %v5034
        %v5169 = vpack.c.b16 %v5037, %v5036
        %v5170 = vpack.c.b16 %v5039, %v5038
        %v5171 = vpack.c.b16 %v5041, %v5040
        %v5172 = vpack.c.b16 %v5043, %v5042
        %v5173 = vpack.c.b16 %v5045, %v5044
        %v5174 = vpack.c.b16 %v5047, %v5046
        %v5175 = vpack.c.b16 %v5049, %v5048
        %v5176 = vpack.c.b16 %v5051, %v5050
        %v5177 = vpack.c.b16 %v5053, %v5052
        %v5178 = vpack.c.b16 %v5055, %v5054
        %v5179 = vpack.c.b16 %v5057, %v5056
        %v5180 = vpack.c.b16 %v5059, %v5058
        %v5181 = vpack.c.b16 %v5061, %v5060
        %v5182 = vpack.c.b16 %v5063, %v5062
        %v5183 = vpack.c.b16 %v5065, %v5064
        %v5184 = vpack.c.b16 %v5067, %v5066
        %v5185 = vpack.c.b16 %v5069, %v5068
        %v5186 = vpack.c.b16 %v5071, %v5070
        %v5187 = vpack.c.b16 %v5073, %v5072
        %v5188 = vpack.c.b16 %v5075, %v5074
        %v5189 = vpack.c.b16 %v5077, %v5076
        %v5190 = vpack.c.b16 %v5079, %v5078
        %v5191 = vpack.c.b16 %v5081, %v5080
        %v5192 = vpack.c.b16 %v5083, %v5082
        %v5193 = vpack.c.b16 %v5085, %v5084
        %v5194 = vpack.c.b16 %v5087, %v5086
        %v5195 = vpack.c.b16 %v5089, %v5088
        %v5196 = vpack.c.b16 %v5091, %v5090
        %v5197 = vpack.c.b16 %v5093, %v5092
        %v5198 = vpack.c.b16 %v5095, %v5094
        %v5199 = vpack.c.b16 %v5097, %v5096
        %v5200 = vpack.c.b16 %v5099, %v5098
        %v5201 = vpack.c.b16 %v5101, %v5100
        %v5202 = vpack.c.b16 %v5103, %v5102
        %v5203 = vpack.c.b16 %v5105, %v5104
        %v5204 = vpack.c.b16 %v5107, %v5106
        %v5205 = vpack.c.b16 %v5109, %v5108
        %v5206 = vpack.c.b16 %v5111, %v5110
        %v5207 = vpack.c.b16 %v5113, %v5112
        %v5208 = vpack.c.b16 %v5115, %v5114
        %v5209 = vpack.c.b16 %v5117, %v5116
        %v5210 = vpack.c.b16 %v5119, %v5118
        %v5211 = vpack.c.b16 %v5121, %v5120
        %v5212 = vpack.c.b16 %v5123, %v5122
        %v5213 = vpack.c.b16 %v5125, %v5124
        %v5214 = vpack.c.b16 %v5127, %v5126
        %v5215 = vpack.c.b16 %v5129, %v5128
        %v5216 = vpack.c.b16 %v5131, %v5130
        %v5217 = vpack.c.b16 %v5133, %v5132
        %v5218 = vpack.c.b16 %v5135, %v5134
        %v5219 = vpack.c.b16 %v5137, %v5136
        %v5220 = vpack.c.b16 %v5139, %v5138
        %v5221 = vpack.c.b16 %v5141, %v5140
        %v5222 = vpack.c.b16 %v5143, %v5142
        %v5223 = vpack.c.b16 %v5145, %v5144
        %v5224 = vpack.c.b16 %v5147, %v5146
        %v5225 = vpack.c.b16 %v5149, %v5148
        %v5226 = vpack.c.b16 %v5151, %v5150
        %v5227 = vpack.c.b16 %v5153, %v5152
        %v5228 = vpack.c.b16 %v5155, %v5154
        %v5229 = vpack.c.b16 %v5157, %v5156
        %5302 = vmatprep.subr.bf16.mxu0 0
        %5303 = vmatpush1.bf16.msra.mxu0 %v5165
        %5304 = vmatprep.subr.bf16.mxu0 0
        %5305 = vmatpush1.bf16.msra.mxu0 %v5164
        %5306 = vmatprep.subr.bf16.mxu0 0
        %5307 = vmatpush1.bf16.msra.mxu0 %v5163
        %5308 = vmatprep.subr.bf16.mxu0 0
        %5309 = vmatpush1.bf16.msra.mxu0 %v5162
        %5310 = vmatprep.subr.bf16.mxu0 0
        %5311 = vmatpush1.bf16.msra.mxu0 %v5161
        %5312 = vmatprep.subr.bf16.mxu0 0
        %5313 = vmatpush1.bf16.msra.mxu0 %v5160
        %5314 = vmatprep.subr.bf16.mxu0 0
        %5315 = vmatpush1.bf16.msra.mxu0 %v5159
        %5316 = vmatprep.subr.bf16.mxu0 0
        %5317 = vmatpush1.bf16.msra.mxu0 %v5158
        %5318 = vmatprep.subr.bf16.mxu0 0
        %5319 = vmatpush2.bf16.msra.mxu0 %v5173
        %5320 = vmatprep.subr.bf16.mxu0 0
        %5321 = vmatpush2.bf16.msra.mxu0 %v5172
        %5322 = vmatprep.subr.bf16.mxu0 0
        %5323 = vmatpush2.bf16.msra.mxu0 %v5171
        %5324 = vmatprep.subr.bf16.mxu0 0
        %5325 = vmatpush2.bf16.msra.mxu0 %v5170
        %5326 = vmatprep.subr.bf16.mxu0 0
        %5327 = vmatpush2.bf16.msra.mxu0 %v5169
        %5328 = vmatprep.subr.bf16.mxu0 0
        %5329 = vmatpush2.bf16.msra.mxu0 %v5168
        %5330 = vmatprep.subr.bf16.mxu0 0
        %5331 = vmatpush2.bf16.msra.mxu0 %v5167
        %5332 = vmatprep.subr.bf16.mxu0 0
        %5333 = vmatpush2.bf16.msra.mxu0 %v5166
        %5334 = vmatprep.mubr.bf16.mxu0 %v4799
        %5335 = vmatmul.mubr.bf16.gmra.mxu0 %v4798
        %v5336 = vpop.f32.mrf.mxu0
        %v5337 = vadd.f32 %v4684, %v5336
        %v5338 = vpop.f32.mrf.mxu0
        %v5339 = vpop.f32.mrf.mxu0
        %v5340 = vadd.f32 %v4684, %v5339
        %v5341 = vpop.f32.mrf.mxu0
        %5342 = vmatprep.mubr.bf16.mxu0 %v4808
        %5343 = vmatmul.mubr.bf16.gmra.mxu0 %v4807
        %v5344 = vpop.f32.mrf.mxu0
        %v5345 = vadd.f32 %v4684, %v5344
        %v5346 = vpop.f32.mrf.mxu0
        %v5347 = vpop.f32.mrf.mxu0
        %v5348 = vadd.f32 %v4684, %v5347
        %v5349 = vpop.f32.mrf.mxu0
        %5350 = vmatprep.mubr.bf16.mxu0 %v4817
        %5351 = vmatmul.mubr.bf16.gmra.mxu0 %v4816
        %v5352 = vpop.f32.mrf.mxu0
        %v5353 = vadd.f32 %v4684, %v5352
        %v5354 = vpop.f32.mrf.mxu0
        %v5355 = vpop.f32.mrf.mxu0
        %v5356 = vadd.f32 %v4684, %v5355
        %v5357 = vpop.f32.mrf.mxu0
        %5358 = vmatprep.mubr.bf16.mxu0 %v4826
        %5359 = vmatmul.mubr.bf16.gmra.mxu0 %v4825
        %v5360 = vpop.f32.mrf.mxu0
        %v5361 = vadd.f32 %v4684, %v5360
        %v5362 = vpop.f32.mrf.mxu0
        %v5363 = vpop.f32.mrf.mxu0
        %v5364 = vadd.f32 %v4684, %v5363
        %v5365 = vpop.f32.mrf.mxu0
        %5366 = vdwg.mxu0
        %5367 = vmatprep.subr.bf16.mxu0 0
        %5368 = vmatpush1.bf16.msra.mxu0 %v5181
        %5369 = vmatprep.subr.bf16.mxu0 0
        %5370 = vmatpush1.bf16.msra.mxu0 %v5180
        %5371 = vmatprep.subr.bf16.mxu0 0
        %5372 = vmatpush1.bf16.msra.mxu0 %v5179
        %5373 = vmatprep.subr.bf16.mxu0 0
        %5374 = vmatpush1.bf16.msra.mxu0 %v5178
        %5375 = vmatprep.subr.bf16.mxu0 0
        %5376 = vmatpush1.bf16.msra.mxu0 %v5177
        %5377 = vmatprep.subr.bf16.mxu0 0
        %5378 = vmatpush1.bf16.msra.mxu0 %v5176
        %5379 = vmatprep.subr.bf16.mxu0 0
        %5380 = vmatpush1.bf16.msra.mxu0 %v5175
        %5381 = vmatprep.subr.bf16.mxu0 0
        %5382 = vmatpush1.bf16.msra.mxu0 %v5174
        %5383 = vmatprep.subr.bf16.mxu0 0
        %5384 = vmatpush2.bf16.msra.mxu0 %v5189
        %5385 = vmatprep.subr.bf16.mxu0 0
        %5386 = vmatpush2.bf16.msra.mxu0 %v5188
        %5387 = vmatprep.subr.bf16.mxu0 0
        %5388 = vmatpush2.bf16.msra.mxu0 %v5187
        %5389 = vmatprep.subr.bf16.mxu0 0
        %5390 = vmatpush2.bf16.msra.mxu0 %v5186
        %5391 = vmatprep.subr.bf16.mxu0 0
        %5392 = vmatpush2.bf16.msra.mxu0 %v5185
        %5393 = vmatprep.subr.bf16.mxu0 0
        %5394 = vmatpush2.bf16.msra.mxu0 %v5184
        %5395 = vmatprep.subr.bf16.mxu0 0
        %5396 = vmatpush2.bf16.msra.mxu0 %v5183
        %5397 = vmatprep.subr.bf16.mxu0 0
        %5398 = vmatpush2.bf16.msra.mxu0 %v5182
        %5399 = vmatprep.mubr.bf16.mxu0 %v4801
        %5400 = vmatmul.mubr.bf16.gmra.mxu0 %v4800
        %v5401 = vpop.f32.mrf.mxu0
        %v5402 = vadd.f32 %v5337, %v5401
        %v5403 = vpop.f32.mrf.mxu0
        %v5404 = vpop.f32.mrf.mxu0
        %v5405 = vadd.f32 %v5340, %v5404
        %v5406 = vpop.f32.mrf.mxu0
        %5407 = vmatprep.mubr.bf16.mxu0 %v4810
        %5408 = vmatmul.mubr.bf16.gmra.mxu0 %v4809
        %v5409 = vpop.f32.mrf.mxu0
        %v5410 = vadd.f32 %v5345, %v5409
        %v5411 = vpop.f32.mrf.mxu0
        %v5412 = vpop.f32.mrf.mxu0
        %v5413 = vadd.f32 %v5348, %v5412
        %v5414 = vpop.f32.mrf.mxu0
        %5415 = vmatprep.mubr.bf16.mxu0 %v4819
        %5416 = vmatmul.mubr.bf16.gmra.mxu0 %v4818
        %v5417 = vpop.f32.mrf.mxu0
        %v5418 = vadd.f32 %v5353, %v5417
        %v5419 = vpop.f32.mrf.mxu0
        %v5420 = vpop.f32.mrf.mxu0
        %v5421 = vadd.f32 %v5356, %v5420
        %v5422 = vpop.f32.mrf.mxu0
        %5423 = vmatprep.mubr.bf16.mxu0 %v4828
        %5424 = vmatmul.mubr.bf16.gmra.mxu0 %v4827
        %v5425 = vpop.f32.mrf.mxu0
        %v5426 = vadd.f32 %v5361, %v5425
        %v5427 = vpop.f32.mrf.mxu0
        %v5428 = vpop.f32.mrf.mxu0
        %v5429 = vadd.f32 %v5364, %v5428
        %v5430 = vpop.f32.mrf.mxu0
        %5431 = vdwg.mxu0
        %5432 = vmatprep.subr.bf16.mxu0 0
        %5433 = vmatpush1.bf16.msra.mxu0 %v5197
        %5434 = vmatprep.subr.bf16.mxu0 0
        %5435 = vmatpush1.bf16.msra.mxu0 %v5196
        %5436 = vmatprep.subr.bf16.mxu0 0
        %5437 = vmatpush1.bf16.msra.mxu0 %v5195
        %5438 = vmatprep.subr.bf16.mxu0 0
        %5439 = vmatpush1.bf16.msra.mxu0 %v5194
        %5440 = vmatprep.subr.bf16.mxu0 0
        %5441 = vmatpush1.bf16.msra.mxu0 %v5193
        %5442 = vmatprep.subr.bf16.mxu0 0
        %5443 = vmatpush1.bf16.msra.mxu0 %v5192
        %5444 = vmatprep.subr.bf16.mxu0 0
        %5445 = vmatpush1.bf16.msra.mxu0 %v5191
        %5446 = vmatprep.subr.bf16.mxu0 0
        %5447 = vmatpush1.bf16.msra.mxu0 %v5190
        %5448 = vmatprep.subr.bf16.mxu0 0
        %5449 = vmatpush2.bf16.msra.mxu0 %v5205
        %5450 = vmatprep.subr.bf16.mxu0 0
        %5451 = vmatpush2.bf16.msra.mxu0 %v5204
        %5452 = vmatprep.subr.bf16.mxu0 0
        %5453 = vmatpush2.bf16.msra.mxu0 %v5203
        %5454 = vmatprep.subr.bf16.mxu0 0
        %5455 = vmatpush2.bf16.msra.mxu0 %v5202
        %5456 = vmatprep.subr.bf16.mxu0 0
        %5457 = vmatpush2.bf16.msra.mxu0 %v5201
        %5458 = vmatprep.subr.bf16.mxu0 0
        %5459 = vmatpush2.bf16.msra.mxu0 %v5200
        %5460 = vmatprep.subr.bf16.mxu0 0
        %5461 = vmatpush2.bf16.msra.mxu0 %v5199
        %5462 = vmatprep.subr.bf16.mxu0 0
        %5463 = vmatpush2.bf16.msra.mxu0 %v5198
        %5464 = vmatprep.mubr.bf16.mxu0 %v4803
        %5465 = vmatmul.mubr.bf16.gmra.mxu0 %v4802
        %v5466 = vpop.f32.mrf.mxu0
        %v5467 = vadd.f32 %v5402, %v5466
        %v5468 = vpop.f32.mrf.mxu0
        %v5469 = vpop.f32.mrf.mxu0
        %v5470 = vadd.f32 %v5405, %v5469
        %v5471 = vpop.f32.mrf.mxu0
        %5472 = vmatprep.mubr.bf16.mxu0 %v4812
        %5473 = vmatmul.mubr.bf16.gmra.mxu0 %v4811
        %v5474 = vpop.f32.mrf.mxu0
        %v5475 = vadd.f32 %v5410, %v5474
        %v5476 = vpop.f32.mrf.mxu0
        %v5477 = vpop.f32.mrf.mxu0
        %v5478 = vadd.f32 %v5413, %v5477
        %v5479 = vpop.f32.mrf.mxu0
        %5480 = vmatprep.mubr.bf16.mxu0 %v4821
        %5481 = vmatmul.mubr.bf16.gmra.mxu0 %v4820
        %v5482 = vpop.f32.mrf.mxu0
        %v5483 = vadd.f32 %v5418, %v5482
        %v5484 = vpop.f32.mrf.mxu0
        %v5485 = vpop.f32.mrf.mxu0
        %v5486 = vadd.f32 %v5421, %v5485
        %v5487 = vpop.f32.mrf.mxu0
        %5488 = vmatprep.mubr.bf16.mxu0 %v4830
        %5489 = vmatmul.mubr.bf16.gmra.mxu0 %v4829
        %v5490 = vpop.f32.mrf.mxu0
        %v5491 = vadd.f32 %v5426, %v5490
        %v5492 = vpop.f32.mrf.mxu0
        %v5493 = vpop.f32.mrf.mxu0
        %v5494 = vadd.f32 %v5429, %v5493
        %v5495 = vpop.f32.mrf.mxu0
        %5496 = vdwg.mxu0
        %5497 = vmatprep.subr.bf16.mxu0 0
        %5498 = vmatpush1.bf16.msra.mxu0 %v5213
        %5499 = vmatprep.subr.bf16.mxu0 0
        %5500 = vmatpush1.bf16.msra.mxu0 %v5212
        %5501 = vmatprep.subr.bf16.mxu0 0
        %5502 = vmatpush1.bf16.msra.mxu0 %v5211
        %5503 = vmatprep.subr.bf16.mxu0 0
        %5504 = vmatpush1.bf16.msra.mxu0 %v5210
        %5505 = vmatprep.subr.bf16.mxu0 0
        %5506 = vmatpush1.bf16.msra.mxu0 %v5209
        %5507 = vmatprep.subr.bf16.mxu0 0
        %5508 = vmatpush1.bf16.msra.mxu0 %v5208
        %5509 = vmatprep.subr.bf16.mxu0 0
        %5510 = vmatpush1.bf16.msra.mxu0 %v5207
        %5511 = vmatprep.subr.bf16.mxu0 0
        %5512 = vmatpush1.bf16.msra.mxu0 %v5206
        %5513 = vmatprep.subr.bf16.mxu0 0
        %5514 = vmatpush2.bf16.msra.mxu0 %v5221
        %5515 = vmatprep.subr.bf16.mxu0 0
        %5516 = vmatpush2.bf16.msra.mxu0 %v5220
        %5517 = vmatprep.subr.bf16.mxu0 0
        %5518 = vmatpush2.bf16.msra.mxu0 %v5219
        %5519 = vmatprep.subr.bf16.mxu0 0
        %5520 = vmatpush2.bf16.msra.mxu0 %v5218
        %5521 = vmatprep.subr.bf16.mxu0 0
        %5522 = vmatpush2.bf16.msra.mxu0 %v5217
        %5523 = vmatprep.subr.bf16.mxu0 0
        %5524 = vmatpush2.bf16.msra.mxu0 %v5216
        %5525 = vmatprep.subr.bf16.mxu0 0
        %5526 = vmatpush2.bf16.msra.mxu0 %v5215
        %5527 = vmatprep.subr.bf16.mxu0 0
        %5528 = vmatpush2.bf16.msra.mxu0 %v5214
        %5529 = vmatprep.mubr.bf16.mxu0 %v4805
        %5530 = vmatmul.mubr.bf16.gmra.mxu0 %v4804
        %v5531 = vpop.f32.mrf.mxu0
        %v5532 = vadd.f32 %v5467, %v5531
        %v5533 = vpop.f32.mrf.mxu0
        %v5534 = vpop.f32.mrf.mxu0
        %v5535 = vadd.f32 %v5470, %v5534
        %v5536 = vpop.f32.mrf.mxu0
        %5537 = vmatprep.mubr.bf16.mxu0 %v4814
        %5538 = vmatmul.mubr.bf16.gmra.mxu0 %v4813
        %v5539 = vpop.f32.mrf.mxu0
        %v5540 = vadd.f32 %v5475, %v5539
        %v5541 = vpop.f32.mrf.mxu0
        %v5542 = vpop.f32.mrf.mxu0
        %v5543 = vadd.f32 %v5478, %v5542
        %v5544 = vpop.f32.mrf.mxu0
        %5545 = vmatprep.mubr.bf16.mxu0 %v4823
        %5546 = vmatmul.mubr.bf16.gmra.mxu0 %v4822
        %v5547 = vpop.f32.mrf.mxu0
        %v5548 = vadd.f32 %v5483, %v5547
        %v5549 = vpop.f32.mrf.mxu0
        %v5550 = vpop.f32.mrf.mxu0
        %v5551 = vadd.f32 %v5486, %v5550
        %v5552 = vpop.f32.mrf.mxu0
        %5553 = vmatprep.mubr.bf16.mxu0 %v4832
        %5554 = vmatmul.mubr.bf16.gmra.mxu0 %v4831
        %v5555 = vpop.f32.mrf.mxu0
        %v5556 = vadd.f32 %v5491, %v5555
        %v5557 = vpop.f32.mrf.mxu0
        %v5558 = vpop.f32.mrf.mxu0
        %v5559 = vadd.f32 %v5494, %v5558
        %v5560 = vpop.f32.mrf.mxu0
        %5561 = vdwg.mxu0
        %5562 = vmatprep.subr.bf16.mxu0 0
        %5563 = vmatpush1.bf16.msra.mxu0 %v5229
        %5564 = vmatprep.subr.bf16.mxu0 0
        %5565 = vmatpush1.bf16.msra.mxu0 %v5228
        %5566 = vmatprep.subr.bf16.mxu0 0
        %5567 = vmatpush1.bf16.msra.mxu0 %v5227
        %5568 = vmatprep.subr.bf16.mxu0 0
        %5569 = vmatpush1.bf16.msra.mxu0 %v5226
        %5570 = vmatprep.subr.bf16.mxu0 0
        %5571 = vmatpush1.bf16.msra.mxu0 %v5225
        %5572 = vmatprep.subr.bf16.mxu0 0
        %5573 = vmatpush1.bf16.msra.mxu0 %v5224
        %5574 = vmatprep.subr.bf16.mxu0 0
        %5575 = vmatpush1.bf16.msra.mxu0 %v5223
        %5576 = vmatprep.subr.bf16.mxu0 0
        %5577 = vmatpush1.bf16.msra.mxu0 %v5222
        %5578 = vmatprep.subr.bf16.mxu0 0
        %5579 = vmatpush2.bf16.msra.mxu0 0
        %5580 = vmatprep.subr.bf16.mxu0 0
        %5581 = vmatpush2.bf16.msra.mxu0 0
        %5582 = vmatprep.subr.bf16.mxu0 0
        %5583 = vmatpush2.bf16.msra.mxu0 0
        %5584 = vmatprep.subr.bf16.mxu0 0
        %5585 = vmatpush2.bf16.msra.mxu0 0
        %5586 = vmatprep.subr.bf16.mxu0 0
        %5587 = vmatpush2.bf16.msra.mxu0 0
        %5588 = vmatprep.subr.bf16.mxu0 0
        %5589 = vmatpush2.bf16.msra.mxu0 0
        %5590 = vmatprep.subr.bf16.mxu0 0
        %5591 = vmatpush2.bf16.msra.mxu0 0
        %5592 = vmatprep.subr.bf16.mxu0 0
        %5593 = vmatpush2.bf16.msra.mxu0 0
        %5594 = vmatprep.mubr.bf16.mxu0 0
        %5595 = vmatmul.mubr.bf16.gmra.mxu0 %v4806
        %v5596 = vpop.f32.mrf.mxu0
        %v5597 = vadd.f32 %v5532, %v5596
        %v5598 = vpop.f32.mrf.mxu0
        %v5599 = vpop.f32.mrf.mxu0
        %v5600 = vadd.f32 %v5535, %v5599
        %v5601 = vpop.f32.mrf.mxu0
        %5602 = vmatprep.mubr.bf16.mxu0 0
        %5603 = vmatmul.mubr.bf16.gmra.mxu0 %v4815
        %v5604 = vpop.f32.mrf.mxu0
        %v5605 = vadd.f32 %v5540, %v5604
        %v5606 = vpop.f32.mrf.mxu0
        %v5607 = vpop.f32.mrf.mxu0
        %v5608 = vadd.f32 %v5543, %v5607
        %v5609 = vpop.f32.mrf.mxu0
        %5610 = vmatprep.mubr.bf16.mxu0 0
        %5611 = vmatmul.mubr.bf16.gmra.mxu0 %v4824
        %v5612 = vpop.f32.mrf.mxu0
        %v5613 = vadd.f32 %v5548, %v5612
        %v5614 = vpop.f32.mrf.mxu0
        %v5615 = vpop.f32.mrf.mxu0
        %v5616 = vadd.f32 %v5551, %v5615
        %v5617 = vpop.f32.mrf.mxu0
        %5618 = vmatprep.mubr.bf16.mxu0 0
        %5619 = vmatmul.mubr.bf16.gmra.mxu0 %v4833
        %v5620 = vpop.f32.mrf.mxu0
        %v5621 = vadd.f32 %v5556, %v5620
        %v5622 = vpop.f32.mrf.mxu0
        %v5623 = vpop.f32.mrf.mxu0
        %v5624 = vadd.f32 %v5559, %v5623
        %v5625 = vpop.f32.mrf.mxu0
        %5626 = vdwg.mxu0
        %v5627 = vadd.f32 %v5597, %v5600
        %v5628 = vadd.f32 %v5627, %v5605
        %v5629 = vadd.f32 %v5628, %v5608
        %v5630 = vadd.f32 %v5629, %v5613
        %v5631 = vadd.f32 %v5630, %v5616
        %v5632 = vadd.f32 %v5631, %v5621
        %v5633 = vadd.f32 %v5632, %v5624
        %v5634 = vrot.slane %v5633, 4
        %v5635 = vadd.f32 %v5633, %v5634
        %v5636 = vrot.slane %v5635, 2
        %v5637 = vadd.f32 %v5635, %v5636
        %v5638 = vrot.slane %v5637, 1
        %v5639 = vadd.f32 %v5637, %v5638
        %v5640 = vmul.f32 %v5597, %v5597
        %v5641 = vmul.f32 %v5600, %v5600
        %v5642 = vmul.f32 %v5605, %v5605
        %v5643 = vmul.f32 %v5608, %v5608
        %v5644 = vmul.f32 %v5613, %v5613
        %v5645 = vmul.f32 %v5616, %v5616
        %v5646 = vmul.f32 %v5621, %v5621
        %v5647 = vmul.f32 %v5624, %v5624
        %v5648 = vadd.f32 %v5640, %v5641
        %v5649 = vadd.f32 %v5648, %v5642
        %v5650 = vadd.f32 %v5649, %v5643
        %v5651 = vadd.f32 %v5650, %v5644
        %v5652 = vadd.f32 %v5651, %v5645
        %v5653 = vadd.f32 %v5652, %v5646
        %v5654 = vadd.f32 %v5653, %v5647
        %v5655 = vrot.slane %v5654, 4
        %v5656 = vadd.f32 %v5654, %v5655
        %v5657 = vrot.slane %v5656, 2
        %v5658 = vadd.f32 %v5656, %v5657
        %v5659 = vrot.slane %v5658, 1
        %v5660 = vadd.f32 %v5658, %v5659
        %v5661 = vsel %vm2103, %v5639, 0.0
        %5662 = vadd.xlane.f32.xlu0 %v5661
        %v5663 = vpop.xlane.xlu0 %5662
        %v5664 = vrot.slane %v5663, 4
        %v5665 = vadd.f32 %v5663, %v5664
        %v5666 = vrot.slane %v5665, 2
        %v5667 = vadd.f32 %v5665, %v5666
        %v5668 = vrot.slane %v5667, 1
        %v5669 = vadd.f32 %v5667, %v5668
        %s5670 = vtos %v5669
        %s5671 = smul.f32 %s5670, 0.00012207031
        %v5672 = vsel %vm2103, %v5660, 0.0
        %5673 = vadd.xlane.f32.xlu0 %v5672
        %v5674 = vpop.xlane.xlu0 %5673
        %v5675 = vrot.slane %v5674, 4
        %v5676 = vadd.f32 %v5674, %v5675
        %v5677 = vrot.slane %v5676, 2
        %v5678 = vadd.f32 %v5676, %v5677
        %v5679 = vrot.slane %v5678, 1
        %v5680 = vadd.f32 %v5678, %v5679
        %s5681 = vtos %v5680
        %s5682 = smul.f32 %s5681, 0.00012207031
        %s5683 = smul.f32 %s5671, %s5671
        %s5684 = ssub.f32 %s5682, %s5683
        %s5685 = smax.f32 %s5684, 0.0
        %v5686 = vstv %s5671
        %v5687 = vsub.f32 %v5597, %v5686
        %v5688 = vsub.f32 %v5600, %v5686
        %v5689 = vsub.f32 %v5605, %v5686
        %v5690 = vsub.f32 %v5608, %v5686
        %v5691 = vsub.f32 %v5613, %v5686
        %v5692 = vsub.f32 %v5616, %v5686
        %v5693 = vsub.f32 %v5621, %v5686
        %v5694 = vsub.f32 %v5624, %v5686
        %s5695 = sadd.f32 %s5685, 1e-05
        %v5696 = vstv %s5695
        %v5697 = vrsqrt.pop %v5696
        %s5698 = vtos %v5697
        %v5699 = vstv %s5698
        %v5700 = vmul.f32 %v5687, %v5699
        %v5701 = vmul.f32 %v5688, %v5699
        %v5702 = vmul.f32 %v5689, %v5699
        %v5703 = vmul.f32 %v5690, %v5699
        %v5704 = vmul.f32 %v5691, %v5699
        %v5705 = vmul.f32 %v5692, %v5699
        %v5706 = vmul.f32 %v5693, %v5699
        %v5707 = vmul.f32 %v5694, %v5699
        %s5708 = scalar_lea.vmem [#allocation11], 64
        %v5709 = vld [vmem:[%s5708] sm:$0xf]
        %v5710 = vld [vmem:[%s5708 + $0x4] sm:$0xf]
        %v5711 = vld [vmem:[%s5708 + $0x8] sm:$0xf]
        %v5712 = vld [vmem:[%s5708 + $0xc] sm:$0xf]
        %v5713 = vld [vmem:[%s5708 + $0x10] sm:$0xf]
        %v5714 = vld [vmem:[%s5708 + $0x14] sm:$0xf]
        %v5715 = vld [vmem:[%s5708 + $0x18] sm:$0xf]
        %v5716 = vld [vmem:[%s5708 + $0x1c] sm:$0xf]
        %v5717 = vunpack.c.l.bf16 %v5709
        %v5718 = vunpack.c.l.bf16 %v5710
        %v5719 = vunpack.c.l.bf16 %v5711
        %v5720 = vunpack.c.l.bf16 %v5712
        %v5721 = vunpack.c.l.bf16 %v5713
        %v5722 = vunpack.c.l.bf16 %v5714
        %v5723 = vunpack.c.l.bf16 %v5715
        %v5724 = vunpack.c.l.bf16 %v5716
        %v5725 = vmul.f32 %v5700, %v5717
        %v5726 = vmul.f32 %v5701, %v5718
        %v5727 = vmul.f32 %v5702, %v5719
        %v5728 = vmul.f32 %v5703, %v5720
        %v5729 = vmul.f32 %v5704, %v5721
        %v5730 = vmul.f32 %v5705, %v5722
        %v5731 = vmul.f32 %v5706, %v5723
        %v5732 = vmul.f32 %v5707, %v5724
        %s5733 = scalar_lea.vmem [#allocation13], 64
        %v5734 = vld [vmem:[%s5733] sm:$0xf]
        %v5735 = vld [vmem:[%s5733 + $0x4] sm:$0xf]
        %v5736 = vld [vmem:[%s5733 + $0x8] sm:$0xf]
        %v5737 = vld [vmem:[%s5733 + $0xc] sm:$0xf]
        %v5738 = vld [vmem:[%s5733 + $0x10] sm:$0xf]
        %v5739 = vld [vmem:[%s5733 + $0x14] sm:$0xf]
        %v5740 = vld [vmem:[%s5733 + $0x18] sm:$0xf]
        %v5741 = vld [vmem:[%s5733 + $0x1c] sm:$0xf]
        %v5742 = vunpack.c.l.bf16 %v5734
        %v5743 = vunpack.c.l.bf16 %v5735
        %v5744 = vunpack.c.l.bf16 %v5736
        %v5745 = vunpack.c.l.bf16 %v5737
        %v5746 = vunpack.c.l.bf16 %v5738
        %v5747 = vunpack.c.l.bf16 %v5739
        %v5748 = vunpack.c.l.bf16 %v5740
        %v5749 = vunpack.c.l.bf16 %v5741
        %v5750 = vadd.f32 %v5725, %v5742
        %v5751 = vadd.f32 %v5726, %v5743
        %v5752 = vadd.f32 %v5727, %v5744
        %v5753 = vadd.f32 %v5728, %v5745
        %v5754 = vadd.f32 %v5729, %v5746
        %v5755 = vadd.f32 %v5730, %v5747
        %v5756 = vadd.f32 %v5731, %v5748
        %v5757 = vadd.f32 %v5732, %v5749
        %v5758 = vmax.f32 %v5750, 0.0
        %v5759 = vmax.f32 %v5751, 0.0
        %v5760 = vmax.f32 %v5752, 0.0
        %v5761 = vmax.f32 %v5753, 0.0
        %v5762 = vmax.f32 %v5754, 0.0
        %v5763 = vmax.f32 %v5755, 0.0
        %v5764 = vmax.f32 %v5756, 0.0
        %v5765 = vmax.f32 %v5757, 0.0
        %5766 = vst [vmem:[%s2207 + $0x1] sm:$0xff] %v5758
        %5767 = vst [vmem:[%s2207 + $0x9] sm:$0xff] %v5759
        %5768 = vst [vmem:[%s2207 + $0x19] sm:$0xff] %v5760
        %5769 = vst [vmem:[%s2207 + $0x21] sm:$0xff] %v5761
        %5770 = vst [vmem:[%s2207 + $0x31] sm:$0xff] %v5762
        %5771 = vst [vmem:[%s2207 + $0x39] sm:$0xff] %v5763
        %5772 = vst [vmem:[%s2207 + $0x49] sm:$0xff] %v5764
        %5773 = vst [vmem:[%s2207 + $0x51] sm:$0xff] %v5765
        %v5774 = vld [vmem:[#allocation3] sm:$0xff]
        %v5775 = vld [vmem:[#allocation3 + $0x8] sm:$0xff]
        %v5776 = vld [vmem:[#allocation3 + $0x18] sm:$0xff]
        %v5777 = vld [vmem:[#allocation3 + $0x20] sm:$0xff]
        %v5778 = vld [vmem:[#allocation3 + $0x30] sm:$0xff]
        %v5779 = vld [vmem:[#allocation3 + $0x38] sm:$0xff]
        %v5780 = vld [vmem:[#allocation3 + $0x48] sm:$0xff]
        %v5781 = vld [vmem:[#allocation3 + $0x50] sm:$0xff]
        %v5782 = vld [vmem:[#allocation3 + $0x60] sm:$0xff]
        %v5783 = vld [vmem:[#allocation3 + $0x68] sm:$0xff]
        %v5784 = vld [vmem:[#allocation3 + $0x78] sm:$0xff]
        %v5785 = vld [vmem:[#allocation3 + $0x80] sm:$0xff]
        %v5786 = vpack.c.bf16 %v5775, %v5774
        %v5787 = vpack.c.bf16 %v5777, %v5776
        %v5788 = vpack.c.bf16 %v5779, %v5778
        %v5789 = vpack.c.bf16 %v5781, %v5780
        %v5790 = vpack.c.bf16 %v5783, %v5782
        %v5791 = vpack.c.bf16 %v5785, %v5784
        %5796 = vrot.lane.b32.xlu0 %v5786, 32
        %v5797 = vpop.permute.xlu0 %5796
        %5798 = vrot.lane.b32.xlu0 %v5787, 32
        %v5799 = vpop.permute.xlu0 %5798
        %5800 = vrot.lane.b32.xlu0 %v5788, 32
        %v5801 = vpop.permute.xlu0 %5800
        %5802 = vrot.lane.b32.xlu0 %v5789, 32
        %v5803 = vpop.permute.xlu0 %5802
        %5805 = vrot.lane.b32.xlu0 %v5790, 32
        %v5806 = vpop.permute.xlu0 %5805
        %v5809 = vsel %vm470, %v5797, %v5799
        %v5811 = vsel %vm470, %v5799, %v5801
        %v5813 = vsel %vm470, %v5801, %v5803
        %v5815 = vsel %vm470, %v5803, %v5806
        %5816 = vrot.lane.b32.xlu0 %v5787, 96
        %v5817 = vpop.permute.xlu0 %5816
        %5818 = vrot.lane.b32.xlu0 %v5788, 96
        %v5819 = vpop.permute.xlu0 %5818
        %5820 = vrot.lane.b32.xlu0 %v5789, 96
        %v5821 = vpop.permute.xlu0 %5820
        %5822 = vrot.lane.b32.xlu0 %v5790, 96
        %v5823 = vpop.permute.xlu0 %5822
        %5825 = vrot.lane.b32.xlu0 %v5791, 96
        %v5826 = vpop.permute.xlu0 %5825
        %v5829 = vsel %vm491, %v5817, %v5819
        %v5831 = vsel %vm491, %v5819, %v5821
        %v5833 = vsel %vm491, %v5821, %v5823
        %v5835 = vsel %vm491, %v5823, %v5826
        %v5840 = vunpack.c.l.b16 %v5809
        %v5841 = vunpack.c.h.b16 %v5809
        %v5842 = vunpack.c.l.b16 %v5811
        %v5843 = vunpack.c.h.b16 %v5811
        %v5844 = vunpack.c.l.b16 %v5813
        %v5845 = vunpack.c.h.b16 %v5813
        %v5846 = vunpack.c.l.b16 %v5815
        %v5847 = vunpack.c.h.b16 %v5815
        %v5848 = vpack.c.b16 %v5840, %v5840
        %v5849 = vpack.c.b16 %v5841, %v5841
        %v5850 = vpack.c.b16 %v5842, %v5842
        %v5851 = vpack.c.b16 %v5843, %v5843
        %v5852 = vpack.c.b16 %v5844, %v5844
        %v5853 = vpack.c.b16 %v5845, %v5845
        %v5854 = vpack.c.b16 %v5846, %v5846
        %v5855 = vpack.c.b16 %v5847, %v5847
        %5864 = vst [vmem:[#allocation4] sm:$0xf] %v5848
        %5865 = vst [vmem:[#allocation4 + $0x24] sm:$0xf] %v5849
        %5866 = vst [vmem:[#allocation4 + $0x48] sm:$0xf] %v5850
        %5867 = vst [vmem:[#allocation4 + $0x6c] sm:$0xf] %v5851
        %5868 = vst [vmem:[#allocation4 + $0x90] sm:$0xf] %v5852
        %5869 = vst [vmem:[#allocation4 + $0xb4] sm:$0xf] %v5853
        %5870 = vst [vmem:[#allocation4 + $0xd8] sm:$0xf] %v5854
        %5871 = vst [vmem:[#allocation4 + $0xfc] sm:$0xf] %v5855
        %v5872 = vunpack.c.l.b16 %v5787
        %v5873 = vunpack.c.h.b16 %v5787
        %v5874 = vunpack.c.l.b16 %v5788
        %v5875 = vunpack.c.h.b16 %v5788
        %v5876 = vunpack.c.l.b16 %v5789
        %v5877 = vunpack.c.h.b16 %v5789
        %v5878 = vunpack.c.l.b16 %v5790
        %v5879 = vunpack.c.h.b16 %v5790
        %v5880 = vpack.c.b16 %v5872, %v5872
        %v5881 = vpack.c.b16 %v5873, %v5873
        %v5882 = vpack.c.b16 %v5874, %v5874
        %v5883 = vpack.c.b16 %v5875, %v5875
        %v5884 = vpack.c.b16 %v5876, %v5876
        %v5885 = vpack.c.b16 %v5877, %v5877
        %v5886 = vpack.c.b16 %v5878, %v5878
        %v5887 = vpack.c.b16 %v5879, %v5879
        %5896 = vst [vmem:[#allocation4 + $0x4] sm:$0xf] %v5880
        %5897 = vst [vmem:[#allocation4 + $0x28] sm:$0xf] %v5881
        %5898 = vst [vmem:[#allocation4 + $0x4c] sm:$0xf] %v5882
        %5899 = vst [vmem:[#allocation4 + $0x70] sm:$0xf] %v5883
        %5900 = vst [vmem:[#allocation4 + $0x94] sm:$0xf] %v5884
        %5901 = vst [vmem:[#allocation4 + $0xb8] sm:$0xf] %v5885
        %5902 = vst [vmem:[#allocation4 + $0xdc] sm:$0xf] %v5886
        %5903 = vst [vmem:[#allocation4 + $0x100] sm:$0xf] %v5887
        %v5908 = vunpack.c.l.b16 %v5829
        %v5909 = vunpack.c.h.b16 %v5829
        %v5910 = vunpack.c.l.b16 %v5831
        %v5911 = vunpack.c.h.b16 %v5831
        %v5912 = vunpack.c.l.b16 %v5833
        %v5913 = vunpack.c.h.b16 %v5833
        %v5914 = vunpack.c.l.b16 %v5835
        %v5915 = vunpack.c.h.b16 %v5835
        %v5916 = vpack.c.b16 %v5908, %v5908
        %v5917 = vpack.c.b16 %v5909, %v5909
        %v5918 = vpack.c.b16 %v5910, %v5910
        %v5919 = vpack.c.b16 %v5911, %v5911
        %v5920 = vpack.c.b16 %v5912, %v5912
        %v5921 = vpack.c.b16 %v5913, %v5913
        %v5922 = vpack.c.b16 %v5914, %v5914
        %v5923 = vpack.c.b16 %v5915, %v5915
        %5932 = vst [vmem:[#allocation4 + $0x8] sm:$0xf] %v5916
        %5933 = vst [vmem:[#allocation4 + $0x2c] sm:$0xf] %v5917
        %5934 = vst [vmem:[#allocation4 + $0x50] sm:$0xf] %v5918
        %5935 = vst [vmem:[#allocation4 + $0x74] sm:$0xf] %v5919
        %5936 = vst [vmem:[#allocation4 + $0x98] sm:$0xf] %v5920
        %5937 = vst [vmem:[#allocation4 + $0xbc] sm:$0xf] %v5921
        %5938 = vst [vmem:[#allocation4 + $0xe0] sm:$0xf] %v5922
        %5939 = vst [vmem:[#allocation4 + $0x104] sm:$0xf] %v5923
        %v5940 = vld [vmem:[#allocation3 + $0x1] sm:$0xff]
        %v5941 = vld [vmem:[#allocation3 + $0x9] sm:$0xff]
        %v5942 = vld [vmem:[#allocation3 + $0x19] sm:$0xff]
        %v5943 = vld [vmem:[#allocation3 + $0x21] sm:$0xff]
        %v5944 = vld [vmem:[#allocation3 + $0x31] sm:$0xff]
        %v5945 = vld [vmem:[#allocation3 + $0x39] sm:$0xff]
        %v5946 = vld [vmem:[#allocation3 + $0x49] sm:$0xff]
        %v5947 = vld [vmem:[#allocation3 + $0x51] sm:$0xff]
        %v5948 = vld [vmem:[#allocation3 + $0x61] sm:$0xff]
        %v5949 = vld [vmem:[#allocation3 + $0x69] sm:$0xff]
        %v5950 = vld [vmem:[#allocation3 + $0x79] sm:$0xff]
        %v5951 = vld [vmem:[#allocation3 + $0x81] sm:$0xff]
        %v5952 = vpack.c.bf16 %v5941, %v5940
        %v5953 = vpack.c.bf16 %v5943, %v5942
        %v5954 = vpack.c.bf16 %v5945, %v5944
        %v5955 = vpack.c.bf16 %v5947, %v5946
        %v5956 = vpack.c.bf16 %v5949, %v5948
        %v5957 = vpack.c.bf16 %v5951, %v5950
        %5962 = vrot.lane.b32.xlu0 %v5952, 32
        %v5963 = vpop.permute.xlu0 %5962
        %5964 = vrot.lane.b32.xlu0 %v5953, 32
        %v5965 = vpop.permute.xlu0 %5964
        %5966 = vrot.lane.b32.xlu0 %v5954, 32
        %v5967 = vpop.permute.xlu0 %5966
        %5968 = vrot.lane.b32.xlu0 %v5955, 32
        %v5969 = vpop.permute.xlu0 %5968
        %5971 = vrot.lane.b32.xlu0 %v5956, 32
        %v5972 = vpop.permute.xlu0 %5971
        %v5975 = vsel %vm470, %v5963, %v5965
        %v5977 = vsel %vm470, %v5965, %v5967
        %v5979 = vsel %vm470, %v5967, %v5969
        %v5981 = vsel %vm470, %v5969, %v5972
        %5982 = vrot.lane.b32.xlu0 %v5953, 96
        %v5983 = vpop.permute.xlu0 %5982
        %5984 = vrot.lane.b32.xlu0 %v5954, 96
        %v5985 = vpop.permute.xlu0 %5984
        %5986 = vrot.lane.b32.xlu0 %v5955, 96
        %v5987 = vpop.permute.xlu0 %5986
        %5988 = vrot.lane.b32.xlu0 %v5956, 96
        %v5989 = vpop.permute.xlu0 %5988
        %5991 = vrot.lane.b32.xlu0 %v5957, 96
        %v5992 = vpop.permute.xlu0 %5991
        %v5995 = vsel %vm491, %v5983, %v5985
        %v5997 = vsel %vm491, %v5985, %v5987
        %v5999 = vsel %vm491, %v5987, %v5989
        %v6001 = vsel %vm491, %v5989, %v5992
        %v6006 = vunpack.c.l.b16 %v5975
        %v6007 = vunpack.c.h.b16 %v5975
        %v6008 = vunpack.c.l.b16 %v5977
        %v6009 = vunpack.c.h.b16 %v5977
        %v6010 = vunpack.c.l.b16 %v5979
        %v6011 = vunpack.c.h.b16 %v5979
        %v6012 = vunpack.c.l.b16 %v5981
        %v6013 = vunpack.c.h.b16 %v5981
        %v6014 = vpack.c.b16 %v6006, %v6006
        %v6015 = vpack.c.b16 %v6007, %v6007
        %v6016 = vpack.c.b16 %v6008, %v6008
        %v6017 = vpack.c.b16 %v6009, %v6009
        %v6018 = vpack.c.b16 %v6010, %v6010
        %v6019 = vpack.c.b16 %v6011, %v6011
        %v6020 = vpack.c.b16 %v6012, %v6012
        %v6021 = vpack.c.b16 %v6013, %v6013
        %6030 = vst [vmem:[#allocation4 + $0xc] sm:$0xf] %v6014
        %6031 = vst [vmem:[#allocation4 + $0x30] sm:$0xf] %v6015
        %6032 = vst [vmem:[#allocation4 + $0x54] sm:$0xf] %v6016
        %6033 = vst [vmem:[#allocation4 + $0x78] sm:$0xf] %v6017
        %6034 = vst [vmem:[#allocation4 + $0x9c] sm:$0xf] %v6018
        %6035 = vst [vmem:[#allocation4 + $0xc0] sm:$0xf] %v6019
        %6036 = vst [vmem:[#allocation4 + $0xe4] sm:$0xf] %v6020
        %6037 = vst [vmem:[#allocation4 + $0x108] sm:$0xf] %v6021
        %v6038 = vunpack.c.l.b16 %v5953
        %v6039 = vunpack.c.h.b16 %v5953
        %v6040 = vunpack.c.l.b16 %v5954
        %v6041 = vunpack.c.h.b16 %v5954
        %v6042 = vunpack.c.l.b16 %v5955
        %v6043 = vunpack.c.h.b16 %v5955
        %v6044 = vunpack.c.l.b16 %v5956
        %v6045 = vunpack.c.h.b16 %v5956
        %v6046 = vpack.c.b16 %v6038, %v6038
        %v6047 = vpack.c.b16 %v6039, %v6039
        %v6048 = vpack.c.b16 %v6040, %v6040
        %v6049 = vpack.c.b16 %v6041, %v6041
        %v6050 = vpack.c.b16 %v6042, %v6042
        %v6051 = vpack.c.b16 %v6043, %v6043
        %v6052 = vpack.c.b16 %v6044, %v6044
        %v6053 = vpack.c.b16 %v6045, %v6045
        %6062 = vst [vmem:[#allocation4 + $0x10] sm:$0xf] %v6046
        %6063 = vst [vmem:[#allocation4 + $0x34] sm:$0xf] %v6047
        %6064 = vst [vmem:[#allocation4 + $0x58] sm:$0xf] %v6048
        %6065 = vst [vmem:[#allocation4 + $0x7c] sm:$0xf] %v6049
        %6066 = vst [vmem:[#allocation4 + $0xa0] sm:$0xf] %v6050
        %6067 = vst [vmem:[#allocation4 + $0xc4] sm:$0xf] %v6051
        %6068 = vst [vmem:[#allocation4 + $0xe8] sm:$0xf] %v6052
        %6069 = vst [vmem:[#allocation4 + $0x10c] sm:$0xf] %v6053
        %v6074 = vunpack.c.l.b16 %v5995
        %v6075 = vunpack.c.h.b16 %v5995
        %v6076 = vunpack.c.l.b16 %v5997
        %v6077 = vunpack.c.h.b16 %v5997
        %v6078 = vunpack.c.l.b16 %v5999
        %v6079 = vunpack.c.h.b16 %v5999
        %v6080 = vunpack.c.l.b16 %v6001
        %v6081 = vunpack.c.h.b16 %v6001
        %v6082 = vpack.c.b16 %v6074, %v6074
        %v6083 = vpack.c.b16 %v6075, %v6075
        %v6084 = vpack.c.b16 %v6076, %v6076
        %v6085 = vpack.c.b16 %v6077, %v6077
        %v6086 = vpack.c.b16 %v6078, %v6078
        %v6087 = vpack.c.b16 %v6079, %v6079
        %v6088 = vpack.c.b16 %v6080, %v6080
        %v6089 = vpack.c.b16 %v6081, %v6081
        %6098 = vst [vmem:[#allocation4 + $0x14] sm:$0xf] %v6082
        %6099 = vst [vmem:[#allocation4 + $0x38] sm:$0xf] %v6083
        %6100 = vst [vmem:[#allocation4 + $0x5c] sm:$0xf] %v6084
        %6101 = vst [vmem:[#allocation4 + $0x80] sm:$0xf] %v6085
        %6102 = vst [vmem:[#allocation4 + $0xa4] sm:$0xf] %v6086
        %6103 = vst [vmem:[#allocation4 + $0xc8] sm:$0xf] %v6087
        %6104 = vst [vmem:[#allocation4 + $0xec] sm:$0xf] %v6088
        %6105 = vst [vmem:[#allocation4 + $0x110] sm:$0xf] %v6089
        %v6106 = vld [vmem:[#allocation3 + $0x2] sm:$0xff]
        %v6107 = vld [vmem:[#allocation3 + $0xa] sm:$0xff]
        %v6108 = vld [vmem:[#allocation3 + $0x1a] sm:$0xff]
        %v6109 = vld [vmem:[#allocation3 + $0x22] sm:$0xff]
        %v6110 = vld [vmem:[#allocation3 + $0x32] sm:$0xff]
        %v6111 = vld [vmem:[#allocation3 + $0x3a] sm:$0xff]
        %v6112 = vld [vmem:[#allocation3 + $0x4a] sm:$0xff]
        %v6113 = vld [vmem:[#allocation3 + $0x52] sm:$0xff]
        %v6114 = vld [vmem:[#allocation3 + $0x62] sm:$0xff]
        %v6115 = vld [vmem:[#allocation3 + $0x6a] sm:$0xff]
        %v6116 = vld [vmem:[#allocation3 + $0x7a] sm:$0xff]
        %v6117 = vld [vmem:[#allocation3 + $0x82] sm:$0xff]
        %v6118 = vpack.c.bf16 %v6107, %v6106
        %v6119 = vpack.c.bf16 %v6109, %v6108
        %v6120 = vpack.c.bf16 %v6111, %v6110
        %v6121 = vpack.c.bf16 %v6113, %v6112
        %v6122 = vpack.c.bf16 %v6115, %v6114
        %v6123 = vpack.c.bf16 %v6117, %v6116
        %6128 = vrot.lane.b32.xlu0 %v6118, 32
        %v6129 = vpop.permute.xlu0 %6128
        %6130 = vrot.lane.b32.xlu0 %v6119, 32
        %v6131 = vpop.permute.xlu0 %6130
        %6132 = vrot.lane.b32.xlu0 %v6120, 32
        %v6133 = vpop.permute.xlu0 %6132
        %6134 = vrot.lane.b32.xlu0 %v6121, 32
        %v6135 = vpop.permute.xlu0 %6134
        %6137 = vrot.lane.b32.xlu0 %v6122, 32
        %v6138 = vpop.permute.xlu0 %6137
        %v6141 = vsel %vm470, %v6129, %v6131
        %v6143 = vsel %vm470, %v6131, %v6133
        %v6145 = vsel %vm470, %v6133, %v6135
        %v6147 = vsel %vm470, %v6135, %v6138
        %6148 = vrot.lane.b32.xlu0 %v6119, 96
        %v6149 = vpop.permute.xlu0 %6148
        %6150 = vrot.lane.b32.xlu0 %v6120, 96
        %v6151 = vpop.permute.xlu0 %6150
        %6152 = vrot.lane.b32.xlu0 %v6121, 96
        %v6153 = vpop.permute.xlu0 %6152
        %6154 = vrot.lane.b32.xlu0 %v6122, 96
        %v6155 = vpop.permute.xlu0 %6154
        %6157 = vrot.lane.b32.xlu0 %v6123, 96
        %v6158 = vpop.permute.xlu0 %6157
        %v6161 = vsel %vm491, %v6149, %v6151
        %v6163 = vsel %vm491, %v6151, %v6153
        %v6165 = vsel %vm491, %v6153, %v6155
        %v6167 = vsel %vm491, %v6155, %v6158
        %v6172 = vunpack.c.l.b16 %v6141
        %v6173 = vunpack.c.h.b16 %v6141
        %v6174 = vunpack.c.l.b16 %v6143
        %v6175 = vunpack.c.h.b16 %v6143
        %v6176 = vunpack.c.l.b16 %v6145
        %v6177 = vunpack.c.h.b16 %v6145
        %v6178 = vunpack.c.l.b16 %v6147
        %v6179 = vunpack.c.h.b16 %v6147
        %v6180 = vpack.c.b16 %v6172, %v6172
        %v6181 = vpack.c.b16 %v6173, %v6173
        %v6182 = vpack.c.b16 %v6174, %v6174
        %v6183 = vpack.c.b16 %v6175, %v6175
        %v6184 = vpack.c.b16 %v6176, %v6176
        %v6185 = vpack.c.b16 %v6177, %v6177
        %v6186 = vpack.c.b16 %v6178, %v6178
        %v6187 = vpack.c.b16 %v6179, %v6179
        %6196 = vst [vmem:[#allocation4 + $0x18] sm:$0xf] %v6180
        %6197 = vst [vmem:[#allocation4 + $0x3c] sm:$0xf] %v6181
        %6198 = vst [vmem:[#allocation4 + $0x60] sm:$0xf] %v6182
        %6199 = vst [vmem:[#allocation4 + $0x84] sm:$0xf] %v6183
        %6200 = vst [vmem:[#allocation4 + $0xa8] sm:$0xf] %v6184
        %6201 = vst [vmem:[#allocation4 + $0xcc] sm:$0xf] %v6185
        %6202 = vst [vmem:[#allocation4 + $0xf0] sm:$0xf] %v6186
        %6203 = vst [vmem:[#allocation4 + $0x114] sm:$0xf] %v6187
        %v6204 = vunpack.c.l.b16 %v6119
        %v6205 = vunpack.c.h.b16 %v6119
        %v6206 = vunpack.c.l.b16 %v6120
        %v6207 = vunpack.c.h.b16 %v6120
        %v6208 = vunpack.c.l.b16 %v6121
        %v6209 = vunpack.c.h.b16 %v6121
        %v6210 = vunpack.c.l.b16 %v6122
        %v6211 = vunpack.c.h.b16 %v6122
        %v6212 = vpack.c.b16 %v6204, %v6204
        %v6213 = vpack.c.b16 %v6205, %v6205
        %v6214 = vpack.c.b16 %v6206, %v6206
        %v6215 = vpack.c.b16 %v6207, %v6207
        %v6216 = vpack.c.b16 %v6208, %v6208
        %v6217 = vpack.c.b16 %v6209, %v6209
        %v6218 = vpack.c.b16 %v6210, %v6210
        %v6219 = vpack.c.b16 %v6211, %v6211
        %6228 = vst [vmem:[#allocation4 + $0x1c] sm:$0xf] %v6212
        %6229 = vst [vmem:[#allocation4 + $0x40] sm:$0xf] %v6213
        %6230 = vst [vmem:[#allocation4 + $0x64] sm:$0xf] %v6214
        %6231 = vst [vmem:[#allocation4 + $0x88] sm:$0xf] %v6215
        %6232 = vst [vmem:[#allocation4 + $0xac] sm:$0xf] %v6216
        %6233 = vst [vmem:[#allocation4 + $0xd0] sm:$0xf] %v6217
        %6234 = vst [vmem:[#allocation4 + $0xf4] sm:$0xf] %v6218
        %6235 = vst [vmem:[#allocation4 + $0x118] sm:$0xf] %v6219
        %v6240 = vunpack.c.l.b16 %v6161
        %v6241 = vunpack.c.h.b16 %v6161
        %v6242 = vunpack.c.l.b16 %v6163
        %v6243 = vunpack.c.h.b16 %v6163
        %v6244 = vunpack.c.l.b16 %v6165
        %v6245 = vunpack.c.h.b16 %v6165
        %v6246 = vunpack.c.l.b16 %v6167
        %v6247 = vunpack.c.h.b16 %v6167
        %v6248 = vpack.c.b16 %v6240, %v6240
        %v6249 = vpack.c.b16 %v6241, %v6241
        %v6250 = vpack.c.b16 %v6242, %v6242
        %v6251 = vpack.c.b16 %v6243, %v6243
        %v6252 = vpack.c.b16 %v6244, %v6244
        %v6253 = vpack.c.b16 %v6245, %v6245
        %v6254 = vpack.c.b16 %v6246, %v6246
        %v6255 = vpack.c.b16 %v6247, %v6247
        %6264 = vst [vmem:[#allocation4 + $0x20] sm:$0xf] %v6248
        %6265 = vst [vmem:[#allocation4 + $0x44] sm:$0xf] %v6249
        %6266 = vst [vmem:[#allocation4 + $0x68] sm:$0xf] %v6250
        %6267 = vst [vmem:[#allocation4 + $0x8c] sm:$0xf] %v6251
        %6268 = vst [vmem:[#allocation4 + $0xb0] sm:$0xf] %v6252
        %6269 = vst [vmem:[#allocation4 + $0xd4] sm:$0xf] %v6253
        %6270 = vst [vmem:[#allocation4 + $0xf8] sm:$0xf] %v6254
        %6271 = vst [vmem:[#allocation4 + $0x11c] sm:$0xf] %v6255
        %v6272 = vld [vmem:[#allocation4] sm:$0xff]
        %v6273 = vld [vmem:[#allocation4 + $0x8] sm:$0xff]
        %v6274 = vld [vmem:[#allocation4 + $0x10] sm:$0xff]
        %v6275 = vld [vmem:[#allocation4 + $0x18] sm:$0xff]
        %v6276 = vld [vmem:[#allocation4 + $0x20] sm:$0xf]
        %v6277 = vld [vmem:[#allocation4 + $0x24] sm:$0xff]
        %v6278 = vld [vmem:[#allocation4 + $0x2c] sm:$0xff]
        %v6279 = vld [vmem:[#allocation4 + $0x34] sm:$0xff]
        %v6280 = vld [vmem:[#allocation4 + $0x3c] sm:$0xff]
        %v6281 = vld [vmem:[#allocation4 + $0x44] sm:$0xf]
        %v6282 = vld [vmem:[#allocation4 + $0x48] sm:$0xff]
        %v6283 = vld [vmem:[#allocation4 + $0x50] sm:$0xff]
        %v6284 = vld [vmem:[#allocation4 + $0x58] sm:$0xff]
        %v6285 = vld [vmem:[#allocation4 + $0x60] sm:$0xff]
        %v6286 = vld [vmem:[#allocation4 + $0x68] sm:$0xf]
        %v6287 = vld [vmem:[#allocation4 + $0x6c] sm:$0xff]
        %v6288 = vld [vmem:[#allocation4 + $0x74] sm:$0xff]
        %v6289 = vld [vmem:[#allocation4 + $0x7c] sm:$0xff]
        %v6290 = vld [vmem:[#allocation4 + $0x84] sm:$0xff]
        %v6291 = vld [vmem:[#allocation4 + $0x8c] sm:$0xf]
        %v6292 = vld [vmem:[#allocation4 + $0x90] sm:$0xff]
        %v6293 = vld [vmem:[#allocation4 + $0x98] sm:$0xff]
        %v6294 = vld [vmem:[#allocation4 + $0xa0] sm:$0xff]
        %v6295 = vld [vmem:[#allocation4 + $0xa8] sm:$0xff]
        %v6296 = vld [vmem:[#allocation4 + $0xb0] sm:$0xf]
        %v6297 = vld [vmem:[#allocation4 + $0xb4] sm:$0xff]
        %v6298 = vld [vmem:[#allocation4 + $0xbc] sm:$0xff]
        %v6299 = vld [vmem:[#allocation4 + $0xc4] sm:$0xff]
        %v6300 = vld [vmem:[#allocation4 + $0xcc] sm:$0xff]
        %v6301 = vld [vmem:[#allocation4 + $0xd4] sm:$0xf]
        %v6302 = vld [vmem:[#allocation4 + $0xd8] sm:$0xff]
        %v6303 = vld [vmem:[#allocation4 + $0xe0] sm:$0xff]
        %v6304 = vld [vmem:[#allocation4 + $0xe8] sm:$0xff]
        %v6305 = vld [vmem:[#allocation4 + $0xf0] sm:$0xff]
        %v6306 = vld [vmem:[#allocation4 + $0xf8] sm:$0xf]
        %v6307 = vld [vmem:[#allocation4 + $0xfc] sm:$0xff]
        %v6308 = vld [vmem:[#allocation4 + $0x104] sm:$0xff]
        %v6309 = vld [vmem:[#allocation4 + $0x10c] sm:$0xff]
        %v6310 = vld [vmem:[#allocation4 + $0x114] sm:$0xff]
        %v6311 = vld [vmem:[#allocation4 + $0x11c] sm:$0xf]
        %s6312 = scalar_lea.vmem [#allocation8], 1728
        %v6313 = vld [vmem:[%s6312] sm:$0xf]
        %v6314 = vld [vmem:[%s6312 + $0x4] sm:$0xf]
        %v6315 = vld [vmem:[%s6312 + $0x8] sm:$0xf]
        %v6316 = vld [vmem:[%s6312 + $0xc] sm:$0xf]
        %v6317 = vld [vmem:[%s6312 + $0x10] sm:$0xf]
        %v6318 = vld [vmem:[%s6312 + $0x14] sm:$0xf]
        %v6319 = vld [vmem:[%s6312 + $0x18] sm:$0xf]
        %v6320 = vld [vmem:[%s6312 + $0x1c] sm:$0xf]
        %v6321 = vld [vmem:[%s6312 + $0x20] sm:$0xf]
        %v6322 = vld [vmem:[%s6312 + $0x24] sm:$0xf]
        %v6323 = vld [vmem:[%s6312 + $0x28] sm:$0xf]
        %v6324 = vld [vmem:[%s6312 + $0x2c] sm:$0xf]
        %v6325 = vld [vmem:[%s6312 + $0x30] sm:$0xf]
        %v6326 = vld [vmem:[%s6312 + $0x34] sm:$0xf]
        %v6327 = vld [vmem:[%s6312 + $0x38] sm:$0xf]
        %v6328 = vld [vmem:[%s6312 + $0x3c] sm:$0xf]
        %v6329 = vld [vmem:[%s6312 + $0x40] sm:$0xf]
        %v6330 = vld [vmem:[%s6312 + $0x44] sm:$0xf]
        %v6331 = vld [vmem:[%s6312 + $0x48] sm:$0xf]
        %v6332 = vld [vmem:[%s6312 + $0x4c] sm:$0xf]
        %v6333 = vld [vmem:[%s6312 + $0x50] sm:$0xf]
        %v6334 = vld [vmem:[%s6312 + $0x54] sm:$0xf]
        %v6335 = vld [vmem:[%s6312 + $0x58] sm:$0xf]
        %v6336 = vld [vmem:[%s6312 + $0x5c] sm:$0xf]
        %v6337 = vld [vmem:[%s6312 + $0x60] sm:$0xf]
        %v6338 = vld [vmem:[%s6312 + $0x64] sm:$0xf]
        %v6339 = vld [vmem:[%s6312 + $0x68] sm:$0xf]
        %v6340 = vld [vmem:[%s6312 + $0x6c] sm:$0xf]
        %v6341 = vld [vmem:[%s6312 + $0x70] sm:$0xf]
        %v6342 = vld [vmem:[%s6312 + $0x74] sm:$0xf]
        %v6343 = vld [vmem:[%s6312 + $0x78] sm:$0xf]
        %v6344 = vld [vmem:[%s6312 + $0x7c] sm:$0xf]
        %v6345 = vld [vmem:[%s6312 + $0x80] sm:$0xf]
        %v6346 = vld [vmem:[%s6312 + $0x84] sm:$0xf]
        %v6347 = vld [vmem:[%s6312 + $0x88] sm:$0xf]
        %v6348 = vld [vmem:[%s6312 + $0x8c] sm:$0xf]
        %v6349 = vld [vmem:[%s6312 + $0x90] sm:$0xf]
        %v6350 = vld [vmem:[%s6312 + $0x94] sm:$0xf]
        %v6351 = vld [vmem:[%s6312 + $0x98] sm:$0xf]
        %v6352 = vld [vmem:[%s6312 + $0x9c] sm:$0xf]
        %v6353 = vld [vmem:[%s6312 + $0xa0] sm:$0xf]
        %v6354 = vld [vmem:[%s6312 + $0xa4] sm:$0xf]
        %v6355 = vld [vmem:[%s6312 + $0xa8] sm:$0xf]
        %v6356 = vld [vmem:[%s6312 + $0xac] sm:$0xf]
        %v6357 = vld [vmem:[%s6312 + $0xb0] sm:$0xf]
        %v6358 = vld [vmem:[%s6312 + $0xb4] sm:$0xf]
        %v6359 = vld [vmem:[%s6312 + $0xb8] sm:$0xf]
        %v6360 = vld [vmem:[%s6312 + $0xbc] sm:$0xf]
        %v6361 = vld [vmem:[%s6312 + $0xc0] sm:$0xf]
        %v6362 = vld [vmem:[%s6312 + $0xc4] sm:$0xf]
        %v6363 = vld [vmem:[%s6312 + $0xc8] sm:$0xf]
        %v6364 = vld [vmem:[%s6312 + $0xcc] sm:$0xf]
        %v6365 = vld [vmem:[%s6312 + $0xd0] sm:$0xf]
        %v6366 = vld [vmem:[%s6312 + $0xd4] sm:$0xf]
        %v6367 = vld [vmem:[%s6312 + $0xd8] sm:$0xf]
        %v6368 = vld [vmem:[%s6312 + $0xdc] sm:$0xf]
        %v6369 = vld [vmem:[%s6312 + $0xe0] sm:$0xf]
        %v6370 = vld [vmem:[%s6312 + $0xe4] sm:$0xf]
        %v6371 = vld [vmem:[%s6312 + $0xe8] sm:$0xf]
        %v6372 = vld [vmem:[%s6312 + $0xec] sm:$0xf]
        %v6373 = vld [vmem:[%s6312 + $0xf0] sm:$0xf]
        %v6374 = vld [vmem:[%s6312 + $0xf4] sm:$0xf]
        %v6375 = vld [vmem:[%s6312 + $0xf8] sm:$0xf]
        %v6376 = vld [vmem:[%s6312 + $0xfc] sm:$0xf]
        %v6377 = vld [vmem:[%s6312 + $0x100] sm:$0xf]
        %v6378 = vld [vmem:[%s6312 + $0x104] sm:$0xf]
        %v6379 = vld [vmem:[%s6312 + $0x108] sm:$0xf]
        %v6380 = vld [vmem:[%s6312 + $0x10c] sm:$0xf]
        %v6381 = vld [vmem:[%s6312 + $0x110] sm:$0xf]
        %v6382 = vld [vmem:[%s6312 + $0x114] sm:$0xf]
        %v6383 = vld [vmem:[%s6312 + $0x118] sm:$0xf]
        %v6384 = vld [vmem:[%s6312 + $0x11c] sm:$0xf]
        %v6385 = vld [vmem:[%s6312 + $0x120] sm:$0xf]
        %v6386 = vld [vmem:[%s6312 + $0x124] sm:$0xf]
        %v6387 = vld [vmem:[%s6312 + $0x128] sm:$0xf]
        %v6388 = vld [vmem:[%s6312 + $0x12c] sm:$0xf]
        %v6389 = vld [vmem:[%s6312 + $0x130] sm:$0xf]
        %v6390 = vld [vmem:[%s6312 + $0x134] sm:$0xf]
        %v6391 = vld [vmem:[%s6312 + $0x138] sm:$0xf]
        %v6392 = vld [vmem:[%s6312 + $0x13c] sm:$0xf]
        %v6393 = vld [vmem:[%s6312 + $0x140] sm:$0xf]
        %v6394 = vld [vmem:[%s6312 + $0x144] sm:$0xf]
        %v6395 = vld [vmem:[%s6312 + $0x148] sm:$0xf]
        %v6396 = vld [vmem:[%s6312 + $0x14c] sm:$0xf]
        %v6397 = vld [vmem:[%s6312 + $0x150] sm:$0xf]
        %v6398 = vld [vmem:[%s6312 + $0x154] sm:$0xf]
        %v6399 = vld [vmem:[%s6312 + $0x158] sm:$0xf]
        %v6400 = vld [vmem:[%s6312 + $0x15c] sm:$0xf]
        %v6401 = vld [vmem:[%s6312 + $0x160] sm:$0xf]
        %v6402 = vld [vmem:[%s6312 + $0x164] sm:$0xf]
        %v6403 = vld [vmem:[%s6312 + $0x168] sm:$0xf]
        %v6404 = vld [vmem:[%s6312 + $0x16c] sm:$0xf]
        %v6405 = vld [vmem:[%s6312 + $0x170] sm:$0xf]
        %v6406 = vld [vmem:[%s6312 + $0x174] sm:$0xf]
        %v6407 = vld [vmem:[%s6312 + $0x178] sm:$0xf]
        %v6408 = vld [vmem:[%s6312 + $0x17c] sm:$0xf]
        %v6409 = vld [vmem:[%s6312 + $0x180] sm:$0xf]
        %v6410 = vld [vmem:[%s6312 + $0x184] sm:$0xf]
        %v6411 = vld [vmem:[%s6312 + $0x188] sm:$0xf]
        %v6412 = vld [vmem:[%s6312 + $0x18c] sm:$0xf]
        %v6413 = vld [vmem:[%s6312 + $0x190] sm:$0xf]
        %v6414 = vld [vmem:[%s6312 + $0x194] sm:$0xf]
        %v6415 = vld [vmem:[%s6312 + $0x198] sm:$0xf]
        %v6416 = vld [vmem:[%s6312 + $0x19c] sm:$0xf]
        %v6417 = vld [vmem:[%s6312 + $0x1a0] sm:$0xf]
        %v6418 = vld [vmem:[%s6312 + $0x1a4] sm:$0xf]
        %v6419 = vld [vmem:[%s6312 + $0x1a8] sm:$0xf]
        %v6420 = vld [vmem:[%s6312 + $0x1ac] sm:$0xf]
        %v6421 = vld [vmem:[%s6312 + $0x1b0] sm:$0xf]
        %v6422 = vld [vmem:[%s6312 + $0x1b4] sm:$0xf]
        %v6423 = vld [vmem:[%s6312 + $0x1b8] sm:$0xf]
        %v6424 = vld [vmem:[%s6312 + $0x1bc] sm:$0xf]
        %v6425 = vld [vmem:[%s6312 + $0x1c0] sm:$0xf]
        %v6426 = vld [vmem:[%s6312 + $0x1c4] sm:$0xf]
        %v6427 = vld [vmem:[%s6312 + $0x1c8] sm:$0xf]
        %v6428 = vld [vmem:[%s6312 + $0x1cc] sm:$0xf]
        %v6429 = vld [vmem:[%s6312 + $0x1d0] sm:$0xf]
        %v6430 = vld [vmem:[%s6312 + $0x1d4] sm:$0xf]
        %v6431 = vld [vmem:[%s6312 + $0x1d8] sm:$0xf]
        %v6432 = vld [vmem:[%s6312 + $0x1dc] sm:$0xf]
        %v6433 = vld [vmem:[%s6312 + $0x1e0] sm:$0xf]
        %v6434 = vld [vmem:[%s6312 + $0x1e4] sm:$0xf]
        %v6435 = vld [vmem:[%s6312 + $0x1e8] sm:$0xf]
        %v6436 = vld [vmem:[%s6312 + $0x1ec] sm:$0xf]
        %v6437 = vld [vmem:[%s6312 + $0x1f0] sm:$0xf]
        %v6438 = vld [vmem:[%s6312 + $0x1f4] sm:$0xf]
        %v6439 = vld [vmem:[%s6312 + $0x1f8] sm:$0xf]
        %v6440 = vld [vmem:[%s6312 + $0x1fc] sm:$0xf]
        %v6441 = vld [vmem:[%s6312 + $0x200] sm:$0xf]
        %v6442 = vld [vmem:[%s6312 + $0x204] sm:$0xf]
        %v6443 = vld [vmem:[%s6312 + $0x208] sm:$0xf]
        %v6444 = vld [vmem:[%s6312 + $0x20c] sm:$0xf]
        %v6445 = vld [vmem:[%s6312 + $0x210] sm:$0xf]
        %v6446 = vld [vmem:[%s6312 + $0x214] sm:$0xf]
        %v6447 = vld [vmem:[%s6312 + $0x218] sm:$0xf]
        %v6448 = vld [vmem:[%s6312 + $0x21c] sm:$0xf]
        %v6449 = vld [vmem:[%s6312 + $0x220] sm:$0xf]
        %v6450 = vld [vmem:[%s6312 + $0x224] sm:$0xf]
        %v6451 = vld [vmem:[%s6312 + $0x228] sm:$0xf]
        %v6452 = vld [vmem:[%s6312 + $0x22c] sm:$0xf]
        %v6453 = vld [vmem:[%s6312 + $0x230] sm:$0xf]
        %v6454 = vld [vmem:[%s6312 + $0x234] sm:$0xf]
        %v6455 = vld [vmem:[%s6312 + $0x238] sm:$0xf]
        %v6456 = vld [vmem:[%s6312 + $0x23c] sm:$0xf]
        %s6457 = scalar_lea.vmem [#allocation10], 3
        %v6458 = vld [vmem:[%s6457] sm:$0x1]
        %v6460 = vlaneseq
        %v6461 = vshrl.u32 %v6460, 7
        %v6462 = vsub.s32 0, %v6461
        %v6463 = vrot.slane %v6458, %v6462
        %v6505 = vunpack.c.l.b16 %v6272
        %v6506 = vunpack.c.h.b16 %v6272
        %v6507 = vunpack.c.l.b16 %v6273
        %v6508 = vunpack.c.h.b16 %v6273
        %v6509 = vunpack.c.l.b16 %v6274
        %v6510 = vunpack.c.h.b16 %v6274
        %v6511 = vunpack.c.l.b16 %v6275
        %v6512 = vunpack.c.h.b16 %v6275
        %v6513 = vunpack.c.l.b16 %v6276
        %v6514 = vunpack.c.l.b16 %v6277
        %v6515 = vunpack.c.h.b16 %v6277
        %v6516 = vunpack.c.l.b16 %v6278
        %v6517 = vunpack.c.h.b16 %v6278
        %v6518 = vunpack.c.l.b16 %v6279
        %v6519 = vunpack.c.h.b16 %v6279
        %v6520 = vunpack.c.l.b16 %v6280
        %v6521 = vunpack.c.h.b16 %v6280
        %v6522 = vunpack.c.l.b16 %v6281
        %v6523 = vunpack.c.l.b16 %v6282
        %v6524 = vunpack.c.h.b16 %v6282
        %v6525 = vunpack.c.l.b16 %v6283
        %v6526 = vunpack.c.h.b16 %v6283
        %v6527 = vunpack.c.l.b16 %v6284
        %v6528 = vunpack.c.h.b16 %v6284
        %v6529 = vunpack.c.l.b16 %v6285
        %v6530 = vunpack.c.h.b16 %v6285
        %v6531 = vunpack.c.l.b16 %v6286
        %v6532 = vunpack.c.l.b16 %v6287
        %v6533 = vunpack.c.h.b16 %v6287
        %v6534 = vunpack.c.l.b16 %v6288
        %v6535 = vunpack.c.h.b16 %v6288
        %v6536 = vunpack.c.l.b16 %v6289
        %v6537 = vunpack.c.h.b16 %v6289
        %v6538 = vunpack.c.l.b16 %v6290
        %v6539 = vunpack.c.h.b16 %v6290
        %v6540 = vunpack.c.l.b16 %v6291
        %v6541 = vunpack.c.l.b16 %v6292
        %v6542 = vunpack.c.h.b16 %v6292
        %v6543 = vunpack.c.l.b16 %v6293
        %v6544 = vunpack.c.h.b16 %v6293
        %v6545 = vunpack.c.l.b16 %v6294
        %v6546 = vunpack.c.h.b16 %v6294
        %v6547 = vunpack.c.l.b16 %v6295
        %v6548 = vunpack.c.h.b16 %v6295
        %v6549 = vunpack.c.l.b16 %v6296
        %v6550 = vunpack.c.l.b16 %v6297
        %v6551 = vunpack.c.h.b16 %v6297
        %v6552 = vunpack.c.l.b16 %v6298
        %v6553 = vunpack.c.h.b16 %v6298
        %v6554 = vunpack.c.l.b16 %v6299
        %v6555 = vunpack.c.h.b16 %v6299
        %v6556 = vunpack.c.l.b16 %v6300
        %v6557 = vunpack.c.h.b16 %v6300
        %v6558 = vunpack.c.l.b16 %v6301
        %v6559 = vunpack.c.l.b16 %v6302
        %v6560 = vunpack.c.h.b16 %v6302
        %v6561 = vunpack.c.l.b16 %v6303
        %v6562 = vunpack.c.h.b16 %v6303
        %v6563 = vunpack.c.l.b16 %v6304
        %v6564 = vunpack.c.h.b16 %v6304
        %v6565 = vunpack.c.l.b16 %v6305
        %v6566 = vunpack.c.h.b16 %v6305
        %v6567 = vunpack.c.l.b16 %v6306
        %v6568 = vunpack.c.l.b16 %v6307
        %v6569 = vunpack.c.h.b16 %v6307
        %v6570 = vunpack.c.l.b16 %v6308
        %v6571 = vunpack.c.h.b16 %v6308
        %v6572 = vunpack.c.l.b16 %v6309
        %v6573 = vunpack.c.h.b16 %v6309
        %v6574 = vunpack.c.l.b16 %v6310
        %v6575 = vunpack.c.h.b16 %v6310
        %v6576 = vunpack.c.l.b16 %v6311
        %v6577 = vpack.c.b16 %v6514, %v6505
        %v6578 = vpack.c.b16 %v6515, %v6506
        %v6579 = vpack.c.b16 %v6516, %v6507
        %v6580 = vpack.c.b16 %v6517, %v6508
        %v6581 = vpack.c.b16 %v6518, %v6509
        %v6582 = vpack.c.b16 %v6519, %v6510
        %v6583 = vpack.c.b16 %v6520, %v6511
        %v6584 = vpack.c.b16 %v6521, %v6512
        %v6585 = vpack.c.b16 %v6522, %v6513
        %v6586 = vpack.c.b16 %v6532, %v6523
        %v6587 = vpack.c.b16 %v6533, %v6524
        %v6588 = vpack.c.b16 %v6534, %v6525
        %v6589 = vpack.c.b16 %v6535, %v6526
        %v6590 = vpack.c.b16 %v6536, %v6527
        %v6591 = vpack.c.b16 %v6537, %v6528
        %v6592 = vpack.c.b16 %v6538, %v6529
        %v6593 = vpack.c.b16 %v6539, %v6530
        %v6594 = vpack.c.b16 %v6540, %v6531
        %v6595 = vpack.c.b16 %v6550, %v6541
        %v6596 = vpack.c.b16 %v6551, %v6542
        %v6597 = vpack.c.b16 %v6552, %v6543
        %v6598 = vpack.c.b16 %v6553, %v6544
        %v6599 = vpack.c.b16 %v6554, %v6545
        %v6600 = vpack.c.b16 %v6555, %v6546
        %v6601 = vpack.c.b16 %v6556, %v6547
        %v6602 = vpack.c.b16 %v6557, %v6548
        %v6603 = vpack.c.b16 %v6558, %v6549
        %v6604 = vpack.c.b16 %v6568, %v6559
        %v6605 = vpack.c.b16 %v6569, %v6560
        %v6606 = vpack.c.b16 %v6570, %v6561
        %v6607 = vpack.c.b16 %v6571, %v6562
        %v6608 = vpack.c.b16 %v6572, %v6563
        %v6609 = vpack.c.b16 %v6573, %v6564
        %v6610 = vpack.c.b16 %v6574, %v6565
        %v6611 = vpack.c.b16 %v6575, %v6566
        %v6612 = vpack.c.b16 %v6576, %v6567
        %v6793 = vunpack.c.l.b16 %v6313
        %v6794 = vunpack.c.l.b16 %v6314
        %v6795 = vunpack.c.l.b16 %v6315
        %v6796 = vunpack.c.l.b16 %v6316
        %v6797 = vunpack.c.l.b16 %v6317
        %v6798 = vunpack.c.l.b16 %v6318
        %v6799 = vunpack.c.l.b16 %v6319
        %v6800 = vunpack.c.l.b16 %v6320
        %v6801 = vunpack.c.l.b16 %v6321
        %v6802 = vunpack.c.l.b16 %v6322
        %v6803 = vunpack.c.l.b16 %v6323
        %v6804 = vunpack.c.l.b16 %v6324
        %v6805 = vunpack.c.l.b16 %v6325
        %v6806 = vunpack.c.l.b16 %v6326
        %v6807 = vunpack.c.l.b16 %v6327
        %v6808 = vunpack.c.l.b16 %v6328
        %v6809 = vunpack.c.l.b16 %v6329
        %v6810 = vunpack.c.l.b16 %v6330
        %v6811 = vunpack.c.l.b16 %v6331
        %v6812 = vunpack.c.l.b16 %v6332
        %v6813 = vunpack.c.l.b16 %v6333
        %v6814 = vunpack.c.l.b16 %v6334
        %v6815 = vunpack.c.l.b16 %v6335
        %v6816 = vunpack.c.l.b16 %v6336
        %v6817 = vunpack.c.l.b16 %v6337
        %v6818 = vunpack.c.l.b16 %v6338
        %v6819 = vunpack.c.l.b16 %v6339
        %v6820 = vunpack.c.l.b16 %v6340
        %v6821 = vunpack.c.l.b16 %v6341
        %v6822 = vunpack.c.l.b16 %v6342
        %v6823 = vunpack.c.l.b16 %v6343
        %v6824 = vunpack.c.l.b16 %v6344
        %v6825 = vunpack.c.l.b16 %v6345
        %v6826 = vunpack.c.l.b16 %v6346
        %v6827 = vunpack.c.l.b16 %v6347
        %v6828 = vunpack.c.l.b16 %v6348
        %v6829 = vunpack.c.l.b16 %v6349
        %v6830 = vunpack.c.l.b16 %v6350
        %v6831 = vunpack.c.l.b16 %v6351
        %v6832 = vunpack.c.l.b16 %v6352
        %v6833 = vunpack.c.l.b16 %v6353
        %v6834 = vunpack.c.l.b16 %v6354
        %v6835 = vunpack.c.l.b16 %v6355
        %v6836 = vunpack.c.l.b16 %v6356
        %v6837 = vunpack.c.l.b16 %v6357
        %v6838 = vunpack.c.l.b16 %v6358
        %v6839 = vunpack.c.l.b16 %v6359
        %v6840 = vunpack.c.l.b16 %v6360
        %v6841 = vunpack.c.l.b16 %v6361
        %v6842 = vunpack.c.l.b16 %v6362
        %v6843 = vunpack.c.l.b16 %v6363
        %v6844 = vunpack.c.l.b16 %v6364
        %v6845 = vunpack.c.l.b16 %v6365
        %v6846 = vunpack.c.l.b16 %v6366
        %v6847 = vunpack.c.l.b16 %v6367
        %v6848 = vunpack.c.l.b16 %v6368
        %v6849 = vunpack.c.l.b16 %v6369
        %v6850 = vunpack.c.l.b16 %v6370
        %v6851 = vunpack.c.l.b16 %v6371
        %v6852 = vunpack.c.l.b16 %v6372
        %v6853 = vunpack.c.l.b16 %v6373
        %v6854 = vunpack.c.l.b16 %v6374
        %v6855 = vunpack.c.l.b16 %v6375
        %v6856 = vunpack.c.l.b16 %v6376
        %v6857 = vunpack.c.l.b16 %v6377
        %v6858 = vunpack.c.l.b16 %v6378
        %v6859 = vunpack.c.l.b16 %v6379
        %v6860 = vunpack.c.l.b16 %v6380
        %v6861 = vunpack.c.l.b16 %v6381
        %v6862 = vunpack.c.l.b16 %v6382
        %v6863 = vunpack.c.l.b16 %v6383
        %v6864 = vunpack.c.l.b16 %v6384
        %v6865 = vunpack.c.l.b16 %v6385
        %v6866 = vunpack.c.l.b16 %v6386
        %v6867 = vunpack.c.l.b16 %v6387
        %v6868 = vunpack.c.l.b16 %v6388
        %v6869 = vunpack.c.l.b16 %v6389
        %v6870 = vunpack.c.l.b16 %v6390
        %v6871 = vunpack.c.l.b16 %v6391
        %v6872 = vunpack.c.l.b16 %v6392
        %v6873 = vunpack.c.l.b16 %v6393
        %v6874 = vunpack.c.l.b16 %v6394
        %v6875 = vunpack.c.l.b16 %v6395
        %v6876 = vunpack.c.l.b16 %v6396
        %v6877 = vunpack.c.l.b16 %v6397
        %v6878 = vunpack.c.l.b16 %v6398
        %v6879 = vunpack.c.l.b16 %v6399
        %v6880 = vunpack.c.l.b16 %v6400
        %v6881 = vunpack.c.l.b16 %v6401
        %v6882 = vunpack.c.l.b16 %v6402
        %v6883 = vunpack.c.l.b16 %v6403
        %v6884 = vunpack.c.l.b16 %v6404
        %v6885 = vunpack.c.l.b16 %v6405
        %v6886 = vunpack.c.l.b16 %v6406
        %v6887 = vunpack.c.l.b16 %v6407
        %v6888 = vunpack.c.l.b16 %v6408
        %v6889 = vunpack.c.l.b16 %v6409
        %v6890 = vunpack.c.l.b16 %v6410
        %v6891 = vunpack.c.l.b16 %v6411
        %v6892 = vunpack.c.l.b16 %v6412
        %v6893 = vunpack.c.l.b16 %v6413
        %v6894 = vunpack.c.l.b16 %v6414
        %v6895 = vunpack.c.l.b16 %v6415
        %v6896 = vunpack.c.l.b16 %v6416
        %v6897 = vunpack.c.l.b16 %v6417
        %v6898 = vunpack.c.l.b16 %v6418
        %v6899 = vunpack.c.l.b16 %v6419
        %v6900 = vunpack.c.l.b16 %v6420
        %v6901 = vunpack.c.l.b16 %v6421
        %v6902 = vunpack.c.l.b16 %v6422
        %v6903 = vunpack.c.l.b16 %v6423
        %v6904 = vunpack.c.l.b16 %v6424
        %v6905 = vunpack.c.l.b16 %v6425
        %v6906 = vunpack.c.l.b16 %v6426
        %v6907 = vunpack.c.l.b16 %v6427
        %v6908 = vunpack.c.l.b16 %v6428
        %v6909 = vunpack.c.l.b16 %v6429
        %v6910 = vunpack.c.l.b16 %v6430
        %v6911 = vunpack.c.l.b16 %v6431
        %v6912 = vunpack.c.l.b16 %v6432
        %v6913 = vunpack.c.l.b16 %v6433
        %v6914 = vunpack.c.l.b16 %v6434
        %v6915 = vunpack.c.l.b16 %v6435
        %v6916 = vunpack.c.l.b16 %v6436
        %v6917 = vunpack.c.l.b16 %v6437
        %v6918 = vunpack.c.l.b16 %v6438
        %v6919 = vunpack.c.l.b16 %v6439
        %v6920 = vunpack.c.l.b16 %v6440
        %v6921 = vunpack.c.l.b16 %v6441
        %v6922 = vunpack.c.l.b16 %v6442
        %v6923 = vunpack.c.l.b16 %v6443
        %v6924 = vunpack.c.l.b16 %v6444
        %v6925 = vunpack.c.l.b16 %v6445
        %v6926 = vunpack.c.l.b16 %v6446
        %v6927 = vunpack.c.l.b16 %v6447
        %v6928 = vunpack.c.l.b16 %v6448
        %v6929 = vunpack.c.l.b16 %v6449
        %v6930 = vunpack.c.l.b16 %v6450
        %v6931 = vunpack.c.l.b16 %v6451
        %v6932 = vunpack.c.l.b16 %v6452
        %v6933 = vunpack.c.l.b16 %v6453
        %v6934 = vunpack.c.l.b16 %v6454
        %v6935 = vunpack.c.l.b16 %v6455
        %v6936 = vunpack.c.l.b16 %v6456
        %v6937 = vpack.c.b16 %v6794, %v6793
        %v6938 = vpack.c.b16 %v6796, %v6795
        %v6939 = vpack.c.b16 %v6798, %v6797
        %v6940 = vpack.c.b16 %v6800, %v6799
        %v6941 = vpack.c.b16 %v6802, %v6801
        %v6942 = vpack.c.b16 %v6804, %v6803
        %v6943 = vpack.c.b16 %v6806, %v6805
        %v6944 = vpack.c.b16 %v6808, %v6807
        %v6945 = vpack.c.b16 %v6810, %v6809
        %v6946 = vpack.c.b16 %v6812, %v6811
        %v6947 = vpack.c.b16 %v6814, %v6813
        %v6948 = vpack.c.b16 %v6816, %v6815
        %v6949 = vpack.c.b16 %v6818, %v6817
        %v6950 = vpack.c.b16 %v6820, %v6819
        %v6951 = vpack.c.b16 %v6822, %v6821
        %v6952 = vpack.c.b16 %v6824, %v6823
        %v6953 = vpack.c.b16 %v6826, %v6825
        %v6954 = vpack.c.b16 %v6828, %v6827
        %v6955 = vpack.c.b16 %v6830, %v6829
        %v6956 = vpack.c.b16 %v6832, %v6831
        %v6957 = vpack.c.b16 %v6834, %v6833
        %v6958 = vpack.c.b16 %v6836, %v6835
        %v6959 = vpack.c.b16 %v6838, %v6837
        %v6960 = vpack.c.b16 %v6840, %v6839
        %v6961 = vpack.c.b16 %v6842, %v6841
        %v6962 = vpack.c.b16 %v6844, %v6843
        %v6963 = vpack.c.b16 %v6846, %v6845
        %v6964 = vpack.c.b16 %v6848, %v6847
        %v6965 = vpack.c.b16 %v6850, %v6849
        %v6966 = vpack.c.b16 %v6852, %v6851
        %v6967 = vpack.c.b16 %v6854, %v6853
        %v6968 = vpack.c.b16 %v6856, %v6855
        %v6969 = vpack.c.b16 %v6858, %v6857
        %v6970 = vpack.c.b16 %v6860, %v6859
        %v6971 = vpack.c.b16 %v6862, %v6861
        %v6972 = vpack.c.b16 %v6864, %v6863
        %v6973 = vpack.c.b16 %v6866, %v6865
        %v6974 = vpack.c.b16 %v6868, %v6867
        %v6975 = vpack.c.b16 %v6870, %v6869
        %v6976 = vpack.c.b16 %v6872, %v6871
        %v6977 = vpack.c.b16 %v6874, %v6873
        %v6978 = vpack.c.b16 %v6876, %v6875
        %v6979 = vpack.c.b16 %v6878, %v6877
        %v6980 = vpack.c.b16 %v6880, %v6879
        %v6981 = vpack.c.b16 %v6882, %v6881
        %v6982 = vpack.c.b16 %v6884, %v6883
        %v6983 = vpack.c.b16 %v6886, %v6885
        %v6984 = vpack.c.b16 %v6888, %v6887
        %v6985 = vpack.c.b16 %v6890, %v6889
        %v6986 = vpack.c.b16 %v6892, %v6891
        %v6987 = vpack.c.b16 %v6894, %v6893
        %v6988 = vpack.c.b16 %v6896, %v6895
        %v6989 = vpack.c.b16 %v6898, %v6897
        %v6990 = vpack.c.b16 %v6900, %v6899
        %v6991 = vpack.c.b16 %v6902, %v6901
        %v6992 = vpack.c.b16 %v6904, %v6903
        %v6993 = vpack.c.b16 %v6906, %v6905
        %v6994 = vpack.c.b16 %v6908, %v6907
        %v6995 = vpack.c.b16 %v6910, %v6909
        %v6996 = vpack.c.b16 %v6912, %v6911
        %v6997 = vpack.c.b16 %v6914, %v6913
        %v6998 = vpack.c.b16 %v6916, %v6915
        %v6999 = vpack.c.b16 %v6918, %v6917
        %v7000 = vpack.c.b16 %v6920, %v6919
        %v7001 = vpack.c.b16 %v6922, %v6921
        %v7002 = vpack.c.b16 %v6924, %v6923
        %v7003 = vpack.c.b16 %v6926, %v6925
        %v7004 = vpack.c.b16 %v6928, %v6927
        %v7005 = vpack.c.b16 %v6930, %v6929
        %v7006 = vpack.c.b16 %v6932, %v6931
        %v7007 = vpack.c.b16 %v6934, %v6933
        %v7008 = vpack.c.b16 %v6936, %v6935
        %7081 = vmatprep.subr.bf16.mxu0 0
        %7082 = vmatpush1.bf16.msra.mxu0 %v6944
        %7083 = vmatprep.subr.bf16.mxu0 0
        %7084 = vmatpush1.bf16.msra.mxu0 %v6943
        %7085 = vmatprep.subr.bf16.mxu0 0
        %7086 = vmatpush1.bf16.msra.mxu0 %v6942
        %7087 = vmatprep.subr.bf16.mxu0 0
        %7088 = vmatpush1.bf16.msra.mxu0 %v6941
        %7089 = vmatprep.subr.bf16.mxu0 0
        %7090 = vmatpush1.bf16.msra.mxu0 %v6940
        %7091 = vmatprep.subr.bf16.mxu0 0
        %7092 = vmatpush1.bf16.msra.mxu0 %v6939
        %7093 = vmatprep.subr.bf16.mxu0 0
        %7094 = vmatpush1.bf16.msra.mxu0 %v6938
        %7095 = vmatprep.subr.bf16.mxu0 0
        %7096 = vmatpush1.bf16.msra.mxu0 %v6937
        %7097 = vmatprep.subr.bf16.mxu0 0
        %7098 = vmatpush2.bf16.msra.mxu0 %v6952
        %7099 = vmatprep.subr.bf16.mxu0 0
        %7100 = vmatpush2.bf16.msra.mxu0 %v6951
        %7101 = vmatprep.subr.bf16.mxu0 0
        %7102 = vmatpush2.bf16.msra.mxu0 %v6950
        %7103 = vmatprep.subr.bf16.mxu0 0
        %7104 = vmatpush2.bf16.msra.mxu0 %v6949
        %7105 = vmatprep.subr.bf16.mxu0 0
        %7106 = vmatpush2.bf16.msra.mxu0 %v6948
        %7107 = vmatprep.subr.bf16.mxu0 0
        %7108 = vmatpush2.bf16.msra.mxu0 %v6947
        %7109 = vmatprep.subr.bf16.mxu0 0
        %7110 = vmatpush2.bf16.msra.mxu0 %v6946
        %7111 = vmatprep.subr.bf16.mxu0 0
        %7112 = vmatpush2.bf16.msra.mxu0 %v6945
        %7113 = vmatprep.mubr.bf16.mxu0 %v6578
        %7114 = vmatmul.mubr.bf16.gmra.mxu0 %v6577
        %v7115 = vpop.f32.mrf.mxu0
        %v7116 = vadd.f32 %v6463, %v7115
        %v7117 = vpop.f32.mrf.mxu0
        %v7118 = vpop.f32.mrf.mxu0
        %v7119 = vadd.f32 %v6463, %v7118
        %v7120 = vpop.f32.mrf.mxu0
        %7121 = vmatprep.mubr.bf16.mxu0 %v6587
        %7122 = vmatmul.mubr.bf16.gmra.mxu0 %v6586
        %v7123 = vpop.f32.mrf.mxu0
        %v7124 = vadd.f32 %v6463, %v7123
        %v7125 = vpop.f32.mrf.mxu0
        %v7126 = vpop.f32.mrf.mxu0
        %v7127 = vadd.f32 %v6463, %v7126
        %v7128 = vpop.f32.mrf.mxu0
        %7129 = vmatprep.mubr.bf16.mxu0 %v6596
        %7130 = vmatmul.mubr.bf16.gmra.mxu0 %v6595
        %v7131 = vpop.f32.mrf.mxu0
        %v7132 = vadd.f32 %v6463, %v7131
        %v7133 = vpop.f32.mrf.mxu0
        %v7134 = vpop.f32.mrf.mxu0
        %v7135 = vadd.f32 %v6463, %v7134
        %v7136 = vpop.f32.mrf.mxu0
        %7137 = vmatprep.mubr.bf16.mxu0 %v6605
        %7138 = vmatmul.mubr.bf16.gmra.mxu0 %v6604
        %v7139 = vpop.f32.mrf.mxu0
        %v7140 = vadd.f32 %v6463, %v7139
        %v7141 = vpop.f32.mrf.mxu0
        %v7142 = vpop.f32.mrf.mxu0
        %v7143 = vadd.f32 %v6463, %v7142
        %v7144 = vpop.f32.mrf.mxu0
        %7145 = vdwg.mxu0
        %7146 = vmatprep.subr.bf16.mxu0 0
        %7147 = vmatpush1.bf16.msra.mxu0 %v6960
        %7148 = vmatprep.subr.bf16.mxu0 0
        %7149 = vmatpush1.bf16.msra.mxu0 %v6959
        %7150 = vmatprep.subr.bf16.mxu0 0
        %7151 = vmatpush1.bf16.msra.mxu0 %v6958
        %7152 = vmatprep.subr.bf16.mxu0 0
        %7153 = vmatpush1.bf16.msra.mxu0 %v6957
        %7154 = vmatprep.subr.bf16.mxu0 0
        %7155 = vmatpush1.bf16.msra.mxu0 %v6956
        %7156 = vmatprep.subr.bf16.mxu0 0
        %7157 = vmatpush1.bf16.msra.mxu0 %v6955
        %7158 = vmatprep.subr.bf16.mxu0 0
        %7159 = vmatpush1.bf16.msra.mxu0 %v6954
        %7160 = vmatprep.subr.bf16.mxu0 0
        %7161 = vmatpush1.bf16.msra.mxu0 %v6953
        %7162 = vmatprep.subr.bf16.mxu0 0
        %7163 = vmatpush2.bf16.msra.mxu0 %v6968
        %7164 = vmatprep.subr.bf16.mxu0 0
        %7165 = vmatpush2.bf16.msra.mxu0 %v6967
        %7166 = vmatprep.subr.bf16.mxu0 0
        %7167 = vmatpush2.bf16.msra.mxu0 %v6966
        %7168 = vmatprep.subr.bf16.mxu0 0
        %7169 = vmatpush2.bf16.msra.mxu0 %v6965
        %7170 = vmatprep.subr.bf16.mxu0 0
        %7171 = vmatpush2.bf16.msra.mxu0 %v6964
        %7172 = vmatprep.subr.bf16.mxu0 0
        %7173 = vmatpush2.bf16.msra.mxu0 %v6963
        %7174 = vmatprep.subr.bf16.mxu0 0
        %7175 = vmatpush2.bf16.msra.mxu0 %v6962
        %7176 = vmatprep.subr.bf16.mxu0 0
        %7177 = vmatpush2.bf16.msra.mxu0 %v6961
        %7178 = vmatprep.mubr.bf16.mxu0 %v6580
        %7179 = vmatmul.mubr.bf16.gmra.mxu0 %v6579
        %v7180 = vpop.f32.mrf.mxu0
        %v7181 = vadd.f32 %v7116, %v7180
        %v7182 = vpop.f32.mrf.mxu0
        %v7183 = vpop.f32.mrf.mxu0
        %v7184 = vadd.f32 %v7119, %v7183
        %v7185 = vpop.f32.mrf.mxu0
        %7186 = vmatprep.mubr.bf16.mxu0 %v6589
        %7187 = vmatmul.mubr.bf16.gmra.mxu0 %v6588
        %v7188 = vpop.f32.mrf.mxu0
        %v7189 = vadd.f32 %v7124, %v7188
        %v7190 = vpop.f32.mrf.mxu0
        %v7191 = vpop.f32.mrf.mxu0
        %v7192 = vadd.f32 %v7127, %v7191
        %v7193 = vpop.f32.mrf.mxu0
        %7194 = vmatprep.mubr.bf16.mxu0 %v6598
        %7195 = vmatmul.mubr.bf16.gmra.mxu0 %v6597
        %v7196 = vpop.f32.mrf.mxu0
        %v7197 = vadd.f32 %v7132, %v7196
        %v7198 = vpop.f32.mrf.mxu0
        %v7199 = vpop.f32.mrf.mxu0
        %v7200 = vadd.f32 %v7135, %v7199
        %v7201 = vpop.f32.mrf.mxu0
        %7202 = vmatprep.mubr.bf16.mxu0 %v6607
        %7203 = vmatmul.mubr.bf16.gmra.mxu0 %v6606
        %v7204 = vpop.f32.mrf.mxu0
        %v7205 = vadd.f32 %v7140, %v7204
        %v7206 = vpop.f32.mrf.mxu0
        %v7207 = vpop.f32.mrf.mxu0
        %v7208 = vadd.f32 %v7143, %v7207
        %v7209 = vpop.f32.mrf.mxu0
        %7210 = vdwg.mxu0
        %7211 = vmatprep.subr.bf16.mxu0 0
        %7212 = vmatpush1.bf16.msra.mxu0 %v6976
        %7213 = vmatprep.subr.bf16.mxu0 0
        %7214 = vmatpush1.bf16.msra.mxu0 %v6975
        %7215 = vmatprep.subr.bf16.mxu0 0
        %7216 = vmatpush1.bf16.msra.mxu0 %v6974
        %7217 = vmatprep.subr.bf16.mxu0 0
        %7218 = vmatpush1.bf16.msra.mxu0 %v6973
        %7219 = vmatprep.subr.bf16.mxu0 0
        %7220 = vmatpush1.bf16.msra.mxu0 %v6972
        %7221 = vmatprep.subr.bf16.mxu0 0
        %7222 = vmatpush1.bf16.msra.mxu0 %v6971
        %7223 = vmatprep.subr.bf16.mxu0 0
        %7224 = vmatpush1.bf16.msra.mxu0 %v6970
        %7225 = vmatprep.subr.bf16.mxu0 0
        %7226 = vmatpush1.bf16.msra.mxu0 %v6969
        %7227 = vmatprep.subr.bf16.mxu0 0
        %7228 = vmatpush2.bf16.msra.mxu0 %v6984
        %7229 = vmatprep.subr.bf16.mxu0 0
        %7230 = vmatpush2.bf16.msra.mxu0 %v6983
        %7231 = vmatprep.subr.bf16.mxu0 0
        %7232 = vmatpush2.bf16.msra.mxu0 %v6982
        %7233 = vmatprep.subr.bf16.mxu0 0
        %7234 = vmatpush2.bf16.msra.mxu0 %v6981
        %7235 = vmatprep.subr.bf16.mxu0 0
        %7236 = vmatpush2.bf16.msra.mxu0 %v6980
        %7237 = vmatprep.subr.bf16.mxu0 0
        %7238 = vmatpush2.bf16.msra.mxu0 %v6979
        %7239 = vmatprep.subr.bf16.mxu0 0
        %7240 = vmatpush2.bf16.msra.mxu0 %v6978
        %7241 = vmatprep.subr.bf16.mxu0 0
        %7242 = vmatpush2.bf16.msra.mxu0 %v6977
        %7243 = vmatprep.mubr.bf16.mxu0 %v6582
        %7244 = vmatmul.mubr.bf16.gmra.mxu0 %v6581
        %v7245 = vpop.f32.mrf.mxu0
        %v7246 = vadd.f32 %v7181, %v7245
        %v7247 = vpop.f32.mrf.mxu0
        %v7248 = vpop.f32.mrf.mxu0
        %v7249 = vadd.f32 %v7184, %v7248
        %v7250 = vpop.f32.mrf.mxu0
        %7251 = vmatprep.mubr.bf16.mxu0 %v6591
        %7252 = vmatmul.mubr.bf16.gmra.mxu0 %v6590
        %v7253 = vpop.f32.mrf.mxu0
        %v7254 = vadd.f32 %v7189, %v7253
        %v7255 = vpop.f32.mrf.mxu0
        %v7256 = vpop.f32.mrf.mxu0
        %v7257 = vadd.f32 %v7192, %v7256
        %v7258 = vpop.f32.mrf.mxu0
        %7259 = vmatprep.mubr.bf16.mxu0 %v6600
        %7260 = vmatmul.mubr.bf16.gmra.mxu0 %v6599
        %v7261 = vpop.f32.mrf.mxu0
        %v7262 = vadd.f32 %v7197, %v7261
        %v7263 = vpop.f32.mrf.mxu0
        %v7264 = vpop.f32.mrf.mxu0
        %v7265 = vadd.f32 %v7200, %v7264
        %v7266 = vpop.f32.mrf.mxu0
        %7267 = vmatprep.mubr.bf16.mxu0 %v6609
        %7268 = vmatmul.mubr.bf16.gmra.mxu0 %v6608
        %v7269 = vpop.f32.mrf.mxu0
        %v7270 = vadd.f32 %v7205, %v7269
        %v7271 = vpop.f32.mrf.mxu0
        %v7272 = vpop.f32.mrf.mxu0
        %v7273 = vadd.f32 %v7208, %v7272
        %v7274 = vpop.f32.mrf.mxu0
        %7275 = vdwg.mxu0
        %7276 = vmatprep.subr.bf16.mxu0 0
        %7277 = vmatpush1.bf16.msra.mxu0 %v6992
        %7278 = vmatprep.subr.bf16.mxu0 0
        %7279 = vmatpush1.bf16.msra.mxu0 %v6991
        %7280 = vmatprep.subr.bf16.mxu0 0
        %7281 = vmatpush1.bf16.msra.mxu0 %v6990
        %7282 = vmatprep.subr.bf16.mxu0 0
        %7283 = vmatpush1.bf16.msra.mxu0 %v6989
        %7284 = vmatprep.subr.bf16.mxu0 0
        %7285 = vmatpush1.bf16.msra.mxu0 %v6988
        %7286 = vmatprep.subr.bf16.mxu0 0
        %7287 = vmatpush1.bf16.msra.mxu0 %v6987
        %7288 = vmatprep.subr.bf16.mxu0 0
        %7289 = vmatpush1.bf16.msra.mxu0 %v6986
        %7290 = vmatprep.subr.bf16.mxu0 0
        %7291 = vmatpush1.bf16.msra.mxu0 %v6985
        %7292 = vmatprep.subr.bf16.mxu0 0
        %7293 = vmatpush2.bf16.msra.mxu0 %v7000
        %7294 = vmatprep.subr.bf16.mxu0 0
        %7295 = vmatpush2.bf16.msra.mxu0 %v6999
        %7296 = vmatprep.subr.bf16.mxu0 0
        %7297 = vmatpush2.bf16.msra.mxu0 %v6998
        %7298 = vmatprep.subr.bf16.mxu0 0
        %7299 = vmatpush2.bf16.msra.mxu0 %v6997
        %7300 = vmatprep.subr.bf16.mxu0 0
        %7301 = vmatpush2.bf16.msra.mxu0 %v6996
        %7302 = vmatprep.subr.bf16.mxu0 0
        %7303 = vmatpush2.bf16.msra.mxu0 %v6995
        %7304 = vmatprep.subr.bf16.mxu0 0
        %7305 = vmatpush2.bf16.msra.mxu0 %v6994
        %7306 = vmatprep.subr.bf16.mxu0 0
        %7307 = vmatpush2.bf16.msra.mxu0 %v6993
        %7308 = vmatprep.mubr.bf16.mxu0 %v6584
        %7309 = vmatmul.mubr.bf16.gmra.mxu0 %v6583
        %v7310 = vpop.f32.mrf.mxu0
        %v7311 = vadd.f32 %v7246, %v7310
        %v7312 = vpop.f32.mrf.mxu0
        %v7313 = vpop.f32.mrf.mxu0
        %v7314 = vadd.f32 %v7249, %v7313
        %v7315 = vpop.f32.mrf.mxu0
        %7316 = vmatprep.mubr.bf16.mxu0 %v6593
        %7317 = vmatmul.mubr.bf16.gmra.mxu0 %v6592
        %v7318 = vpop.f32.mrf.mxu0
        %v7319 = vadd.f32 %v7254, %v7318
        %v7320 = vpop.f32.mrf.mxu0
        %v7321 = vpop.f32.mrf.mxu0
        %v7322 = vadd.f32 %v7257, %v7321
        %v7323 = vpop.f32.mrf.mxu0
        %7324 = vmatprep.mubr.bf16.mxu0 %v6602
        %7325 = vmatmul.mubr.bf16.gmra.mxu0 %v6601
        %v7326 = vpop.f32.mrf.mxu0
        %v7327 = vadd.f32 %v7262, %v7326
        %v7328 = vpop.f32.mrf.mxu0
        %v7329 = vpop.f32.mrf.mxu0
        %v7330 = vadd.f32 %v7265, %v7329
        %v7331 = vpop.f32.mrf.mxu0
        %7332 = vmatprep.mubr.bf16.mxu0 %v6611
        %7333 = vmatmul.mubr.bf16.gmra.mxu0 %v6610
        %v7334 = vpop.f32.mrf.mxu0
        %v7335 = vadd.f32 %v7270, %v7334
        %v7336 = vpop.f32.mrf.mxu0
        %v7337 = vpop.f32.mrf.mxu0
        %v7338 = vadd.f32 %v7273, %v7337
        %v7339 = vpop.f32.mrf.mxu0
        %7340 = vdwg.mxu0
        %7341 = vmatprep.subr.bf16.mxu0 0
        %7342 = vmatpush1.bf16.msra.mxu0 %v7008
        %7343 = vmatprep.subr.bf16.mxu0 0
        %7344 = vmatpush1.bf16.msra.mxu0 %v7007
        %7345 = vmatprep.subr.bf16.mxu0 0
        %7346 = vmatpush1.bf16.msra.mxu0 %v7006
        %7347 = vmatprep.subr.bf16.mxu0 0
        %7348 = vmatpush1.bf16.msra.mxu0 %v7005
        %7349 = vmatprep.subr.bf16.mxu0 0
        %7350 = vmatpush1.bf16.msra.mxu0 %v7004
        %7351 = vmatprep.subr.bf16.mxu0 0
        %7352 = vmatpush1.bf16.msra.mxu0 %v7003
        %7353 = vmatprep.subr.bf16.mxu0 0
        %7354 = vmatpush1.bf16.msra.mxu0 %v7002
        %7355 = vmatprep.subr.bf16.mxu0 0
        %7356 = vmatpush1.bf16.msra.mxu0 %v7001
        %7357 = vmatprep.subr.bf16.mxu0 0
        %7358 = vmatpush2.bf16.msra.mxu0 0
        %7359 = vmatprep.subr.bf16.mxu0 0
        %7360 = vmatpush2.bf16.msra.mxu0 0
        %7361 = vmatprep.subr.bf16.mxu0 0
        %7362 = vmatpush2.bf16.msra.mxu0 0
        %7363 = vmatprep.subr.bf16.mxu0 0
        %7364 = vmatpush2.bf16.msra.mxu0 0
        %7365 = vmatprep.subr.bf16.mxu0 0
        %7366 = vmatpush2.bf16.msra.mxu0 0
        %7367 = vmatprep.subr.bf16.mxu0 0
        %7368 = vmatpush2.bf16.msra.mxu0 0
        %7369 = vmatprep.subr.bf16.mxu0 0
        %7370 = vmatpush2.bf16.msra.mxu0 0
        %7371 = vmatprep.subr.bf16.mxu0 0
        %7372 = vmatpush2.bf16.msra.mxu0 0
        %7373 = vmatprep.mubr.bf16.mxu0 0
        %7374 = vmatmul.mubr.bf16.gmra.mxu0 %v6585
        %v7375 = vpop.f32.mrf.mxu0
        %v7376 = vadd.f32 %v7311, %v7375
        %v7377 = vpop.f32.mrf.mxu0
        %v7378 = vpop.f32.mrf.mxu0
        %v7379 = vadd.f32 %v7314, %v7378
        %v7380 = vpop.f32.mrf.mxu0
        %7381 = vmatprep.mubr.bf16.mxu0 0
        %7382 = vmatmul.mubr.bf16.gmra.mxu0 %v6594
        %v7383 = vpop.f32.mrf.mxu0
        %v7384 = vadd.f32 %v7319, %v7383
        %v7385 = vpop.f32.mrf.mxu0
        %v7386 = vpop.f32.mrf.mxu0
        %v7387 = vadd.f32 %v7322, %v7386
        %v7388 = vpop.f32.mrf.mxu0
        %7389 = vmatprep.mubr.bf16.mxu0 0
        %7390 = vmatmul.mubr.bf16.gmra.mxu0 %v6603
        %v7391 = vpop.f32.mrf.mxu0
        %v7392 = vadd.f32 %v7327, %v7391
        %v7393 = vpop.f32.mrf.mxu0
        %v7394 = vpop.f32.mrf.mxu0
        %v7395 = vadd.f32 %v7330, %v7394
        %v7396 = vpop.f32.mrf.mxu0
        %7397 = vmatprep.mubr.bf16.mxu0 0
        %7398 = vmatmul.mubr.bf16.gmra.mxu0 %v6612
        %v7399 = vpop.f32.mrf.mxu0
        %v7400 = vadd.f32 %v7335, %v7399
        %v7401 = vpop.f32.mrf.mxu0
        %v7402 = vpop.f32.mrf.mxu0
        %v7403 = vadd.f32 %v7338, %v7402
        %v7404 = vpop.f32.mrf.mxu0
        %7405 = vdwg.mxu0
        %v7406 = vadd.f32 %v7376, %v7379
        %v7407 = vadd.f32 %v7406, %v7384
        %v7408 = vadd.f32 %v7407, %v7387
        %v7409 = vadd.f32 %v7408, %v7392
        %v7410 = vadd.f32 %v7409, %v7395
        %v7411 = vadd.f32 %v7410, %v7400
        %v7412 = vadd.f32 %v7411, %v7403
        %v7413 = vrot.slane %v7412, 4
        %v7414 = vadd.f32 %v7412, %v7413
        %v7415 = vrot.slane %v7414, 2
        %v7416 = vadd.f32 %v7414, %v7415
        %v7417 = vrot.slane %v7416, 1
        %v7418 = vadd.f32 %v7416, %v7417
        %v7419 = vmul.f32 %v7376, %v7376
        %v7420 = vmul.f32 %v7379, %v7379
        %v7421 = vmul.f32 %v7384, %v7384
        %v7422 = vmul.f32 %v7387, %v7387
        %v7423 = vmul.f32 %v7392, %v7392
        %v7424 = vmul.f32 %v7395, %v7395
        %v7425 = vmul.f32 %v7400, %v7400
        %v7426 = vmul.f32 %v7403, %v7403
        %v7427 = vadd.f32 %v7419, %v7420
        %v7428 = vadd.f32 %v7427, %v7421
        %v7429 = vadd.f32 %v7428, %v7422
        %v7430 = vadd.f32 %v7429, %v7423
        %v7431 = vadd.f32 %v7430, %v7424
        %v7432 = vadd.f32 %v7431, %v7425
        %v7433 = vadd.f32 %v7432, %v7426
        %v7434 = vrot.slane %v7433, 4
        %v7435 = vadd.f32 %v7433, %v7434
        %v7436 = vrot.slane %v7435, 2
        %v7437 = vadd.f32 %v7435, %v7436
        %v7438 = vrot.slane %v7437, 1
        %v7439 = vadd.f32 %v7437, %v7438
        %v7440 = vsel %vm2103, %v7418, 0.0
        %7441 = vadd.xlane.f32.xlu0 %v7440
        %v7442 = vpop.xlane.xlu0 %7441
        %v7443 = vrot.slane %v7442, 4
        %v7444 = vadd.f32 %v7442, %v7443
        %v7445 = vrot.slane %v7444, 2
        %v7446 = vadd.f32 %v7444, %v7445
        %v7447 = vrot.slane %v7446, 1
        %v7448 = vadd.f32 %v7446, %v7447
        %s7449 = vtos %v7448
        %s7450 = smul.f32 %s7449, 0.00048828125
        %v7451 = vsel %vm2103, %v7439, 0.0
        %7452 = vadd.xlane.f32.xlu0 %v7451
        %v7453 = vpop.xlane.xlu0 %7452
        %v7454 = vrot.slane %v7453, 4
        %v7455 = vadd.f32 %v7453, %v7454
        %v7456 = vrot.slane %v7455, 2
        %v7457 = vadd.f32 %v7455, %v7456
        %v7458 = vrot.slane %v7457, 1
        %v7459 = vadd.f32 %v7457, %v7458
        %s7460 = vtos %v7459
        %s7461 = smul.f32 %s7460, 0.00048828125
        %s7462 = smul.f32 %s7450, %s7450
        %s7463 = ssub.f32 %s7461, %s7462
        %s7464 = smax.f32 %s7463, 0.0
        %v7465 = vstv %s7450
        %v7466 = vsub.f32 %v7376, %v7465
        %v7467 = vsub.f32 %v7379, %v7465
        %v7468 = vsub.f32 %v7384, %v7465
        %v7469 = vsub.f32 %v7387, %v7465
        %v7470 = vsub.f32 %v7392, %v7465
        %v7471 = vsub.f32 %v7395, %v7465
        %v7472 = vsub.f32 %v7400, %v7465
        %v7473 = vsub.f32 %v7403, %v7465
        %s7474 = sadd.f32 %s7464, 1e-05
        %v7475 = vstv %s7474
        %v7476 = vrsqrt.pop %v7475
        %s7477 = vtos %v7476
        %v7478 = vstv %s7477
        %v7479 = vmul.f32 %v7466, %v7478
        %v7480 = vmul.f32 %v7467, %v7478
        %v7481 = vmul.f32 %v7468, %v7478
        %v7482 = vmul.f32 %v7469, %v7478
        %v7483 = vmul.f32 %v7470, %v7478
        %v7484 = vmul.f32 %v7471, %v7478
        %v7485 = vmul.f32 %v7472, %v7478
        %v7486 = vmul.f32 %v7473, %v7478
        %s7487 = scalar_lea.vmem [#allocation11], 96
        %v7488 = vld [vmem:[%s7487] sm:$0xf]
        %v7489 = vld [vmem:[%s7487 + $0x4] sm:$0xf]
        %v7490 = vld [vmem:[%s7487 + $0x8] sm:$0xf]
        %v7491 = vld [vmem:[%s7487 + $0xc] sm:$0xf]
        %v7492 = vld [vmem:[%s7487 + $0x10] sm:$0xf]
        %v7493 = vld [vmem:[%s7487 + $0x14] sm:$0xf]
        %v7494 = vld [vmem:[%s7487 + $0x18] sm:$0xf]
        %v7495 = vld [vmem:[%s7487 + $0x1c] sm:$0xf]
        %v7496 = vunpack.c.l.bf16 %v7488
        %v7497 = vunpack.c.l.bf16 %v7489
        %v7498 = vunpack.c.l.bf16 %v7490
        %v7499 = vunpack.c.l.bf16 %v7491
        %v7500 = vunpack.c.l.bf16 %v7492
        %v7501 = vunpack.c.l.bf16 %v7493
        %v7502 = vunpack.c.l.bf16 %v7494
        %v7503 = vunpack.c.l.bf16 %v7495
        %v7504 = vmul.f32 %v7479, %v7496
        %v7505 = vmul.f32 %v7480, %v7497
        %v7506 = vmul.f32 %v7481, %v7498
        %v7507 = vmul.f32 %v7482, %v7499
        %v7508 = vmul.f32 %v7483, %v7500
        %v7509 = vmul.f32 %v7484, %v7501
        %v7510 = vmul.f32 %v7485, %v7502
        %v7511 = vmul.f32 %v7486, %v7503
        %s7512 = scalar_lea.vmem [#allocation13], 96
        %v7513 = vld [vmem:[%s7512] sm:$0xf]
        %v7514 = vld [vmem:[%s7512 + $0x4] sm:$0xf]
        %v7515 = vld [vmem:[%s7512 + $0x8] sm:$0xf]
        %v7516 = vld [vmem:[%s7512 + $0xc] sm:$0xf]
        %v7517 = vld [vmem:[%s7512 + $0x10] sm:$0xf]
        %v7518 = vld [vmem:[%s7512 + $0x14] sm:$0xf]
        %v7519 = vld [vmem:[%s7512 + $0x18] sm:$0xf]
        %v7520 = vld [vmem:[%s7512 + $0x1c] sm:$0xf]
        %v7521 = vunpack.c.l.bf16 %v7513
        %v7522 = vunpack.c.l.bf16 %v7514
        %v7523 = vunpack.c.l.bf16 %v7515
        %v7524 = vunpack.c.l.bf16 %v7516
        %v7525 = vunpack.c.l.bf16 %v7517
        %v7526 = vunpack.c.l.bf16 %v7518
        %v7527 = vunpack.c.l.bf16 %v7519
        %v7528 = vunpack.c.l.bf16 %v7520
        %v7529 = vadd.f32 %v7504, %v7521
        %v7530 = vadd.f32 %v7505, %v7522
        %v7531 = vadd.f32 %v7506, %v7523
        %v7532 = vadd.f32 %v7507, %v7524
        %v7533 = vadd.f32 %v7508, %v7525
        %v7534 = vadd.f32 %v7509, %v7526
        %v7535 = vadd.f32 %v7510, %v7527
        %v7536 = vadd.f32 %v7511, %v7528
        %v7537 = vmax.f32 %v7529, 0.0
        %v7538 = vmax.f32 %v7530, 0.0
        %v7539 = vmax.f32 %v7531, 0.0
        %v7540 = vmax.f32 %v7532, 0.0
        %v7541 = vmax.f32 %v7533, 0.0
        %v7542 = vmax.f32 %v7534, 0.0
        %v7543 = vmax.f32 %v7535, 0.0
        %v7544 = vmax.f32 %v7536, 0.0
        %v7545 = vadd.f32 %v7537, %v7538
        %v7546 = vadd.f32 %v7545, %v7539
        %v7547 = vadd.f32 %v7546, %v7540
        %v7548 = vadd.f32 %v7547, %v7541
        %v7549 = vadd.f32 %v7548, %v7542
        %v7550 = vadd.f32 %v7549, %v7543
        %v7551 = vadd.f32 %v7550, %v7544
        %v7552 = vrot.slane %v7551, 4
        %v7553 = vadd.f32 %v7551, %v7552
        %v7554 = vrot.slane %v7553, 2
        %v7555 = vadd.f32 %v7553, %v7554
        %v7556 = vrot.slane %v7555, 1
        %v7557 = vadd.f32 %v7555, %v7556
        %7559 = vrot.lane.b32.xlu0 %v7557, 96
        %v7560 = vpop.permute.xlu0 %7559
        %v7562 = vadd.f32 %v7557, %v7560
        %7563 = vrot.lane.b32.xlu0 %v7557, 64
        %v7564 = vpop.permute.xlu0 %7563
        %v7566 = vadd.f32 %v7562, %v7564
        %7567 = vrot.lane.b32.xlu0 %v7557, 32
        %v7568 = vpop.permute.xlu0 %7567
        %v7570 = vadd.f32 %v7566, %v7568
        %v7571 = vmul.f32 %v7570, 0.00390625
        %v7572 = vpack.c.bf16 %v7571, %v7571
        %v7573 = vld [vmem:[#allocation14] sm:$0xf]
        %v7574 = vld [vmem:[#allocation14 + $0x4] sm:$0xf]
        %v7575 = vld [vmem:[#allocation14 + $0x8] sm:$0xf]
        %v7576 = vld [vmem:[#allocation14 + $0xc] sm:$0xf]
        %v7577 = vld [vmem:[#allocation16] sm:$0x1]
        %v7582 = vunpack.c.l.b16 %v7573
        %v7583 = vunpack.c.l.b16 %v7574
        %v7584 = vunpack.c.l.b16 %v7575
        %v7585 = vunpack.c.l.b16 %v7576
        %v7586 = vpack.c.b16 %v7583, %v7582
        %v7587 = vpack.c.b16 %v7585, %v7584
        %v7591 = vsel %vm470, %v7572, 0
        %7593 = vmatprep.subr.bf16.mxu0 0
        %7594 = vmatpush1.bf16.msra.mxu0 0
        %7595 = vmatprep.subr.bf16.mxu0 0
        %7596 = vmatpush1.bf16.msra.mxu0 0
        %7597 = vmatprep.subr.bf16.mxu0 0
        %7598 = vmatpush1.bf16.msra.mxu0 0
        %7599 = vmatprep.subr.bf16.mxu0 0
        %7600 = vmatpush1.bf16.msra.mxu0 0
        %7601 = vmatprep.subr.bf16.mxu0 0
        %7602 = vmatpush1.bf16.msra.mxu0 0
        %7603 = vmatprep.subr.bf16.mxu0 0
        %7604 = vmatpush1.bf16.msra.mxu0 0
        %7605 = vmatprep.subr.bf16.mxu0 0
        %7606 = vmatpush1.bf16.msra.mxu0 %v7587
        %7607 = vmatprep.subr.bf16.mxu0 0
        %7608 = vmatpush1.bf16.msra.mxu0 %v7586
        %7609 = vmatprep.subr.bf16.mxu0 0
        %7610 = vmatpush2.bf16.msra.mxu0 0
        %7611 = vmatprep.subr.bf16.mxu0 0
        %7612 = vmatpush2.bf16.msra.mxu0 0
        %7613 = vmatprep.subr.bf16.mxu0 0
        %7614 = vmatpush2.bf16.msra.mxu0 0
        %7615 = vmatprep.subr.bf16.mxu0 0
        %7616 = vmatpush2.bf16.msra.mxu0 0
        %7617 = vmatprep.subr.bf16.mxu0 0
        %7618 = vmatpush2.bf16.msra.mxu0 0
        %7619 = vmatprep.subr.bf16.mxu0 0
        %7620 = vmatpush2.bf16.msra.mxu0 0
        %7621 = vmatprep.subr.bf16.mxu0 0
        %7622 = vmatpush2.bf16.msra.mxu0 0
        %7623 = vmatprep.subr.bf16.mxu0 0
        %7624 = vmatpush2.bf16.msra.mxu0 0
        %7625 = vmatprep.mubr.bf16.mxu0 0
        %7626 = vmatmul.mubr.bf16.gmra.mxu0 %v7591
        %v7627 = vpop.f32.mrf.mxu0
        %v7628 = vadd.f32 %v7577, %v7627
        %v7629 = vpop.f32.mrf.mxu0
        %v7630 = vpop.f32.mrf.mxu0
        %v7631 = vpop.f32.mrf.mxu0
        %7632 = vdwg.mxu0
        %v7633 = vsub.f32 0.0, %v7628
        %v7634 = vmul.f32 %v7633, 1.442695
        %v7635 = vpow.pop %v7634
        %v7636 = vadd.f32 %v7635, 1.0
        %v7637 = vrcp.pop %v7636
        %v7638 = vmul.f32 1.0, %v7637
        %7639 = vst [vmem:[%s380] sm:$0x1] %v7638
        %s7640 = sand.u32 %s187, 1
        %s7641 = scalar_lea.sflag [#allocation7], %s7640
        %s7642 = sand.u32 %s187, 1
        %s7643 = scalar_lea.vmem [#allocation17], %s7642
        // Predicated region
        $region77: #{tpu_custom_call.1} parent=47 // pred_check
          %p7644 = pneg %p197
        $region78: #{tpu_custom_call.1} parent=47 // pred_check_branch
          %7646 = sbr.rel (%p7644) target = $region80
        $region79: #{tpu_custom_call.1} parent=47 // pred_region
          %s7648 = ssub.s32 16, 16
          %7649 = vsyncadd %s7641, %s7648
          %s7650 = smul.addr %s27, 16
          %s7651 = scalar_lea.hbm %s7, %s7650
          %s7653 = sshll.u32 %s7643, 4
          %s7654 = int_to_ptr.vmem [resolvable:$true] %s7653
          %7656 = dma.vmem_to_hbm [thread:$0]  %s7654, 16, %s7651, %s7641
        $region80: #{tpu_custom_call.1} parent=47 // pred_fallthru
          _
      $region48: #{tpu_custom_call.1} parent=5 // pred_fallthru
        _
      %p7657 = scmp.le.s32.totalorder 2, %s22
      // Predicated region
      $region81: #{tpu_custom_call.1} parent=5 // pred_check
        %p7658 = pneg %p7657
      $region82: #{tpu_custom_call.1} parent=5 // pred_check_branch
        %7660 = sbr.rel (%p7658) target = $region84
      $region83: #{tpu_custom_call.1} parent=5 // pred_region
        %s7661 = ssub.s32 %s22, 2
        // Predicated region
        $region85: #{tpu_custom_call.1} parent=83 // pred_check
          %p7662 = pneg %p203
        $region86: #{tpu_custom_call.1} parent=83 // pred_check_branch
          %7664 = sbr.rel (%p7662) target = $region88
        $region87: #{tpu_custom_call.1} parent=83 // pred_region
          %s7665 = sand.u32 %s188, 1
          %s7666 = scalar_lea.sflag [#allocation7], %s7665
          %s7667 = sand.u32 %s188, 1
          %s7668 = scalar_lea.vmem [#allocation17], %s7667
          %7669 = dma.done %s7666, 16
        $region88: #{tpu_custom_call.1} parent=83 // pred_fallthru
          _
      $region84: #{tpu_custom_call.1} parent=5 // pred_fallthru
        _
    $region6: #{tpu_custom_call.1} parent=1 // loop_footer
      %s26 = sadd.s32 1, %s22
    $region7: #{tpu_custom_call.1} parent=1 // loop_footer_branch
      %21 = sbr.rel target = $region3
    $region8: #{tpu_custom_call.1} parent=1 // loop_exit
      _
    %7670 = vsyncpa [#allocation6], 1
    %s7671 = scalar_lea.sflag [#allocation6], 1
    %7672 = vsyncpa %s7671, 1
    %7673 = vsyncpa [#allocation9], 1
    %7674 = vsyncpa [#allocation12], 1
    %7675 = vsyncpa [#allocation15], 1
    %7676 = vsyncpa [#allocation7], 1
    %s7677 = scalar_lea.sflag [#allocation7], 1
    %7678 = vsyncpa %s7677, 1

</llo_original>
